<compile_context>
chip_gen: v7x
topology: tpu7x:2x2x1
jax: 0.10.0
libtpu: 0.0.40
codegen_flags: <defaults>
</compile_context>

<pallas_src>
import jax
import jax.numpy as jnp
import numpy as np
from jax.experimental import pallas as pl
from jax.experimental.pallas import tpu as pltpu

_LANES = 128


# ----------------------------------------------------------------------------
# Fused Pallas kernel (one grid step == one image):
# conv1..conv9 + 2 maxpools + global avg-pool + log_softmax
# ----------------------------------------------------------------------------
def _nin_fused_kernel(col1_ref, w_ref, b_ref, w4_ref, w7_ref,
                      gp1_ref, gc4_ref, gp2_ref, gc7_ref, mask_ref, out_ref):
    """All operands are VMEM-resident; activations live as in-kernel values.

    Activation layout: rows = flattened (y, x) pixels of this image, lanes =
    channels zero-padded to 128.  Spatial selection (conv taps / pool windows /
    padding) uses small constant 0/1 gather matrices on the MXU (exact in bf16).
    """
    f32 = jnp.float32
    mxu_dt = w_ref.dtype            # bf16 (default fast path) or f32 (parity)
    # fp32 parity path: force true multi-pass f32 MXU matmuls.
    prec = jax.lax.Precision.HIGHEST if mxu_dt == f32 else None

    def mm(a, b):
        return jnp.dot(a, b, preferred_element_type=f32, precision=prec)

    def tree(vals, op):
        # pairwise reduction: shortens the dependent chain (25->5, 9->4 steps)
        while len(vals) > 1:
            nxt = [op(vals[i], vals[i + 1]) for i in range(0, len(vals) - 1, 2)]
            if len(vals) % 2:
                nxt.append(vals[-1])
            vals = nxt
        return vals[0]

    def dense(x, wi, bi, relu=True):
        # 1x1 conv (or conv1-as-GEMM): X @ W + b, fp32 bias/ReLU epilogue.
        acc = mm(x.astype(mxu_dt), w_ref[wi]) + b_ref[bi]
        return jnp.maximum(acc, 0.0) if relu else acc

    def maxpool(x, g_ref):
        # 3x3/2 max-pool: tree-max over 9 gathered taps.
        # INVARIANT: x is post-ReLU (>= 0), so an all-zero row for an
        # out-of-range tap never beats the true window max (== -inf padding).
        xm = x.astype(mxu_dt)
        taps = [mm(g_ref[t], xm) for t in range(g_ref.shape[0])]
        return tree(taps, jnp.maximum)

    def conv5x5(x, g_ref, wcat_ref, bi):
        # 5x5/1 conv (pad 2): in-kernel im2col -- lane-concat the 25 gathered
        # taps, then ONE wide GEMM (K = 25*128) so the 25-term spatial sum
        # accumulates inside the MXU instead of a VPU add chain.
        xm = x.astype(mxu_dt)
        taps = [mm(g_ref[t], xm).astype(mxu_dt) for t in range(g_ref.shape[0])]
        xcat = jnp.concatenate(taps, axis=-1)            # (M, 25*cp)
        return jnp.maximum(mm(xcat, wcat_ref[...]) + b_ref[bi], 0.0)

    x = dense(col1_ref[0], 0, 0)          # conv1 + relu   (81, cp)
    x = dense(x, 1, 1)                    # conv2 + relu
    x = dense(x, 2, 2)                    # conv3 + relu
    x = maxpool(x, gp1_ref)               # maxpool 3x3/2  (25, cp)
    # dropout (eval mode) -> identity
    x = conv5x5(x, gc4_ref, w4_ref, 3)    # conv4 + relu
    x = dense(x, 3, 4)                    # conv5 + relu
    x = dense(x, 4, 5)                    # conv6 + relu
    x = maxpool(x, gp2_ref)               # maxpool 3x3/2  (9, cp)
    # dropout (eval mode) -> identity
    x = conv5x5(x, gc7_ref, w7_ref, 6)    # conv7 + relu
    x = dense(x, 5, 7)                    # conv8 + relu
    x = dense(x, 6, 8, relu=False)        # conv9 (no relu)

    # global 3x3 avg-pool == exact f32 mean over the 9 pixels (sublane/XLU
    # reduce, off the MXU), then masked log_softmax over the 128 class lanes.
    logits = jnp.mean(x, axis=0, keepdims=True) + mask_ref[...]   # (1, cp)
    z = logits - jnp.max(logits, axis=-1, keepdims=True)
    out_ref[0] = z - jnp.log(jnp.sum(jnp.exp(z), axis=-1, keepdims=True))


# ----------------------------------------------------------------------------
# Host-side constant construction (shape-only; runs at trace time)
# ----------------------------------------------------------------------------
def _conv_out(n, k, stride, pad):
    return (n + 2 * pad - k) // stride + 1


def _gather_taps(h, w, k, stride, pad):
    """Batch-independent constant 0/1 gather matrices, one per (ky, kx) tap.

    G[t] @ X (X rows = flattened (y, x) pixels of ONE image) selects, for every
    output pixel, the input pixel (oy*stride - pad + ky, ox*stride - pad + kx);
    out-of-range taps give an all-zero row (zero padding for conv sums; for the
    post-ReLU max-pools a 0 tap never beats the true >= 0 window max).
    Returns (k*k, ho*wo, h*w) float32 and (ho, wo)."""
    ho, wo = _conv_out(h, k, stride, pad), _conv_out(w, k, stride, pad)
    g = np.zeros((k * k, ho * wo, h * w), np.float32)
    for ky in range(k):
        for kx in range(k):
            t = ky * k + kx
            for oy in range(ho):
                iy = oy * stride - pad + ky
                if not 0 <= iy < h:
                    continue
                for ox in range(wo):
                    ix = ox * stride - pad + kx
                    if 0 <= ix < w:
                        g[t, oy * wo + ox, iy * w + ix] = 1.0
    return g, ho, wo


def _im2col_entry(x, k, stride, pad):
    """Entry-only im2col for conv1; columns ordered (cin, ky, kx) to match
    PyTorch's weight.reshape(cout, cin*k*k).  Returns (B, ho*wo, cin*k*k)."""
    b, c, h, w = x.shape
    xp = jnp.pad(x, ((0, 0), (0, 0), (pad, pad), (pad, pad)))
    ho, wo = _conv_out(h, k, stride, pad), _conv_out(w, k, stride, pad)
    cols = []
    for i in range(k):
        for j in range(k):
            cols.append(xp[:, :, i:i + stride * ho:stride, j:j + stride * wo:stride])
    col = jnp.stack(cols, axis=0)            # (k*k, B, C, Ho, Wo)
    col = col.transpose(1, 3, 4, 2, 0)       # (B, Ho, Wo, C, k*k)
    return col.reshape(b, ho * wo, c * k * k), ho, wo


def _pad2d(a, rows, cols):
    return jnp.pad(a, ((0, rows - a.shape[0]), (0, cols - a.shape[1])))


# ----------------------------------------------------------------------------
# Model wrapper
# ----------------------------------------------------------------------------
def nin_forward(params, x, mxu_dtype=jnp.bfloat16):
    """PyTorch NetworkInNetwork.forward (eval-mode dropout).

    NCHW input -> (B, num_classes) log-probabilities via one fused pallas_call
    with a batch-parallel grid.  mxu_dtype=jnp.bfloat16 (default) is the fast
    path on ALL generations (gather matrices are 0/1 so exact; fp32
    accumulation + fp32 epilogue).  mxu_dtype=jnp.float32 is the exact-parity
    path (Precision.HIGHEST on every dot)."""
    c1, c2, c3, c4, c5, c6, c7, c8, c9 = params
    x = x.astype(jnp.float32)
    batch, cin, h, w = x.shape
    num_classes = c9[0].shape[0]

    # one channel-pad width covers every layer of this model (all dims <= 128)
    cp = _LANES * int(np.ceil(max(cin * 25, _LANES, num_classes) / _LANES))

    # -- entry: conv1 lowered to a GEMM (the only layout conversion) ----------
    col1, h1, w1 = _im2col_entry(x, 5, 2, 0)              # (B, h1*w1, cin*25)
    col1 = jnp.pad(col1, ((0, 0), (0, 0), (0, cp - col1.shape[-1]))
                   ).astype(mxu_dtype)

    # -- batch-independent gather matrices (cast to MXU dtype; 0/1 => exact) --
    gp1, hp1, wp1 = _gather_taps(h1, w1, 3, 2, 1)         # maxpool 1
    gc4, _, _ = _gather_taps(hp1, wp1, 5, 1, 2)           # conv4 taps
    gp2, hp2, wp2 = _gather_taps(hp1, wp1, 3, 2, 1)       # maxpool 2
    gc7, _, _ = _gather_taps(hp2, wp2, 5, 1, 2)           # conv7 taps
    if (hp2, wp2) != (3, 3):
        raise ValueError(f"final feature map must be 3x3, got {hp2}x{wp2} "
                         "(use ~21x21 inputs like the reference model)")
    gp1j, gc4j, gp2j, gc7j = (jnp.asarray(g, mxu_dtype)
                              for g in (gp1, gc4, gp2, gc7))

    cls_mask = np.full((1, cp), -1e30, np.float32)
    cls_mask[0, :num_classes] = 0.0
    cls_mask = jnp.asarray(cls_mask)

    # -- weights in channels-last GEMM form, zero-padded to 128 lanes ---------
    def mat1x1(wb):
        ww = wb[0]
        return _pad2d(ww.reshape(ww.shape[0], ww.shape[1]).T, cp, cp)

    w1mat = _pad2d(c1[0].reshape(c1[0].shape[0], -1).T, cp, cp)
    w_stack = jnp.stack([w1mat, mat1x1(c2), mat1x1(c3), mat1x1(c5),
                         mat1x1(c6), mat1x1(c8), mat1x1(c9)]).astype(mxu_dtype)
    b_stack = jnp.stack([jnp.pad(bb, (0, cp - bb.shape[0]))[None, :]
                         for (_, bb) in params])           # (9, 1, cp) fp32

    def wcat5x5(wb):
        # vertical stack of the 25 per-tap (cp, cp) weight matrices -> one
        # (25*cp, cp) operand for the wide-K GEMM in conv5x5().
        ww = wb[0]                                   # (cout, cin_, 5, 5)
        t = ww.transpose(2, 3, 1, 0).reshape(25, ww.shape[1], ww.shape[0])
        t = jnp.pad(t, ((0, 0), (0, cp - ww.shape[1]), (0, cp - ww.shape[0])))
        return t.reshape(25 * cp, cp).astype(mxu_dtype)

    w4cat, w7cat = wcat5x5(c4), wcat5x5(c7)

    operands = (col1, w_stack, b_stack, w4cat, w7cat,
                gp1j, gc4j, gp2j, gc7j, cls_mask)

    # -- advisory cost estimate for XLA's scheduler ----------------------------
    m1, mp1, mp2 = h1 * w1, hp1 * wp1, hp2 * wp2
    flops_img = 2 * (3 * m1 * cp * cp
                     + 9 * mp1 * m1 * cp
                     + 25 * mp1 * mp1 * cp + mp1 * (25 * cp) * cp
                     + 2 * mp1 * cp * cp
                     + 9 * mp2 * mp1 * cp
                     + 25 * mp2 * mp2 * cp + mp2 * (25 * cp) * cp
                     + 2 * mp2 * cp * cp)
    bytes_accessed = int(sum(int(np.prod(a.shape)) * a.dtype.itemsize
                             for a in operands) + batch * cp * 4)
    cost = pl.CostEstimate(flops=int(batch * flops_img),
                           transcendentals=int(batch * cp),
                           bytes_accessed=bytes_accessed)

    grid_spec = pltpu.PrefetchScalarGridSpec(
        num_scalar_prefetch=0,
        grid=(batch,),                                 # one image per program
        in_specs=[
            pl.BlockSpec((1, m1, cp), lambda b: (b, 0, 0)),       # per-image im2col
            pl.BlockSpec(w_stack.shape, lambda b: (0, 0, 0)),     # resident weights
            pl.BlockSpec(b_stack.shape, lambda b: (0, 0, 0)),
            pl.BlockSpec(w4cat.shape, lambda b: (0, 0)),
            pl.BlockSpec(w7cat.shape, lambda b: (0, 0)),
            pl.BlockSpec(gp1j.shape, lambda b: (0, 0, 0)),        # resident gathers
            pl.BlockSpec(gc4j.shape, lambda b: (0, 0, 0)),
            pl.BlockSpec(gp2j.shape, lambda b: (0, 0, 0)),
            pl.BlockSpec(gc7j.shape, lambda b: (0, 0, 0)),
            pl.BlockSpec(cls_mask.shape, lambda b: (0, 0)),
        ],
        out_specs=pl.BlockSpec((1, 1, cp), lambda b: (b, 0, 0)),  # lane-dense
    )

    out = pl.pallas_call(
        _nin_fused_kernel,
        out_shape=jax.ShapeDtypeStruct((batch, 1, cp), jnp.float32),
        grid_spec=grid_spec,
        # actual VMEM use ~5 MB (bf16) / ~10 MB (fp32) incl. double-buffering;
        # 16 MiB leaves headroom and fits every generation's scoped limit.
        compiler_params=pltpu.CompilerParams(
            dimension_semantics=("parallel",),
            vmem_limit_bytes=16 * 1024 * 1024),
        cost_estimate=cost,
    )(*operands)
    return out.reshape(batch, cp)[:, :num_classes]


# ----------------------------------------------------------------------------
# Parameters & plain-XLA reference (for correctness checks)
# ----------------------------------------------------------------------------
def init_params(key, input_dim=3, num_classes=10):
    specs = [
        (96, input_dim, 5, 5),    # conv1
        (64, 96, 1, 1),           # conv2
        (48, 64, 1, 1),           # conv3
        (128, 48, 5, 5),          # conv4
        (96, 128, 1, 1),          # conv5
        (48, 96, 1, 1),           # conv6
        (128, 48, 5, 5),          # conv7
        (96, 128, 1, 1),          # conv8
        (num_classes, 96, 1, 1),  # conv9
    ]
    params = []
    for sp in specs:
        key, kw_, kb_ = jax.random.split(key, 3)
        fan_in = sp[1] * sp[2] * sp[3]
        w = jax.random.normal(kw_, sp, jnp.float32) * jnp.sqrt(2.0 / fan_in)
        b = jax.random.normal(kb_, (sp[0],), jnp.float32) * 0.01
        params.append((w, b))
    return params


def _conv_nchw(x, w, b, stride=1, pad=0):
    y = jax.lax.conv_general_dilated(
        x, w, (stride, stride), [(pad, pad), (pad, pad)],
        dimension_numbers=("NCHW", "OIHW", "NCHW"),
        precision=jax.lax.Precision.HIGHEST)
    return y + b[None, :, None, None]


def nin_reference(params, x):
    """Plain-XLA reference of the PyTorch forward (eval-mode dropout)."""
    c1, c2, c3, c4, c5, c6, c7, c8, c9 = params
    relu = jax.nn.relu

    def maxpool(y):
        return jax.lax.reduce_window(y, -jnp.inf, jax.lax.max,
                                     (1, 1, 3, 3), (1, 1, 2, 2),
                                     ((0, 0), (0, 0), (1, 1), (1, 1)))

    y = relu(_conv_nchw(x, *c1, stride=2))
    y = relu(_conv_nchw(y, *c2))
    y = relu(_conv_nchw(y, *c3))
    y = maxpool(y)
    y = relu(_conv_nchw(y, *c4, pad=2))
    y = relu(_conv_nchw(y, *c5))
    y = relu(_conv_nchw(y, *c6))
    y = maxpool(y)
    y = relu(_conv_nchw(y, *c7, pad=2))
    y = relu(_conv_nchw(y, *c8))
    y = _conv_nchw(y, *c9)
    y = jnp.mean(y, axis=(2, 3))            # 3x3 avg-pool on a 3x3 map + squeeze
    return jax.nn.log_softmax(y, axis=1)


# ----------------------------------------------------------------------------
if __name__ == "__main__":
    key = jax.random.PRNGKey(0)
    kx, kp = jax.random.split(key)

    batch_size, input_dim, num_classes = 2, 3, 10
    height = width = 21   # 21 -> conv1: 9 -> pool: 5 -> pool: 3 -> avgpool: 1

    x = jax.random.normal(kx, (batch_size, input_dim, height, width), jnp.float32)
    params = init_params(kp, input_dim=input_dim, num_classes=num_classes)

    ref = nin_reference(params, x)

    # default fast path (all generations): bf16 MXU inputs, fp32 accum/epilogue
    nin_bf16 = jax.jit(lambda p, a: nin_forward(p, a, mxu_dtype=jnp.bfloat16))
    out_bf16 = jax.block_until_ready(nin_bf16(params, x))
    assert out_bf16.shape == (batch_size, num_classes), out_bf16.shape
    assert bool(jnp.allclose(jnp.sum(jnp.exp(out_bf16), axis=1), 1.0, atol=1e-4))
    assert bool(jnp.max(jnp.abs(out_bf16 - ref)) < 0.3), \
        float(jnp.max(jnp.abs(out_bf16 - ref)))

    # exact-parity path: fp32 MXU inputs + Precision.HIGHEST on every dot
    nin_fp32 = jax.jit(lambda p, a: nin_forward(p, a, mxu_dtype=jnp.float32))
    out_fp32 = jax.block_until_ready(nin_fp32(params, x))
    assert out_fp32.shape == (batch_size, num_classes), out_fp32.shape
    assert bool(jnp.allclose(jnp.sum(jnp.exp(out_fp32), axis=1), 1.0, atol=1e-4))
    assert bool(jnp.max(jnp.abs(out_fp32 - ref)) < 5e-2), \
        float(jnp.max(jnp.abs(out_fp32 - ref)))

    print("KERNEL_OK")
</pallas_src>

<mosaic_0001>
module attributes {stable_mosaic.version = 11 : i64} {
  func.func @_nin_fused_kernel(%arg0: i32, %arg1: memref<1x81x128xbf16, #tpu.memory_space<vmem>>, %arg2: memref<7x128x128xbf16, #tpu.memory_space<vmem>>, %arg3: memref<9x1x128xf32, #tpu.memory_space<vmem>>, %arg4: memref<3200x128xbf16, #tpu.memory_space<vmem>>, %arg5: memref<3200x128xbf16, #tpu.memory_space<vmem>>, %arg6: memref<9x25x81xbf16, #tpu.memory_space<vmem>>, %arg7: memref<25x25x25xbf16, #tpu.memory_space<vmem>>, %arg8: memref<9x9x25xbf16, #tpu.memory_space<vmem>>, %arg9: memref<25x9x9xbf16, #tpu.memory_space<vmem>>, %arg10: memref<1x128xf32, #tpu.memory_space<vmem>>, %arg11: memref<1x1x128xf32, #tpu.memory_space<vmem>>) attributes {dimension_semantics = [#tpu.dimension_semantics<parallel>], iteration_bounds = array<i64: 2>, scalar_prefetch = 0 : i64, scratch_operands = 0 : i64, tpu.core_type = #tpu.core_type<tc>, window_params = [{transform_indices = @transform_0, window_bounds = array<i64: 1, 81, 128>}, {pipeline_mode = #tpu.pipeline_mode<synchronous>, transform_indices = @transform_1, window_bounds = array<i64: 7, 128, 128>}, {pipeline_mode = #tpu.pipeline_mode<synchronous>, transform_indices = @transform_2, window_bounds = array<i64: 9, 1, 128>}, {pipeline_mode = #tpu.pipeline_mode<synchronous>, transform_indices = @transform_3, window_bounds = array<i64: 3200, 128>}, {pipeline_mode = #tpu.pipeline_mode<synchronous>, transform_indices = @transform_4, window_bounds = array<i64: 3200, 128>}, {pipeline_mode = #tpu.pipeline_mode<synchronous>, transform_indices = @transform_5, window_bounds = array<i64: 9, 25, 81>}, {pipeline_mode = #tpu.pipeline_mode<synchronous>, transform_indices = @transform_6, window_bounds = array<i64: 25, 25, 25>}, {pipeline_mode = #tpu.pipeline_mode<synchronous>, transform_indices = @transform_7, window_bounds = array<i64: 9, 9, 25>}, {pipeline_mode = #tpu.pipeline_mode<synchronous>, transform_indices = @transform_8, window_bounds = array<i64: 25, 9, 9>}, {pipeline_mode = #tpu.pipeline_mode<synchronous>, transform_indices = @transform_9, window_bounds = array<i64: 1, 128>}, {transform_indices = @transform_10, window_bounds = array<i64: 1, 1, 128>}]} {
    %c0 = arith.constant 0 : index
    %c0_0 = arith.constant 0 : index
    %c0_1 = arith.constant 0 : index
    %0 = vector.load %arg1[%c0, %c0_0, %c0_1] : memref<1x81x128xbf16, #tpu.memory_space<vmem>>, vector<1x81x128xbf16>
    %1 = vector.shape_cast %0 : vector<1x81x128xbf16> to vector<81x128xbf16>
    %c0_2 = arith.constant 0 : index
    %c0_3 = arith.constant 0 : index
    %c0_4 = arith.constant 0 : index
    %2 = vector.load %arg2[%c0_2, %c0_3, %c0_4] : memref<7x128x128xbf16, #tpu.memory_space<vmem>>, vector<1x128x128xbf16>
    %3 = vector.shape_cast %2 : vector<1x128x128xbf16> to vector<128x128xbf16>
    %cst = arith.constant dense<0.000000e+00> : vector<81x128xf32>
    %4 = tpu.matmul %1, %3, %cst {dimension_numbers = #tpu.dot_dimension_numbers<[1], [0], [0], [1], [0, 0, 1, 1], [], []>} : vector<81x128xbf16>, vector<128x128xbf16>, vector<81x128xf32> -> vector<81x128xf32>
    %c0_5 = arith.constant 0 : index
    %c0_6 = arith.constant 0 : index
    %c0_7 = arith.constant 0 : index
    %5 = vector.load %arg3[%c0_5, %c0_6, %c0_7] : memref<9x1x128xf32, #tpu.memory_space<vmem>>, vector<1x1x128xf32>
    %6 = vector.shape_cast %5 : vector<1x1x128xf32> to vector<1x128xf32>
    %7 = vector.broadcast %6 : vector<1x128xf32> to vector<81x128xf32>
    %8 = arith.addf %4, %7 : vector<81x128xf32>
    %cst_8 = arith.constant 0.000000e+00 : f32
    %9 = vector.broadcast %cst_8 : f32 to vector<81x128xf32>
    %10 = arith.maximumf %8, %9 : vector<81x128xf32>
    %11 = arith.truncf %10 : vector<81x128xf32> to vector<81x128xbf16>
    %c1 = arith.constant 1 : index
    %c0_9 = arith.constant 0 : index
    %c0_10 = arith.constant 0 : index
    %12 = vector.load %arg2[%c1, %c0_9, %c0_10] : memref<7x128x128xbf16, #tpu.memory_space<vmem>>, vector<1x128x128xbf16>
    %13 = vector.shape_cast %12 : vector<1x128x128xbf16> to vector<128x128xbf16>
    %cst_11 = arith.constant dense<0.000000e+00> : vector<81x128xf32>
    %14 = tpu.matmul %11, %13, %cst_11 {dimension_numbers = #tpu.dot_dimension_numbers<[1], [0], [0], [1], [0, 0, 1, 1], [], []>} : vector<81x128xbf16>, vector<128x128xbf16>, vector<81x128xf32> -> vector<81x128xf32>
    %c1_12 = arith.constant 1 : index
    %c0_13 = arith.constant 0 : index
    %c0_14 = arith.constant 0 : index
    %15 = vector.load %arg3[%c1_12, %c0_13, %c0_14] : memref<9x1x128xf32, #tpu.memory_space<vmem>>, vector<1x1x128xf32>
    %16 = vector.shape_cast %15 : vector<1x1x128xf32> to vector<1x128xf32>
    %17 = vector.broadcast %16 : vector<1x128xf32> to vector<81x128xf32>
    %18 = arith.addf %14, %17 : vector<81x128xf32>
    %cst_15 = arith.constant 0.000000e+00 : f32
    %19 = vector.broadcast %cst_15 : f32 to vector<81x128xf32>
    %20 = arith.maximumf %18, %19 : vector<81x128xf32>
    %21 = arith.truncf %20 : vector<81x128xf32> to vector<81x128xbf16>
    %c2 = arith.constant 2 : index
    %c0_16 = arith.constant 0 : index
    %c0_17 = arith.constant 0 : index
    %22 = vector.load %arg2[%c2, %c0_16, %c0_17] : memref<7x128x128xbf16, #tpu.memory_space<vmem>>, vector<1x128x128xbf16>
    %23 = vector.shape_cast %22 : vector<1x128x128xbf16> to vector<128x128xbf16>
    %cst_18 = arith.constant dense<0.000000e+00> : vector<81x128xf32>
    %24 = tpu.matmul %21, %23, %cst_18 {dimension_numbers = #tpu.dot_dimension_numbers<[1], [0], [0], [1], [0, 0, 1, 1], [], []>} : vector<81x128xbf16>, vector<128x128xbf16>, vector<81x128xf32> -> vector<81x128xf32>
    %c2_19 = arith.constant 2 : index
    %c0_20 = arith.constant 0 : index
    %c0_21 = arith.constant 0 : index
    %25 = vector.load %arg3[%c2_19, %c0_20, %c0_21] : memref<9x1x128xf32, #tpu.memory_space<vmem>>, vector<1x1x128xf32>
    %26 = vector.shape_cast %25 : vector<1x1x128xf32> to vector<1x128xf32>
    %27 = vector.broadcast %26 : vector<1x128xf32> to vector<81x128xf32>
    %28 = arith.addf %24, %27 : vector<81x128xf32>
    %cst_22 = arith.constant 0.000000e+00 : f32
    %29 = vector.broadcast %cst_22 : f32 to vector<81x128xf32>
    %30 = arith.maximumf %28, %29 : vector<81x128xf32>
    %31 = arith.truncf %30 : vector<81x128xf32> to vector<81x128xbf16>
    %c0_23 = arith.constant 0 : index
    %c0_24 = arith.constant 0 : index
    %c0_25 = arith.constant 0 : index
    %32 = vector.load %arg6[%c0_23, %c0_24, %c0_25] : memref<9x25x81xbf16, #tpu.memory_space<vmem>>, vector<1x25x81xbf16>
    %33 = vector.shape_cast %32 : vector<1x25x81xbf16> to vector<25x81xbf16>
    %cst_26 = arith.constant dense<0.000000e+00> : vector<25x128xf32>
    %34 = tpu.matmul %33, %31, %cst_26 {dimension_numbers = #tpu.dot_dimension_numbers<[1], [0], [0], [1], [0, 0, 1, 1], [], []>} : vector<25x81xbf16>, vector<81x128xbf16>, vector<25x128xf32> -> vector<25x128xf32>
    %c1_27 = arith.constant 1 : index
    %c0_28 = arith.constant 0 : index
    %c0_29 = arith.constant 0 : index
    %35 = vector.load %arg6[%c1_27, %c0_28, %c0_29] : memref<9x25x81xbf16, #tpu.memory_space<vmem>>, vector<1x25x81xbf16>
    %36 = vector.shape_cast %35 : vector<1x25x81xbf16> to vector<25x81xbf16>
    %cst_30 = arith.constant dense<0.000000e+00> : vector<25x128xf32>
    %37 = tpu.matmul %36, %31, %cst_30 {dimension_numbers = #tpu.dot_dimension_numbers<[1], [0], [0], [1], [0, 0, 1, 1], [], []>} : vector<25x81xbf16>, vector<81x128xbf16>, vector<25x128xf32> -> vector<25x128xf32>
    %c2_31 = arith.constant 2 : index
    %c0_32 = arith.constant 0 : index
    %c0_33 = arith.constant 0 : index
    %38 = vector.load %arg6[%c2_31, %c0_32, %c0_33] : memref<9x25x81xbf16, #tpu.memory_space<vmem>>, vector<1x25x81xbf16>
    %39 = vector.shape_cast %38 : vector<1x25x81xbf16> to vector<25x81xbf16>
    %cst_34 = arith.constant dense<0.000000e+00> : vector<25x128xf32>
    %40 = tpu.matmul %39, %31, %cst_34 {dimension_numbers = #tpu.dot_dimension_numbers<[1], [0], [0], [1], [0, 0, 1, 1], [], []>} : vector<25x81xbf16>, vector<81x128xbf16>, vector<25x128xf32> -> vector<25x128xf32>
    %c3 = arith.constant 3 : index
    %c0_35 = arith.constant 0 : index
    %c0_36 = arith.constant 0 : index
    %41 = vector.load %arg6[%c3, %c0_35, %c0_36] : memref<9x25x81xbf16, #tpu.memory_space<vmem>>, vector<1x25x81xbf16>
    %42 = vector.shape_cast %41 : vector<1x25x81xbf16> to vector<25x81xbf16>
    %cst_37 = arith.constant dense<0.000000e+00> : vector<25x128xf32>
    %43 = tpu.matmul %42, %31, %cst_37 {dimension_numbers = #tpu.dot_dimension_numbers<[1], [0], [0], [1], [0, 0, 1, 1], [], []>} : vector<25x81xbf16>, vector<81x128xbf16>, vector<25x128xf32> -> vector<25x128xf32>
    %c4 = arith.constant 4 : index
    %c0_38 = arith.constant 0 : index
    %c0_39 = arith.constant 0 : index
    %44 = vector.load %arg6[%c4, %c0_38, %c0_39] : memref<9x25x81xbf16, #tpu.memory_space<vmem>>, vector<1x25x81xbf16>
    %45 = vector.shape_cast %44 : vector<1x25x81xbf16> to vector<25x81xbf16>
    %cst_40 = arith.constant dense<0.000000e+00> : vector<25x128xf32>
    %46 = tpu.matmul %45, %31, %cst_40 {dimension_numbers = #tpu.dot_dimension_numbers<[1], [0], [0], [1], [0, 0, 1, 1], [], []>} : vector<25x81xbf16>, vector<81x128xbf16>, vector<25x128xf32> -> vector<25x128xf32>
    %c5 = arith.constant 5 : index
    %c0_41 = arith.constant 0 : index
    %c0_42 = arith.constant 0 : index
    %47 = vector.load %arg6[%c5, %c0_41, %c0_42] : memref<9x25x81xbf16, #tpu.memory_space<vmem>>, vector<1x25x81xbf16>
    %48 = vector.shape_cast %47 : vector<1x25x81xbf16> to vector<25x81xbf16>
    %cst_43 = arith.constant dense<0.000000e+00> : vector<25x128xf32>
    %49 = tpu.matmul %48, %31, %cst_43 {dimension_numbers = #tpu.dot_dimension_numbers<[1], [0], [0], [1], [0, 0, 1, 1], [], []>} : vector<25x81xbf16>, vector<81x128xbf16>, vector<25x128xf32> -> vector<25x128xf32>
    %c6 = arith.constant 6 : index
    %c0_44 = arith.constant 0 : index
    %c0_45 = arith.constant 0 : index
    %50 = vector.load %arg6[%c6, %c0_44, %c0_45] : memref<9x25x81xbf16, #tpu.memory_space<vmem>>, vector<1x25x81xbf16>
    %51 = vector.shape_cast %50 : vector<1x25x81xbf16> to vector<25x81xbf16>
    %cst_46 = arith.constant dense<0.000000e+00> : vector<25x128xf32>
    %52 = tpu.matmul %51, %31, %cst_46 {dimension_numbers = #tpu.dot_dimension_numbers<[1], [0], [0], [1], [0, 0, 1, 1], [], []>} : vector<25x81xbf16>, vector<81x128xbf16>, vector<25x128xf32> -> vector<25x128xf32>
    %c7 = arith.constant 7 : index
    %c0_47 = arith.constant 0 : index
    %c0_48 = arith.constant 0 : index
    %53 = vector.load %arg6[%c7, %c0_47, %c0_48] : memref<9x25x81xbf16, #tpu.memory_space<vmem>>, vector<1x25x81xbf16>
    %54 = vector.shape_cast %53 : vector<1x25x81xbf16> to vector<25x81xbf16>
    %cst_49 = arith.constant dense<0.000000e+00> : vector<25x128xf32>
    %55 = tpu.matmul %54, %31, %cst_49 {dimension_numbers = #tpu.dot_dimension_numbers<[1], [0], [0], [1], [0, 0, 1, 1], [], []>} : vector<25x81xbf16>, vector<81x128xbf16>, vector<25x128xf32> -> vector<25x128xf32>
    %c8 = arith.constant 8 : index
    %c0_50 = arith.constant 0 : index
    %c0_51 = arith.constant 0 : index
    %56 = vector.load %arg6[%c8, %c0_50, %c0_51] : memref<9x25x81xbf16, #tpu.memory_space<vmem>>, vector<1x25x81xbf16>
    %57 = vector.shape_cast %56 : vector<1x25x81xbf16> to vector<25x81xbf16>
    %cst_52 = arith.constant dense<0.000000e+00> : vector<25x128xf32>
    %58 = tpu.matmul %57, %31, %cst_52 {dimension_numbers = #tpu.dot_dimension_numbers<[1], [0], [0], [1], [0, 0, 1, 1], [], []>} : vector<25x81xbf16>, vector<81x128xbf16>, vector<25x128xf32> -> vector<25x128xf32>
    %59 = arith.maximumf %34, %37 : vector<25x128xf32>
    %60 = arith.maximumf %40, %43 : vector<25x128xf32>
    %61 = arith.maximumf %46, %49 : vector<25x128xf32>
    %62 = arith.maximumf %52, %55 : vector<25x128xf32>
    %63 = arith.maximumf %59, %60 : vector<25x128xf32>
    %64 = arith.maximumf %61, %62 : vector<25x128xf32>
    %65 = arith.maximumf %63, %64 : vector<25x128xf32>
    %66 = arith.maximumf %65, %58 : vector<25x128xf32>
    %67 = arith.truncf %66 : vector<25x128xf32> to vector<25x128xbf16>
    %c0_53 = arith.constant 0 : index
    %c0_54 = arith.constant 0 : index
    %c0_55 = arith.constant 0 : index
    %68 = vector.load %arg7[%c0_53, %c0_54, %c0_55] : memref<25x25x25xbf16, #tpu.memory_space<vmem>>, vector<1x25x25xbf16>
    %69 = vector.shape_cast %68 : vector<1x25x25xbf16> to vector<25x25xbf16>
    %cst_56 = arith.constant dense<0.000000e+00> : vector<25x128xf32>
    %70 = tpu.matmul %69, %67, %cst_56 {dimension_numbers = #tpu.dot_dimension_numbers<[1], [0], [0], [1], [0, 0, 1, 1], [], []>} : vector<25x25xbf16>, vector<25x128xbf16>, vector<25x128xf32> -> vector<25x128xf32>
    %71 = arith.truncf %70 : vector<25x128xf32> to vector<25x128xbf16>
    %c1_57 = arith.constant 1 : index
    %c0_58 = arith.constant 0 : index
    %c0_59 = arith.constant 0 : index
    %72 = vector.load %arg7[%c1_57, %c0_58, %c0_59] : memref<25x25x25xbf16, #tpu.memory_space<vmem>>, vector<1x25x25xbf16>
    %73 = vector.shape_cast %72 : vector<1x25x25xbf16> to vector<25x25xbf16>
    %cst_60 = arith.constant dense<0.000000e+00> : vector<25x128xf32>
    %74 = tpu.matmul %73, %67, %cst_60 {dimension_numbers = #tpu.dot_dimension_numbers<[1], [0], [0], [1], [0, 0, 1, 1], [], []>} : vector<25x25xbf16>, vector<25x128xbf16>, vector<25x128xf32> -> vector<25x128xf32>
    %75 = arith.truncf %74 : vector<25x128xf32> to vector<25x128xbf16>
    %c2_61 = arith.constant 2 : index
    %c0_62 = arith.constant 0 : index
    %c0_63 = arith.constant 0 : index
    %76 = vector.load %arg7[%c2_61, %c0_62, %c0_63] : memref<25x25x25xbf16, #tpu.memory_space<vmem>>, vector<1x25x25xbf16>
    %77 = vector.shape_cast %76 : vector<1x25x25xbf16> to vector<25x25xbf16>
    %cst_64 = arith.constant dense<0.000000e+00> : vector<25x128xf32>
    %78 = tpu.matmul %77, %67, %cst_64 {dimension_numbers = #tpu.dot_dimension_numbers<[1], [0], [0], [1], [0, 0, 1, 1], [], []>} : vector<25x25xbf16>, vector<25x128xbf16>, vector<25x128xf32> -> vector<25x128xf32>
    %79 = arith.truncf %78 : vector<25x128xf32> to vector<25x128xbf16>
    %c3_65 = arith.constant 3 : index
    %c0_66 = arith.constant 0 : index
    %c0_67 = arith.constant 0 : index
    %80 = vector.load %arg7[%c3_65, %c0_66, %c0_67] : memref<25x25x25xbf16, #tpu.memory_space<vmem>>, vector<1x25x25xbf16>
    %81 = vector.shape_cast %80 : vector<1x25x25xbf16> to vector<25x25xbf16>
    %cst_68 = arith.constant dense<0.000000e+00> : vector<25x128xf32>
    %82 = tpu.matmul %81, %67, %cst_68 {dimension_numbers = #tpu.dot_dimension_numbers<[1], [0], [0], [1], [0, 0, 1, 1], [], []>} : vector<25x25xbf16>, vector<25x128xbf16>, vector<25x128xf32> -> vector<25x128xf32>
    %83 = arith.truncf %82 : vector<25x128xf32> to vector<25x128xbf16>
    %c4_69 = arith.constant 4 : index
    %c0_70 = arith.constant 0 : index
    %c0_71 = arith.constant 0 : index
    %84 = vector.load %arg7[%c4_69, %c0_70, %c0_71] : memref<25x25x25xbf16, #tpu.memory_space<vmem>>, vector<1x25x25xbf16>
    %85 = vector.shape_cast %84 : vector<1x25x25xbf16> to vector<25x25xbf16>
    %cst_72 = arith.constant dense<0.000000e+00> : vector<25x128xf32>
    %86 = tpu.matmul %85, %67, %cst_72 {dimension_numbers = #tpu.dot_dimension_numbers<[1], [0], [0], [1], [0, 0, 1, 1], [], []>} : vector<25x25xbf16>, vector<25x128xbf16>, vector<25x128xf32> -> vector<25x128xf32>
    %87 = arith.truncf %86 : vector<25x128xf32> to vector<25x128xbf16>
    %c5_73 = arith.constant 5 : index
    %c0_74 = arith.constant 0 : index
    %c0_75 = arith.constant 0 : index
    %88 = vector.load %arg7[%c5_73, %c0_74, %c0_75] : memref<25x25x25xbf16, #tpu.memory_space<vmem>>, vector<1x25x25xbf16>
    %89 = vector.shape_cast %88 : vector<1x25x25xbf16> to vector<25x25xbf16>
    %cst_76 = arith.constant dense<0.000000e+00> : vector<25x128xf32>
    %90 = tpu.matmul %89, %67, %cst_76 {dimension_numbers = #tpu.dot_dimension_numbers<[1], [0], [0], [1], [0, 0, 1, 1], [], []>} : vector<25x25xbf16>, vector<25x128xbf16>, vector<25x128xf32> -> vector<25x128xf32>
    %91 = arith.truncf %90 : vector<25x128xf32> to vector<25x128xbf16>
    %c6_77 = arith.constant 6 : index
    %c0_78 = arith.constant 0 : index
    %c0_79 = arith.constant 0 : index
    %92 = vector.load %arg7[%c6_77, %c0_78, %c0_79] : memref<25x25x25xbf16, #tpu.memory_space<vmem>>, vector<1x25x25xbf16>
    %93 = vector.shape_cast %92 : vector<1x25x25xbf16> to vector<25x25xbf16>
    %cst_80 = arith.constant dense<0.000000e+00> : vector<25x128xf32>
    %94 = tpu.matmul %93, %67, %cst_80 {dimension_numbers = #tpu.dot_dimension_numbers<[1], [0], [0], [1], [0, 0, 1, 1], [], []>} : vector<25x25xbf16>, vector<25x128xbf16>, vector<25x128xf32> -> vector<25x128xf32>
    %95 = arith.truncf %94 : vector<25x128xf32> to vector<25x128xbf16>
    %c7_81 = arith.constant 7 : index
    %c0_82 = arith.constant 0 : index
    %c0_83 = arith.constant 0 : index
    %96 = vector.load %arg7[%c7_81, %c0_82, %c0_83] : memref<25x25x25xbf16, #tpu.memory_space<vmem>>, vector<1x25x25xbf16>
    %97 = vector.shape_cast %96 : vector<1x25x25xbf16> to vector<25x25xbf16>
    %cst_84 = arith.constant dense<0.000000e+00> : vector<25x128xf32>
    %98 = tpu.matmul %97, %67, %cst_84 {dimension_numbers = #tpu.dot_dimension_numbers<[1], [0], [0], [1], [0, 0, 1, 1], [], []>} : vector<25x25xbf16>, vector<25x128xbf16>, vector<25x128xf32> -> vector<25x128xf32>
    %99 = arith.truncf %98 : vector<25x128xf32> to vector<25x128xbf16>
    %c8_85 = arith.constant 8 : index
    %c0_86 = arith.constant 0 : index
    %c0_87 = arith.constant 0 : index
    %100 = vector.load %arg7[%c8_85, %c0_86, %c0_87] : memref<25x25x25xbf16, #tpu.memory_space<vmem>>, vector<1x25x25xbf16>
    %101 = vector.shape_cast %100 : vector<1x25x25xbf16> to vector<25x25xbf16>
    %cst_88 = arith.constant dense<0.000000e+00> : vector<25x128xf32>
    %102 = tpu.matmul %101, %67, %cst_88 {dimension_numbers = #tpu.dot_dimension_numbers<[1], [0], [0], [1], [0, 0, 1, 1], [], []>} : vector<25x25xbf16>, vector<25x128xbf16>, vector<25x128xf32> -> vector<25x128xf32>
    %103 = arith.truncf %102 : vector<25x128xf32> to vector<25x128xbf16>
    %c9 = arith.constant 9 : index
    %c0_89 = arith.constant 0 : index
    %c0_90 = arith.constant 0 : index
    %104 = vector.load %arg7[%c9, %c0_89, %c0_90] : memref<25x25x25xbf16, #tpu.memory_space<vmem>>, vector<1x25x25xbf16>
    %105 = vector.shape_cast %104 : vector<1x25x25xbf16> to vector<25x25xbf16>
    %cst_91 = arith.constant dense<0.000000e+00> : vector<25x128xf32>
    %106 = tpu.matmul %105, %67, %cst_91 {dimension_numbers = #tpu.dot_dimension_numbers<[1], [0], [0], [1], [0, 0, 1, 1], [], []>} : vector<25x25xbf16>, vector<25x128xbf16>, vector<25x128xf32> -> vector<25x128xf32>
    %107 = arith.truncf %106 : vector<25x128xf32> to vector<25x128xbf16>
    %c10 = arith.constant 10 : index
    %c0_92 = arith.constant 0 : index
    %c0_93 = arith.constant 0 : index
    %108 = vector.load %arg7[%c10, %c0_92, %c0_93] : memref<25x25x25xbf16, #tpu.memory_space<vmem>>, vector<1x25x25xbf16>
    %109 = vector.shape_cast %108 : vector<1x25x25xbf16> to vector<25x25xbf16>
    %cst_94 = arith.constant dense<0.000000e+00> : vector<25x128xf32>
    %110 = tpu.matmul %109, %67, %cst_94 {dimension_numbers = #tpu.dot_dimension_numbers<[1], [0], [0], [1], [0, 0, 1, 1], [], []>} : vector<25x25xbf16>, vector<25x128xbf16>, vector<25x128xf32> -> vector<25x128xf32>
    %111 = arith.truncf %110 : vector<25x128xf32> to vector<25x128xbf16>
    %c11 = arith.constant 11 : index
    %c0_95 = arith.constant 0 : index
    %c0_96 = arith.constant 0 : index
    %112 = vector.load %arg7[%c11, %c0_95, %c0_96] : memref<25x25x25xbf16, #tpu.memory_space<vmem>>, vector<1x25x25xbf16>
    %113 = vector.shape_cast %112 : vector<1x25x25xbf16> to vector<25x25xbf16>
    %cst_97 = arith.constant dense<0.000000e+00> : vector<25x128xf32>
    %114 = tpu.matmul %113, %67, %cst_97 {dimension_numbers = #tpu.dot_dimension_numbers<[1], [0], [0], [1], [0, 0, 1, 1], [], []>} : vector<25x25xbf16>, vector<25x128xbf16>, vector<25x128xf32> -> vector<25x128xf32>
    %115 = arith.truncf %114 : vector<25x128xf32> to vector<25x128xbf16>
    %c12 = arith.constant 12 : index
    %c0_98 = arith.constant 0 : index
    %c0_99 = arith.constant 0 : index
    %116 = vector.load %arg7[%c12, %c0_98, %c0_99] : memref<25x25x25xbf16, #tpu.memory_space<vmem>>, vector<1x25x25xbf16>
    %117 = vector.shape_cast %116 : vector<1x25x25xbf16> to vector<25x25xbf16>
    %cst_100 = arith.constant dense<0.000000e+00> : vector<25x128xf32>
    %118 = tpu.matmul %117, %67, %cst_100 {dimension_numbers = #tpu.dot_dimension_numbers<[1], [0], [0], [1], [0, 0, 1, 1], [], []>} : vector<25x25xbf16>, vector<25x128xbf16>, vector<25x128xf32> -> vector<25x128xf32>
    %119 = arith.truncf %118 : vector<25x128xf32> to vector<25x128xbf16>
    %c13 = arith.constant 13 : index
    %c0_101 = arith.constant 0 : index
    %c0_102 = arith.constant 0 : index
    %120 = vector.load %arg7[%c13, %c0_101, %c0_102] : memref<25x25x25xbf16, #tpu.memory_space<vmem>>, vector<1x25x25xbf16>
    %121 = vector.shape_cast %120 : vector<1x25x25xbf16> to vector<25x25xbf16>
    %cst_103 = arith.constant dense<0.000000e+00> : vector<25x128xf32>
    %122 = tpu.matmul %121, %67, %cst_103 {dimension_numbers = #tpu.dot_dimension_numbers<[1], [0], [0], [1], [0, 0, 1, 1], [], []>} : vector<25x25xbf16>, vector<25x128xbf16>, vector<25x128xf32> -> vector<25x128xf32>
    %123 = arith.truncf %122 : vector<25x128xf32> to vector<25x128xbf16>
    %c14 = arith.constant 14 : index
    %c0_104 = arith.constant 0 : index
    %c0_105 = arith.constant 0 : index
    %124 = vector.load %arg7[%c14, %c0_104, %c0_105] : memref<25x25x25xbf16, #tpu.memory_space<vmem>>, vector<1x25x25xbf16>
    %125 = vector.shape_cast %124 : vector<1x25x25xbf16> to vector<25x25xbf16>
    %cst_106 = arith.constant dense<0.000000e+00> : vector<25x128xf32>
    %126 = tpu.matmul %125, %67, %cst_106 {dimension_numbers = #tpu.dot_dimension_numbers<[1], [0], [0], [1], [0, 0, 1, 1], [], []>} : vector<25x25xbf16>, vector<25x128xbf16>, vector<25x128xf32> -> vector<25x128xf32>
    %127 = arith.truncf %126 : vector<25x128xf32> to vector<25x128xbf16>
    %c15 = arith.constant 15 : index
    %c0_107 = arith.constant 0 : index
    %c0_108 = arith.constant 0 : index
    %128 = vector.load %arg7[%c15, %c0_107, %c0_108] : memref<25x25x25xbf16, #tpu.memory_space<vmem>>, vector<1x25x25xbf16>
    %129 = vector.shape_cast %128 : vector<1x25x25xbf16> to vector<25x25xbf16>
    %cst_109 = arith.constant dense<0.000000e+00> : vector<25x128xf32>
    %130 = tpu.matmul %129, %67, %cst_109 {dimension_numbers = #tpu.dot_dimension_numbers<[1], [0], [0], [1], [0, 0, 1, 1], [], []>} : vector<25x25xbf16>, vector<25x128xbf16>, vector<25x128xf32> -> vector<25x128xf32>
    %131 = arith.truncf %130 : vector<25x128xf32> to vector<25x128xbf16>
    %c16 = arith.constant 16 : index
    %c0_110 = arith.constant 0 : index
    %c0_111 = arith.constant 0 : index
    %132 = vector.load %arg7[%c16, %c0_110, %c0_111] : memref<25x25x25xbf16, #tpu.memory_space<vmem>>, vector<1x25x25xbf16>
    %133 = vector.shape_cast %132 : vector<1x25x25xbf16> to vector<25x25xbf16>
    %cst_112 = arith.constant dense<0.000000e+00> : vector<25x128xf32>
    %134 = tpu.matmul %133, %67, %cst_112 {dimension_numbers = #tpu.dot_dimension_numbers<[1], [0], [0], [1], [0, 0, 1, 1], [], []>} : vector<25x25xbf16>, vector<25x128xbf16>, vector<25x128xf32> -> vector<25x128xf32>
    %135 = arith.truncf %134 : vector<25x128xf32> to vector<25x128xbf16>
    %c17 = arith.constant 17 : index
    %c0_113 = arith.constant 0 : index
    %c0_114 = arith.constant 0 : index
    %136 = vector.load %arg7[%c17, %c0_113, %c0_114] : memref<25x25x25xbf16, #tpu.memory_space<vmem>>, vector<1x25x25xbf16>
    %137 = vector.shape_cast %136 : vector<1x25x25xbf16> to vector<25x25xbf16>
    %cst_115 = arith.constant dense<0.000000e+00> : vector<25x128xf32>
    %138 = tpu.matmul %137, %67, %cst_115 {dimension_numbers = #tpu.dot_dimension_numbers<[1], [0], [0], [1], [0, 0, 1, 1], [], []>} : vector<25x25xbf16>, vector<25x128xbf16>, vector<25x128xf32> -> vector<25x128xf32>
    %139 = arith.truncf %138 : vector<25x128xf32> to vector<25x128xbf16>
    %c18 = arith.constant 18 : index
    %c0_116 = arith.constant 0 : index
    %c0_117 = arith.constant 0 : index
    %140 = vector.load %arg7[%c18, %c0_116, %c0_117] : memref<25x25x25xbf16, #tpu.memory_space<vmem>>, vector<1x25x25xbf16>
    %141 = vector.shape_cast %140 : vector<1x25x25xbf16> to vector<25x25xbf16>
    %cst_118 = arith.constant dense<0.000000e+00> : vector<25x128xf32>
    %142 = tpu.matmul %141, %67, %cst_118 {dimension_numbers = #tpu.dot_dimension_numbers<[1], [0], [0], [1], [0, 0, 1, 1], [], []>} : vector<25x25xbf16>, vector<25x128xbf16>, vector<25x128xf32> -> vector<25x128xf32>
    %143 = arith.truncf %142 : vector<25x128xf32> to vector<25x128xbf16>
    %c19 = arith.constant 19 : index
    %c0_119 = arith.constant 0 : index
    %c0_120 = arith.constant 0 : index
    %144 = vector.load %arg7[%c19, %c0_119, %c0_120] : memref<25x25x25xbf16, #tpu.memory_space<vmem>>, vector<1x25x25xbf16>
    %145 = vector.shape_cast %144 : vector<1x25x25xbf16> to vector<25x25xbf16>
    %cst_121 = arith.constant dense<0.000000e+00> : vector<25x128xf32>
    %146 = tpu.matmul %145, %67, %cst_121 {dimension_numbers = #tpu.dot_dimension_numbers<[1], [0], [0], [1], [0, 0, 1, 1], [], []>} : vector<25x25xbf16>, vector<25x128xbf16>, vector<25x128xf32> -> vector<25x128xf32>
    %147 = arith.truncf %146 : vector<25x128xf32> to vector<25x128xbf16>
    %c20 = arith.constant 20 : index
    %c0_122 = arith.constant 0 : index
    %c0_123 = arith.constant 0 : index
    %148 = vector.load %arg7[%c20, %c0_122, %c0_123] : memref<25x25x25xbf16, #tpu.memory_space<vmem>>, vector<1x25x25xbf16>
    %149 = vector.shape_cast %148 : vector<1x25x25xbf16> to vector<25x25xbf16>
    %cst_124 = arith.constant dense<0.000000e+00> : vector<25x128xf32>
    %150 = tpu.matmul %149, %67, %cst_124 {dimension_numbers = #tpu.dot_dimension_numbers<[1], [0], [0], [1], [0, 0, 1, 1], [], []>} : vector<25x25xbf16>, vector<25x128xbf16>, vector<25x128xf32> -> vector<25x128xf32>
    %151 = arith.truncf %150 : vector<25x128xf32> to vector<25x128xbf16>
    %c21 = arith.constant 21 : index
    %c0_125 = arith.constant 0 : index
    %c0_126 = arith.constant 0 : index
    %152 = vector.load %arg7[%c21, %c0_125, %c0_126] : memref<25x25x25xbf16, #tpu.memory_space<vmem>>, vector<1x25x25xbf16>
    %153 = vector.shape_cast %152 : vector<1x25x25xbf16> to vector<25x25xbf16>
    %cst_127 = arith.constant dense<0.000000e+00> : vector<25x128xf32>
    %154 = tpu.matmul %153, %67, %cst_127 {dimension_numbers = #tpu.dot_dimension_numbers<[1], [0], [0], [1], [0, 0, 1, 1], [], []>} : vector<25x25xbf16>, vector<25x128xbf16>, vector<25x128xf32> -> vector<25x128xf32>
    %155 = arith.truncf %154 : vector<25x128xf32> to vector<25x128xbf16>
    %c22 = arith.constant 22 : index
    %c0_128 = arith.constant 0 : index
    %c0_129 = arith.constant 0 : index
    %156 = vector.load %arg7[%c22, %c0_128, %c0_129] : memref<25x25x25xbf16, #tpu.memory_space<vmem>>, vector<1x25x25xbf16>
    %157 = vector.shape_cast %156 : vector<1x25x25xbf16> to vector<25x25xbf16>
    %cst_130 = arith.constant dense<0.000000e+00> : vector<25x128xf32>
    %158 = tpu.matmul %157, %67, %cst_130 {dimension_numbers = #tpu.dot_dimension_numbers<[1], [0], [0], [1], [0, 0, 1, 1], [], []>} : vector<25x25xbf16>, vector<25x128xbf16>, vector<25x128xf32> -> vector<25x128xf32>
    %159 = arith.truncf %158 : vector<25x128xf32> to vector<25x128xbf16>
    %c23 = arith.constant 23 : index
    %c0_131 = arith.constant 0 : index
    %c0_132 = arith.constant 0 : index
    %160 = vector.load %arg7[%c23, %c0_131, %c0_132] : memref<25x25x25xbf16, #tpu.memory_space<vmem>>, vector<1x25x25xbf16>
    %161 = vector.shape_cast %160 : vector<1x25x25xbf16> to vector<25x25xbf16>
    %cst_133 = arith.constant dense<0.000000e+00> : vector<25x128xf32>
    %162 = tpu.matmul %161, %67, %cst_133 {dimension_numbers = #tpu.dot_dimension_numbers<[1], [0], [0], [1], [0, 0, 1, 1], [], []>} : vector<25x25xbf16>, vector<25x128xbf16>, vector<25x128xf32> -> vector<25x128xf32>
    %163 = arith.truncf %162 : vector<25x128xf32> to vector<25x128xbf16>
    %c24 = arith.constant 24 : index
    %c0_134 = arith.constant 0 : index
    %c0_135 = arith.constant 0 : index
    %164 = vector.load %arg7[%c24, %c0_134, %c0_135] : memref<25x25x25xbf16, #tpu.memory_space<vmem>>, vector<1x25x25xbf16>
    %165 = vector.shape_cast %164 : vector<1x25x25xbf16> to vector<25x25xbf16>
    %cst_136 = arith.constant dense<0.000000e+00> : vector<25x128xf32>
    %166 = tpu.matmul %165, %67, %cst_136 {dimension_numbers = #tpu.dot_dimension_numbers<[1], [0], [0], [1], [0, 0, 1, 1], [], []>} : vector<25x25xbf16>, vector<25x128xbf16>, vector<25x128xf32> -> vector<25x128xf32>
    %167 = arith.truncf %166 : vector<25x128xf32> to vector<25x128xbf16>
    %168 = tpu.concatenate %71, %75, %79, %83, %87, %91, %95, %99, %103, %107, %111, %115, %119, %123, %127, %131 in 1 : vector<25x128xbf16>, vector<25x128xbf16>, vector<25x128xbf16>, vector<25x128xbf16>, vector<25x128xbf16>, vector<25x128xbf16>, vector<25x128xbf16>, vector<25x128xbf16>, vector<25x128xbf16>, vector<25x128xbf16>, vector<25x128xbf16>, vector<25x128xbf16>, vector<25x128xbf16>, vector<25x128xbf16>, vector<25x128xbf16>, vector<25x128xbf16> -> vector<25x2048xbf16>
    %169 = tpu.concatenate %135, %139, %143, %147, %151, %155, %159, %163, %167 in 1 : vector<25x128xbf16>, vector<25x128xbf16>, vector<25x128xbf16>, vector<25x128xbf16>, vector<25x128xbf16>, vector<25x128xbf16>, vector<25x128xbf16>, vector<25x128xbf16>, vector<25x128xbf16> -> vector<25x1152xbf16>
    %170 = tpu.concatenate %168, %169 in 1 : vector<25x2048xbf16>, vector<25x1152xbf16> -> vector<25x3200xbf16>
    %c0_137 = arith.constant 0 : index
    %c0_138 = arith.constant 0 : index
    %171 = vector.load %arg4[%c0_137, %c0_138] : memref<3200x128xbf16, #tpu.memory_space<vmem>>, vector<3200x128xbf16>
    %cst_139 = arith.constant dense<0.000000e+00> : vector<25x128xf32>
    %172 = tpu.matmul %170, %171, %cst_139 {dimension_numbers = #tpu.dot_dimension_numbers<[1], [0], [0], [1], [0, 0, 1, 1], [], []>} : vector<25x3200xbf16>, vector<3200x128xbf16>, vector<25x128xf32> -> vector<25x128xf32>
    %c3_140 = arith.constant 3 : index
    %c0_141 = arith.constant 0 : index
    %c0_142 = arith.constant 0 : index
    %173 = vector.load %arg3[%c3_140, %c0_141, %c0_142] : memref<9x1x128xf32, #tpu.memory_space<vmem>>, vector<1x1x128xf32>
    %174 = vector.shape_cast %173 : vector<1x1x128xf32> to vector<1x128xf32>
    %175 = vector.broadcast %174 : vector<1x128xf32> to vector<25x128xf32>
    %176 = arith.addf %172, %175 : vector<25x128xf32>
    %cst_143 = arith.constant 0.000000e+00 : f32
    %177 = vector.broadcast %cst_143 : f32 to vector<25x128xf32>
    %178 = arith.maximumf %176, %177 : vector<25x128xf32>
    %179 = arith.truncf %178 : vector<25x128xf32> to vector<25x128xbf16>
    %c3_144 = arith.constant 3 : index
    %c0_145 = arith.constant 0 : index
    %c0_146 = arith.constant 0 : index
    %180 = vector.load %arg2[%c3_144, %c0_145, %c0_146] : memref<7x128x128xbf16, #tpu.memory_space<vmem>>, vector<1x128x128xbf16>
    %181 = vector.shape_cast %180 : vector<1x128x128xbf16> to vector<128x128xbf16>
    %cst_147 = arith.constant dense<0.000000e+00> : vector<25x128xf32>
    %182 = tpu.matmul %179, %181, %cst_147 {dimension_numbers = #tpu.dot_dimension_numbers<[1], [0], [0], [1], [0, 0, 1, 1], [], []>} : vector<25x128xbf16>, vector<128x128xbf16>, vector<25x128xf32> -> vector<25x128xf32>
    %c4_148 = arith.constant 4 : index
    %c0_149 = arith.constant 0 : index
    %c0_150 = arith.constant 0 : index
    %183 = vector.load %arg3[%c4_148, %c0_149, %c0_150] : memref<9x1x128xf32, #tpu.memory_space<vmem>>, vector<1x1x128xf32>
    %184 = vector.shape_cast %183 : vector<1x1x128xf32> to vector<1x128xf32>
    %185 = vector.broadcast %184 : vector<1x128xf32> to vector<25x128xf32>
    %186 = arith.addf %182, %185 : vector<25x128xf32>
    %cst_151 = arith.constant 0.000000e+00 : f32
    %187 = vector.broadcast %cst_151 : f32 to vector<25x128xf32>
    %188 = arith.maximumf %186, %187 : vector<25x128xf32>
    %189 = arith.truncf %188 : vector<25x128xf32> to vector<25x128xbf16>
    %c4_152 = arith.constant 4 : index
    %c0_153 = arith.constant 0 : index
    %c0_154 = arith.constant 0 : index
    %190 = vector.load %arg2[%c4_152, %c0_153, %c0_154] : memref<7x128x128xbf16, #tpu.memory_space<vmem>>, vector<1x128x128xbf16>
    %191 = vector.shape_cast %190 : vector<1x128x128xbf16> to vector<128x128xbf16>
    %cst_155 = arith.constant dense<0.000000e+00> : vector<25x128xf32>
    %192 = tpu.matmul %189, %191, %cst_155 {dimension_numbers = #tpu.dot_dimension_numbers<[1], [0], [0], [1], [0, 0, 1, 1], [], []>} : vector<25x128xbf16>, vector<128x128xbf16>, vector<25x128xf32> -> vector<25x128xf32>
    %c5_156 = arith.constant 5 : index
    %c0_157 = arith.constant 0 : index
    %c0_158 = arith.constant 0 : index
    %193 = vector.load %arg3[%c5_156, %c0_157, %c0_158] : memref<9x1x128xf32, #tpu.memory_space<vmem>>, vector<1x1x128xf32>
    %194 = vector.shape_cast %193 : vector<1x1x128xf32> to vector<1x128xf32>
    %195 = vector.broadcast %194 : vector<1x128xf32> to vector<25x128xf32>
    %196 = arith.addf %192, %195 : vector<25x128xf32>
    %cst_159 = arith.constant 0.000000e+00 : f32
    %197 = vector.broadcast %cst_159 : f32 to vector<25x128xf32>
    %198 = arith.maximumf %196, %197 : vector<25x128xf32>
    %199 = arith.truncf %198 : vector<25x128xf32> to vector<25x128xbf16>
    %c0_160 = arith.constant 0 : index
    %c0_161 = arith.constant 0 : index
    %c0_162 = arith.constant 0 : index
    %200 = vector.load %arg8[%c0_160, %c0_161, %c0_162] : memref<9x9x25xbf16, #tpu.memory_space<vmem>>, vector<1x9x25xbf16>
    %201 = vector.shape_cast %200 : vector<1x9x25xbf16> to vector<9x25xbf16>
    %cst_163 = arith.constant dense<0.000000e+00> : vector<9x128xf32>
    %202 = tpu.matmul %201, %199, %cst_163 {dimension_numbers = #tpu.dot_dimension_numbers<[1], [0], [0], [1], [0, 0, 1, 1], [], []>} : vector<9x25xbf16>, vector<25x128xbf16>, vector<9x128xf32> -> vector<9x128xf32>
    %c1_164 = arith.constant 1 : index
    %c0_165 = arith.constant 0 : index
    %c0_166 = arith.constant 0 : index
    %203 = vector.load %arg8[%c1_164, %c0_165, %c0_166] : memref<9x9x25xbf16, #tpu.memory_space<vmem>>, vector<1x9x25xbf16>
    %204 = vector.shape_cast %203 : vector<1x9x25xbf16> to vector<9x25xbf16>
    %cst_167 = arith.constant dense<0.000000e+00> : vector<9x128xf32>
    %205 = tpu.matmul %204, %199, %cst_167 {dimension_numbers = #tpu.dot_dimension_numbers<[1], [0], [0], [1], [0, 0, 1, 1], [], []>} : vector<9x25xbf16>, vector<25x128xbf16>, vector<9x128xf32> -> vector<9x128xf32>
    %c2_168 = arith.constant 2 : index
    %c0_169 = arith.constant 0 : index
    %c0_170 = arith.constant 0 : index
    %206 = vector.load %arg8[%c2_168, %c0_169, %c0_170] : memref<9x9x25xbf16, #tpu.memory_space<vmem>>, vector<1x9x25xbf16>
    %207 = vector.shape_cast %206 : vector<1x9x25xbf16> to vector<9x25xbf16>
    %cst_171 = arith.constant dense<0.000000e+00> : vector<9x128xf32>
    %208 = tpu.matmul %207, %199, %cst_171 {dimension_numbers = #tpu.dot_dimension_numbers<[1], [0], [0], [1], [0, 0, 1, 1], [], []>} : vector<9x25xbf16>, vector<25x128xbf16>, vector<9x128xf32> -> vector<9x128xf32>
    %c3_172 = arith.constant 3 : index
    %c0_173 = arith.constant 0 : index
    %c0_174 = arith.constant 0 : index
    %209 = vector.load %arg8[%c3_172, %c0_173, %c0_174] : memref<9x9x25xbf16, #tpu.memory_space<vmem>>, vector<1x9x25xbf16>
    %210 = vector.shape_cast %209 : vector<1x9x25xbf16> to vector<9x25xbf16>
    %cst_175 = arith.constant dense<0.000000e+00> : vector<9x128xf32>
    %211 = tpu.matmul %210, %199, %cst_175 {dimension_numbers = #tpu.dot_dimension_numbers<[1], [0], [0], [1], [0, 0, 1, 1], [], []>} : vector<9x25xbf16>, vector<25x128xbf16>, vector<9x128xf32> -> vector<9x128xf32>
    %c4_176 = arith.constant 4 : index
    %c0_177 = arith.constant 0 : index
    %c0_178 = arith.constant 0 : index
    %212 = vector.load %arg8[%c4_176, %c0_177, %c0_178] : memref<9x9x25xbf16, #tpu.memory_space<vmem>>, vector<1x9x25xbf16>
    %213 = vector.shape_cast %212 : vector<1x9x25xbf16> to vector<9x25xbf16>
    %cst_179 = arith.constant dense<0.000000e+00> : vector<9x128xf32>
    %214 = tpu.matmul %213, %199, %cst_179 {dimension_numbers = #tpu.dot_dimension_numbers<[1], [0], [0], [1], [0, 0, 1, 1], [], []>} : vector<9x25xbf16>, vector<25x128xbf16>, vector<9x128xf32> -> vector<9x128xf32>
    %c5_180 = arith.constant 5 : index
    %c0_181 = arith.constant 0 : index
    %c0_182 = arith.constant 0 : index
    %215 = vector.load %arg8[%c5_180, %c0_181, %c0_182] : memref<9x9x25xbf16, #tpu.memory_space<vmem>>, vector<1x9x25xbf16>
    %216 = vector.shape_cast %215 : vector<1x9x25xbf16> to vector<9x25xbf16>
    %cst_183 = arith.constant dense<0.000000e+00> : vector<9x128xf32>
    %217 = tpu.matmul %216, %199, %cst_183 {dimension_numbers = #tpu.dot_dimension_numbers<[1], [0], [0], [1], [0, 0, 1, 1], [], []>} : vector<9x25xbf16>, vector<25x128xbf16>, vector<9x128xf32> -> vector<9x128xf32>
    %c6_184 = arith.constant 6 : index
    %c0_185 = arith.constant 0 : index
    %c0_186 = arith.constant 0 : index
    %218 = vector.load %arg8[%c6_184, %c0_185, %c0_186] : memref<9x9x25xbf16, #tpu.memory_space<vmem>>, vector<1x9x25xbf16>
    %219 = vector.shape_cast %218 : vector<1x9x25xbf16> to vector<9x25xbf16>
    %cst_187 = arith.constant dense<0.000000e+00> : vector<9x128xf32>
    %220 = tpu.matmul %219, %199, %cst_187 {dimension_numbers = #tpu.dot_dimension_numbers<[1], [0], [0], [1], [0, 0, 1, 1], [], []>} : vector<9x25xbf16>, vector<25x128xbf16>, vector<9x128xf32> -> vector<9x128xf32>
    %c7_188 = arith.constant 7 : index
    %c0_189 = arith.constant 0 : index
    %c0_190 = arith.constant 0 : index
    %221 = vector.load %arg8[%c7_188, %c0_189, %c0_190] : memref<9x9x25xbf16, #tpu.memory_space<vmem>>, vector<1x9x25xbf16>
    %222 = vector.shape_cast %221 : vector<1x9x25xbf16> to vector<9x25xbf16>
    %cst_191 = arith.constant dense<0.000000e+00> : vector<9x128xf32>
    %223 = tpu.matmul %222, %199, %cst_191 {dimension_numbers = #tpu.dot_dimension_numbers<[1], [0], [0], [1], [0, 0, 1, 1], [], []>} : vector<9x25xbf16>, vector<25x128xbf16>, vector<9x128xf32> -> vector<9x128xf32>
    %c8_192 = arith.constant 8 : index
    %c0_193 = arith.constant 0 : index
    %c0_194 = arith.constant 0 : index
    %224 = vector.load %arg8[%c8_192, %c0_193, %c0_194] : memref<9x9x25xbf16, #tpu.memory_space<vmem>>, vector<1x9x25xbf16>
    %225 = vector.shape_cast %224 : vector<1x9x25xbf16> to vector<9x25xbf16>
    %cst_195 = arith.constant dense<0.000000e+00> : vector<9x128xf32>
    %226 = tpu.matmul %225, %199, %cst_195 {dimension_numbers = #tpu.dot_dimension_numbers<[1], [0], [0], [1], [0, 0, 1, 1], [], []>} : vector<9x25xbf16>, vector<25x128xbf16>, vector<9x128xf32> -> vector<9x128xf32>
    %227 = arith.maximumf %202, %205 : vector<9x128xf32>
    %228 = arith.maximumf %208, %211 : vector<9x128xf32>
    %229 = arith.maximumf %214, %217 : vector<9x128xf32>
    %230 = arith.maximumf %220, %223 : vector<9x128xf32>
    %231 = arith.maximumf %227, %228 : vector<9x128xf32>
    %232 = arith.maximumf %229, %230 : vector<9x128xf32>
    %233 = arith.maximumf %231, %232 : vector<9x128xf32>
    %234 = arith.maximumf %233, %226 : vector<9x128xf32>
    %235 = arith.truncf %234 : vector<9x128xf32> to vector<9x128xbf16>
    %c0_196 = arith.constant 0 : index
    %c0_197 = arith.constant 0 : index
    %c0_198 = arith.constant 0 : index
    %236 = vector.load %arg9[%c0_196, %c0_197, %c0_198] : memref<25x9x9xbf16, #tpu.memory_space<vmem>>, vector<1x9x9xbf16>
    %237 = vector.shape_cast %236 : vector<1x9x9xbf16> to vector<9x9xbf16>
    %cst_199 = arith.constant dense<0.000000e+00> : vector<9x128xf32>
    %238 = tpu.matmul %237, %235, %cst_199 {dimension_numbers = #tpu.dot_dimension_numbers<[1], [0], [0], [1], [0, 0, 1, 1], [], []>} : vector<9x9xbf16>, vector<9x128xbf16>, vector<9x128xf32> -> vector<9x128xf32>
    %239 = arith.truncf %238 : vector<9x128xf32> to vector<9x128xbf16>
    %c1_200 = arith.constant 1 : index
    %c0_201 = arith.constant 0 : index
    %c0_202 = arith.constant 0 : index
    %240 = vector.load %arg9[%c1_200, %c0_201, %c0_202] : memref<25x9x9xbf16, #tpu.memory_space<vmem>>, vector<1x9x9xbf16>
    %241 = vector.shape_cast %240 : vector<1x9x9xbf16> to vector<9x9xbf16>
    %cst_203 = arith.constant dense<0.000000e+00> : vector<9x128xf32>
    %242 = tpu.matmul %241, %235, %cst_203 {dimension_numbers = #tpu.dot_dimension_numbers<[1], [0], [0], [1], [0, 0, 1, 1], [], []>} : vector<9x9xbf16>, vector<9x128xbf16>, vector<9x128xf32> -> vector<9x128xf32>
    %243 = arith.truncf %242 : vector<9x128xf32> to vector<9x128xbf16>
    %c2_204 = arith.constant 2 : index
    %c0_205 = arith.constant 0 : index
    %c0_206 = arith.constant 0 : index
    %244 = vector.load %arg9[%c2_204, %c0_205, %c0_206] : memref<25x9x9xbf16, #tpu.memory_space<vmem>>, vector<1x9x9xbf16>
    %245 = vector.shape_cast %244 : vector<1x9x9xbf16> to vector<9x9xbf16>
    %cst_207 = arith.constant dense<0.000000e+00> : vector<9x128xf32>
    %246 = tpu.matmul %245, %235, %cst_207 {dimension_numbers = #tpu.dot_dimension_numbers<[1], [0], [0], [1], [0, 0, 1, 1], [], []>} : vector<9x9xbf16>, vector<9x128xbf16>, vector<9x128xf32> -> vector<9x128xf32>
    %247 = arith.truncf %246 : vector<9x128xf32> to vector<9x128xbf16>
    %c3_208 = arith.constant 3 : index
    %c0_209 = arith.constant 0 : index
    %c0_210 = arith.constant 0 : index
    %248 = vector.load %arg9[%c3_208, %c0_209, %c0_210] : memref<25x9x9xbf16, #tpu.memory_space<vmem>>, vector<1x9x9xbf16>
    %249 = vector.shape_cast %248 : vector<1x9x9xbf16> to vector<9x9xbf16>
    %cst_211 = arith.constant dense<0.000000e+00> : vector<9x128xf32>
    %250 = tpu.matmul %249, %235, %cst_211 {dimension_numbers = #tpu.dot_dimension_numbers<[1], [0], [0], [1], [0, 0, 1, 1], [], []>} : vector<9x9xbf16>, vector<9x128xbf16>, vector<9x128xf32> -> vector<9x128xf32>
    %251 = arith.truncf %250 : vector<9x128xf32> to vector<9x128xbf16>
    %c4_212 = arith.constant 4 : index
    %c0_213 = arith.constant 0 : index
    %c0_214 = arith.constant 0 : index
    %252 = vector.load %arg9[%c4_212, %c0_213, %c0_214] : memref<25x9x9xbf16, #tpu.memory_space<vmem>>, vector<1x9x9xbf16>
    %253 = vector.shape_cast %252 : vector<1x9x9xbf16> to vector<9x9xbf16>
    %cst_215 = arith.constant dense<0.000000e+00> : vector<9x128xf32>
    %254 = tpu.matmul %253, %235, %cst_215 {dimension_numbers = #tpu.dot_dimension_numbers<[1], [0], [0], [1], [0, 0, 1, 1], [], []>} : vector<9x9xbf16>, vector<9x128xbf16>, vector<9x128xf32> -> vector<9x128xf32>
    %255 = arith.truncf %254 : vector<9x128xf32> to vector<9x128xbf16>
    %c5_216 = arith.constant 5 : index
    %c0_217 = arith.constant 0 : index
    %c0_218 = arith.constant 0 : index
    %256 = vector.load %arg9[%c5_216, %c0_217, %c0_218] : memref<25x9x9xbf16, #tpu.memory_space<vmem>>, vector<1x9x9xbf16>
    %257 = vector.shape_cast %256 : vector<1x9x9xbf16> to vector<9x9xbf16>
    %cst_219 = arith.constant dense<0.000000e+00> : vector<9x128xf32>
    %258 = tpu.matmul %257, %235, %cst_219 {dimension_numbers = #tpu.dot_dimension_numbers<[1], [0], [0], [1], [0, 0, 1, 1], [], []>} : vector<9x9xbf16>, vector<9x128xbf16>, vector<9x128xf32> -> vector<9x128xf32>
    %259 = arith.truncf %258 : vector<9x128xf32> to vector<9x128xbf16>
    %c6_220 = arith.constant 6 : index
    %c0_221 = arith.constant 0 : index
    %c0_222 = arith.constant 0 : index
    %260 = vector.load %arg9[%c6_220, %c0_221, %c0_222] : memref<25x9x9xbf16, #tpu.memory_space<vmem>>, vector<1x9x9xbf16>
    %261 = vector.shape_cast %260 : vector<1x9x9xbf16> to vector<9x9xbf16>
    %cst_223 = arith.constant dense<0.000000e+00> : vector<9x128xf32>
    %262 = tpu.matmul %261, %235, %cst_223 {dimension_numbers = #tpu.dot_dimension_numbers<[1], [0], [0], [1], [0, 0, 1, 1], [], []>} : vector<9x9xbf16>, vector<9x128xbf16>, vector<9x128xf32> -> vector<9x128xf32>
    %263 = arith.truncf %262 : vector<9x128xf32> to vector<9x128xbf16>
    %c7_224 = arith.constant 7 : index
    %c0_225 = arith.constant 0 : index
    %c0_226 = arith.constant 0 : index
    %264 = vector.load %arg9[%c7_224, %c0_225, %c0_226] : memref<25x9x9xbf16, #tpu.memory_space<vmem>>, vector<1x9x9xbf16>
    %265 = vector.shape_cast %264 : vector<1x9x9xbf16> to vector<9x9xbf16>
    %cst_227 = arith.constant dense<0.000000e+00> : vector<9x128xf32>
    %266 = tpu.matmul %265, %235, %cst_227 {dimension_numbers = #tpu.dot_dimension_numbers<[1], [0], [0], [1], [0, 0, 1, 1], [], []>} : vector<9x9xbf16>, vector<9x128xbf16>, vector<9x128xf32> -> vector<9x128xf32>
    %267 = arith.truncf %266 : vector<9x128xf32> to vector<9x128xbf16>
    %c8_228 = arith.constant 8 : index
    %c0_229 = arith.constant 0 : index
    %c0_230 = arith.constant 0 : index
    %268 = vector.load %arg9[%c8_228, %c0_229, %c0_230] : memref<25x9x9xbf16, #tpu.memory_space<vmem>>, vector<1x9x9xbf16>
    %269 = vector.shape_cast %268 : vector<1x9x9xbf16> to vector<9x9xbf16>
    %cst_231 = arith.constant dense<0.000000e+00> : vector<9x128xf32>
    %270 = tpu.matmul %269, %235, %cst_231 {dimension_numbers = #tpu.dot_dimension_numbers<[1], [0], [0], [1], [0, 0, 1, 1], [], []>} : vector<9x9xbf16>, vector<9x128xbf16>, vector<9x128xf32> -> vector<9x128xf32>
    %271 = arith.truncf %270 : vector<9x128xf32> to vector<9x128xbf16>
    %c9_232 = arith.constant 9 : index
    %c0_233 = arith.constant 0 : index
    %c0_234 = arith.constant 0 : index
    %272 = vector.load %arg9[%c9_232, %c0_233, %c0_234] : memref<25x9x9xbf16, #tpu.memory_space<vmem>>, vector<1x9x9xbf16>
    %273 = vector.shape_cast %272 : vector<1x9x9xbf16> to vector<9x9xbf16>
    %cst_235 = arith.constant dense<0.000000e+00> : vector<9x128xf32>
    %274 = tpu.matmul %273, %235, %cst_235 {dimension_numbers = #tpu.dot_dimension_numbers<[1], [0], [0], [1], [0, 0, 1, 1], [], []>} : vector<9x9xbf16>, vector<9x128xbf16>, vector<9x128xf32> -> vector<9x128xf32>
    %275 = arith.truncf %274 : vector<9x128xf32> to vector<9x128xbf16>
    %c10_236 = arith.constant 10 : index
    %c0_237 = arith.constant 0 : index
    %c0_238 = arith.constant 0 : index
    %276 = vector.load %arg9[%c10_236, %c0_237, %c0_238] : memref<25x9x9xbf16, #tpu.memory_space<vmem>>, vector<1x9x9xbf16>
    %277 = vector.shape_cast %276 : vector<1x9x9xbf16> to vector<9x9xbf16>
    %cst_239 = arith.constant dense<0.000000e+00> : vector<9x128xf32>
    %278 = tpu.matmul %277, %235, %cst_239 {dimension_numbers = #tpu.dot_dimension_numbers<[1], [0], [0], [1], [0, 0, 1, 1], [], []>} : vector<9x9xbf16>, vector<9x128xbf16>, vector<9x128xf32> -> vector<9x128xf32>
    %279 = arith.truncf %278 : vector<9x128xf32> to vector<9x128xbf16>
    %c11_240 = arith.constant 11 : index
    %c0_241 = arith.constant 0 : index
    %c0_242 = arith.constant 0 : index
    %280 = vector.load %arg9[%c11_240, %c0_241, %c0_242] : memref<25x9x9xbf16, #tpu.memory_space<vmem>>, vector<1x9x9xbf16>
    %281 = vector.shape_cast %280 : vector<1x9x9xbf16> to vector<9x9xbf16>
    %cst_243 = arith.constant dense<0.000000e+00> : vector<9x128xf32>
    %282 = tpu.matmul %281, %235, %cst_243 {dimension_numbers = #tpu.dot_dimension_numbers<[1], [0], [0], [1], [0, 0, 1, 1], [], []>} : vector<9x9xbf16>, vector<9x128xbf16>, vector<9x128xf32> -> vector<9x128xf32>
    %283 = arith.truncf %282 : vector<9x128xf32> to vector<9x128xbf16>
    %c12_244 = arith.constant 12 : index
    %c0_245 = arith.constant 0 : index
    %c0_246 = arith.constant 0 : index
    %284 = vector.load %arg9[%c12_244, %c0_245, %c0_246] : memref<25x9x9xbf16, #tpu.memory_space<vmem>>, vector<1x9x9xbf16>
    %285 = vector.shape_cast %284 : vector<1x9x9xbf16> to vector<9x9xbf16>
    %cst_247 = arith.constant dense<0.000000e+00> : vector<9x128xf32>
    %286 = tpu.matmul %285, %235, %cst_247 {dimension_numbers = #tpu.dot_dimension_numbers<[1], [0], [0], [1], [0, 0, 1, 1], [], []>} : vector<9x9xbf16>, vector<9x128xbf16>, vector<9x128xf32> -> vector<9x128xf32>
    %287 = arith.truncf %286 : vector<9x128xf32> to vector<9x128xbf16>
    %c13_248 = arith.constant 13 : index
    %c0_249 = arith.constant 0 : index
    %c0_250 = arith.constant 0 : index
    %288 = vector.load %arg9[%c13_248, %c0_249, %c0_250] : memref<25x9x9xbf16, #tpu.memory_space<vmem>>, vector<1x9x9xbf16>
    %289 = vector.shape_cast %288 : vector<1x9x9xbf16> to vector<9x9xbf16>
    %cst_251 = arith.constant dense<0.000000e+00> : vector<9x128xf32>
    %290 = tpu.matmul %289, %235, %cst_251 {dimension_numbers = #tpu.dot_dimension_numbers<[1], [0], [0], [1], [0, 0, 1, 1], [], []>} : vector<9x9xbf16>, vector<9x128xbf16>, vector<9x128xf32> -> vector<9x128xf32>
    %291 = arith.truncf %290 : vector<9x128xf32> to vector<9x128xbf16>
    %c14_252 = arith.constant 14 : index
    %c0_253 = arith.constant 0 : index
    %c0_254 = arith.constant 0 : index
    %292 = vector.load %arg9[%c14_252, %c0_253, %c0_254] : memref<25x9x9xbf16, #tpu.memory_space<vmem>>, vector<1x9x9xbf16>
    %293 = vector.shape_cast %292 : vector<1x9x9xbf16> to vector<9x9xbf16>
    %cst_255 = arith.constant dense<0.000000e+00> : vector<9x128xf32>
    %294 = tpu.matmul %293, %235, %cst_255 {dimension_numbers = #tpu.dot_dimension_numbers<[1], [0], [0], [1], [0, 0, 1, 1], [], []>} : vector<9x9xbf16>, vector<9x128xbf16>, vector<9x128xf32> -> vector<9x128xf32>
    %295 = arith.truncf %294 : vector<9x128xf32> to vector<9x128xbf16>
    %c15_256 = arith.constant 15 : index
    %c0_257 = arith.constant 0 : index
    %c0_258 = arith.constant 0 : index
    %296 = vector.load %arg9[%c15_256, %c0_257, %c0_258] : memref<25x9x9xbf16, #tpu.memory_space<vmem>>, vector<1x9x9xbf16>
    %297 = vector.shape_cast %296 : vector<1x9x9xbf16> to vector<9x9xbf16>
    %cst_259 = arith.constant dense<0.000000e+00> : vector<9x128xf32>
    %298 = tpu.matmul %297, %235, %cst_259 {dimension_numbers = #tpu.dot_dimension_numbers<[1], [0], [0], [1], [0, 0, 1, 1], [], []>} : vector<9x9xbf16>, vector<9x128xbf16>, vector<9x128xf32> -> vector<9x128xf32>
    %299 = arith.truncf %298 : vector<9x128xf32> to vector<9x128xbf16>
    %c16_260 = arith.constant 16 : index
    %c0_261 = arith.constant 0 : index
    %c0_262 = arith.constant 0 : index
    %300 = vector.load %arg9[%c16_260, %c0_261, %c0_262] : memref<25x9x9xbf16, #tpu.memory_space<vmem>>, vector<1x9x9xbf16>
    %301 = vector.shape_cast %300 : vector<1x9x9xbf16> to vector<9x9xbf16>
    %cst_263 = arith.constant dense<0.000000e+00> : vector<9x128xf32>
    %302 = tpu.matmul %301, %235, %cst_263 {dimension_numbers = #tpu.dot_dimension_numbers<[1], [0], [0], [1], [0, 0, 1, 1], [], []>} : vector<9x9xbf16>, vector<9x128xbf16>, vector<9x128xf32> -> vector<9x128xf32>
    %303 = arith.truncf %302 : vector<9x128xf32> to vector<9x128xbf16>
    %c17_264 = arith.constant 17 : index
    %c0_265 = arith.constant 0 : index
    %c0_266 = arith.constant 0 : index
    %304 = vector.load %arg9[%c17_264, %c0_265, %c0_266] : memref<25x9x9xbf16, #tpu.memory_space<vmem>>, vector<1x9x9xbf16>
    %305 = vector.shape_cast %304 : vector<1x9x9xbf16> to vector<9x9xbf16>
    %cst_267 = arith.constant dense<0.000000e+00> : vector<9x128xf32>
    %306 = tpu.matmul %305, %235, %cst_267 {dimension_numbers = #tpu.dot_dimension_numbers<[1], [0], [0], [1], [0, 0, 1, 1], [], []>} : vector<9x9xbf16>, vector<9x128xbf16>, vector<9x128xf32> -> vector<9x128xf32>
    %307 = arith.truncf %306 : vector<9x128xf32> to vector<9x128xbf16>
    %c18_268 = arith.constant 18 : index
    %c0_269 = arith.constant 0 : index
    %c0_270 = arith.constant 0 : index
    %308 = vector.load %arg9[%c18_268, %c0_269, %c0_270] : memref<25x9x9xbf16, #tpu.memory_space<vmem>>, vector<1x9x9xbf16>
    %309 = vector.shape_cast %308 : vector<1x9x9xbf16> to vector<9x9xbf16>
    %cst_271 = arith.constant dense<0.000000e+00> : vector<9x128xf32>
    %310 = tpu.matmul %309, %235, %cst_271 {dimension_numbers = #tpu.dot_dimension_numbers<[1], [0], [0], [1], [0, 0, 1, 1], [], []>} : vector<9x9xbf16>, vector<9x128xbf16>, vector<9x128xf32> -> vector<9x128xf32>
    %311 = arith.truncf %310 : vector<9x128xf32> to vector<9x128xbf16>
    %c19_272 = arith.constant 19 : index
    %c0_273 = arith.constant 0 : index
    %c0_274 = arith.constant 0 : index
    %312 = vector.load %arg9[%c19_272, %c0_273, %c0_274] : memref<25x9x9xbf16, #tpu.memory_space<vmem>>, vector<1x9x9xbf16>
    %313 = vector.shape_cast %312 : vector<1x9x9xbf16> to vector<9x9xbf16>
    %cst_275 = arith.constant dense<0.000000e+00> : vector<9x128xf32>
    %314 = tpu.matmul %313, %235, %cst_275 {dimension_numbers = #tpu.dot_dimension_numbers<[1], [0], [0], [1], [0, 0, 1, 1], [], []>} : vector<9x9xbf16>, vector<9x128xbf16>, vector<9x128xf32> -> vector<9x128xf32>
    %315 = arith.truncf %314 : vector<9x128xf32> to vector<9x128xbf16>
    %c20_276 = arith.constant 20 : index
    %c0_277 = arith.constant 0 : index
    %c0_278 = arith.constant 0 : index
    %316 = vector.load %arg9[%c20_276, %c0_277, %c0_278] : memref<25x9x9xbf16, #tpu.memory_space<vmem>>, vector<1x9x9xbf16>
    %317 = vector.shape_cast %316 : vector<1x9x9xbf16> to vector<9x9xbf16>
    %cst_279 = arith.constant dense<0.000000e+00> : vector<9x128xf32>
    %318 = tpu.matmul %317, %235, %cst_279 {dimension_numbers = #tpu.dot_dimension_numbers<[1], [0], [0], [1], [0, 0, 1, 1], [], []>} : vector<9x9xbf16>, vector<9x128xbf16>, vector<9x128xf32> -> vector<9x128xf32>
    %319 = arith.truncf %318 : vector<9x128xf32> to vector<9x128xbf16>
    %c21_280 = arith.constant 21 : index
    %c0_281 = arith.constant 0 : index
    %c0_282 = arith.constant 0 : index
    %320 = vector.load %arg9[%c21_280, %c0_281, %c0_282] : memref<25x9x9xbf16, #tpu.memory_space<vmem>>, vector<1x9x9xbf16>
    %321 = vector.shape_cast %320 : vector<1x9x9xbf16> to vector<9x9xbf16>
    %cst_283 = arith.constant dense<0.000000e+00> : vector<9x128xf32>
    %322 = tpu.matmul %321, %235, %cst_283 {dimension_numbers = #tpu.dot_dimension_numbers<[1], [0], [0], [1], [0, 0, 1, 1], [], []>} : vector<9x9xbf16>, vector<9x128xbf16>, vector<9x128xf32> -> vector<9x128xf32>
    %323 = arith.truncf %322 : vector<9x128xf32> to vector<9x128xbf16>
    %c22_284 = arith.constant 22 : index
    %c0_285 = arith.constant 0 : index
    %c0_286 = arith.constant 0 : index
    %324 = vector.load %arg9[%c22_284, %c0_285, %c0_286] : memref<25x9x9xbf16, #tpu.memory_space<vmem>>, vector<1x9x9xbf16>
    %325 = vector.shape_cast %324 : vector<1x9x9xbf16> to vector<9x9xbf16>
    %cst_287 = arith.constant dense<0.000000e+00> : vector<9x128xf32>
    %326 = tpu.matmul %325, %235, %cst_287 {dimension_numbers = #tpu.dot_dimension_numbers<[1], [0], [0], [1], [0, 0, 1, 1], [], []>} : vector<9x9xbf16>, vector<9x128xbf16>, vector<9x128xf32> -> vector<9x128xf32>
    %327 = arith.truncf %326 : vector<9x128xf32> to vector<9x128xbf16>
    %c23_288 = arith.constant 23 : index
    %c0_289 = arith.constant 0 : index
    %c0_290 = arith.constant 0 : index
    %328 = vector.load %arg9[%c23_288, %c0_289, %c0_290] : memref<25x9x9xbf16, #tpu.memory_space<vmem>>, vector<1x9x9xbf16>
    %329 = vector.shape_cast %328 : vector<1x9x9xbf16> to vector<9x9xbf16>
    %cst_291 = arith.constant dense<0.000000e+00> : vector<9x128xf32>
    %330 = tpu.matmul %329, %235, %cst_291 {dimension_numbers = #tpu.dot_dimension_numbers<[1], [0], [0], [1], [0, 0, 1, 1], [], []>} : vector<9x9xbf16>, vector<9x128xbf16>, vector<9x128xf32> -> vector<9x128xf32>
    %331 = arith.truncf %330 : vector<9x128xf32> to vector<9x128xbf16>
    %c24_292 = arith.constant 24 : index
    %c0_293 = arith.constant 0 : index
    %c0_294 = arith.constant 0 : index
    %332 = vector.load %arg9[%c24_292, %c0_293, %c0_294] : memref<25x9x9xbf16, #tpu.memory_space<vmem>>, vector<1x9x9xbf16>
    %333 = vector.shape_cast %332 : vector<1x9x9xbf16> to vector<9x9xbf16>
    %cst_295 = arith.constant dense<0.000000e+00> : vector<9x128xf32>
    %334 = tpu.matmul %333, %235, %cst_295 {dimension_numbers = #tpu.dot_dimension_numbers<[1], [0], [0], [1], [0, 0, 1, 1], [], []>} : vector<9x9xbf16>, vector<9x128xbf16>, vector<9x128xf32> -> vector<9x128xf32>
    %335 = arith.truncf %334 : vector<9x128xf32> to vector<9x128xbf16>
    %336 = tpu.concatenate %239, %243, %247, %251, %255, %259, %263, %267, %271, %275, %279, %283, %287, %291, %295, %299 in 1 : vector<9x128xbf16>, vector<9x128xbf16>, vector<9x128xbf16>, vector<9x128xbf16>, vector<9x128xbf16>, vector<9x128xbf16>, vector<9x128xbf16>, vector<9x128xbf16>, vector<9x128xbf16>, vector<9x128xbf16>, vector<9x128xbf16>, vector<9x128xbf16>, vector<9x128xbf16>, vector<9x128xbf16>, vector<9x128xbf16>, vector<9x128xbf16> -> vector<9x2048xbf16>
    %337 = tpu.concatenate %303, %307, %311, %315, %319, %323, %327, %331, %335 in 1 : vector<9x128xbf16>, vector<9x128xbf16>, vector<9x128xbf16>, vector<9x128xbf16>, vector<9x128xbf16>, vector<9x128xbf16>, vector<9x128xbf16>, vector<9x128xbf16>, vector<9x128xbf16> -> vector<9x1152xbf16>
    %338 = tpu.concatenate %336, %337 in 1 : vector<9x2048xbf16>, vector<9x1152xbf16> -> vector<9x3200xbf16>
    %c0_296 = arith.constant 0 : index
    %c0_297 = arith.constant 0 : index
    %339 = vector.load %arg5[%c0_296, %c0_297] : memref<3200x128xbf16, #tpu.memory_space<vmem>>, vector<3200x128xbf16>
    %cst_298 = arith.constant dense<0.000000e+00> : vector<9x128xf32>
    %340 = tpu.matmul %338, %339, %cst_298 {dimension_numbers = #tpu.dot_dimension_numbers<[1], [0], [0], [1], [0, 0, 1, 1], [], []>} : vector<9x3200xbf16>, vector<3200x128xbf16>, vector<9x128xf32> -> vector<9x128xf32>
    %c6_299 = arith.constant 6 : index
    %c0_300 = arith.constant 0 : index
    %c0_301 = arith.constant 0 : index
    %341 = vector.load %arg3[%c6_299, %c0_300, %c0_301] : memref<9x1x128xf32, #tpu.memory_space<vmem>>, vector<1x1x128xf32>
    %342 = vector.shape_cast %341 : vector<1x1x128xf32> to vector<1x128xf32>
    %343 = vector.broadcast %342 : vector<1x128xf32> to vector<9x128xf32>
    %344 = arith.addf %340, %343 : vector<9x128xf32>
    %cst_302 = arith.constant 0.000000e+00 : f32
    %345 = vector.broadcast %cst_302 : f32 to vector<9x128xf32>
    %346 = arith.maximumf %344, %345 : vector<9x128xf32>
    %347 = arith.truncf %346 : vector<9x128xf32> to vector<9x128xbf16>
    %c5_303 = arith.constant 5 : index
    %c0_304 = arith.constant 0 : index
    %c0_305 = arith.constant 0 : index
    %348 = vector.load %arg2[%c5_303, %c0_304, %c0_305] : memref<7x128x128xbf16, #tpu.memory_space<vmem>>, vector<1x128x128xbf16>
    %349 = vector.shape_cast %348 : vector<1x128x128xbf16> to vector<128x128xbf16>
    %cst_306 = arith.constant dense<0.000000e+00> : vector<9x128xf32>
    %350 = tpu.matmul %347, %349, %cst_306 {dimension_numbers = #tpu.dot_dimension_numbers<[1], [0], [0], [1], [0, 0, 1, 1], [], []>} : vector<9x128xbf16>, vector<128x128xbf16>, vector<9x128xf32> -> vector<9x128xf32>
    %c7_307 = arith.constant 7 : index
    %c0_308 = arith.constant 0 : index
    %c0_309 = arith.constant 0 : index
    %351 = vector.load %arg3[%c7_307, %c0_308, %c0_309] : memref<9x1x128xf32, #tpu.memory_space<vmem>>, vector<1x1x128xf32>
    %352 = vector.shape_cast %351 : vector<1x1x128xf32> to vector<1x128xf32>
    %353 = vector.broadcast %352 : vector<1x128xf32> to vector<9x128xf32>
    %354 = arith.addf %350, %353 : vector<9x128xf32>
    %cst_310 = arith.constant 0.000000e+00 : f32
    %355 = vector.broadcast %cst_310 : f32 to vector<9x128xf32>
    %356 = arith.maximumf %354, %355 : vector<9x128xf32>
    %357 = arith.truncf %356 : vector<9x128xf32> to vector<9x128xbf16>
    %c6_311 = arith.constant 6 : index
    %c0_312 = arith.constant 0 : index
    %c0_313 = arith.constant 0 : index
    %358 = vector.load %arg2[%c6_311, %c0_312, %c0_313] : memref<7x128x128xbf16, #tpu.memory_space<vmem>>, vector<1x128x128xbf16>
    %359 = vector.shape_cast %358 : vector<1x128x128xbf16> to vector<128x128xbf16>
    %cst_314 = arith.constant dense<0.000000e+00> : vector<9x128xf32>
    %360 = tpu.matmul %357, %359, %cst_314 {dimension_numbers = #tpu.dot_dimension_numbers<[1], [0], [0], [1], [0, 0, 1, 1], [], []>} : vector<9x128xbf16>, vector<128x128xbf16>, vector<9x128xf32> -> vector<9x128xf32>
    %c8_315 = arith.constant 8 : index
    %c0_316 = arith.constant 0 : index
    %c0_317 = arith.constant 0 : index
    %361 = vector.load %arg3[%c8_315, %c0_316, %c0_317] : memref<9x1x128xf32, #tpu.memory_space<vmem>>, vector<1x1x128xf32>
    %362 = vector.shape_cast %361 : vector<1x1x128xf32> to vector<1x128xf32>
    %363 = vector.broadcast %362 : vector<1x128xf32> to vector<9x128xf32>
    %364 = arith.addf %360, %363 : vector<9x128xf32>
    %cst_318 = arith.constant dense<0.000000e+00> : vector<128xf32>
    %365 = vector.multi_reduction <add>, %364, %cst_318 [0] : vector<9x128xf32> to vector<128xf32>
    %366 = vector.shape_cast %365 : vector<128xf32> to vector<1x128xf32>
    %cst_319 = arith.constant 9.000000e+00 : f32
    %367 = vector.broadcast %cst_319 : f32 to vector<1x128xf32>
    %368 = arith.divf %366, %367 : vector<1x128xf32>
    %c0_320 = arith.constant 0 : index
    %c0_321 = arith.constant 0 : index
    %369 = vector.load %arg10[%c0_320, %c0_321] : memref<1x128xf32, #tpu.memory_space<vmem>>, vector<1x128xf32>
    %370 = arith.addf %368, %369 : vector<1x128xf32>
    %cst_322 = arith.constant dense<0xFF800000> : vector<1xf32>
    %371 = vector.multi_reduction <maximumf>, %370, %cst_322 [1] : vector<1x128xf32> to vector<1xf32>
    %372 = vector.shape_cast %371 : vector<1xf32> to vector<1x1xf32>
    %373 = vector.broadcast %372 : vector<1x1xf32> to vector<1x128xf32>
    %374 = arith.subf %370, %373 : vector<1x128xf32>
    %375 = math.exp %374 : vector<1x128xf32>
    %cst_323 = arith.constant dense<0.000000e+00> : vector<1xf32>
    %376 = vector.multi_reduction <add>, %375, %cst_323 [1] : vector<1x128xf32> to vector<1xf32>
    %377 = vector.shape_cast %376 : vector<1xf32> to vector<1x1xf32>
    %378 = math.log %377 : vector<1x1xf32>
    %379 = vector.broadcast %378 : vector<1x1xf32> to vector<1x128xf32>
    %380 = arith.subf %374, %379 : vector<1x128xf32>
    %c0_324 = arith.constant 0 : index
    %c0_325 = arith.constant 0 : index
    %c0_326 = arith.constant 0 : index
    %381 = vector.load %arg11[%c0_324, %c0_325, %c0_326] : memref<1x1x128xf32, #tpu.memory_space<vmem>>, vector<1x1x128xf32>
    %382 = vector.shape_cast %381 : vector<1x1x128xf32> to vector<1x128xf32>
    %383 = vector.shape_cast %380 : vector<1x128xf32> to vector<1x1x128xf32>
    tpu.vector_store %arg11[%c0_324, %c0_325, %c0_326], %383 {strides = array<i32>} : memref<1x1x128xf32, #tpu.memory_space<vmem>>, vector<1x1x128xf32>,
    return
  }
  func.func @transform_0(%arg0: i32) -> (i32, i32, i32) {
    %c0_i32 = arith.constant 0 : i32
    %c0_i32_0 = arith.constant 0 : i32
    %c0_i32_1 = arith.constant 0 : i32
    return %arg0, %c0_i32, %c0_i32_0 : i32, i32, i32
  }
  func.func @transform_1(%arg0: i32) -> (i32, i32, i32) {
    %c0_i32 = arith.constant 0 : i32
    %c0_i32_0 = arith.constant 0 : i32
    %c0_i32_1 = arith.constant 0 : i32
    %c0_i32_2 = arith.constant 0 : i32
    return %c0_i32, %c0_i32_0, %c0_i32_1 : i32, i32, i32
  }
  func.func @transform_2(%arg0: i32) -> (i32, i32, i32) {
    %c0_i32 = arith.constant 0 : i32
    %c0_i32_0 = arith.constant 0 : i32
    %c0_i32_1 = arith.constant 0 : i32
    %c0_i32_2 = arith.constant 0 : i32
    return %c0_i32, %c0_i32_0, %c0_i32_1 : i32, i32, i32
  }
  func.func @transform_3(%arg0: i32) -> (i32, i32) {
    %c0_i32 = arith.constant 0 : i32
    %c0_i32_0 = arith.constant 0 : i32
    %c0_i32_1 = arith.constant 0 : i32
    return %c0_i32, %c0_i32_0 : i32, i32
  }
  func.func @transform_4(%arg0: i32) -> (i32, i32) {
    %c0_i32 = arith.constant 0 : i32
    %c0_i32_0 = arith.constant 0 : i32
    %c0_i32_1 = arith.constant 0 : i32
    return %c0_i32, %c0_i32_0 : i32, i32
  }
  func.func @transform_5(%arg0: i32) -> (i32, i32, i32) {
    %c0_i32 = arith.constant 0 : i32
    %c0_i32_0 = arith.constant 0 : i32
    %c0_i32_1 = arith.constant 0 : i32
    %c0_i32_2 = arith.constant 0 : i32
    return %c0_i32, %c0_i32_0, %c0_i32_1 : i32, i32, i32
  }
  func.func @transform_6(%arg0: i32) -> (i32, i32, i32) {
    %c0_i32 = arith.constant 0 : i32
    %c0_i32_0 = arith.constant 0 : i32
    %c0_i32_1 = arith.constant 0 : i32
    %c0_i32_2 = arith.constant 0 : i32
    return %c0_i32, %c0_i32_0, %c0_i32_1 : i32, i32, i32
  }
  func.func @transform_7(%arg0: i32) -> (i32, i32, i32) {
    %c0_i32 = arith.constant 0 : i32
    %c0_i32_0 = arith.constant 0 : i32
    %c0_i32_1 = arith.constant 0 : i32
    %c0_i32_2 = arith.constant 0 : i32
    return %c0_i32, %c0_i32_0, %c0_i32_1 : i32, i32, i32
  }
  func.func @transform_8(%arg0: i32) -> (i32, i32, i32) {
    %c0_i32 = arith.constant 0 : i32
    %c0_i32_0 = arith.constant 0 : i32
    %c0_i32_1 = arith.constant 0 : i32
    %c0_i32_2 = arith.constant 0 : i32
    return %c0_i32, %c0_i32_0, %c0_i32_1 : i32, i32, i32
  }
  func.func @transform_9(%arg0: i32) -> (i32, i32) {
    %c0_i32 = arith.constant 0 : i32
    %c0_i32_0 = arith.constant 0 : i32
    %c0_i32_1 = arith.constant 0 : i32
    return %c0_i32, %c0_i32_0 : i32, i32
  }
  func.func @transform_10(%arg0: i32) -> (i32, i32, i32) {
    %c0_i32 = arith.constant 0 : i32
    %c0_i32_0 = arith.constant 0 : i32
    %c0_i32_1 = arith.constant 0 : i32
    return %arg0, %c0_i32, %c0_i32_0 : i32, i32, i32
  }
}

</mosaic_0001>

<llo_original>
// kernel: _lambda_.1
$region0: #{_lambda_.1}
  #allocation0 [shape = 'u32[]', space=smem, size = 0x4, offset = 0x4, fixed_abs, tag = 'smem constant byte address 0x4 - core index']
  #allocation1 [shape = 'u32[144,128]{1,0:T(1,128)}', space=vmem, size = 0x12000, scoped, tag = 'internal scratch']
  %s0 = inlined_call_operand.vmem [shape: bf16[2,81,128], index: 0, kind: input, shape index: {}]
  %s1 = inlined_call_operand.vmem [shape: bf16[7,128,128], index: 1, kind: input, shape index: {}]
  %s2 = inlined_call_operand.vmem [shape: f32[9,1,128], index: 2, kind: input, shape index: {}]
  %s3 = inlined_call_operand.vmem [shape: bf16[3200,128], index: 3, kind: input, shape index: {}]
  %s4 = inlined_call_operand.vmem [shape: bf16[3200,128], index: 4, kind: input, shape index: {}]
  %s5 = inlined_call_operand.vmem [shape: bf16[9,25,81], index: 5, kind: input, shape index: {}]
  %s6 = inlined_call_operand.vmem [shape: bf16[25,25,25], index: 6, kind: input, shape index: {}]
  %s7 = inlined_call_operand.vmem [shape: bf16[9,9,25], index: 7, kind: input, shape index: {}]
  %s8 = inlined_call_operand.vmem [shape: bf16[25,9,9], index: 8, kind: input, shape index: {}]
  %s9 = inlined_call_operand.vmem [shape: f32[1,128], index: 9, kind: input, shape index: {}]
  %s10 = inlined_call_operand.hbm [shape: f32[2,1,128], index: 10, kind: output, shape index: {}]
  %s11 = sld [smem:[#allocation0]]
  $region73: #{_lambda_.1} parent=0
    _
  %s13 = ssub.s32 1, %s11
  %s14 = scalar_select 0, %s13, %s11
  $region1: #{_lambda_.1} parent=0
    #allocation2 [shape = 'u8[1024]{0}', space=vmem, size = 0x400, scoped, tag = 'output window, operand 0']
    #allocation3 [shape = 's32[2]{0}', space=sflag, size = 0x8, scoped, tag = 'scoped memory for _lambda_.1']
    %15 = vsyncpa [#allocation3], 0
    %s16 = scalar_lea.sflag [#allocation3], 1
    %17 = vsyncpa %s16, 0
    loop: start=0, step=1, limit=4
    $region2: #{_lambda_.1} parent=1 // loop_pre_header
      _
    $region3: #{_lambda_.1} parent=1 // loop_header
      %s19 = sphi 0, %s23
      %p20 = scmp.ge.s32.totalorder %s19, 4
      %s29 = sphi 0, %s31
      %s32 = sphi 0, %s29
      %s33 = sphi 0, %s32
      %s49 = sphi 0, %s33
      %s53 = sphi 0, %s53
      %s55 = sphi 0, %s53
      %s56 = sphi 0, %s55
      %s70 = sphi 0, %s56
      %s74 = sphi 0, %s74
      %s76 = sphi 0, %s74
      %s77 = sphi 0, %s76
      %s91 = sphi 0, %s77
      %s95 = sphi 0, %s95
      %s97 = sphi 0, %s95
      %s98 = sphi 0, %s97
      %s112 = sphi 0, %s98
      %s116 = sphi 0, %s116
      %s118 = sphi 0, %s116
      %s119 = sphi 0, %s118
      %s133 = sphi 0, %s119
      %s137 = sphi 0, %s137
      %s139 = sphi 0, %s137
      %s140 = sphi 0, %s139
      %s154 = sphi 0, %s140
      %s158 = sphi 0, %s158
      %s160 = sphi 0, %s158
      %s161 = sphi 0, %s160
      %s175 = sphi 0, %s161
      %s179 = sphi 0, %s179
      %s181 = sphi 0, %s179
      %s182 = sphi 0, %s181
      %s196 = sphi 0, %s182
      %s200 = sphi 0, %s200
      %s202 = sphi 0, %s200
      %s203 = sphi 0, %s202
      %s217 = sphi 0, %s203
      %s221 = sphi 0, %s221
      %s223 = sphi 0, %s221
      %s224 = sphi 0, %s223
      %s238 = sphi 0, %s224
      %s244 = sphi 0, %s246
      %s247 = sphi 0, %s244
      %s248 = sphi 0, %s247
      %s264 = sphi 0, %s248
    $region4: #{_lambda_.1} parent=1 // loop_header_branch
      %22 = sbr.rel (%p20) target = $region8
    $region5: #{_lambda_.1} parent=1 // loop_body
      %s24 = ssub.s32 %s19, 1
      %s25 = ssub.s32 %s19, 2
      %s26 = sadd.s32 %s19, 1
      %s27 = ssub.s32 %s19, %s26
      %p28 = scmp.eq.s32.totalorder %s27, 0
      %s30 = sadd.s32 %s29, 1
      %s31 = scalar_select %p28, %s29, %s30
      %p34 = pneg %p28
      %p35 = scmp.eq.s32.totalorder %s19, 1
      %p36 = por %p34, %p35
      %p37 = scmp.ne.s32.totalorder %s29, %s32
      %p38 = scmp.eq.s32.totalorder %s19, 0
      %p39 = por %p37, %p38
      %p40 = scmp.ne.s32.totalorder %s29, %s32
      %p41 = scmp.eq.s32.totalorder %s24, 1
      %p42 = por %p40, %p41
      %p43 = scmp.ne.s32.totalorder %s32, %s33
      %p44 = scmp.eq.s32.totalorder %s24, 0
      %p45 = por %p43, %p44
      %p46 = scmp.ne.s32.totalorder %s32, %s33
      %p47 = scmp.eq.s32.totalorder %s25, 1
      %p48 = por %p46, %p47
      %p50 = scmp.ne.s32.totalorder %s33, %s49
      %p51 = scmp.eq.s32.totalorder %s25, 0
      %p52 = por %p50, %p51
      %s54 = sadd.s32 %s53, 1
      %p57 = scmp.eq.s32.totalorder %s19, 1
      %p58 = scmp.ne.s32.totalorder %s53, %s55
      %p59 = scmp.eq.s32.totalorder %s19, 0
      %p60 = por %p58, %p59
      %p61 = scmp.ne.s32.totalorder %s53, %s55
      %p62 = scmp.eq.s32.totalorder %s24, 1
      %p63 = por %p61, %p62
      %p64 = scmp.ne.s32.totalorder %s55, %s56
      %p65 = scmp.eq.s32.totalorder %s24, 0
      %p66 = por %p64, %p65
      %p67 = scmp.ne.s32.totalorder %s55, %s56
      %p68 = scmp.eq.s32.totalorder %s25, 1
      %p69 = por %p67, %p68
      %p71 = scmp.ne.s32.totalorder %s56, %s70
      %p72 = scmp.eq.s32.totalorder %s25, 0
      %p73 = por %p71, %p72
      %s75 = sadd.s32 %s74, 1
      %p78 = scmp.eq.s32.totalorder %s19, 1
      %p79 = scmp.ne.s32.totalorder %s74, %s76
      %p80 = scmp.eq.s32.totalorder %s19, 0
      %p81 = por %p79, %p80
      %p82 = scmp.ne.s32.totalorder %s74, %s76
      %p83 = scmp.eq.s32.totalorder %s24, 1
      %p84 = por %p82, %p83
      %p85 = scmp.ne.s32.totalorder %s76, %s77
      %p86 = scmp.eq.s32.totalorder %s24, 0
      %p87 = por %p85, %p86
      %p88 = scmp.ne.s32.totalorder %s76, %s77
      %p89 = scmp.eq.s32.totalorder %s25, 1
      %p90 = por %p88, %p89
      %p92 = scmp.ne.s32.totalorder %s77, %s91
      %p93 = scmp.eq.s32.totalorder %s25, 0
      %p94 = por %p92, %p93
      %s96 = sadd.s32 %s95, 1
      %p99 = scmp.eq.s32.totalorder %s19, 1
      %p100 = scmp.ne.s32.totalorder %s95, %s97
      %p101 = scmp.eq.s32.totalorder %s19, 0
      %p102 = por %p100, %p101
      %p103 = scmp.ne.s32.totalorder %s95, %s97
      %p104 = scmp.eq.s32.totalorder %s24, 1
      %p105 = por %p103, %p104
      %p106 = scmp.ne.s32.totalorder %s97, %s98
      %p107 = scmp.eq.s32.totalorder %s24, 0
      %p108 = por %p106, %p107
      %p109 = scmp.ne.s32.totalorder %s97, %s98
      %p110 = scmp.eq.s32.totalorder %s25, 1
      %p111 = por %p109, %p110
      %p113 = scmp.ne.s32.totalorder %s98, %s112
      %p114 = scmp.eq.s32.totalorder %s25, 0
      %p115 = por %p113, %p114
      %s117 = sadd.s32 %s116, 1
      %p120 = scmp.eq.s32.totalorder %s19, 1
      %p121 = scmp.ne.s32.totalorder %s116, %s118
      %p122 = scmp.eq.s32.totalorder %s19, 0
      %p123 = por %p121, %p122
      %p124 = scmp.ne.s32.totalorder %s116, %s118
      %p125 = scmp.eq.s32.totalorder %s24, 1
      %p126 = por %p124, %p125
      %p127 = scmp.ne.s32.totalorder %s118, %s119
      %p128 = scmp.eq.s32.totalorder %s24, 0
      %p129 = por %p127, %p128
      %p130 = scmp.ne.s32.totalorder %s118, %s119
      %p131 = scmp.eq.s32.totalorder %s25, 1
      %p132 = por %p130, %p131
      %p134 = scmp.ne.s32.totalorder %s119, %s133
      %p135 = scmp.eq.s32.totalorder %s25, 0
      %p136 = por %p134, %p135
      %s138 = sadd.s32 %s137, 1
      %p141 = scmp.eq.s32.totalorder %s19, 1
      %p142 = scmp.ne.s32.totalorder %s137, %s139
      %p143 = scmp.eq.s32.totalorder %s19, 0
      %p144 = por %p142, %p143
      %p145 = scmp.ne.s32.totalorder %s137, %s139
      %p146 = scmp.eq.s32.totalorder %s24, 1
      %p147 = por %p145, %p146
      %p148 = scmp.ne.s32.totalorder %s139, %s140
      %p149 = scmp.eq.s32.totalorder %s24, 0
      %p150 = por %p148, %p149
      %p151 = scmp.ne.s32.totalorder %s139, %s140
      %p152 = scmp.eq.s32.totalorder %s25, 1
      %p153 = por %p151, %p152
      %p155 = scmp.ne.s32.totalorder %s140, %s154
      %p156 = scmp.eq.s32.totalorder %s25, 0
      %p157 = por %p155, %p156
      %s159 = sadd.s32 %s158, 1
      %p162 = scmp.eq.s32.totalorder %s19, 1
      %p163 = scmp.ne.s32.totalorder %s158, %s160
      %p164 = scmp.eq.s32.totalorder %s19, 0
      %p165 = por %p163, %p164
      %p166 = scmp.ne.s32.totalorder %s158, %s160
      %p167 = scmp.eq.s32.totalorder %s24, 1
      %p168 = por %p166, %p167
      %p169 = scmp.ne.s32.totalorder %s160, %s161
      %p170 = scmp.eq.s32.totalorder %s24, 0
      %p171 = por %p169, %p170
      %p172 = scmp.ne.s32.totalorder %s160, %s161
      %p173 = scmp.eq.s32.totalorder %s25, 1
      %p174 = por %p172, %p173
      %p176 = scmp.ne.s32.totalorder %s161, %s175
      %p177 = scmp.eq.s32.totalorder %s25, 0
      %p178 = por %p176, %p177
      %s180 = sadd.s32 %s179, 1
      %p183 = scmp.eq.s32.totalorder %s19, 1
      %p184 = scmp.ne.s32.totalorder %s179, %s181
      %p185 = scmp.eq.s32.totalorder %s19, 0
      %p186 = por %p184, %p185
      %p187 = scmp.ne.s32.totalorder %s179, %s181
      %p188 = scmp.eq.s32.totalorder %s24, 1
      %p189 = por %p187, %p188
      %p190 = scmp.ne.s32.totalorder %s181, %s182
      %p191 = scmp.eq.s32.totalorder %s24, 0
      %p192 = por %p190, %p191
      %p193 = scmp.ne.s32.totalorder %s181, %s182
      %p194 = scmp.eq.s32.totalorder %s25, 1
      %p195 = por %p193, %p194
      %p197 = scmp.ne.s32.totalorder %s182, %s196
      %p198 = scmp.eq.s32.totalorder %s25, 0
      %p199 = por %p197, %p198
      %s201 = sadd.s32 %s200, 1
      %p204 = scmp.eq.s32.totalorder %s19, 1
      %p205 = scmp.ne.s32.totalorder %s200, %s202
      %p206 = scmp.eq.s32.totalorder %s19, 0
      %p207 = por %p205, %p206
      %p208 = scmp.ne.s32.totalorder %s200, %s202
      %p209 = scmp.eq.s32.totalorder %s24, 1
      %p210 = por %p208, %p209
      %p211 = scmp.ne.s32.totalorder %s202, %s203
      %p212 = scmp.eq.s32.totalorder %s24, 0
      %p213 = por %p211, %p212
      %p214 = scmp.ne.s32.totalorder %s202, %s203
      %p215 = scmp.eq.s32.totalorder %s25, 1
      %p216 = por %p214, %p215
      %p218 = scmp.ne.s32.totalorder %s203, %s217
      %p219 = scmp.eq.s32.totalorder %s25, 0
      %p220 = por %p218, %p219
      %s222 = sadd.s32 %s221, 1
      %p225 = scmp.eq.s32.totalorder %s19, 1
      %p226 = scmp.ne.s32.totalorder %s221, %s223
      %p227 = scmp.eq.s32.totalorder %s19, 0
      %p228 = por %p226, %p227
      %p229 = scmp.ne.s32.totalorder %s221, %s223
      %p230 = scmp.eq.s32.totalorder %s24, 1
      %p231 = por %p229, %p230
      %p232 = scmp.ne.s32.totalorder %s223, %s224
      %p233 = scmp.eq.s32.totalorder %s24, 0
      %p234 = por %p232, %p233
      %p235 = scmp.ne.s32.totalorder %s223, %s224
      %p236 = scmp.eq.s32.totalorder %s25, 1
      %p237 = por %p235, %p236
      %p239 = scmp.ne.s32.totalorder %s224, %s238
      %p240 = scmp.eq.s32.totalorder %s25, 0
      %p241 = por %p239, %p240
      %s242 = ssub.s32 %s19, %s26
      %p243 = scmp.eq.s32.totalorder %s242, 0
      %s245 = sadd.s32 %s244, 1
      %s246 = scalar_select %p243, %s244, %s245
      %p249 = pneg %p243
      %p250 = scmp.eq.s32.totalorder %s19, 1
      %p251 = por %p249, %p250
      %p252 = scmp.ne.s32.totalorder %s244, %s247
      %p253 = scmp.eq.s32.totalorder %s19, 0
      %p254 = por %p252, %p253
      %p255 = scmp.ne.s32.totalorder %s244, %s247
      %p256 = scmp.eq.s32.totalorder %s24, 1
      %p257 = por %p255, %p256
      %p258 = scmp.ne.s32.totalorder %s247, %s248
      %p259 = scmp.eq.s32.totalorder %s24, 0
      %p260 = por %p258, %p259
      %p261 = scmp.ne.s32.totalorder %s247, %s248
      %p262 = scmp.eq.s32.totalorder %s25, 1
      %p263 = por %p261, %p262
      %p265 = scmp.ne.s32.totalorder %s248, %s264
      %p266 = scmp.eq.s32.totalorder %s25, 0
      %p267 = por %p265, %p266
      %p268 = scmp.le.s32.totalorder 1, %s19
      %p269 = scmp.lt.s32.totalorder %s19, 3
      %p270 = pnand %p268, %p269
      %p271 = pneg %p270
      // Predicated region
      $region9: #{_lambda_.1} parent=5 // pred_check
        _
      $region10: #{_lambda_.1} parent=5 // pred_check_branch
        %273 = sbr.rel (%p270) target = $region12
      $region11: #{_lambda_.1} parent=5 // pred_region
        %s274 = ssub.s32 %s19, 1
        // Predicated region
        $region13: #{_lambda_.1} parent=11 // pred_check
          %p275 = pneg %p66
        $region14: #{_lambda_.1} parent=11 // pred_check_branch
          %277 = sbr.rel (%p275) target = $region16
        $region15: #{_lambda_.1} parent=11 // pred_region
          _
        $region16: #{_lambda_.1} parent=11 // pred_fallthru
          _
        // Predicated region
        $region17: #{_lambda_.1} parent=11 // pred_check
          %p278 = pneg %p87
        $region18: #{_lambda_.1} parent=11 // pred_check_branch
          %280 = sbr.rel (%p278) target = $region20
        $region19: #{_lambda_.1} parent=11 // pred_region
          _
        $region20: #{_lambda_.1} parent=11 // pred_fallthru
          _
        // Predicated region
        $region21: #{_lambda_.1} parent=11 // pred_check
          %p281 = pneg %p108
        $region22: #{_lambda_.1} parent=11 // pred_check_branch
          %283 = sbr.rel (%p281) target = $region24
        $region23: #{_lambda_.1} parent=11 // pred_region
          _
        $region24: #{_lambda_.1} parent=11 // pred_fallthru
          _
        // Predicated region
        $region25: #{_lambda_.1} parent=11 // pred_check
          %p284 = pneg %p129
        $region26: #{_lambda_.1} parent=11 // pred_check_branch
          %286 = sbr.rel (%p284) target = $region28
        $region27: #{_lambda_.1} parent=11 // pred_region
          _
        $region28: #{_lambda_.1} parent=11 // pred_fallthru
          _
        // Predicated region
        $region29: #{_lambda_.1} parent=11 // pred_check
          %p287 = pneg %p150
        $region30: #{_lambda_.1} parent=11 // pred_check_branch
          %289 = sbr.rel (%p287) target = $region32
        $region31: #{_lambda_.1} parent=11 // pred_region
          _
        $region32: #{_lambda_.1} parent=11 // pred_fallthru
          _
        // Predicated region
        $region33: #{_lambda_.1} parent=11 // pred_check
          %p290 = pneg %p171
        $region34: #{_lambda_.1} parent=11 // pred_check_branch
          %292 = sbr.rel (%p290) target = $region36
        $region35: #{_lambda_.1} parent=11 // pred_region
          _
        $region36: #{_lambda_.1} parent=11 // pred_fallthru
          _
        // Predicated region
        $region37: #{_lambda_.1} parent=11 // pred_check
          %p293 = pneg %p192
        $region38: #{_lambda_.1} parent=11 // pred_check_branch
          %295 = sbr.rel (%p293) target = $region40
        $region39: #{_lambda_.1} parent=11 // pred_region
          _
        $region40: #{_lambda_.1} parent=11 // pred_fallthru
          _
        // Predicated region
        $region41: #{_lambda_.1} parent=11 // pred_check
          %p296 = pneg %p213
        $region42: #{_lambda_.1} parent=11 // pred_check_branch
          %298 = sbr.rel (%p296) target = $region44
        $region43: #{_lambda_.1} parent=11 // pred_region
          _
        $region44: #{_lambda_.1} parent=11 // pred_fallthru
          _
        // Predicated region
        $region45: #{_lambda_.1} parent=11 // pred_check
          %p299 = pneg %p234
        $region46: #{_lambda_.1} parent=11 // pred_check_branch
          %301 = sbr.rel (%p299) target = $region48
        $region47: #{_lambda_.1} parent=11 // pred_region
          _
        $region48: #{_lambda_.1} parent=11 // pred_fallthru
          _
      $region12: #{_lambda_.1} parent=5 // pred_fallthru
        _
      %p302 = scmp.lt.s32.totalorder %s19, 2
      // Predicated region
      $region49: #{_lambda_.1} parent=5 // pred_check
        %p303 = pneg %p302
      $region50: #{_lambda_.1} parent=5 // pred_check_branch
        %305 = sbr.rel (%p303) target = $region52
      $region51: #{_lambda_.1} parent=5 // pred_region
        // Predicated region
        $region53: #{_lambda_.1} parent=51 // pred_check
          %p306 = pneg %p39
        $region54: #{_lambda_.1} parent=51 // pred_check_branch
          %308 = sbr.rel (%p306) target = $region56
        $region55: #{_lambda_.1} parent=51 // pred_region
          %p309 = scmp.lt.s32.totalorder %s19, 1
          %s310 = scalar_select %p309, %s19, 1
          %s311 = smul.addr %s310, 11
          %s312 = smul.addr %s311, 4
          %s313 = scalar_lea.vmem %s0, %s312
        $region56: #{_lambda_.1} parent=51 // pred_fallthru
          _
      $region52: #{_lambda_.1} parent=5 // pred_fallthru
        _
      %p314 = scmp.le.s32.totalorder 1, %s19
      %p315 = scmp.lt.s32.totalorder %s19, 3
      %p316 = pnand %p314, %p315
      %p317 = pneg %p316
      // Predicated region
      $region57: #{_lambda_.1} parent=5 // pred_check
        _
      $region58: #{_lambda_.1} parent=5 // pred_check_branch
        %319 = sbr.rel (%p316) target = $region60
      $region59: #{_lambda_.1} parent=5 // pred_region
        %s320 = ssub.s32 %s19, 1
        %p321 = scmp.lt.s32.totalorder %s24, 1
        %s322 = scalar_select %p321, %s24, 1
        %s323 = smul.addr %s322, 11
        %s324 = smul.addr %s323, 4
        %s325 = scalar_lea.vmem %s0, %s324
        %p326 = pneg %p45
        %p327 = pneg %p42
        %p328 = pneg %p66
        %p329 = pneg %p63
        %p330 = pneg %p87
        %p331 = pneg %p84
        %p332 = pneg %p108
        %p333 = pneg %p105
        %p334 = pneg %p129
        %p335 = pneg %p126
        %p336 = pneg %p150
        %p337 = pneg %p147
        %p338 = pneg %p171
        %p339 = pneg %p168
        %p340 = pneg %p192
        %p341 = pneg %p189
        %p342 = pneg %p213
        %p343 = pneg %p210
        %p344 = pneg %p234
        %p345 = pneg %p231
        %p346 = pneg %p260
        %p347 = pneg %p257
        %s348 = sand.u32 %s247, 1
        %s349 = scalar_lea.sflag [#allocation3], %s348
        %s350 = sand.u32 %s247, 1
        %s351 = scalar_lea.vmem [#allocation2], %s350
        %p352 = scmp.lt.s32.totalorder %s24, 1
        %s353 = scalar_select %p352, %s24, 1
        %s354 = smul.addr %s353, 11
        %s355 = smul.addr %s354, 4
        %s356 = scalar_lea.vmem %s0, %s355
        %v358 = vld [vmem:[%s356] sm:$0xf]
        %v359 = vld [vmem:[%s356 + $0x4] sm:$0xf]
        %v360 = vld [vmem:[%s356 + $0x8] sm:$0xf]
        %v361 = vld [vmem:[%s356 + $0xc] sm:$0xf]
        %v362 = vld [vmem:[%s356 + $0x10] sm:$0xf]
        %v363 = vld [vmem:[%s356 + $0x14] sm:$0xf]
        %v364 = vld [vmem:[%s356 + $0x18] sm:$0xf]
        %v365 = vld [vmem:[%s356 + $0x1c] sm:$0xf]
        %v366 = vld [vmem:[%s356 + $0x20] sm:$0xf]
        %v367 = vld [vmem:[%s356 + $0x24] sm:$0xf]
        %v368 = vld [vmem:[%s356 + $0x28] sm:$0x1]
        %v369 = vld [vmem:[%s1] sm:$0xf]
        %v370 = vld [vmem:[%s1 + $0x4] sm:$0xf]
        %v371 = vld [vmem:[%s1 + $0x8] sm:$0xf]
        %v372 = vld [vmem:[%s1 + $0xc] sm:$0xf]
        %v373 = vld [vmem:[%s1 + $0x10] sm:$0xf]
        %v374 = vld [vmem:[%s1 + $0x14] sm:$0xf]
        %v375 = vld [vmem:[%s1 + $0x18] sm:$0xf]
        %v376 = vld [vmem:[%s1 + $0x1c] sm:$0xf]
        %v377 = vld [vmem:[%s1 + $0x20] sm:$0xf]
        %v378 = vld [vmem:[%s1 + $0x24] sm:$0xf]
        %v379 = vld [vmem:[%s1 + $0x28] sm:$0xf]
        %v380 = vld [vmem:[%s1 + $0x2c] sm:$0xf]
        %v381 = vld [vmem:[%s1 + $0x30] sm:$0xf]
        %v382 = vld [vmem:[%s1 + $0x34] sm:$0xf]
        %v383 = vld [vmem:[%s1 + $0x38] sm:$0xf]
        %v384 = vld [vmem:[%s1 + $0x3c] sm:$0xf]
        %v385 = vld [vmem:[%s2] sm:$0x1]
        %v387 = vlaneseq
        %v388 = vshrl.u32 %v387, 7
        %v389 = vsub.s32 0, %v388
        %v390 = vrot.slane %v385, %v389
        %v403 = vunpack.c.l.b16 %v358
        %v404 = vunpack.c.l.b16 %v359
        %v405 = vunpack.c.l.b16 %v360
        %v406 = vunpack.c.l.b16 %v361
        %v407 = vunpack.c.l.b16 %v362
        %v408 = vunpack.c.l.b16 %v363
        %v409 = vunpack.c.l.b16 %v364
        %v410 = vunpack.c.l.b16 %v365
        %v411 = vunpack.c.l.b16 %v366
        %v412 = vunpack.c.l.b16 %v367
        %v413 = vunpack.c.l.b16 %v368
        %v414 = vpack.c.b16 %v404, %v403
        %v415 = vpack.c.b16 %v406, %v405
        %v416 = vpack.c.b16 %v408, %v407
        %v417 = vpack.c.b16 %v410, %v409
        %v418 = vpack.c.b16 %v412, %v411
        %v419 = vpack.c.b16 %v413, %v413
        %v442 = vunpack.c.l.b16 %v369
        %v443 = vunpack.c.l.b16 %v370
        %v444 = vunpack.c.l.b16 %v371
        %v445 = vunpack.c.l.b16 %v372
        %v446 = vunpack.c.l.b16 %v373
        %v447 = vunpack.c.l.b16 %v374
        %v448 = vunpack.c.l.b16 %v375
        %v449 = vunpack.c.l.b16 %v376
        %v450 = vunpack.c.l.b16 %v377
        %v451 = vunpack.c.l.b16 %v378
        %v452 = vunpack.c.l.b16 %v379
        %v453 = vunpack.c.l.b16 %v380
        %v454 = vunpack.c.l.b16 %v381
        %v455 = vunpack.c.l.b16 %v382
        %v456 = vunpack.c.l.b16 %v383
        %v457 = vunpack.c.l.b16 %v384
        %v458 = vpack.c.b16 %v443, %v442
        %v459 = vpack.c.b16 %v445, %v444
        %v460 = vpack.c.b16 %v447, %v446
        %v461 = vpack.c.b16 %v449, %v448
        %v462 = vpack.c.b16 %v451, %v450
        %v463 = vpack.c.b16 %v453, %v452
        %v464 = vpack.c.b16 %v455, %v454
        %v465 = vpack.c.b16 %v457, %v456
        %474 = vmatprep.subr.bf16.mxu0 0
        %475 = vmatpush1.bf16.msra.mxu0 %v458
        %476 = vmatprep.subr.bf16.mxu0 0
        %477 = vmatpush1.bf16.msra.mxu0 %v459
        %478 = vmatprep.subr.bf16.mxu0 0
        %479 = vmatpush1.bf16.msra.mxu0 %v460
        %480 = vmatprep.subr.bf16.mxu0 0
        %481 = vmatpush1.bf16.msra.mxu0 %v461
        %482 = vmatprep.subr.bf16.mxu0 0
        %483 = vmatpush1.bf16.msra.mxu0 %v462
        %484 = vmatprep.subr.bf16.mxu0 0
        %485 = vmatpush1.bf16.msra.mxu0 %v463
        %486 = vmatprep.subr.bf16.mxu0 0
        %487 = vmatpush1.bf16.msra.mxu0 %v464
        %488 = vmatprep.subr.bf16.mxu0 0
        %489 = vmatpush1.bf16.msra.mxu0 %v465
        %490 = vmatprep.subr.bf16.mxu0 0
        %491 = vmatpush1.bf16.msra.mxu0 0
        %492 = vmatprep.subr.bf16.mxu0 0
        %493 = vmatpush1.bf16.msra.mxu0 0
        %494 = vmatprep.subr.bf16.mxu0 0
        %495 = vmatpush1.bf16.msra.mxu0 0
        %496 = vmatprep.subr.bf16.mxu0 0
        %497 = vmatpush1.bf16.msra.mxu0 0
        %498 = vmatprep.subr.bf16.mxu0 0
        %499 = vmatpush1.bf16.msra.mxu0 0
        %500 = vmatprep.subr.bf16.mxu0 0
        %501 = vmatpush1.bf16.msra.mxu0 0
        %502 = vmatprep.subr.bf16.mxu0 0
        %503 = vmatpush1.bf16.msra.mxu0 0
        %504 = vmatprep.subr.bf16.mxu0 0
        %505 = vmatpush1.bf16.msra.mxu0 0
        %506 = vmatprep.mubr.bf16.mxu0 0
        %507 = vmatmul.mubr.bf16.gmra.mrb[0].mxu0 %v414
        %v508 = vpop.f32.mrb[0].mxu0
        %v509 = vadd.f32 %v390, %v508
        %v510 = vpop.f32.mrb[0].mxu0
        %v511 = vpop.f32.mrb[0].mxu0
        %v512 = vadd.f32 %v390, %v511
        %v513 = vpop.f32.mrb[0].mxu0
        %514 = vmatprep.mubr.bf16.mxu0 0
        %515 = vmatmul.mubr.bf16.gmra.mrb[0].mxu0 %v415
        %v516 = vpop.f32.mrb[0].mxu0
        %v517 = vadd.f32 %v390, %v516
        %v518 = vpop.f32.mrb[0].mxu0
        %v519 = vpop.f32.mrb[0].mxu0
        %v520 = vadd.f32 %v390, %v519
        %v521 = vpop.f32.mrb[0].mxu0
        %522 = vmatprep.mubr.bf16.mxu0 0
        %523 = vmatmul.mubr.bf16.gmra.mrb[0].mxu0 %v416
        %v524 = vpop.f32.mrb[0].mxu0
        %v525 = vadd.f32 %v390, %v524
        %v526 = vpop.f32.mrb[0].mxu0
        %v527 = vpop.f32.mrb[0].mxu0
        %v528 = vadd.f32 %v390, %v527
        %v529 = vpop.f32.mrb[0].mxu0
        %530 = vmatprep.mubr.bf16.mxu0 0
        %531 = vmatmul.mubr.bf16.gmra.mrb[0].mxu0 %v417
        %v532 = vpop.f32.mrb[0].mxu0
        %v533 = vadd.f32 %v390, %v532
        %v534 = vpop.f32.mrb[0].mxu0
        %v535 = vpop.f32.mrb[0].mxu0
        %v536 = vadd.f32 %v390, %v535
        %v537 = vpop.f32.mrb[0].mxu0
        %538 = vmatprep.mubr.bf16.mxu0 0
        %539 = vmatmul.mubr.bf16.gmra.mrb[0].mxu0 %v418
        %v540 = vpop.f32.mrb[0].mxu0
        %v541 = vadd.f32 %v390, %v540
        %v542 = vpop.f32.mrb[0].mxu0
        %v543 = vpop.f32.mrb[0].mxu0
        %v544 = vadd.f32 %v390, %v543
        %v545 = vpop.f32.mrb[0].mxu0
        %546 = vmatprep.mubr.bf16.mxu0 0
        %547 = vmatmul.mubr.bf16.gmra.mrb[0].mxu0 %v419
        %v548 = vpop.f32.mrb[0].mxu0
        %v549 = vadd.f32 %v390, %v548
        %v550 = vpop.f32.mrb[0].mxu0
        %v551 = vpop.f32.mrb[0].mxu0
        %v552 = vpop.f32.mrb[0].mxu0
        %553 = vdwg.mxu0
        %v554 = vmax.f32 %v509, 0.0
        %v555 = vmax.f32 %v512, 0.0
        %v556 = vmax.f32 %v517, 0.0
        %v557 = vmax.f32 %v520, 0.0
        %v558 = vmax.f32 %v525, 0.0
        %v559 = vmax.f32 %v528, 0.0
        %v560 = vmax.f32 %v533, 0.0
        %v561 = vmax.f32 %v536, 0.0
        %v562 = vmax.f32 %v541, 0.0
        %v563 = vmax.f32 %v544, 0.0
        %v564 = vmax.f32 %v549, 0.0
        %v565 = vpack.c.bf16 %v555, %v554
        %v566 = vpack.c.bf16 %v557, %v556
        %v567 = vpack.c.bf16 %v559, %v558
        %v568 = vpack.c.bf16 %v561, %v560
        %v569 = vpack.c.bf16 %v563, %v562
        %v570 = vpack.c.bf16 %v564, %v564
        %s571 = scalar_lea.vmem %s1, 64
        %v572 = vld [vmem:[%s571] sm:$0xf]
        %v573 = vld [vmem:[%s571 + $0x4] sm:$0xf]
        %v574 = vld [vmem:[%s571 + $0x8] sm:$0xf]
        %v575 = vld [vmem:[%s571 + $0xc] sm:$0xf]
        %v576 = vld [vmem:[%s571 + $0x10] sm:$0xf]
        %v577 = vld [vmem:[%s571 + $0x14] sm:$0xf]
        %v578 = vld [vmem:[%s571 + $0x18] sm:$0xf]
        %v579 = vld [vmem:[%s571 + $0x1c] sm:$0xf]
        %v580 = vld [vmem:[%s571 + $0x20] sm:$0xf]
        %v581 = vld [vmem:[%s571 + $0x24] sm:$0xf]
        %v582 = vld [vmem:[%s571 + $0x28] sm:$0xf]
        %v583 = vld [vmem:[%s571 + $0x2c] sm:$0xf]
        %v584 = vld [vmem:[%s571 + $0x30] sm:$0xf]
        %v585 = vld [vmem:[%s571 + $0x34] sm:$0xf]
        %v586 = vld [vmem:[%s571 + $0x38] sm:$0xf]
        %v587 = vld [vmem:[%s571 + $0x3c] sm:$0xf]
        %s588 = scalar_lea.vmem %s2, 1
        %v589 = vld [vmem:[%s588] sm:$0x1]
        %v591 = vlaneseq
        %v592 = vshrl.u32 %v591, 7
        %v593 = vsub.s32 0, %v592
        %v594 = vrot.slane %v589, %v593
        %v612 = vunpack.c.l.b16 %v572
        %v613 = vunpack.c.l.b16 %v573
        %v614 = vunpack.c.l.b16 %v574
        %v615 = vunpack.c.l.b16 %v575
        %v616 = vunpack.c.l.b16 %v576
        %v617 = vunpack.c.l.b16 %v577
        %v618 = vunpack.c.l.b16 %v578
        %v619 = vunpack.c.l.b16 %v579
        %v620 = vunpack.c.l.b16 %v580
        %v621 = vunpack.c.l.b16 %v581
        %v622 = vunpack.c.l.b16 %v582
        %v623 = vunpack.c.l.b16 %v583
        %v624 = vunpack.c.l.b16 %v584
        %v625 = vunpack.c.l.b16 %v585
        %v626 = vunpack.c.l.b16 %v586
        %v627 = vunpack.c.l.b16 %v587
        %v628 = vpack.c.b16 %v613, %v612
        %v629 = vpack.c.b16 %v615, %v614
        %v630 = vpack.c.b16 %v617, %v616
        %v631 = vpack.c.b16 %v619, %v618
        %v632 = vpack.c.b16 %v621, %v620
        %v633 = vpack.c.b16 %v623, %v622
        %v634 = vpack.c.b16 %v625, %v624
        %v635 = vpack.c.b16 %v627, %v626
        %644 = vmatprep.subr.bf16.mxu0 0
        %645 = vmatpush1.bf16.msra.mxu0 %v628
        %646 = vmatprep.subr.bf16.mxu0 0
        %647 = vmatpush1.bf16.msra.mxu0 %v629
        %648 = vmatprep.subr.bf16.mxu0 0
        %649 = vmatpush1.bf16.msra.mxu0 %v630
        %650 = vmatprep.subr.bf16.mxu0 0
        %651 = vmatpush1.bf16.msra.mxu0 %v631
        %652 = vmatprep.subr.bf16.mxu0 0
        %653 = vmatpush1.bf16.msra.mxu0 %v632
        %654 = vmatprep.subr.bf16.mxu0 0
        %655 = vmatpush1.bf16.msra.mxu0 %v633
        %656 = vmatprep.subr.bf16.mxu0 0
        %657 = vmatpush1.bf16.msra.mxu0 %v634
        %658 = vmatprep.subr.bf16.mxu0 0
        %659 = vmatpush1.bf16.msra.mxu0 %v635
        %660 = vmatprep.subr.bf16.mxu0 0
        %661 = vmatpush1.bf16.msra.mxu0 0
        %662 = vmatprep.subr.bf16.mxu0 0
        %663 = vmatpush1.bf16.msra.mxu0 0
        %664 = vmatprep.subr.bf16.mxu0 0
        %665 = vmatpush1.bf16.msra.mxu0 0
        %666 = vmatprep.subr.bf16.mxu0 0
        %667 = vmatpush1.bf16.msra.mxu0 0
        %668 = vmatprep.subr.bf16.mxu0 0
        %669 = vmatpush1.bf16.msra.mxu0 0
        %670 = vmatprep.subr.bf16.mxu0 0
        %671 = vmatpush1.bf16.msra.mxu0 0
        %672 = vmatprep.subr.bf16.mxu0 0
        %673 = vmatpush1.bf16.msra.mxu0 0
        %674 = vmatprep.subr.bf16.mxu0 0
        %675 = vmatpush1.bf16.msra.mxu0 0
        %676 = vmatprep.mubr.bf16.mxu0 0
        %677 = vmatmul.mubr.bf16.gmra.mrb[0].mxu0 %v565
        %v678 = vpop.f32.mrb[0].mxu0
        %v679 = vadd.f32 %v594, %v678
        %v680 = vpop.f32.mrb[0].mxu0
        %v681 = vpop.f32.mrb[0].mxu0
        %v682 = vadd.f32 %v594, %v681
        %v683 = vpop.f32.mrb[0].mxu0
        %684 = vmatprep.mubr.bf16.mxu0 0
        %685 = vmatmul.mubr.bf16.gmra.mrb[0].mxu0 %v566
        %v686 = vpop.f32.mrb[0].mxu0
        %v687 = vadd.f32 %v594, %v686
        %v688 = vpop.f32.mrb[0].mxu0
        %v689 = vpop.f32.mrb[0].mxu0
        %v690 = vadd.f32 %v594, %v689
        %v691 = vpop.f32.mrb[0].mxu0
        %692 = vmatprep.mubr.bf16.mxu0 0
        %693 = vmatmul.mubr.bf16.gmra.mrb[0].mxu0 %v567
        %v694 = vpop.f32.mrb[0].mxu0
        %v695 = vadd.f32 %v594, %v694
        %v696 = vpop.f32.mrb[0].mxu0
        %v697 = vpop.f32.mrb[0].mxu0
        %v698 = vadd.f32 %v594, %v697
        %v699 = vpop.f32.mrb[0].mxu0
        %700 = vmatprep.mubr.bf16.mxu0 0
        %701 = vmatmul.mubr.bf16.gmra.mrb[0].mxu0 %v568
        %v702 = vpop.f32.mrb[0].mxu0
        %v703 = vadd.f32 %v594, %v702
        %v704 = vpop.f32.mrb[0].mxu0
        %v705 = vpop.f32.mrb[0].mxu0
        %v706 = vadd.f32 %v594, %v705
        %v707 = vpop.f32.mrb[0].mxu0
        %708 = vmatprep.mubr.bf16.mxu0 0
        %709 = vmatmul.mubr.bf16.gmra.mrb[0].mxu0 %v569
        %v710 = vpop.f32.mrb[0].mxu0
        %v711 = vadd.f32 %v594, %v710
        %v712 = vpop.f32.mrb[0].mxu0
        %v713 = vpop.f32.mrb[0].mxu0
        %v714 = vadd.f32 %v594, %v713
        %v715 = vpop.f32.mrb[0].mxu0
        %716 = vmatprep.mubr.bf16.mxu0 0
        %717 = vmatmul.mubr.bf16.gmra.mrb[0].mxu0 %v570
        %v718 = vpop.f32.mrb[0].mxu0
        %v719 = vadd.f32 %v594, %v718
        %v720 = vpop.f32.mrb[0].mxu0
        %v721 = vpop.f32.mrb[0].mxu0
        %v722 = vpop.f32.mrb[0].mxu0
        %723 = vdwg.mxu0
        %v724 = vmax.f32 %v679, 0.0
        %v725 = vmax.f32 %v682, 0.0
        %v726 = vmax.f32 %v687, 0.0
        %v727 = vmax.f32 %v690, 0.0
        %v728 = vmax.f32 %v695, 0.0
        %v729 = vmax.f32 %v698, 0.0
        %v730 = vmax.f32 %v703, 0.0
        %v731 = vmax.f32 %v706, 0.0
        %v732 = vmax.f32 %v711, 0.0
        %v733 = vmax.f32 %v714, 0.0
        %v734 = vmax.f32 %v719, 0.0
        %v735 = vpack.c.bf16 %v725, %v724
        %v736 = vpack.c.bf16 %v727, %v726
        %v737 = vpack.c.bf16 %v729, %v728
        %v738 = vpack.c.bf16 %v731, %v730
        %v739 = vpack.c.bf16 %v733, %v732
        %v740 = vpack.c.bf16 %v734, %v734
        %s741 = scalar_lea.vmem %s1, 128
        %v742 = vld [vmem:[%s741] sm:$0xf]
        %v743 = vld [vmem:[%s741 + $0x4] sm:$0xf]
        %v744 = vld [vmem:[%s741 + $0x8] sm:$0xf]
        %v745 = vld [vmem:[%s741 + $0xc] sm:$0xf]
        %v746 = vld [vmem:[%s741 + $0x10] sm:$0xf]
        %v747 = vld [vmem:[%s741 + $0x14] sm:$0xf]
        %v748 = vld [vmem:[%s741 + $0x18] sm:$0xf]
        %v749 = vld [vmem:[%s741 + $0x1c] sm:$0xf]
        %v750 = vld [vmem:[%s741 + $0x20] sm:$0xf]
        %v751 = vld [vmem:[%s741 + $0x24] sm:$0xf]
        %v752 = vld [vmem:[%s741 + $0x28] sm:$0xf]
        %v753 = vld [vmem:[%s741 + $0x2c] sm:$0xf]
        %v754 = vld [vmem:[%s741 + $0x30] sm:$0xf]
        %v755 = vld [vmem:[%s741 + $0x34] sm:$0xf]
        %v756 = vld [vmem:[%s741 + $0x38] sm:$0xf]
        %v757 = vld [vmem:[%s741 + $0x3c] sm:$0xf]
        %s758 = scalar_lea.vmem %s2, 2
        %v759 = vld [vmem:[%s758] sm:$0x1]
        %v761 = vlaneseq
        %v762 = vshrl.u32 %v761, 7
        %v763 = vsub.s32 0, %v762
        %v764 = vrot.slane %v759, %v763
        %v782 = vunpack.c.l.b16 %v742
        %v783 = vunpack.c.l.b16 %v743
        %v784 = vunpack.c.l.b16 %v744
        %v785 = vunpack.c.l.b16 %v745
        %v786 = vunpack.c.l.b16 %v746
        %v787 = vunpack.c.l.b16 %v747
        %v788 = vunpack.c.l.b16 %v748
        %v789 = vunpack.c.l.b16 %v749
        %v790 = vunpack.c.l.b16 %v750
        %v791 = vunpack.c.l.b16 %v751
        %v792 = vunpack.c.l.b16 %v752
        %v793 = vunpack.c.l.b16 %v753
        %v794 = vunpack.c.l.b16 %v754
        %v795 = vunpack.c.l.b16 %v755
        %v796 = vunpack.c.l.b16 %v756
        %v797 = vunpack.c.l.b16 %v757
        %v798 = vpack.c.b16 %v783, %v782
        %v799 = vpack.c.b16 %v785, %v784
        %v800 = vpack.c.b16 %v787, %v786
        %v801 = vpack.c.b16 %v789, %v788
        %v802 = vpack.c.b16 %v791, %v790
        %v803 = vpack.c.b16 %v793, %v792
        %v804 = vpack.c.b16 %v795, %v794
        %v805 = vpack.c.b16 %v797, %v796
        %814 = vmatprep.subr.bf16.mxu0 0
        %815 = vmatpush1.bf16.msra.mxu0 %v798
        %816 = vmatprep.subr.bf16.mxu0 0
        %817 = vmatpush1.bf16.msra.mxu0 %v799
        %818 = vmatprep.subr.bf16.mxu0 0
        %819 = vmatpush1.bf16.msra.mxu0 %v800
        %820 = vmatprep.subr.bf16.mxu0 0
        %821 = vmatpush1.bf16.msra.mxu0 %v801
        %822 = vmatprep.subr.bf16.mxu0 0
        %823 = vmatpush1.bf16.msra.mxu0 %v802
        %824 = vmatprep.subr.bf16.mxu0 0
        %825 = vmatpush1.bf16.msra.mxu0 %v803
        %826 = vmatprep.subr.bf16.mxu0 0
        %827 = vmatpush1.bf16.msra.mxu0 %v804
        %828 = vmatprep.subr.bf16.mxu0 0
        %829 = vmatpush1.bf16.msra.mxu0 %v805
        %830 = vmatprep.subr.bf16.mxu0 0
        %831 = vmatpush1.bf16.msra.mxu0 0
        %832 = vmatprep.subr.bf16.mxu0 0
        %833 = vmatpush1.bf16.msra.mxu0 0
        %834 = vmatprep.subr.bf16.mxu0 0
        %835 = vmatpush1.bf16.msra.mxu0 0
        %836 = vmatprep.subr.bf16.mxu0 0
        %837 = vmatpush1.bf16.msra.mxu0 0
        %838 = vmatprep.subr.bf16.mxu0 0
        %839 = vmatpush1.bf16.msra.mxu0 0
        %840 = vmatprep.subr.bf16.mxu0 0
        %841 = vmatpush1.bf16.msra.mxu0 0
        %842 = vmatprep.subr.bf16.mxu0 0
        %843 = vmatpush1.bf16.msra.mxu0 0
        %844 = vmatprep.subr.bf16.mxu0 0
        %845 = vmatpush1.bf16.msra.mxu0 0
        %846 = vmatprep.mubr.bf16.mxu0 0
        %847 = vmatmul.mubr.bf16.gmra.mrb[0].mxu0 %v735
        %v848 = vpop.f32.mrb[0].mxu0
        %v849 = vadd.f32 %v764, %v848
        %v850 = vpop.f32.mrb[0].mxu0
        %v851 = vpop.f32.mrb[0].mxu0
        %v852 = vadd.f32 %v764, %v851
        %v853 = vpop.f32.mrb[0].mxu0
        %854 = vmatprep.mubr.bf16.mxu0 0
        %855 = vmatmul.mubr.bf16.gmra.mrb[0].mxu0 %v736
        %v856 = vpop.f32.mrb[0].mxu0
        %v857 = vadd.f32 %v764, %v856
        %v858 = vpop.f32.mrb[0].mxu0
        %v859 = vpop.f32.mrb[0].mxu0
        %v860 = vadd.f32 %v764, %v859
        %v861 = vpop.f32.mrb[0].mxu0
        %862 = vmatprep.mubr.bf16.mxu0 0
        %863 = vmatmul.mubr.bf16.gmra.mrb[0].mxu0 %v737
        %v864 = vpop.f32.mrb[0].mxu0
        %v865 = vadd.f32 %v764, %v864
        %v866 = vpop.f32.mrb[0].mxu0
        %v867 = vpop.f32.mrb[0].mxu0
        %v868 = vadd.f32 %v764, %v867
        %v869 = vpop.f32.mrb[0].mxu0
        %870 = vmatprep.mubr.bf16.mxu0 0
        %871 = vmatmul.mubr.bf16.gmra.mrb[0].mxu0 %v738
        %v872 = vpop.f32.mrb[0].mxu0
        %v873 = vadd.f32 %v764, %v872
        %v874 = vpop.f32.mrb[0].mxu0
        %v875 = vpop.f32.mrb[0].mxu0
        %v876 = vadd.f32 %v764, %v875
        %v877 = vpop.f32.mrb[0].mxu0
        %878 = vmatprep.mubr.bf16.mxu0 0
        %879 = vmatmul.mubr.bf16.gmra.mrb[0].mxu0 %v739
        %v880 = vpop.f32.mrb[0].mxu0
        %v881 = vadd.f32 %v764, %v880
        %v882 = vpop.f32.mrb[0].mxu0
        %v883 = vpop.f32.mrb[0].mxu0
        %v884 = vadd.f32 %v764, %v883
        %v885 = vpop.f32.mrb[0].mxu0
        %886 = vmatprep.mubr.bf16.mxu0 0
        %887 = vmatmul.mubr.bf16.gmra.mrb[0].mxu0 %v740
        %v888 = vpop.f32.mrb[0].mxu0
        %v889 = vadd.f32 %v764, %v888
        %v890 = vpop.f32.mrb[0].mxu0
        %v891 = vpop.f32.mrb[0].mxu0
        %v892 = vpop.f32.mrb[0].mxu0
        %893 = vdwg.mxu0
        %v894 = vmax.f32 %v849, 0.0
        %v895 = vmax.f32 %v852, 0.0
        %v896 = vmax.f32 %v857, 0.0
        %v897 = vmax.f32 %v860, 0.0
        %v898 = vmax.f32 %v865, 0.0
        %v899 = vmax.f32 %v868, 0.0
        %v900 = vmax.f32 %v873, 0.0
        %v901 = vmax.f32 %v876, 0.0
        %v902 = vmax.f32 %v881, 0.0
        %v903 = vmax.f32 %v884, 0.0
        %v904 = vmax.f32 %v889, 0.0
        %v905 = vpack.c.bf16 %v895, %v894
        %v906 = vpack.c.bf16 %v897, %v896
        %v907 = vpack.c.bf16 %v899, %v898
        %v908 = vpack.c.bf16 %v901, %v900
        %v909 = vpack.c.bf16 %v903, %v902
        %v910 = vpack.c.bf16 %v904, %v904
        %v911 = vld [vmem:[%s5] sm:$0xf]
        %v912 = vld [vmem:[%s5 + $0x4] sm:$0xf]
        %v913 = vld [vmem:[%s5 + $0x8] sm:$0xf]
        %v914 = vld [vmem:[%s5 + $0xc] sm:$0x1]
        %v919 = vunpack.c.l.b16 %v911
        %v920 = vunpack.c.l.b16 %v912
        %v921 = vunpack.c.l.b16 %v913
        %v922 = vunpack.c.l.b16 %v914
        %v923 = vpack.c.b16 %v920, %v919
        %v924 = vpack.c.b16 %v922, %v921
        %vm925 = vcmask 662528
        %v927 = vsel %vm925, %v923, 0
        %v930 = vsel %vm925, %v924, 0
        %vm932 = vcmask 1040384
        %v933 = vsel 0, 4294967295, 65535
        %v934 = vsel %vm932, %v933, 0
        %v936 = vand.u32 %v910, %v934
        %938 = vmatprep.subr.bf16.mxu0 0
        %939 = vmatpush1.bf16.msra.mxu0 %v905
        %940 = vmatprep.subr.bf16.mxu0 0
        %941 = vmatpush1.bf16.msra.mxu0 %v906
        %942 = vmatprep.subr.bf16.mxu0 0
        %943 = vmatpush1.bf16.msra.mxu0 %v907
        %944 = vmatprep.subr.bf16.mxu0 0
        %945 = vmatpush1.bf16.msra.mxu0 %v908
        %946 = vmatprep.subr.bf16.mxu0 0
        %947 = vmatpush1.bf16.msra.mxu0 %v909
        %948 = vmatprep.subr.bf16.mxu0 0
        %949 = vmatpush1.bf16.msra.mxu0 %v936
        %950 = vmatprep.subr.bf16.mxu0 0
        %951 = vmatpush1.bf16.msra.mxu0 0
        %952 = vmatprep.subr.bf16.mxu0 0
        %953 = vmatpush1.bf16.msra.mxu0 0
        %954 = vmatprep.subr.bf16.mxu0 0
        %955 = vmatpush1.bf16.msra.mxu0 0
        %956 = vmatprep.subr.bf16.mxu0 0
        %957 = vmatpush1.bf16.msra.mxu0 0
        %958 = vmatprep.subr.bf16.mxu0 0
        %959 = vmatpush1.bf16.msra.mxu0 0
        %960 = vmatprep.subr.bf16.mxu0 0
        %961 = vmatpush1.bf16.msra.mxu0 0
        %962 = vmatprep.subr.bf16.mxu0 0
        %963 = vmatpush1.bf16.msra.mxu0 0
        %964 = vmatprep.subr.bf16.mxu0 0
        %965 = vmatpush1.bf16.msra.mxu0 0
        %966 = vmatprep.subr.bf16.mxu0 0
        %967 = vmatpush1.bf16.msra.mxu0 0
        %968 = vmatprep.subr.bf16.mxu0 0
        %969 = vmatpush1.bf16.msra.mxu0 0
        %970 = vmatprep.mubr.bf16.mxu0 0
        %971 = vmatmul.mubr.bf16.gmra.mrb[0].mxu0 %v927
        %v972 = vpop.f32.mrb[0].mxu0
        %v973 = vadd.f32 0.0, %v972
        %v974 = vpop.f32.mrb[0].mxu0
        %v975 = vpop.f32.mrb[0].mxu0
        %v976 = vadd.f32 0.0, %v975
        %v977 = vpop.f32.mrb[0].mxu0
        %978 = vmatprep.mubr.bf16.mxu0 0
        %979 = vmatmul.mubr.bf16.gmra.mrb[0].mxu0 %v930
        %v980 = vpop.f32.mrb[0].mxu0
        %v981 = vadd.f32 0.0, %v980
        %v982 = vpop.f32.mrb[0].mxu0
        %v983 = vpop.f32.mrb[0].mxu0
        %v984 = vadd.f32 0.0, %v983
        %v985 = vpop.f32.mrb[0].mxu0
        %986 = vdwg.mxu0
        %s987 = scalar_lea.vmem %s5, 16
        %v988 = vld [vmem:[%s987] sm:$0xf]
        %v989 = vld [vmem:[%s987 + $0x4] sm:$0xf]
        %v990 = vld [vmem:[%s987 + $0x8] sm:$0xf]
        %v991 = vld [vmem:[%s987 + $0xc] sm:$0x1]
        %v996 = vunpack.c.l.b16 %v988
        %v997 = vunpack.c.l.b16 %v989
        %v998 = vunpack.c.l.b16 %v990
        %v999 = vunpack.c.l.b16 %v991
        %v1000 = vpack.c.b16 %v997, %v996
        %v1001 = vpack.c.b16 %v999, %v998
        %v1003 = vsel %vm925, %v1000, 0
        %v1006 = vsel %vm925, %v1001, 0
        %1008 = vmatprep.subr.bf16.mxu0 0
        %1009 = vmatpush1.bf16.msra.mxu0 %v905
        %1010 = vmatprep.subr.bf16.mxu0 0
        %1011 = vmatpush1.bf16.msra.mxu0 %v906
        %1012 = vmatprep.subr.bf16.mxu0 0
        %1013 = vmatpush1.bf16.msra.mxu0 %v907
        %1014 = vmatprep.subr.bf16.mxu0 0
        %1015 = vmatpush1.bf16.msra.mxu0 %v908
        %1016 = vmatprep.subr.bf16.mxu0 0
        %1017 = vmatpush1.bf16.msra.mxu0 %v909
        %1018 = vmatprep.subr.bf16.mxu0 0
        %1019 = vmatpush1.bf16.msra.mxu0 %v936
        %1020 = vmatprep.subr.bf16.mxu0 0
        %1021 = vmatpush1.bf16.msra.mxu0 0
        %1022 = vmatprep.subr.bf16.mxu0 0
        %1023 = vmatpush1.bf16.msra.mxu0 0
        %1024 = vmatprep.subr.bf16.mxu0 0
        %1025 = vmatpush1.bf16.msra.mxu0 0
        %1026 = vmatprep.subr.bf16.mxu0 0
        %1027 = vmatpush1.bf16.msra.mxu0 0
        %1028 = vmatprep.subr.bf16.mxu0 0
        %1029 = vmatpush1.bf16.msra.mxu0 0
        %1030 = vmatprep.subr.bf16.mxu0 0
        %1031 = vmatpush1.bf16.msra.mxu0 0
        %1032 = vmatprep.subr.bf16.mxu0 0
        %1033 = vmatpush1.bf16.msra.mxu0 0
        %1034 = vmatprep.subr.bf16.mxu0 0
        %1035 = vmatpush1.bf16.msra.mxu0 0
        %1036 = vmatprep.subr.bf16.mxu0 0
        %1037 = vmatpush1.bf16.msra.mxu0 0
        %1038 = vmatprep.subr.bf16.mxu0 0
        %1039 = vmatpush1.bf16.msra.mxu0 0
        %1040 = vmatprep.mubr.bf16.mxu0 0
        %1041 = vmatmul.mubr.bf16.gmra.mrb[0].mxu0 %v1003
        %v1042 = vpop.f32.mrb[0].mxu0
        %v1043 = vadd.f32 0.0, %v1042
        %v1044 = vpop.f32.mrb[0].mxu0
        %v1045 = vpop.f32.mrb[0].mxu0
        %v1046 = vadd.f32 0.0, %v1045
        %v1047 = vpop.f32.mrb[0].mxu0
        %1048 = vmatprep.mubr.bf16.mxu0 0
        %1049 = vmatmul.mubr.bf16.gmra.mrb[0].mxu0 %v1006
        %v1050 = vpop.f32.mrb[0].mxu0
        %v1051 = vadd.f32 0.0, %v1050
        %v1052 = vpop.f32.mrb[0].mxu0
        %v1053 = vpop.f32.mrb[0].mxu0
        %v1054 = vadd.f32 0.0, %v1053
        %v1055 = vpop.f32.mrb[0].mxu0
        %1056 = vdwg.mxu0
        %s1057 = scalar_lea.vmem %s5, 32
        %v1058 = vld [vmem:[%s1057] sm:$0xf]
        %v1059 = vld [vmem:[%s1057 + $0x4] sm:$0xf]
        %v1060 = vld [vmem:[%s1057 + $0x8] sm:$0xf]
        %v1061 = vld [vmem:[%s1057 + $0xc] sm:$0x1]
        %v1066 = vunpack.c.l.b16 %v1058
        %v1067 = vunpack.c.l.b16 %v1059
        %v1068 = vunpack.c.l.b16 %v1060
        %v1069 = vunpack.c.l.b16 %v1061
        %v1070 = vpack.c.b16 %v1067, %v1066
        %v1071 = vpack.c.b16 %v1069, %v1068
        %v1073 = vsel %vm925, %v1070, 0
        %v1076 = vsel %vm925, %v1071, 0
        %1078 = vmatprep.subr.bf16.mxu0 0
        %1079 = vmatpush1.bf16.msra.mxu0 %v905
        %1080 = vmatprep.subr.bf16.mxu0 0
        %1081 = vmatpush1.bf16.msra.mxu0 %v906
        %1082 = vmatprep.subr.bf16.mxu0 0
        %1083 = vmatpush1.bf16.msra.mxu0 %v907
        %1084 = vmatprep.subr.bf16.mxu0 0
        %1085 = vmatpush1.bf16.msra.mxu0 %v908
        %1086 = vmatprep.subr.bf16.mxu0 0
        %1087 = vmatpush1.bf16.msra.mxu0 %v909
        %1088 = vmatprep.subr.bf16.mxu0 0
        %1089 = vmatpush1.bf16.msra.mxu0 %v936
        %1090 = vmatprep.subr.bf16.mxu0 0
        %1091 = vmatpush1.bf16.msra.mxu0 0
        %1092 = vmatprep.subr.bf16.mxu0 0
        %1093 = vmatpush1.bf16.msra.mxu0 0
        %1094 = vmatprep.subr.bf16.mxu0 0
        %1095 = vmatpush1.bf16.msra.mxu0 0
        %1096 = vmatprep.subr.bf16.mxu0 0
        %1097 = vmatpush1.bf16.msra.mxu0 0
        %1098 = vmatprep.subr.bf16.mxu0 0
        %1099 = vmatpush1.bf16.msra.mxu0 0
        %1100 = vmatprep.subr.bf16.mxu0 0
        %1101 = vmatpush1.bf16.msra.mxu0 0
        %1102 = vmatprep.subr.bf16.mxu0 0
        %1103 = vmatpush1.bf16.msra.mxu0 0
        %1104 = vmatprep.subr.bf16.mxu0 0
        %1105 = vmatpush1.bf16.msra.mxu0 0
        %1106 = vmatprep.subr.bf16.mxu0 0
        %1107 = vmatpush1.bf16.msra.mxu0 0
        %1108 = vmatprep.subr.bf16.mxu0 0
        %1109 = vmatpush1.bf16.msra.mxu0 0
        %1110 = vmatprep.mubr.bf16.mxu0 0
        %1111 = vmatmul.mubr.bf16.gmra.mrb[0].mxu0 %v1073
        %v1112 = vpop.f32.mrb[0].mxu0
        %v1113 = vadd.f32 0.0, %v1112
        %v1114 = vpop.f32.mrb[0].mxu0
        %v1115 = vpop.f32.mrb[0].mxu0
        %v1116 = vadd.f32 0.0, %v1115
        %v1117 = vpop.f32.mrb[0].mxu0
        %1118 = vmatprep.mubr.bf16.mxu0 0
        %1119 = vmatmul.mubr.bf16.gmra.mrb[0].mxu0 %v1076
        %v1120 = vpop.f32.mrb[0].mxu0
        %v1121 = vadd.f32 0.0, %v1120
        %v1122 = vpop.f32.mrb[0].mxu0
        %v1123 = vpop.f32.mrb[0].mxu0
        %v1124 = vadd.f32 0.0, %v1123
        %v1125 = vpop.f32.mrb[0].mxu0
        %1126 = vdwg.mxu0
        %s1127 = scalar_lea.vmem %s5, 48
        %v1128 = vld [vmem:[%s1127] sm:$0xf]
        %v1129 = vld [vmem:[%s1127 + $0x4] sm:$0xf]
        %v1130 = vld [vmem:[%s1127 + $0x8] sm:$0xf]
        %v1131 = vld [vmem:[%s1127 + $0xc] sm:$0x1]
        %v1136 = vunpack.c.l.b16 %v1128
        %v1137 = vunpack.c.l.b16 %v1129
        %v1138 = vunpack.c.l.b16 %v1130
        %v1139 = vunpack.c.l.b16 %v1131
        %v1140 = vpack.c.b16 %v1137, %v1136
        %v1141 = vpack.c.b16 %v1139, %v1138
        %v1143 = vsel %vm925, %v1140, 0
        %v1146 = vsel %vm925, %v1141, 0
        %1148 = vmatprep.subr.bf16.mxu0 0
        %1149 = vmatpush1.bf16.msra.mxu0 %v905
        %1150 = vmatprep.subr.bf16.mxu0 0
        %1151 = vmatpush1.bf16.msra.mxu0 %v906
        %1152 = vmatprep.subr.bf16.mxu0 0
        %1153 = vmatpush1.bf16.msra.mxu0 %v907
        %1154 = vmatprep.subr.bf16.mxu0 0
        %1155 = vmatpush1.bf16.msra.mxu0 %v908
        %1156 = vmatprep.subr.bf16.mxu0 0
        %1157 = vmatpush1.bf16.msra.mxu0 %v909
        %1158 = vmatprep.subr.bf16.mxu0 0
        %1159 = vmatpush1.bf16.msra.mxu0 %v936
        %1160 = vmatprep.subr.bf16.mxu0 0
        %1161 = vmatpush1.bf16.msra.mxu0 0
        %1162 = vmatprep.subr.bf16.mxu0 0
        %1163 = vmatpush1.bf16.msra.mxu0 0
        %1164 = vmatprep.subr.bf16.mxu0 0
        %1165 = vmatpush1.bf16.msra.mxu0 0
        %1166 = vmatprep.subr.bf16.mxu0 0
        %1167 = vmatpush1.bf16.msra.mxu0 0
        %1168 = vmatprep.subr.bf16.mxu0 0
        %1169 = vmatpush1.bf16.msra.mxu0 0
        %1170 = vmatprep.subr.bf16.mxu0 0
        %1171 = vmatpush1.bf16.msra.mxu0 0
        %1172 = vmatprep.subr.bf16.mxu0 0
        %1173 = vmatpush1.bf16.msra.mxu0 0
        %1174 = vmatprep.subr.bf16.mxu0 0
        %1175 = vmatpush1.bf16.msra.mxu0 0
        %1176 = vmatprep.subr.bf16.mxu0 0
        %1177 = vmatpush1.bf16.msra.mxu0 0
        %1178 = vmatprep.subr.bf16.mxu0 0
        %1179 = vmatpush1.bf16.msra.mxu0 0
        %1180 = vmatprep.mubr.bf16.mxu0 0
        %1181 = vmatmul.mubr.bf16.gmra.mrb[0].mxu0 %v1143
        %v1182 = vpop.f32.mrb[0].mxu0
        %v1183 = vadd.f32 0.0, %v1182
        %v1184 = vpop.f32.mrb[0].mxu0
        %v1185 = vpop.f32.mrb[0].mxu0
        %v1186 = vadd.f32 0.0, %v1185
        %v1187 = vpop.f32.mrb[0].mxu0
        %1188 = vmatprep.mubr.bf16.mxu0 0
        %1189 = vmatmul.mubr.bf16.gmra.mrb[0].mxu0 %v1146
        %v1190 = vpop.f32.mrb[0].mxu0
        %v1191 = vadd.f32 0.0, %v1190
        %v1192 = vpop.f32.mrb[0].mxu0
        %v1193 = vpop.f32.mrb[0].mxu0
        %v1194 = vadd.f32 0.0, %v1193
        %v1195 = vpop.f32.mrb[0].mxu0
        %1196 = vdwg.mxu0
        %s1197 = scalar_lea.vmem %s5, 64
        %v1198 = vld [vmem:[%s1197] sm:$0xf]
        %v1199 = vld [vmem:[%s1197 + $0x4] sm:$0xf]
        %v1200 = vld [vmem:[%s1197 + $0x8] sm:$0xf]
        %v1201 = vld [vmem:[%s1197 + $0xc] sm:$0x1]
        %v1206 = vunpack.c.l.b16 %v1198
        %v1207 = vunpack.c.l.b16 %v1199
        %v1208 = vunpack.c.l.b16 %v1200
        %v1209 = vunpack.c.l.b16 %v1201
        %v1210 = vpack.c.b16 %v1207, %v1206
        %v1211 = vpack.c.b16 %v1209, %v1208
        %v1213 = vsel %vm925, %v1210, 0
        %v1216 = vsel %vm925, %v1211, 0
        %1218 = vmatprep.subr.bf16.mxu0 0
        %1219 = vmatpush1.bf16.msra.mxu0 %v905
        %1220 = vmatprep.subr.bf16.mxu0 0
        %1221 = vmatpush1.bf16.msra.mxu0 %v906
        %1222 = vmatprep.subr.bf16.mxu0 0
        %1223 = vmatpush1.bf16.msra.mxu0 %v907
        %1224 = vmatprep.subr.bf16.mxu0 0
        %1225 = vmatpush1.bf16.msra.mxu0 %v908
        %1226 = vmatprep.subr.bf16.mxu0 0
        %1227 = vmatpush1.bf16.msra.mxu0 %v909
        %1228 = vmatprep.subr.bf16.mxu0 0
        %1229 = vmatpush1.bf16.msra.mxu0 %v936
        %1230 = vmatprep.subr.bf16.mxu0 0
        %1231 = vmatpush1.bf16.msra.mxu0 0
        %1232 = vmatprep.subr.bf16.mxu0 0
        %1233 = vmatpush1.bf16.msra.mxu0 0
        %1234 = vmatprep.subr.bf16.mxu0 0
        %1235 = vmatpush1.bf16.msra.mxu0 0
        %1236 = vmatprep.subr.bf16.mxu0 0
        %1237 = vmatpush1.bf16.msra.mxu0 0
        %1238 = vmatprep.subr.bf16.mxu0 0
        %1239 = vmatpush1.bf16.msra.mxu0 0
        %1240 = vmatprep.subr.bf16.mxu0 0
        %1241 = vmatpush1.bf16.msra.mxu0 0
        %1242 = vmatprep.subr.bf16.mxu0 0
        %1243 = vmatpush1.bf16.msra.mxu0 0
        %1244 = vmatprep.subr.bf16.mxu0 0
        %1245 = vmatpush1.bf16.msra.mxu0 0
        %1246 = vmatprep.subr.bf16.mxu0 0
        %1247 = vmatpush1.bf16.msra.mxu0 0
        %1248 = vmatprep.subr.bf16.mxu0 0
        %1249 = vmatpush1.bf16.msra.mxu0 0
        %1250 = vmatprep.mubr.bf16.mxu0 0
        %1251 = vmatmul.mubr.bf16.gmra.mrb[0].mxu0 %v1213
        %v1252 = vpop.f32.mrb[0].mxu0
        %v1253 = vadd.f32 0.0, %v1252
        %v1254 = vpop.f32.mrb[0].mxu0
        %v1255 = vpop.f32.mrb[0].mxu0
        %v1256 = vadd.f32 0.0, %v1255
        %v1257 = vpop.f32.mrb[0].mxu0
        %1258 = vmatprep.mubr.bf16.mxu0 0
        %1259 = vmatmul.mubr.bf16.gmra.mrb[0].mxu0 %v1216
        %v1260 = vpop.f32.mrb[0].mxu0
        %v1261 = vadd.f32 0.0, %v1260
        %v1262 = vpop.f32.mrb[0].mxu0
        %v1263 = vpop.f32.mrb[0].mxu0
        %v1264 = vadd.f32 0.0, %v1263
        %v1265 = vpop.f32.mrb[0].mxu0
        %1266 = vdwg.mxu0
        %s1267 = scalar_lea.vmem %s5, 80
        %v1268 = vld [vmem:[%s1267] sm:$0xf]
        %v1269 = vld [vmem:[%s1267 + $0x4] sm:$0xf]
        %v1270 = vld [vmem:[%s1267 + $0x8] sm:$0xf]
        %v1271 = vld [vmem:[%s1267 + $0xc] sm:$0x1]
        %v1276 = vunpack.c.l.b16 %v1268
        %v1277 = vunpack.c.l.b16 %v1269
        %v1278 = vunpack.c.l.b16 %v1270
        %v1279 = vunpack.c.l.b16 %v1271
        %v1280 = vpack.c.b16 %v1277, %v1276
        %v1281 = vpack.c.b16 %v1279, %v1278
        %v1283 = vsel %vm925, %v1280, 0
        %v1286 = vsel %vm925, %v1281, 0
        %1288 = vmatprep.subr.bf16.mxu0 0
        %1289 = vmatpush1.bf16.msra.mxu0 %v905
        %1290 = vmatprep.subr.bf16.mxu0 0
        %1291 = vmatpush1.bf16.msra.mxu0 %v906
        %1292 = vmatprep.subr.bf16.mxu0 0
        %1293 = vmatpush1.bf16.msra.mxu0 %v907
        %1294 = vmatprep.subr.bf16.mxu0 0
        %1295 = vmatpush1.bf16.msra.mxu0 %v908
        %1296 = vmatprep.subr.bf16.mxu0 0
        %1297 = vmatpush1.bf16.msra.mxu0 %v909
        %1298 = vmatprep.subr.bf16.mxu0 0
        %1299 = vmatpush1.bf16.msra.mxu0 %v936
        %1300 = vmatprep.subr.bf16.mxu0 0
        %1301 = vmatpush1.bf16.msra.mxu0 0
        %1302 = vmatprep.subr.bf16.mxu0 0
        %1303 = vmatpush1.bf16.msra.mxu0 0
        %1304 = vmatprep.subr.bf16.mxu0 0
        %1305 = vmatpush1.bf16.msra.mxu0 0
        %1306 = vmatprep.subr.bf16.mxu0 0
        %1307 = vmatpush1.bf16.msra.mxu0 0
        %1308 = vmatprep.subr.bf16.mxu0 0
        %1309 = vmatpush1.bf16.msra.mxu0 0
        %1310 = vmatprep.subr.bf16.mxu0 0
        %1311 = vmatpush1.bf16.msra.mxu0 0
        %1312 = vmatprep.subr.bf16.mxu0 0
        %1313 = vmatpush1.bf16.msra.mxu0 0
        %1314 = vmatprep.subr.bf16.mxu0 0
        %1315 = vmatpush1.bf16.msra.mxu0 0
        %1316 = vmatprep.subr.bf16.mxu0 0
        %1317 = vmatpush1.bf16.msra.mxu0 0
        %1318 = vmatprep.subr.bf16.mxu0 0
        %1319 = vmatpush1.bf16.msra.mxu0 0
        %1320 = vmatprep.mubr.bf16.mxu0 0
        %1321 = vmatmul.mubr.bf16.gmra.mrb[0].mxu0 %v1283
        %v1322 = vpop.f32.mrb[0].mxu0
        %v1323 = vadd.f32 0.0, %v1322
        %v1324 = vpop.f32.mrb[0].mxu0
        %v1325 = vpop.f32.mrb[0].mxu0
        %v1326 = vadd.f32 0.0, %v1325
        %v1327 = vpop.f32.mrb[0].mxu0
        %1328 = vmatprep.mubr.bf16.mxu0 0
        %1329 = vmatmul.mubr.bf16.gmra.mrb[0].mxu0 %v1286
        %v1330 = vpop.f32.mrb[0].mxu0
        %v1331 = vadd.f32 0.0, %v1330
        %v1332 = vpop.f32.mrb[0].mxu0
        %v1333 = vpop.f32.mrb[0].mxu0
        %v1334 = vadd.f32 0.0, %v1333
        %v1335 = vpop.f32.mrb[0].mxu0
        %1336 = vdwg.mxu0
        %s1337 = scalar_lea.vmem %s5, 96
        %v1338 = vld [vmem:[%s1337] sm:$0xf]
        %v1339 = vld [vmem:[%s1337 + $0x4] sm:$0xf]
        %v1340 = vld [vmem:[%s1337 + $0x8] sm:$0xf]
        %v1341 = vld [vmem:[%s1337 + $0xc] sm:$0x1]
        %v1346 = vunpack.c.l.b16 %v1338
        %v1347 = vunpack.c.l.b16 %v1339
        %v1348 = vunpack.c.l.b16 %v1340
        %v1349 = vunpack.c.l.b16 %v1341
        %v1350 = vpack.c.b16 %v1347, %v1346
        %v1351 = vpack.c.b16 %v1349, %v1348
        %v1353 = vsel %vm925, %v1350, 0
        %v1356 = vsel %vm925, %v1351, 0
        %1358 = vmatprep.subr.bf16.mxu0 0
        %1359 = vmatpush1.bf16.msra.mxu0 %v905
        %1360 = vmatprep.subr.bf16.mxu0 0
        %1361 = vmatpush1.bf16.msra.mxu0 %v906
        %1362 = vmatprep.subr.bf16.mxu0 0
        %1363 = vmatpush1.bf16.msra.mxu0 %v907
        %1364 = vmatprep.subr.bf16.mxu0 0
        %1365 = vmatpush1.bf16.msra.mxu0 %v908
        %1366 = vmatprep.subr.bf16.mxu0 0
        %1367 = vmatpush1.bf16.msra.mxu0 %v909
        %1368 = vmatprep.subr.bf16.mxu0 0
        %1369 = vmatpush1.bf16.msra.mxu0 %v936
        %1370 = vmatprep.subr.bf16.mxu0 0
        %1371 = vmatpush1.bf16.msra.mxu0 0
        %1372 = vmatprep.subr.bf16.mxu0 0
        %1373 = vmatpush1.bf16.msra.mxu0 0
        %1374 = vmatprep.subr.bf16.mxu0 0
        %1375 = vmatpush1.bf16.msra.mxu0 0
        %1376 = vmatprep.subr.bf16.mxu0 0
        %1377 = vmatpush1.bf16.msra.mxu0 0
        %1378 = vmatprep.subr.bf16.mxu0 0
        %1379 = vmatpush1.bf16.msra.mxu0 0
        %1380 = vmatprep.subr.bf16.mxu0 0
        %1381 = vmatpush1.bf16.msra.mxu0 0
        %1382 = vmatprep.subr.bf16.mxu0 0
        %1383 = vmatpush1.bf16.msra.mxu0 0
        %1384 = vmatprep.subr.bf16.mxu0 0
        %1385 = vmatpush1.bf16.msra.mxu0 0
        %1386 = vmatprep.subr.bf16.mxu0 0
        %1387 = vmatpush1.bf16.msra.mxu0 0
        %1388 = vmatprep.subr.bf16.mxu0 0
        %1389 = vmatpush1.bf16.msra.mxu0 0
        %1390 = vmatprep.mubr.bf16.mxu0 0
        %1391 = vmatmul.mubr.bf16.gmra.mrb[0].mxu0 %v1353
        %v1392 = vpop.f32.mrb[0].mxu0
        %v1393 = vadd.f32 0.0, %v1392
        %v1394 = vpop.f32.mrb[0].mxu0
        %v1395 = vpop.f32.mrb[0].mxu0
        %v1396 = vadd.f32 0.0, %v1395
        %v1397 = vpop.f32.mrb[0].mxu0
        %1398 = vmatprep.mubr.bf16.mxu0 0
        %1399 = vmatmul.mubr.bf16.gmra.mrb[0].mxu0 %v1356
        %v1400 = vpop.f32.mrb[0].mxu0
        %v1401 = vadd.f32 0.0, %v1400
        %v1402 = vpop.f32.mrb[0].mxu0
        %v1403 = vpop.f32.mrb[0].mxu0
        %v1404 = vadd.f32 0.0, %v1403
        %v1405 = vpop.f32.mrb[0].mxu0
        %1406 = vdwg.mxu0
        %s1407 = scalar_lea.vmem %s5, 112
        %v1408 = vld [vmem:[%s1407] sm:$0xf]
        %v1409 = vld [vmem:[%s1407 + $0x4] sm:$0xf]
        %v1410 = vld [vmem:[%s1407 + $0x8] sm:$0xf]
        %v1411 = vld [vmem:[%s1407 + $0xc] sm:$0x1]
        %v1416 = vunpack.c.l.b16 %v1408
        %v1417 = vunpack.c.l.b16 %v1409
        %v1418 = vunpack.c.l.b16 %v1410
        %v1419 = vunpack.c.l.b16 %v1411
        %v1420 = vpack.c.b16 %v1417, %v1416
        %v1421 = vpack.c.b16 %v1419, %v1418
        %v1423 = vsel %vm925, %v1420, 0
        %v1426 = vsel %vm925, %v1421, 0
        %1428 = vmatprep.subr.bf16.mxu0 0
        %1429 = vmatpush1.bf16.msra.mxu0 %v905
        %1430 = vmatprep.subr.bf16.mxu0 0
        %1431 = vmatpush1.bf16.msra.mxu0 %v906
        %1432 = vmatprep.subr.bf16.mxu0 0
        %1433 = vmatpush1.bf16.msra.mxu0 %v907
        %1434 = vmatprep.subr.bf16.mxu0 0
        %1435 = vmatpush1.bf16.msra.mxu0 %v908
        %1436 = vmatprep.subr.bf16.mxu0 0
        %1437 = vmatpush1.bf16.msra.mxu0 %v909
        %1438 = vmatprep.subr.bf16.mxu0 0
        %1439 = vmatpush1.bf16.msra.mxu0 %v936
        %1440 = vmatprep.subr.bf16.mxu0 0
        %1441 = vmatpush1.bf16.msra.mxu0 0
        %1442 = vmatprep.subr.bf16.mxu0 0
        %1443 = vmatpush1.bf16.msra.mxu0 0
        %1444 = vmatprep.subr.bf16.mxu0 0
        %1445 = vmatpush1.bf16.msra.mxu0 0
        %1446 = vmatprep.subr.bf16.mxu0 0
        %1447 = vmatpush1.bf16.msra.mxu0 0
        %1448 = vmatprep.subr.bf16.mxu0 0
        %1449 = vmatpush1.bf16.msra.mxu0 0
        %1450 = vmatprep.subr.bf16.mxu0 0
        %1451 = vmatpush1.bf16.msra.mxu0 0
        %1452 = vmatprep.subr.bf16.mxu0 0
        %1453 = vmatpush1.bf16.msra.mxu0 0
        %1454 = vmatprep.subr.bf16.mxu0 0
        %1455 = vmatpush1.bf16.msra.mxu0 0
        %1456 = vmatprep.subr.bf16.mxu0 0
        %1457 = vmatpush1.bf16.msra.mxu0 0
        %1458 = vmatprep.subr.bf16.mxu0 0
        %1459 = vmatpush1.bf16.msra.mxu0 0
        %1460 = vmatprep.mubr.bf16.mxu0 0
        %1461 = vmatmul.mubr.bf16.gmra.mrb[0].mxu0 %v1423
        %v1462 = vpop.f32.mrb[0].mxu0
        %v1463 = vadd.f32 0.0, %v1462
        %v1464 = vpop.f32.mrb[0].mxu0
        %v1465 = vpop.f32.mrb[0].mxu0
        %v1466 = vadd.f32 0.0, %v1465
        %v1467 = vpop.f32.mrb[0].mxu0
        %1468 = vmatprep.mubr.bf16.mxu0 0
        %1469 = vmatmul.mubr.bf16.gmra.mrb[0].mxu0 %v1426
        %v1470 = vpop.f32.mrb[0].mxu0
        %v1471 = vadd.f32 0.0, %v1470
        %v1472 = vpop.f32.mrb[0].mxu0
        %v1473 = vpop.f32.mrb[0].mxu0
        %v1474 = vadd.f32 0.0, %v1473
        %v1475 = vpop.f32.mrb[0].mxu0
        %1476 = vdwg.mxu0
        %s1477 = scalar_lea.vmem %s5, 128
        %v1478 = vld [vmem:[%s1477] sm:$0xf]
        %v1479 = vld [vmem:[%s1477 + $0x4] sm:$0xf]
        %v1480 = vld [vmem:[%s1477 + $0x8] sm:$0xf]
        %v1481 = vld [vmem:[%s1477 + $0xc] sm:$0x1]
        %v1486 = vunpack.c.l.b16 %v1478
        %v1487 = vunpack.c.l.b16 %v1479
        %v1488 = vunpack.c.l.b16 %v1480
        %v1489 = vunpack.c.l.b16 %v1481
        %v1490 = vpack.c.b16 %v1487, %v1486
        %v1491 = vpack.c.b16 %v1489, %v1488
        %v1493 = vsel %vm925, %v1490, 0
        %v1496 = vsel %vm925, %v1491, 0
        %1498 = vmatprep.subr.bf16.mxu0 0
        %1499 = vmatpush1.bf16.msra.mxu0 %v905
        %1500 = vmatprep.subr.bf16.mxu0 0
        %1501 = vmatpush1.bf16.msra.mxu0 %v906
        %1502 = vmatprep.subr.bf16.mxu0 0
        %1503 = vmatpush1.bf16.msra.mxu0 %v907
        %1504 = vmatprep.subr.bf16.mxu0 0
        %1505 = vmatpush1.bf16.msra.mxu0 %v908
        %1506 = vmatprep.subr.bf16.mxu0 0
        %1507 = vmatpush1.bf16.msra.mxu0 %v909
        %1508 = vmatprep.subr.bf16.mxu0 0
        %1509 = vmatpush1.bf16.msra.mxu0 %v936
        %1510 = vmatprep.subr.bf16.mxu0 0
        %1511 = vmatpush1.bf16.msra.mxu0 0
        %1512 = vmatprep.subr.bf16.mxu0 0
        %1513 = vmatpush1.bf16.msra.mxu0 0
        %1514 = vmatprep.subr.bf16.mxu0 0
        %1515 = vmatpush1.bf16.msra.mxu0 0
        %1516 = vmatprep.subr.bf16.mxu0 0
        %1517 = vmatpush1.bf16.msra.mxu0 0
        %1518 = vmatprep.subr.bf16.mxu0 0
        %1519 = vmatpush1.bf16.msra.mxu0 0
        %1520 = vmatprep.subr.bf16.mxu0 0
        %1521 = vmatpush1.bf16.msra.mxu0 0
        %1522 = vmatprep.subr.bf16.mxu0 0
        %1523 = vmatpush1.bf16.msra.mxu0 0
        %1524 = vmatprep.subr.bf16.mxu0 0
        %1525 = vmatpush1.bf16.msra.mxu0 0
        %1526 = vmatprep.subr.bf16.mxu0 0
        %1527 = vmatpush1.bf16.msra.mxu0 0
        %1528 = vmatprep.subr.bf16.mxu0 0
        %1529 = vmatpush1.bf16.msra.mxu0 0
        %1530 = vmatprep.mubr.bf16.mxu0 0
        %1531 = vmatmul.mubr.bf16.gmra.mrb[0].mxu0 %v1493
        %v1532 = vpop.f32.mrb[0].mxu0
        %v1533 = vadd.f32 0.0, %v1532
        %v1534 = vpop.f32.mrb[0].mxu0
        %v1535 = vpop.f32.mrb[0].mxu0
        %v1536 = vadd.f32 0.0, %v1535
        %v1537 = vpop.f32.mrb[0].mxu0
        %1538 = vmatprep.mubr.bf16.mxu0 0
        %1539 = vmatmul.mubr.bf16.gmra.mrb[0].mxu0 %v1496
        %v1540 = vpop.f32.mrb[0].mxu0
        %v1541 = vadd.f32 0.0, %v1540
        %v1542 = vpop.f32.mrb[0].mxu0
        %v1543 = vpop.f32.mrb[0].mxu0
        %v1544 = vadd.f32 0.0, %v1543
        %v1545 = vpop.f32.mrb[0].mxu0
        %1546 = vdwg.mxu0
        %v1547 = vmax.f32 %v973, %v1043
        %v1548 = vmax.f32 %v976, %v1046
        %v1549 = vmax.f32 %v981, %v1051
        %v1550 = vmax.f32 %v984, %v1054
        %v1551 = vmax.f32 %v1113, %v1183
        %v1552 = vmax.f32 %v1116, %v1186
        %v1553 = vmax.f32 %v1121, %v1191
        %v1554 = vmax.f32 %v1124, %v1194
        %v1555 = vmax.f32 %v1253, %v1323
        %v1556 = vmax.f32 %v1256, %v1326
        %v1557 = vmax.f32 %v1261, %v1331
        %v1558 = vmax.f32 %v1264, %v1334
        %v1559 = vmax.f32 %v1393, %v1463
        %v1560 = vmax.f32 %v1396, %v1466
        %v1561 = vmax.f32 %v1401, %v1471
        %v1562 = vmax.f32 %v1404, %v1474
        %v1563 = vmax.f32 %v1547, %v1551
        %v1564 = vmax.f32 %v1548, %v1552
        %v1565 = vmax.f32 %v1549, %v1553
        %v1566 = vmax.f32 %v1550, %v1554
        %v1567 = vmax.f32 %v1555, %v1559
        %v1568 = vmax.f32 %v1556, %v1560
        %v1569 = vmax.f32 %v1557, %v1561
        %v1570 = vmax.f32 %v1558, %v1562
        %v1571 = vmax.f32 %v1563, %v1567
        %v1572 = vmax.f32 %v1564, %v1568
        %v1573 = vmax.f32 %v1565, %v1569
        %v1574 = vmax.f32 %v1566, %v1570
        %v1575 = vmax.f32 %v1571, %v1533
        %v1576 = vmax.f32 %v1572, %v1536
        %v1577 = vmax.f32 %v1573, %v1541
        %v1578 = vmax.f32 %v1574, %v1544
        %v1579 = vpack.c.bf16 %v1576, %v1575
        %v1580 = vpack.c.bf16 %v1578, %v1577
        %v1581 = vld [vmem:[%s6] sm:$0xf]
        %v1582 = vld [vmem:[%s6 + $0x4] sm:$0xf]
        %v1583 = vld [vmem:[%s6 + $0x8] sm:$0xf]
        %v1584 = vld [vmem:[%s6 + $0xc] sm:$0x1]
        %v1589 = vunpack.c.l.b16 %v1581
        %v1590 = vunpack.c.l.b16 %v1582
        %v1591 = vunpack.c.l.b16 %v1583
        %v1592 = vunpack.c.l.b16 %v1584
        %v1593 = vpack.c.b16 %v1590, %v1589
        %v1594 = vpack.c.b16 %v1592, %v1591
        %vm1595 = vcmask 203776
        %v1597 = vsel %vm1595, %v1593, 0
        %v1600 = vsel %vm1595, %v1594, 0
        %vm1602 = vcmask 1043456
        %vm1603 = vcmask 1044480
        %v1604 = vsel %vm1602, 4294967295, 65535
        %v1605 = vsel %vm1603, %v1604, 0
        %v1607 = vand.u32 %v1580, %v1605
        %1609 = vmatprep.subr.bf16.mxu0 0
        %1610 = vmatpush1.bf16.msra.mxu0 %v1579
        %1611 = vmatprep.subr.bf16.mxu0 0
        %1612 = vmatpush1.bf16.msra.mxu0 %v1607
        %1613 = vmatprep.subr.bf16.mxu0 0
        %1614 = vmatpush1.bf16.msra.mxu0 0
        %1615 = vmatprep.subr.bf16.mxu0 0
        %1616 = vmatpush1.bf16.msra.mxu0 0
        %1617 = vmatprep.subr.bf16.mxu0 0
        %1618 = vmatpush1.bf16.msra.mxu0 0
        %1619 = vmatprep.subr.bf16.mxu0 0
        %1620 = vmatpush1.bf16.msra.mxu0 0
        %1621 = vmatprep.subr.bf16.mxu0 0
        %1622 = vmatpush1.bf16.msra.mxu0 0
        %1623 = vmatprep.subr.bf16.mxu0 0
        %1624 = vmatpush1.bf16.msra.mxu0 0
        %1625 = vmatprep.subr.bf16.mxu0 0
        %1626 = vmatpush1.bf16.msra.mxu0 0
        %1627 = vmatprep.subr.bf16.mxu0 0
        %1628 = vmatpush1.bf16.msra.mxu0 0
        %1629 = vmatprep.subr.bf16.mxu0 0
        %1630 = vmatpush1.bf16.msra.mxu0 0
        %1631 = vmatprep.subr.bf16.mxu0 0
        %1632 = vmatpush1.bf16.msra.mxu0 0
        %1633 = vmatprep.subr.bf16.mxu0 0
        %1634 = vmatpush1.bf16.msra.mxu0 0
        %1635 = vmatprep.subr.bf16.mxu0 0
        %1636 = vmatpush1.bf16.msra.mxu0 0
        %1637 = vmatprep.subr.bf16.mxu0 0
        %1638 = vmatpush1.bf16.msra.mxu0 0
        %1639 = vmatprep.subr.bf16.mxu0 0
        %1640 = vmatpush1.bf16.msra.mxu0 0
        %1641 = vmatprep.mubr.bf16.mxu0 0
        %1642 = vmatmul.mubr.bf16.gmra.mrb[0].mxu0 %v1597
        %v1643 = vpop.f32.mrb[0].mxu0
        %v1644 = vadd.f32 0.0, %v1643
        %v1645 = vpop.f32.mrb[0].mxu0
        %v1646 = vpop.f32.mrb[0].mxu0
        %v1647 = vadd.f32 0.0, %v1646
        %v1648 = vpop.f32.mrb[0].mxu0
        %1649 = vmatprep.mubr.bf16.mxu0 0
        %1650 = vmatmul.mubr.bf16.gmra.mrb[0].mxu0 %v1600
        %v1651 = vpop.f32.mrb[0].mxu0
        %v1652 = vadd.f32 0.0, %v1651
        %v1653 = vpop.f32.mrb[0].mxu0
        %v1654 = vpop.f32.mrb[0].mxu0
        %v1655 = vadd.f32 0.0, %v1654
        %v1656 = vpop.f32.mrb[0].mxu0
        %1657 = vdwg.mxu0
        %v1658 = vpack.c.bf16 %v1647, %v1644
        %v1659 = vpack.c.bf16 %v1655, %v1652
        %s1660 = scalar_lea.vmem %s6, 16
        %v1661 = vld [vmem:[%s1660] sm:$0xf]
        %v1662 = vld [vmem:[%s1660 + $0x4] sm:$0xf]
        %v1663 = vld [vmem:[%s1660 + $0x8] sm:$0xf]
        %v1664 = vld [vmem:[%s1660 + $0xc] sm:$0x1]
        %v1669 = vunpack.c.l.b16 %v1661
        %v1670 = vunpack.c.l.b16 %v1662
        %v1671 = vunpack.c.l.b16 %v1663
        %v1672 = vunpack.c.l.b16 %v1664
        %v1673 = vpack.c.b16 %v1670, %v1669
        %v1674 = vpack.c.b16 %v1672, %v1671
        %v1676 = vsel %vm1595, %v1673, 0
        %v1679 = vsel %vm1595, %v1674, 0
        %1681 = vmatprep.subr.bf16.mxu0 0
        %1682 = vmatpush1.bf16.msra.mxu0 %v1579
        %1683 = vmatprep.subr.bf16.mxu0 0
        %1684 = vmatpush1.bf16.msra.mxu0 %v1607
        %1685 = vmatprep.subr.bf16.mxu0 0
        %1686 = vmatpush1.bf16.msra.mxu0 0
        %1687 = vmatprep.subr.bf16.mxu0 0
        %1688 = vmatpush1.bf16.msra.mxu0 0
        %1689 = vmatprep.subr.bf16.mxu0 0
        %1690 = vmatpush1.bf16.msra.mxu0 0
        %1691 = vmatprep.subr.bf16.mxu0 0
        %1692 = vmatpush1.bf16.msra.mxu0 0
        %1693 = vmatprep.subr.bf16.mxu0 0
        %1694 = vmatpush1.bf16.msra.mxu0 0
        %1695 = vmatprep.subr.bf16.mxu0 0
        %1696 = vmatpush1.bf16.msra.mxu0 0
        %1697 = vmatprep.subr.bf16.mxu0 0
        %1698 = vmatpush1.bf16.msra.mxu0 0
        %1699 = vmatprep.subr.bf16.mxu0 0
        %1700 = vmatpush1.bf16.msra.mxu0 0
        %1701 = vmatprep.subr.bf16.mxu0 0
        %1702 = vmatpush1.bf16.msra.mxu0 0
        %1703 = vmatprep.subr.bf16.mxu0 0
        %1704 = vmatpush1.bf16.msra.mxu0 0
        %1705 = vmatprep.subr.bf16.mxu0 0
        %1706 = vmatpush1.bf16.msra.mxu0 0
        %1707 = vmatprep.subr.bf16.mxu0 0
        %1708 = vmatpush1.bf16.msra.mxu0 0
        %1709 = vmatprep.subr.bf16.mxu0 0
        %1710 = vmatpush1.bf16.msra.mxu0 0
        %1711 = vmatprep.subr.bf16.mxu0 0
        %1712 = vmatpush1.bf16.msra.mxu0 0
        %1713 = vmatprep.mubr.bf16.mxu0 0
        %1714 = vmatmul.mubr.bf16.gmra.mrb[0].mxu0 %v1676
        %v1715 = vpop.f32.mrb[0].mxu0
        %v1716 = vadd.f32 0.0, %v1715
        %v1717 = vpop.f32.mrb[0].mxu0
        %v1718 = vpop.f32.mrb[0].mxu0
        %v1719 = vadd.f32 0.0, %v1718
        %v1720 = vpop.f32.mrb[0].mxu0
        %1721 = vmatprep.mubr.bf16.mxu0 0
        %1722 = vmatmul.mubr.bf16.gmra.mrb[0].mxu0 %v1679
        %v1723 = vpop.f32.mrb[0].mxu0
        %v1724 = vadd.f32 0.0, %v1723
        %v1725 = vpop.f32.mrb[0].mxu0
        %v1726 = vpop.f32.mrb[0].mxu0
        %v1727 = vadd.f32 0.0, %v1726
        %v1728 = vpop.f32.mrb[0].mxu0
        %1729 = vdwg.mxu0
        %v1730 = vpack.c.bf16 %v1719, %v1716
        %v1731 = vpack.c.bf16 %v1727, %v1724
        %s1732 = scalar_lea.vmem %s6, 32
        %v1733 = vld [vmem:[%s1732] sm:$0xf]
        %v1734 = vld [vmem:[%s1732 + $0x4] sm:$0xf]
        %v1735 = vld [vmem:[%s1732 + $0x8] sm:$0xf]
        %v1736 = vld [vmem:[%s1732 + $0xc] sm:$0x1]
        %v1741 = vunpack.c.l.b16 %v1733
        %v1742 = vunpack.c.l.b16 %v1734
        %v1743 = vunpack.c.l.b16 %v1735
        %v1744 = vunpack.c.l.b16 %v1736
        %v1745 = vpack.c.b16 %v1742, %v1741
        %v1746 = vpack.c.b16 %v1744, %v1743
        %v1748 = vsel %vm1595, %v1745, 0
        %v1751 = vsel %vm1595, %v1746, 0
        %1753 = vmatprep.subr.bf16.mxu0 0
        %1754 = vmatpush1.bf16.msra.mxu0 %v1579
        %1755 = vmatprep.subr.bf16.mxu0 0
        %1756 = vmatpush1.bf16.msra.mxu0 %v1607
        %1757 = vmatprep.subr.bf16.mxu0 0
        %1758 = vmatpush1.bf16.msra.mxu0 0
        %1759 = vmatprep.subr.bf16.mxu0 0
        %1760 = vmatpush1.bf16.msra.mxu0 0
        %1761 = vmatprep.subr.bf16.mxu0 0
        %1762 = vmatpush1.bf16.msra.mxu0 0
        %1763 = vmatprep.subr.bf16.mxu0 0
        %1764 = vmatpush1.bf16.msra.mxu0 0
        %1765 = vmatprep.subr.bf16.mxu0 0
        %1766 = vmatpush1.bf16.msra.mxu0 0
        %1767 = vmatprep.subr.bf16.mxu0 0
        %1768 = vmatpush1.bf16.msra.mxu0 0
        %1769 = vmatprep.subr.bf16.mxu0 0
        %1770 = vmatpush1.bf16.msra.mxu0 0
        %1771 = vmatprep.subr.bf16.mxu0 0
        %1772 = vmatpush1.bf16.msra.mxu0 0
        %1773 = vmatprep.subr.bf16.mxu0 0
        %1774 = vmatpush1.bf16.msra.mxu0 0
        %1775 = vmatprep.subr.bf16.mxu0 0
        %1776 = vmatpush1.bf16.msra.mxu0 0
        %1777 = vmatprep.subr.bf16.mxu0 0
        %1778 = vmatpush1.bf16.msra.mxu0 0
        %1779 = vmatprep.subr.bf16.mxu0 0
        %1780 = vmatpush1.bf16.msra.mxu0 0
        %1781 = vmatprep.subr.bf16.mxu0 0
        %1782 = vmatpush1.bf16.msra.mxu0 0
        %1783 = vmatprep.subr.bf16.mxu0 0
        %1784 = vmatpush1.bf16.msra.mxu0 0
        %1785 = vmatprep.mubr.bf16.mxu0 0
        %1786 = vmatmul.mubr.bf16.gmra.mrb[0].mxu0 %v1748
        %v1787 = vpop.f32.mrb[0].mxu0
        %v1788 = vadd.f32 0.0, %v1787
        %v1789 = vpop.f32.mrb[0].mxu0
        %v1790 = vpop.f32.mrb[0].mxu0
        %v1791 = vadd.f32 0.0, %v1790
        %v1792 = vpop.f32.mrb[0].mxu0
        %1793 = vmatprep.mubr.bf16.mxu0 0
        %1794 = vmatmul.mubr.bf16.gmra.mrb[0].mxu0 %v1751
        %v1795 = vpop.f32.mrb[0].mxu0
        %v1796 = vadd.f32 0.0, %v1795
        %v1797 = vpop.f32.mrb[0].mxu0
        %v1798 = vpop.f32.mrb[0].mxu0
        %v1799 = vadd.f32 0.0, %v1798
        %v1800 = vpop.f32.mrb[0].mxu0
        %1801 = vdwg.mxu0
        %v1802 = vpack.c.bf16 %v1791, %v1788
        %v1803 = vpack.c.bf16 %v1799, %v1796
        %s1804 = scalar_lea.vmem %s6, 48
        %v1805 = vld [vmem:[%s1804] sm:$0xf]
        %v1806 = vld [vmem:[%s1804 + $0x4] sm:$0xf]
        %v1807 = vld [vmem:[%s1804 + $0x8] sm:$0xf]
        %v1808 = vld [vmem:[%s1804 + $0xc] sm:$0x1]
        %v1813 = vunpack.c.l.b16 %v1805
        %v1814 = vunpack.c.l.b16 %v1806
        %v1815 = vunpack.c.l.b16 %v1807
        %v1816 = vunpack.c.l.b16 %v1808
        %v1817 = vpack.c.b16 %v1814, %v1813
        %v1818 = vpack.c.b16 %v1816, %v1815
        %v1820 = vsel %vm1595, %v1817, 0
        %v1823 = vsel %vm1595, %v1818, 0
        %1825 = vmatprep.subr.bf16.mxu0 0
        %1826 = vmatpush1.bf16.msra.mxu0 %v1579
        %1827 = vmatprep.subr.bf16.mxu0 0
        %1828 = vmatpush1.bf16.msra.mxu0 %v1607
        %1829 = vmatprep.subr.bf16.mxu0 0
        %1830 = vmatpush1.bf16.msra.mxu0 0
        %1831 = vmatprep.subr.bf16.mxu0 0
        %1832 = vmatpush1.bf16.msra.mxu0 0
        %1833 = vmatprep.subr.bf16.mxu0 0
        %1834 = vmatpush1.bf16.msra.mxu0 0
        %1835 = vmatprep.subr.bf16.mxu0 0
        %1836 = vmatpush1.bf16.msra.mxu0 0
        %1837 = vmatprep.subr.bf16.mxu0 0
        %1838 = vmatpush1.bf16.msra.mxu0 0
        %1839 = vmatprep.subr.bf16.mxu0 0
        %1840 = vmatpush1.bf16.msra.mxu0 0
        %1841 = vmatprep.subr.bf16.mxu0 0
        %1842 = vmatpush1.bf16.msra.mxu0 0
        %1843 = vmatprep.subr.bf16.mxu0 0
        %1844 = vmatpush1.bf16.msra.mxu0 0
        %1845 = vmatprep.subr.bf16.mxu0 0
        %1846 = vmatpush1.bf16.msra.mxu0 0
        %1847 = vmatprep.subr.bf16.mxu0 0
        %1848 = vmatpush1.bf16.msra.mxu0 0
        %1849 = vmatprep.subr.bf16.mxu0 0
        %1850 = vmatpush1.bf16.msra.mxu0 0
        %1851 = vmatprep.subr.bf16.mxu0 0
        %1852 = vmatpush1.bf16.msra.mxu0 0
        %1853 = vmatprep.subr.bf16.mxu0 0
        %1854 = vmatpush1.bf16.msra.mxu0 0
        %1855 = vmatprep.subr.bf16.mxu0 0
        %1856 = vmatpush1.bf16.msra.mxu0 0
        %1857 = vmatprep.mubr.bf16.mxu0 0
        %1858 = vmatmul.mubr.bf16.gmra.mrb[0].mxu0 %v1820
        %v1859 = vpop.f32.mrb[0].mxu0
        %v1860 = vadd.f32 0.0, %v1859
        %v1861 = vpop.f32.mrb[0].mxu0
        %v1862 = vpop.f32.mrb[0].mxu0
        %v1863 = vadd.f32 0.0, %v1862
        %v1864 = vpop.f32.mrb[0].mxu0
        %1865 = vmatprep.mubr.bf16.mxu0 0
        %1866 = vmatmul.mubr.bf16.gmra.mrb[0].mxu0 %v1823
        %v1867 = vpop.f32.mrb[0].mxu0
        %v1868 = vadd.f32 0.0, %v1867
        %v1869 = vpop.f32.mrb[0].mxu0
        %v1870 = vpop.f32.mrb[0].mxu0
        %v1871 = vadd.f32 0.0, %v1870
        %v1872 = vpop.f32.mrb[0].mxu0
        %1873 = vdwg.mxu0
        %v1874 = vpack.c.bf16 %v1863, %v1860
        %v1875 = vpack.c.bf16 %v1871, %v1868
        %s1876 = scalar_lea.vmem %s6, 64
        %v1877 = vld [vmem:[%s1876] sm:$0xf]
        %v1878 = vld [vmem:[%s1876 + $0x4] sm:$0xf]
        %v1879 = vld [vmem:[%s1876 + $0x8] sm:$0xf]
        %v1880 = vld [vmem:[%s1876 + $0xc] sm:$0x1]
        %v1885 = vunpack.c.l.b16 %v1877
        %v1886 = vunpack.c.l.b16 %v1878
        %v1887 = vunpack.c.l.b16 %v1879
        %v1888 = vunpack.c.l.b16 %v1880
        %v1889 = vpack.c.b16 %v1886, %v1885
        %v1890 = vpack.c.b16 %v1888, %v1887
        %v1892 = vsel %vm1595, %v1889, 0
        %v1895 = vsel %vm1595, %v1890, 0
        %1897 = vmatprep.subr.bf16.mxu0 0
        %1898 = vmatpush1.bf16.msra.mxu0 %v1579
        %1899 = vmatprep.subr.bf16.mxu0 0
        %1900 = vmatpush1.bf16.msra.mxu0 %v1607
        %1901 = vmatprep.subr.bf16.mxu0 0
        %1902 = vmatpush1.bf16.msra.mxu0 0
        %1903 = vmatprep.subr.bf16.mxu0 0
        %1904 = vmatpush1.bf16.msra.mxu0 0
        %1905 = vmatprep.subr.bf16.mxu0 0
        %1906 = vmatpush1.bf16.msra.mxu0 0
        %1907 = vmatprep.subr.bf16.mxu0 0
        %1908 = vmatpush1.bf16.msra.mxu0 0
        %1909 = vmatprep.subr.bf16.mxu0 0
        %1910 = vmatpush1.bf16.msra.mxu0 0
        %1911 = vmatprep.subr.bf16.mxu0 0
        %1912 = vmatpush1.bf16.msra.mxu0 0
        %1913 = vmatprep.subr.bf16.mxu0 0
        %1914 = vmatpush1.bf16.msra.mxu0 0
        %1915 = vmatprep.subr.bf16.mxu0 0
        %1916 = vmatpush1.bf16.msra.mxu0 0
        %1917 = vmatprep.subr.bf16.mxu0 0
        %1918 = vmatpush1.bf16.msra.mxu0 0
        %1919 = vmatprep.subr.bf16.mxu0 0
        %1920 = vmatpush1.bf16.msra.mxu0 0
        %1921 = vmatprep.subr.bf16.mxu0 0
        %1922 = vmatpush1.bf16.msra.mxu0 0
        %1923 = vmatprep.subr.bf16.mxu0 0
        %1924 = vmatpush1.bf16.msra.mxu0 0
        %1925 = vmatprep.subr.bf16.mxu0 0
        %1926 = vmatpush1.bf16.msra.mxu0 0
        %1927 = vmatprep.subr.bf16.mxu0 0
        %1928 = vmatpush1.bf16.msra.mxu0 0
        %1929 = vmatprep.mubr.bf16.mxu0 0
        %1930 = vmatmul.mubr.bf16.gmra.mrb[0].mxu0 %v1892
        %v1931 = vpop.f32.mrb[0].mxu0
        %v1932 = vadd.f32 0.0, %v1931
        %v1933 = vpop.f32.mrb[0].mxu0
        %v1934 = vpop.f32.mrb[0].mxu0
        %v1935 = vadd.f32 0.0, %v1934
        %v1936 = vpop.f32.mrb[0].mxu0
        %1937 = vmatprep.mubr.bf16.mxu0 0
        %1938 = vmatmul.mubr.bf16.gmra.mrb[0].mxu0 %v1895
        %v1939 = vpop.f32.mrb[0].mxu0
        %v1940 = vadd.f32 0.0, %v1939
        %v1941 = vpop.f32.mrb[0].mxu0
        %v1942 = vpop.f32.mrb[0].mxu0
        %v1943 = vadd.f32 0.0, %v1942
        %v1944 = vpop.f32.mrb[0].mxu0
        %1945 = vdwg.mxu0
        %v1946 = vpack.c.bf16 %v1935, %v1932
        %v1947 = vpack.c.bf16 %v1943, %v1940
        %s1948 = scalar_lea.vmem %s6, 80
        %v1949 = vld [vmem:[%s1948] sm:$0xf]
        %v1950 = vld [vmem:[%s1948 + $0x4] sm:$0xf]
        %v1951 = vld [vmem:[%s1948 + $0x8] sm:$0xf]
        %v1952 = vld [vmem:[%s1948 + $0xc] sm:$0x1]
        %v1957 = vunpack.c.l.b16 %v1949
        %v1958 = vunpack.c.l.b16 %v1950
        %v1959 = vunpack.c.l.b16 %v1951
        %v1960 = vunpack.c.l.b16 %v1952
        %v1961 = vpack.c.b16 %v1958, %v1957
        %v1962 = vpack.c.b16 %v1960, %v1959
        %v1964 = vsel %vm1595, %v1961, 0
        %v1967 = vsel %vm1595, %v1962, 0
        %1969 = vmatprep.subr.bf16.mxu0 0
        %1970 = vmatpush1.bf16.msra.mxu0 %v1579
        %1971 = vmatprep.subr.bf16.mxu0 0
        %1972 = vmatpush1.bf16.msra.mxu0 %v1607
        %1973 = vmatprep.subr.bf16.mxu0 0
        %1974 = vmatpush1.bf16.msra.mxu0 0
        %1975 = vmatprep.subr.bf16.mxu0 0
        %1976 = vmatpush1.bf16.msra.mxu0 0
        %1977 = vmatprep.subr.bf16.mxu0 0
        %1978 = vmatpush1.bf16.msra.mxu0 0
        %1979 = vmatprep.subr.bf16.mxu0 0
        %1980 = vmatpush1.bf16.msra.mxu0 0
        %1981 = vmatprep.subr.bf16.mxu0 0
        %1982 = vmatpush1.bf16.msra.mxu0 0
        %1983 = vmatprep.subr.bf16.mxu0 0
        %1984 = vmatpush1.bf16.msra.mxu0 0
        %1985 = vmatprep.subr.bf16.mxu0 0
        %1986 = vmatpush1.bf16.msra.mxu0 0
        %1987 = vmatprep.subr.bf16.mxu0 0
        %1988 = vmatpush1.bf16.msra.mxu0 0
        %1989 = vmatprep.subr.bf16.mxu0 0
        %1990 = vmatpush1.bf16.msra.mxu0 0
        %1991 = vmatprep.subr.bf16.mxu0 0
        %1992 = vmatpush1.bf16.msra.mxu0 0
        %1993 = vmatprep.subr.bf16.mxu0 0
        %1994 = vmatpush1.bf16.msra.mxu0 0
        %1995 = vmatprep.subr.bf16.mxu0 0
        %1996 = vmatpush1.bf16.msra.mxu0 0
        %1997 = vmatprep.subr.bf16.mxu0 0
        %1998 = vmatpush1.bf16.msra.mxu0 0
        %1999 = vmatprep.subr.bf16.mxu0 0
        %2000 = vmatpush1.bf16.msra.mxu0 0
        %2001 = vmatprep.mubr.bf16.mxu0 0
        %2002 = vmatmul.mubr.bf16.gmra.mrb[0].mxu0 %v1964
        %v2003 = vpop.f32.mrb[0].mxu0
        %v2004 = vadd.f32 0.0, %v2003
        %v2005 = vpop.f32.mrb[0].mxu0
        %v2006 = vpop.f32.mrb[0].mxu0
        %v2007 = vadd.f32 0.0, %v2006
        %v2008 = vpop.f32.mrb[0].mxu0
        %2009 = vmatprep.mubr.bf16.mxu0 0
        %2010 = vmatmul.mubr.bf16.gmra.mrb[0].mxu0 %v1967
        %v2011 = vpop.f32.mrb[0].mxu0
        %v2012 = vadd.f32 0.0, %v2011
        %v2013 = vpop.f32.mrb[0].mxu0
        %v2014 = vpop.f32.mrb[0].mxu0
        %v2015 = vadd.f32 0.0, %v2014
        %v2016 = vpop.f32.mrb[0].mxu0
        %2017 = vdwg.mxu0
        %v2018 = vpack.c.bf16 %v2007, %v2004
        %v2019 = vpack.c.bf16 %v2015, %v2012
        %s2020 = scalar_lea.vmem %s6, 96
        %v2021 = vld [vmem:[%s2020] sm:$0xf]
        %v2022 = vld [vmem:[%s2020 + $0x4] sm:$0xf]
        %v2023 = vld [vmem:[%s2020 + $0x8] sm:$0xf]
        %v2024 = vld [vmem:[%s2020 + $0xc] sm:$0x1]
        %v2029 = vunpack.c.l.b16 %v2021
        %v2030 = vunpack.c.l.b16 %v2022
        %v2031 = vunpack.c.l.b16 %v2023
        %v2032 = vunpack.c.l.b16 %v2024
        %v2033 = vpack.c.b16 %v2030, %v2029
        %v2034 = vpack.c.b16 %v2032, %v2031
        %v2036 = vsel %vm1595, %v2033, 0
        %v2039 = vsel %vm1595, %v2034, 0
        %2041 = vmatprep.subr.bf16.mxu0 0
        %2042 = vmatpush1.bf16.msra.mxu0 %v1579
        %2043 = vmatprep.subr.bf16.mxu0 0
        %2044 = vmatpush1.bf16.msra.mxu0 %v1607
        %2045 = vmatprep.subr.bf16.mxu0 0
        %2046 = vmatpush1.bf16.msra.mxu0 0
        %2047 = vmatprep.subr.bf16.mxu0 0
        %2048 = vmatpush1.bf16.msra.mxu0 0
        %2049 = vmatprep.subr.bf16.mxu0 0
        %2050 = vmatpush1.bf16.msra.mxu0 0
        %2051 = vmatprep.subr.bf16.mxu0 0
        %2052 = vmatpush1.bf16.msra.mxu0 0
        %2053 = vmatprep.subr.bf16.mxu0 0
        %2054 = vmatpush1.bf16.msra.mxu0 0
        %2055 = vmatprep.subr.bf16.mxu0 0
        %2056 = vmatpush1.bf16.msra.mxu0 0
        %2057 = vmatprep.subr.bf16.mxu0 0
        %2058 = vmatpush1.bf16.msra.mxu0 0
        %2059 = vmatprep.subr.bf16.mxu0 0
        %2060 = vmatpush1.bf16.msra.mxu0 0
        %2061 = vmatprep.subr.bf16.mxu0 0
        %2062 = vmatpush1.bf16.msra.mxu0 0
        %2063 = vmatprep.subr.bf16.mxu0 0
        %2064 = vmatpush1.bf16.msra.mxu0 0
        %2065 = vmatprep.subr.bf16.mxu0 0
        %2066 = vmatpush1.bf16.msra.mxu0 0
        %2067 = vmatprep.subr.bf16.mxu0 0
        %2068 = vmatpush1.bf16.msra.mxu0 0
        %2069 = vmatprep.subr.bf16.mxu0 0
        %2070 = vmatpush1.bf16.msra.mxu0 0
        %2071 = vmatprep.subr.bf16.mxu0 0
        %2072 = vmatpush1.bf16.msra.mxu0 0
        %2073 = vmatprep.mubr.bf16.mxu0 0
        %2074 = vmatmul.mubr.bf16.gmra.mrb[0].mxu0 %v2036
        %v2075 = vpop.f32.mrb[0].mxu0
        %v2076 = vadd.f32 0.0, %v2075
        %v2077 = vpop.f32.mrb[0].mxu0
        %v2078 = vpop.f32.mrb[0].mxu0
        %v2079 = vadd.f32 0.0, %v2078
        %v2080 = vpop.f32.mrb[0].mxu0
        %2081 = vmatprep.mubr.bf16.mxu0 0
        %2082 = vmatmul.mubr.bf16.gmra.mrb[0].mxu0 %v2039
        %v2083 = vpop.f32.mrb[0].mxu0
        %v2084 = vadd.f32 0.0, %v2083
        %v2085 = vpop.f32.mrb[0].mxu0
        %v2086 = vpop.f32.mrb[0].mxu0
        %v2087 = vadd.f32 0.0, %v2086
        %v2088 = vpop.f32.mrb[0].mxu0
        %2089 = vdwg.mxu0
        %v2090 = vpack.c.bf16 %v2079, %v2076
        %v2091 = vpack.c.bf16 %v2087, %v2084
        %s2092 = scalar_lea.vmem %s6, 112
        %v2093 = vld [vmem:[%s2092] sm:$0xf]
        %v2094 = vld [vmem:[%s2092 + $0x4] sm:$0xf]
        %v2095 = vld [vmem:[%s2092 + $0x8] sm:$0xf]
        %v2096 = vld [vmem:[%s2092 + $0xc] sm:$0x1]
        %v2101 = vunpack.c.l.b16 %v2093
        %v2102 = vunpack.c.l.b16 %v2094
        %v2103 = vunpack.c.l.b16 %v2095
        %v2104 = vunpack.c.l.b16 %v2096
        %v2105 = vpack.c.b16 %v2102, %v2101
        %v2106 = vpack.c.b16 %v2104, %v2103
        %v2108 = vsel %vm1595, %v2105, 0
        %v2111 = vsel %vm1595, %v2106, 0
        %2113 = vmatprep.subr.bf16.mxu0 0
        %2114 = vmatpush1.bf16.msra.mxu0 %v1579
        %2115 = vmatprep.subr.bf16.mxu0 0
        %2116 = vmatpush1.bf16.msra.mxu0 %v1607
        %2117 = vmatprep.subr.bf16.mxu0 0
        %2118 = vmatpush1.bf16.msra.mxu0 0
        %2119 = vmatprep.subr.bf16.mxu0 0
        %2120 = vmatpush1.bf16.msra.mxu0 0
        %2121 = vmatprep.subr.bf16.mxu0 0
        %2122 = vmatpush1.bf16.msra.mxu0 0
        %2123 = vmatprep.subr.bf16.mxu0 0
        %2124 = vmatpush1.bf16.msra.mxu0 0
        %2125 = vmatprep.subr.bf16.mxu0 0
        %2126 = vmatpush1.bf16.msra.mxu0 0
        %2127 = vmatprep.subr.bf16.mxu0 0
        %2128 = vmatpush1.bf16.msra.mxu0 0
        %2129 = vmatprep.subr.bf16.mxu0 0
        %2130 = vmatpush1.bf16.msra.mxu0 0
        %2131 = vmatprep.subr.bf16.mxu0 0
        %2132 = vmatpush1.bf16.msra.mxu0 0
        %2133 = vmatprep.subr.bf16.mxu0 0
        %2134 = vmatpush1.bf16.msra.mxu0 0
        %2135 = vmatprep.subr.bf16.mxu0 0
        %2136 = vmatpush1.bf16.msra.mxu0 0
        %2137 = vmatprep.subr.bf16.mxu0 0
        %2138 = vmatpush1.bf16.msra.mxu0 0
        %2139 = vmatprep.subr.bf16.mxu0 0
        %2140 = vmatpush1.bf16.msra.mxu0 0
        %2141 = vmatprep.subr.bf16.mxu0 0
        %2142 = vmatpush1.bf16.msra.mxu0 0
        %2143 = vmatprep.subr.bf16.mxu0 0
        %2144 = vmatpush1.bf16.msra.mxu0 0
        %2145 = vmatprep.mubr.bf16.mxu0 0
        %2146 = vmatmul.mubr.bf16.gmra.mrb[0].mxu0 %v2108
        %v2147 = vpop.f32.mrb[0].mxu0
        %v2148 = vadd.f32 0.0, %v2147
        %v2149 = vpop.f32.mrb[0].mxu0
        %v2150 = vpop.f32.mrb[0].mxu0
        %v2151 = vadd.f32 0.0, %v2150
        %v2152 = vpop.f32.mrb[0].mxu0
        %2153 = vmatprep.mubr.bf16.mxu0 0
        %2154 = vmatmul.mubr.bf16.gmra.mrb[0].mxu0 %v2111
        %v2155 = vpop.f32.mrb[0].mxu0
        %v2156 = vadd.f32 0.0, %v2155
        %v2157 = vpop.f32.mrb[0].mxu0
        %v2158 = vpop.f32.mrb[0].mxu0
        %v2159 = vadd.f32 0.0, %v2158
        %v2160 = vpop.f32.mrb[0].mxu0
        %2161 = vdwg.mxu0
        %v2162 = vpack.c.bf16 %v2151, %v2148
        %v2163 = vpack.c.bf16 %v2159, %v2156
        %s2164 = scalar_lea.vmem %s6, 128
        %v2165 = vld [vmem:[%s2164] sm:$0xf]
        %v2166 = vld [vmem:[%s2164 + $0x4] sm:$0xf]
        %v2167 = vld [vmem:[%s2164 + $0x8] sm:$0xf]
        %v2168 = vld [vmem:[%s2164 + $0xc] sm:$0x1]
        %v2173 = vunpack.c.l.b16 %v2165
        %v2174 = vunpack.c.l.b16 %v2166
        %v2175 = vunpack.c.l.b16 %v2167
        %v2176 = vunpack.c.l.b16 %v2168
        %v2177 = vpack.c.b16 %v2174, %v2173
        %v2178 = vpack.c.b16 %v2176, %v2175
        %v2180 = vsel %vm1595, %v2177, 0
        %v2183 = vsel %vm1595, %v2178, 0
        %2185 = vmatprep.subr.bf16.mxu0 0
        %2186 = vmatpush1.bf16.msra.mxu0 %v1579
        %2187 = vmatprep.subr.bf16.mxu0 0
        %2188 = vmatpush1.bf16.msra.mxu0 %v1607
        %2189 = vmatprep.subr.bf16.mxu0 0
        %2190 = vmatpush1.bf16.msra.mxu0 0
        %2191 = vmatprep.subr.bf16.mxu0 0
        %2192 = vmatpush1.bf16.msra.mxu0 0
        %2193 = vmatprep.subr.bf16.mxu0 0
        %2194 = vmatpush1.bf16.msra.mxu0 0
        %2195 = vmatprep.subr.bf16.mxu0 0
        %2196 = vmatpush1.bf16.msra.mxu0 0
        %2197 = vmatprep.subr.bf16.mxu0 0
        %2198 = vmatpush1.bf16.msra.mxu0 0
        %2199 = vmatprep.subr.bf16.mxu0 0
        %2200 = vmatpush1.bf16.msra.mxu0 0
        %2201 = vmatprep.subr.bf16.mxu0 0
        %2202 = vmatpush1.bf16.msra.mxu0 0
        %2203 = vmatprep.subr.bf16.mxu0 0
        %2204 = vmatpush1.bf16.msra.mxu0 0
        %2205 = vmatprep.subr.bf16.mxu0 0
        %2206 = vmatpush1.bf16.msra.mxu0 0
        %2207 = vmatprep.subr.bf16.mxu0 0
        %2208 = vmatpush1.bf16.msra.mxu0 0
        %2209 = vmatprep.subr.bf16.mxu0 0
        %2210 = vmatpush1.bf16.msra.mxu0 0
        %2211 = vmatprep.subr.bf16.mxu0 0
        %2212 = vmatpush1.bf16.msra.mxu0 0
        %2213 = vmatprep.subr.bf16.mxu0 0
        %2214 = vmatpush1.bf16.msra.mxu0 0
        %2215 = vmatprep.subr.bf16.mxu0 0
        %2216 = vmatpush1.bf16.msra.mxu0 0
        %2217 = vmatprep.mubr.bf16.mxu0 0
        %2218 = vmatmul.mubr.bf16.gmra.mrb[0].mxu0 %v2180
        %v2219 = vpop.f32.mrb[0].mxu0
        %v2220 = vadd.f32 0.0, %v2219
        %v2221 = vpop.f32.mrb[0].mxu0
        %v2222 = vpop.f32.mrb[0].mxu0
        %v2223 = vadd.f32 0.0, %v2222
        %v2224 = vpop.f32.mrb[0].mxu0
        %2225 = vmatprep.mubr.bf16.mxu0 0
        %2226 = vmatmul.mubr.bf16.gmra.mrb[0].mxu0 %v2183
        %v2227 = vpop.f32.mrb[0].mxu0
        %v2228 = vadd.f32 0.0, %v2227
        %v2229 = vpop.f32.mrb[0].mxu0
        %v2230 = vpop.f32.mrb[0].mxu0
        %v2231 = vadd.f32 0.0, %v2230
        %v2232 = vpop.f32.mrb[0].mxu0
        %2233 = vdwg.mxu0
        %v2234 = vpack.c.bf16 %v2223, %v2220
        %v2235 = vpack.c.bf16 %v2231, %v2228
        %s2236 = scalar_lea.vmem %s6, 144
        %v2237 = vld [vmem:[%s2236] sm:$0xf]
        %v2238 = vld [vmem:[%s2236 + $0x4] sm:$0xf]
        %v2239 = vld [vmem:[%s2236 + $0x8] sm:$0xf]
        %v2240 = vld [vmem:[%s2236 + $0xc] sm:$0x1]
        %v2245 = vunpack.c.l.b16 %v2237
        %v2246 = vunpack.c.l.b16 %v2238
        %v2247 = vunpack.c.l.b16 %v2239
        %v2248 = vunpack.c.l.b16 %v2240
        %v2249 = vpack.c.b16 %v2246, %v2245
        %v2250 = vpack.c.b16 %v2248, %v2247
        %v2252 = vsel %vm1595, %v2249, 0
        %v2255 = vsel %vm1595, %v2250, 0
        %2257 = vmatprep.subr.bf16.mxu0 0
        %2258 = vmatpush1.bf16.msra.mxu0 %v1579
        %2259 = vmatprep.subr.bf16.mxu0 0
        %2260 = vmatpush1.bf16.msra.mxu0 %v1607
        %2261 = vmatprep.subr.bf16.mxu0 0
        %2262 = vmatpush1.bf16.msra.mxu0 0
        %2263 = vmatprep.subr.bf16.mxu0 0
        %2264 = vmatpush1.bf16.msra.mxu0 0
        %2265 = vmatprep.subr.bf16.mxu0 0
        %2266 = vmatpush1.bf16.msra.mxu0 0
        %2267 = vmatprep.subr.bf16.mxu0 0
        %2268 = vmatpush1.bf16.msra.mxu0 0
        %2269 = vmatprep.subr.bf16.mxu0 0
        %2270 = vmatpush1.bf16.msra.mxu0 0
        %2271 = vmatprep.subr.bf16.mxu0 0
        %2272 = vmatpush1.bf16.msra.mxu0 0
        %2273 = vmatprep.subr.bf16.mxu0 0
        %2274 = vmatpush1.bf16.msra.mxu0 0
        %2275 = vmatprep.subr.bf16.mxu0 0
        %2276 = vmatpush1.bf16.msra.mxu0 0
        %2277 = vmatprep.subr.bf16.mxu0 0
        %2278 = vmatpush1.bf16.msra.mxu0 0
        %2279 = vmatprep.subr.bf16.mxu0 0
        %2280 = vmatpush1.bf16.msra.mxu0 0
        %2281 = vmatprep.subr.bf16.mxu0 0
        %2282 = vmatpush1.bf16.msra.mxu0 0
        %2283 = vmatprep.subr.bf16.mxu0 0
        %2284 = vmatpush1.bf16.msra.mxu0 0
        %2285 = vmatprep.subr.bf16.mxu0 0
        %2286 = vmatpush1.bf16.msra.mxu0 0
        %2287 = vmatprep.subr.bf16.mxu0 0
        %2288 = vmatpush1.bf16.msra.mxu0 0
        %2289 = vmatprep.mubr.bf16.mxu0 0
        %2290 = vmatmul.mubr.bf16.gmra.mrb[0].mxu0 %v2252
        %v2291 = vpop.f32.mrb[0].mxu0
        %v2292 = vadd.f32 0.0, %v2291
        %v2293 = vpop.f32.mrb[0].mxu0
        %v2294 = vpop.f32.mrb[0].mxu0
        %v2295 = vadd.f32 0.0, %v2294
        %v2296 = vpop.f32.mrb[0].mxu0
        %2297 = vmatprep.mubr.bf16.mxu0 0
        %2298 = vmatmul.mubr.bf16.gmra.mrb[0].mxu0 %v2255
        %v2299 = vpop.f32.mrb[0].mxu0
        %v2300 = vadd.f32 0.0, %v2299
        %v2301 = vpop.f32.mrb[0].mxu0
        %v2302 = vpop.f32.mrb[0].mxu0
        %v2303 = vadd.f32 0.0, %v2302
        %v2304 = vpop.f32.mrb[0].mxu0
        %2305 = vdwg.mxu0
        %v2306 = vpack.c.bf16 %v2295, %v2292
        %v2307 = vpack.c.bf16 %v2303, %v2300
        %s2308 = scalar_lea.vmem %s6, 160
        %v2309 = vld [vmem:[%s2308] sm:$0xf]
        %v2310 = vld [vmem:[%s2308 + $0x4] sm:$0xf]
        %v2311 = vld [vmem:[%s2308 + $0x8] sm:$0xf]
        %v2312 = vld [vmem:[%s2308 + $0xc] sm:$0x1]
        %v2317 = vunpack.c.l.b16 %v2309
        %v2318 = vunpack.c.l.b16 %v2310
        %v2319 = vunpack.c.l.b16 %v2311
        %v2320 = vunpack.c.l.b16 %v2312
        %v2321 = vpack.c.b16 %v2318, %v2317
        %v2322 = vpack.c.b16 %v2320, %v2319
        %v2324 = vsel %vm1595, %v2321, 0
        %v2327 = vsel %vm1595, %v2322, 0
        %2329 = vmatprep.subr.bf16.mxu0 0
        %2330 = vmatpush1.bf16.msra.mxu0 %v1579
        %2331 = vmatprep.subr.bf16.mxu0 0
        %2332 = vmatpush1.bf16.msra.mxu0 %v1607
        %2333 = vmatprep.subr.bf16.mxu0 0
        %2334 = vmatpush1.bf16.msra.mxu0 0
        %2335 = vmatprep.subr.bf16.mxu0 0
        %2336 = vmatpush1.bf16.msra.mxu0 0
        %2337 = vmatprep.subr.bf16.mxu0 0
        %2338 = vmatpush1.bf16.msra.mxu0 0
        %2339 = vmatprep.subr.bf16.mxu0 0
        %2340 = vmatpush1.bf16.msra.mxu0 0
        %2341 = vmatprep.subr.bf16.mxu0 0
        %2342 = vmatpush1.bf16.msra.mxu0 0
        %2343 = vmatprep.subr.bf16.mxu0 0
        %2344 = vmatpush1.bf16.msra.mxu0 0
        %2345 = vmatprep.subr.bf16.mxu0 0
        %2346 = vmatpush1.bf16.msra.mxu0 0
        %2347 = vmatprep.subr.bf16.mxu0 0
        %2348 = vmatpush1.bf16.msra.mxu0 0
        %2349 = vmatprep.subr.bf16.mxu0 0
        %2350 = vmatpush1.bf16.msra.mxu0 0
        %2351 = vmatprep.subr.bf16.mxu0 0
        %2352 = vmatpush1.bf16.msra.mxu0 0
        %2353 = vmatprep.subr.bf16.mxu0 0
        %2354 = vmatpush1.bf16.msra.mxu0 0
        %2355 = vmatprep.subr.bf16.mxu0 0
        %2356 = vmatpush1.bf16.msra.mxu0 0
        %2357 = vmatprep.subr.bf16.mxu0 0
        %2358 = vmatpush1.bf16.msra.mxu0 0
        %2359 = vmatprep.subr.bf16.mxu0 0
        %2360 = vmatpush1.bf16.msra.mxu0 0
        %2361 = vmatprep.mubr.bf16.mxu0 0
        %2362 = vmatmul.mubr.bf16.gmra.mrb[0].mxu0 %v2324
        %v2363 = vpop.f32.mrb[0].mxu0
        %v2364 = vadd.f32 0.0, %v2363
        %v2365 = vpop.f32.mrb[0].mxu0
        %v2366 = vpop.f32.mrb[0].mxu0
        %v2367 = vadd.f32 0.0, %v2366
        %v2368 = vpop.f32.mrb[0].mxu0
        %2369 = vmatprep.mubr.bf16.mxu0 0
        %2370 = vmatmul.mubr.bf16.gmra.mrb[0].mxu0 %v2327
        %v2371 = vpop.f32.mrb[0].mxu0
        %v2372 = vadd.f32 0.0, %v2371
        %v2373 = vpop.f32.mrb[0].mxu0
        %v2374 = vpop.f32.mrb[0].mxu0
        %v2375 = vadd.f32 0.0, %v2374
        %v2376 = vpop.f32.mrb[0].mxu0
        %2377 = vdwg.mxu0
        %v2378 = vpack.c.bf16 %v2367, %v2364
        %v2379 = vpack.c.bf16 %v2375, %v2372
        %s2380 = scalar_lea.vmem %s6, 176
        %v2381 = vld [vmem:[%s2380] sm:$0xf]
        %v2382 = vld [vmem:[%s2380 + $0x4] sm:$0xf]
        %v2383 = vld [vmem:[%s2380 + $0x8] sm:$0xf]
        %v2384 = vld [vmem:[%s2380 + $0xc] sm:$0x1]
        %v2389 = vunpack.c.l.b16 %v2381
        %v2390 = vunpack.c.l.b16 %v2382
        %v2391 = vunpack.c.l.b16 %v2383
        %v2392 = vunpack.c.l.b16 %v2384
        %v2393 = vpack.c.b16 %v2390, %v2389
        %v2394 = vpack.c.b16 %v2392, %v2391
        %v2396 = vsel %vm1595, %v2393, 0
        %v2399 = vsel %vm1595, %v2394, 0
        %2401 = vmatprep.subr.bf16.mxu0 0
        %2402 = vmatpush1.bf16.msra.mxu0 %v1579
        %2403 = vmatprep.subr.bf16.mxu0 0
        %2404 = vmatpush1.bf16.msra.mxu0 %v1607
        %2405 = vmatprep.subr.bf16.mxu0 0
        %2406 = vmatpush1.bf16.msra.mxu0 0
        %2407 = vmatprep.subr.bf16.mxu0 0
        %2408 = vmatpush1.bf16.msra.mxu0 0
        %2409 = vmatprep.subr.bf16.mxu0 0
        %2410 = vmatpush1.bf16.msra.mxu0 0
        %2411 = vmatprep.subr.bf16.mxu0 0
        %2412 = vmatpush1.bf16.msra.mxu0 0
        %2413 = vmatprep.subr.bf16.mxu0 0
        %2414 = vmatpush1.bf16.msra.mxu0 0
        %2415 = vmatprep.subr.bf16.mxu0 0
        %2416 = vmatpush1.bf16.msra.mxu0 0
        %2417 = vmatprep.subr.bf16.mxu0 0
        %2418 = vmatpush1.bf16.msra.mxu0 0
        %2419 = vmatprep.subr.bf16.mxu0 0
        %2420 = vmatpush1.bf16.msra.mxu0 0
        %2421 = vmatprep.subr.bf16.mxu0 0
        %2422 = vmatpush1.bf16.msra.mxu0 0
        %2423 = vmatprep.subr.bf16.mxu0 0
        %2424 = vmatpush1.bf16.msra.mxu0 0
        %2425 = vmatprep.subr.bf16.mxu0 0
        %2426 = vmatpush1.bf16.msra.mxu0 0
        %2427 = vmatprep.subr.bf16.mxu0 0
        %2428 = vmatpush1.bf16.msra.mxu0 0
        %2429 = vmatprep.subr.bf16.mxu0 0
        %2430 = vmatpush1.bf16.msra.mxu0 0
        %2431 = vmatprep.subr.bf16.mxu0 0
        %2432 = vmatpush1.bf16.msra.mxu0 0
        %2433 = vmatprep.mubr.bf16.mxu0 0
        %2434 = vmatmul.mubr.bf16.gmra.mrb[0].mxu0 %v2396
        %v2435 = vpop.f32.mrb[0].mxu0
        %v2436 = vadd.f32 0.0, %v2435
        %v2437 = vpop.f32.mrb[0].mxu0
        %v2438 = vpop.f32.mrb[0].mxu0
        %v2439 = vadd.f32 0.0, %v2438
        %v2440 = vpop.f32.mrb[0].mxu0
        %2441 = vmatprep.mubr.bf16.mxu0 0
        %2442 = vmatmul.mubr.bf16.gmra.mrb[0].mxu0 %v2399
        %v2443 = vpop.f32.mrb[0].mxu0
        %v2444 = vadd.f32 0.0, %v2443
        %v2445 = vpop.f32.mrb[0].mxu0
        %v2446 = vpop.f32.mrb[0].mxu0
        %v2447 = vadd.f32 0.0, %v2446
        %v2448 = vpop.f32.mrb[0].mxu0
        %2449 = vdwg.mxu0
        %v2450 = vpack.c.bf16 %v2439, %v2436
        %v2451 = vpack.c.bf16 %v2447, %v2444
        %s2452 = scalar_lea.vmem %s6, 192
        %v2453 = vld [vmem:[%s2452] sm:$0xf]
        %v2454 = vld [vmem:[%s2452 + $0x4] sm:$0xf]
        %v2455 = vld [vmem:[%s2452 + $0x8] sm:$0xf]
        %v2456 = vld [vmem:[%s2452 + $0xc] sm:$0x1]
        %v2461 = vunpack.c.l.b16 %v2453
        %v2462 = vunpack.c.l.b16 %v2454
        %v2463 = vunpack.c.l.b16 %v2455
        %v2464 = vunpack.c.l.b16 %v2456
        %v2465 = vpack.c.b16 %v2462, %v2461
        %v2466 = vpack.c.b16 %v2464, %v2463
        %v2468 = vsel %vm1595, %v2465, 0
        %v2471 = vsel %vm1595, %v2466, 0
        %2473 = vmatprep.subr.bf16.mxu0 0
        %2474 = vmatpush1.bf16.msra.mxu0 %v1579
        %2475 = vmatprep.subr.bf16.mxu0 0
        %2476 = vmatpush1.bf16.msra.mxu0 %v1607
        %2477 = vmatprep.subr.bf16.mxu0 0
        %2478 = vmatpush1.bf16.msra.mxu0 0
        %2479 = vmatprep.subr.bf16.mxu0 0
        %2480 = vmatpush1.bf16.msra.mxu0 0
        %2481 = vmatprep.subr.bf16.mxu0 0
        %2482 = vmatpush1.bf16.msra.mxu0 0
        %2483 = vmatprep.subr.bf16.mxu0 0
        %2484 = vmatpush1.bf16.msra.mxu0 0
        %2485 = vmatprep.subr.bf16.mxu0 0
        %2486 = vmatpush1.bf16.msra.mxu0 0
        %2487 = vmatprep.subr.bf16.mxu0 0
        %2488 = vmatpush1.bf16.msra.mxu0 0
        %2489 = vmatprep.subr.bf16.mxu0 0
        %2490 = vmatpush1.bf16.msra.mxu0 0
        %2491 = vmatprep.subr.bf16.mxu0 0
        %2492 = vmatpush1.bf16.msra.mxu0 0
        %2493 = vmatprep.subr.bf16.mxu0 0
        %2494 = vmatpush1.bf16.msra.mxu0 0
        %2495 = vmatprep.subr.bf16.mxu0 0
        %2496 = vmatpush1.bf16.msra.mxu0 0
        %2497 = vmatprep.subr.bf16.mxu0 0
        %2498 = vmatpush1.bf16.msra.mxu0 0
        %2499 = vmatprep.subr.bf16.mxu0 0
        %2500 = vmatpush1.bf16.msra.mxu0 0
        %2501 = vmatprep.subr.bf16.mxu0 0
        %2502 = vmatpush1.bf16.msra.mxu0 0
        %2503 = vmatprep.subr.bf16.mxu0 0
        %2504 = vmatpush1.bf16.msra.mxu0 0
        %2505 = vmatprep.mubr.bf16.mxu0 0
        %2506 = vmatmul.mubr.bf16.gmra.mrb[0].mxu0 %v2468
        %v2507 = vpop.f32.mrb[0].mxu0
        %v2508 = vadd.f32 0.0, %v2507
        %v2509 = vpop.f32.mrb[0].mxu0
        %v2510 = vpop.f32.mrb[0].mxu0
        %v2511 = vadd.f32 0.0, %v2510
        %v2512 = vpop.f32.mrb[0].mxu0
        %2513 = vmatprep.mubr.bf16.mxu0 0
        %2514 = vmatmul.mubr.bf16.gmra.mrb[0].mxu0 %v2471
        %v2515 = vpop.f32.mrb[0].mxu0
        %v2516 = vadd.f32 0.0, %v2515
        %v2517 = vpop.f32.mrb[0].mxu0
        %v2518 = vpop.f32.mrb[0].mxu0
        %v2519 = vadd.f32 0.0, %v2518
        %v2520 = vpop.f32.mrb[0].mxu0
        %2521 = vdwg.mxu0
        %v2522 = vpack.c.bf16 %v2511, %v2508
        %v2523 = vpack.c.bf16 %v2519, %v2516
        %s2524 = scalar_lea.vmem %s6, 208
        %v2525 = vld [vmem:[%s2524] sm:$0xf]
        %v2526 = vld [vmem:[%s2524 + $0x4] sm:$0xf]
        %v2527 = vld [vmem:[%s2524 + $0x8] sm:$0xf]
        %v2528 = vld [vmem:[%s2524 + $0xc] sm:$0x1]
        %v2533 = vunpack.c.l.b16 %v2525
        %v2534 = vunpack.c.l.b16 %v2526
        %v2535 = vunpack.c.l.b16 %v2527
        %v2536 = vunpack.c.l.b16 %v2528
        %v2537 = vpack.c.b16 %v2534, %v2533
        %v2538 = vpack.c.b16 %v2536, %v2535
        %v2540 = vsel %vm1595, %v2537, 0
        %v2543 = vsel %vm1595, %v2538, 0
        %2545 = vmatprep.subr.bf16.mxu0 0
        %2546 = vmatpush1.bf16.msra.mxu0 %v1579
        %2547 = vmatprep.subr.bf16.mxu0 0
        %2548 = vmatpush1.bf16.msra.mxu0 %v1607
        %2549 = vmatprep.subr.bf16.mxu0 0
        %2550 = vmatpush1.bf16.msra.mxu0 0
        %2551 = vmatprep.subr.bf16.mxu0 0
        %2552 = vmatpush1.bf16.msra.mxu0 0
        %2553 = vmatprep.subr.bf16.mxu0 0
        %2554 = vmatpush1.bf16.msra.mxu0 0
        %2555 = vmatprep.subr.bf16.mxu0 0
        %2556 = vmatpush1.bf16.msra.mxu0 0
        %2557 = vmatprep.subr.bf16.mxu0 0
        %2558 = vmatpush1.bf16.msra.mxu0 0
        %2559 = vmatprep.subr.bf16.mxu0 0
        %2560 = vmatpush1.bf16.msra.mxu0 0
        %2561 = vmatprep.subr.bf16.mxu0 0
        %2562 = vmatpush1.bf16.msra.mxu0 0
        %2563 = vmatprep.subr.bf16.mxu0 0
        %2564 = vmatpush1.bf16.msra.mxu0 0
        %2565 = vmatprep.subr.bf16.mxu0 0
        %2566 = vmatpush1.bf16.msra.mxu0 0
        %2567 = vmatprep.subr.bf16.mxu0 0
        %2568 = vmatpush1.bf16.msra.mxu0 0
        %2569 = vmatprep.subr.bf16.mxu0 0
        %2570 = vmatpush1.bf16.msra.mxu0 0
        %2571 = vmatprep.subr.bf16.mxu0 0
        %2572 = vmatpush1.bf16.msra.mxu0 0
        %2573 = vmatprep.subr.bf16.mxu0 0
        %2574 = vmatpush1.bf16.msra.mxu0 0
        %2575 = vmatprep.subr.bf16.mxu0 0
        %2576 = vmatpush1.bf16.msra.mxu0 0
        %2577 = vmatprep.mubr.bf16.mxu0 0
        %2578 = vmatmul.mubr.bf16.gmra.mrb[0].mxu0 %v2540
        %v2579 = vpop.f32.mrb[0].mxu0
        %v2580 = vadd.f32 0.0, %v2579
        %v2581 = vpop.f32.mrb[0].mxu0
        %v2582 = vpop.f32.mrb[0].mxu0
        %v2583 = vadd.f32 0.0, %v2582
        %v2584 = vpop.f32.mrb[0].mxu0
        %2585 = vmatprep.mubr.bf16.mxu0 0
        %2586 = vmatmul.mubr.bf16.gmra.mrb[0].mxu0 %v2543
        %v2587 = vpop.f32.mrb[0].mxu0
        %v2588 = vadd.f32 0.0, %v2587
        %v2589 = vpop.f32.mrb[0].mxu0
        %v2590 = vpop.f32.mrb[0].mxu0
        %v2591 = vadd.f32 0.0, %v2590
        %v2592 = vpop.f32.mrb[0].mxu0
        %2593 = vdwg.mxu0
        %v2594 = vpack.c.bf16 %v2583, %v2580
        %v2595 = vpack.c.bf16 %v2591, %v2588
        %s2596 = scalar_lea.vmem %s6, 224
        %v2597 = vld [vmem:[%s2596] sm:$0xf]
        %v2598 = vld [vmem:[%s2596 + $0x4] sm:$0xf]
        %v2599 = vld [vmem:[%s2596 + $0x8] sm:$0xf]
        %v2600 = vld [vmem:[%s2596 + $0xc] sm:$0x1]
        %v2605 = vunpack.c.l.b16 %v2597
        %v2606 = vunpack.c.l.b16 %v2598
        %v2607 = vunpack.c.l.b16 %v2599
        %v2608 = vunpack.c.l.b16 %v2600
        %v2609 = vpack.c.b16 %v2606, %v2605
        %v2610 = vpack.c.b16 %v2608, %v2607
        %v2612 = vsel %vm1595, %v2609, 0
        %v2615 = vsel %vm1595, %v2610, 0
        %2617 = vmatprep.subr.bf16.mxu0 0
        %2618 = vmatpush1.bf16.msra.mxu0 %v1579
        %2619 = vmatprep.subr.bf16.mxu0 0
        %2620 = vmatpush1.bf16.msra.mxu0 %v1607
        %2621 = vmatprep.subr.bf16.mxu0 0
        %2622 = vmatpush1.bf16.msra.mxu0 0
        %2623 = vmatprep.subr.bf16.mxu0 0
        %2624 = vmatpush1.bf16.msra.mxu0 0
        %2625 = vmatprep.subr.bf16.mxu0 0
        %2626 = vmatpush1.bf16.msra.mxu0 0
        %2627 = vmatprep.subr.bf16.mxu0 0
        %2628 = vmatpush1.bf16.msra.mxu0 0
        %2629 = vmatprep.subr.bf16.mxu0 0
        %2630 = vmatpush1.bf16.msra.mxu0 0
        %2631 = vmatprep.subr.bf16.mxu0 0
        %2632 = vmatpush1.bf16.msra.mxu0 0
        %2633 = vmatprep.subr.bf16.mxu0 0
        %2634 = vmatpush1.bf16.msra.mxu0 0
        %2635 = vmatprep.subr.bf16.mxu0 0
        %2636 = vmatpush1.bf16.msra.mxu0 0
        %2637 = vmatprep.subr.bf16.mxu0 0
        %2638 = vmatpush1.bf16.msra.mxu0 0
        %2639 = vmatprep.subr.bf16.mxu0 0
        %2640 = vmatpush1.bf16.msra.mxu0 0
        %2641 = vmatprep.subr.bf16.mxu0 0
        %2642 = vmatpush1.bf16.msra.mxu0 0
        %2643 = vmatprep.subr.bf16.mxu0 0
        %2644 = vmatpush1.bf16.msra.mxu0 0
        %2645 = vmatprep.subr.bf16.mxu0 0
        %2646 = vmatpush1.bf16.msra.mxu0 0
        %2647 = vmatprep.subr.bf16.mxu0 0
        %2648 = vmatpush1.bf16.msra.mxu0 0
        %2649 = vmatprep.mubr.bf16.mxu0 0
        %2650 = vmatmul.mubr.bf16.gmra.mrb[0].mxu0 %v2612
        %v2651 = vpop.f32.mrb[0].mxu0
        %v2652 = vadd.f32 0.0, %v2651
        %v2653 = vpop.f32.mrb[0].mxu0
        %v2654 = vpop.f32.mrb[0].mxu0
        %v2655 = vadd.f32 0.0, %v2654
        %v2656 = vpop.f32.mrb[0].mxu0
        %2657 = vmatprep.mubr.bf16.mxu0 0
        %2658 = vmatmul.mubr.bf16.gmra.mrb[0].mxu0 %v2615
        %v2659 = vpop.f32.mrb[0].mxu0
        %v2660 = vadd.f32 0.0, %v2659
        %v2661 = vpop.f32.mrb[0].mxu0
        %v2662 = vpop.f32.mrb[0].mxu0
        %v2663 = vadd.f32 0.0, %v2662
        %v2664 = vpop.f32.mrb[0].mxu0
        %2665 = vdwg.mxu0
        %v2666 = vpack.c.bf16 %v2655, %v2652
        %v2667 = vpack.c.bf16 %v2663, %v2660
        %s2668 = scalar_lea.vmem %s6, 240
        %v2669 = vld [vmem:[%s2668] sm:$0xf]
        %v2670 = vld [vmem:[%s2668 + $0x4] sm:$0xf]
        %v2671 = vld [vmem:[%s2668 + $0x8] sm:$0xf]
        %v2672 = vld [vmem:[%s2668 + $0xc] sm:$0x1]
        %v2677 = vunpack.c.l.b16 %v2669
        %v2678 = vunpack.c.l.b16 %v2670
        %v2679 = vunpack.c.l.b16 %v2671
        %v2680 = vunpack.c.l.b16 %v2672
        %v2681 = vpack.c.b16 %v2678, %v2677
        %v2682 = vpack.c.b16 %v2680, %v2679
        %v2684 = vsel %vm1595, %v2681, 0
        %v2687 = vsel %vm1595, %v2682, 0
        %2689 = vmatprep.subr.bf16.mxu0 0
        %2690 = vmatpush1.bf16.msra.mxu0 %v1579
        %2691 = vmatprep.subr.bf16.mxu0 0
        %2692 = vmatpush1.bf16.msra.mxu0 %v1607
        %2693 = vmatprep.subr.bf16.mxu0 0
        %2694 = vmatpush1.bf16.msra.mxu0 0
        %2695 = vmatprep.subr.bf16.mxu0 0
        %2696 = vmatpush1.bf16.msra.mxu0 0
        %2697 = vmatprep.subr.bf16.mxu0 0
        %2698 = vmatpush1.bf16.msra.mxu0 0
        %2699 = vmatprep.subr.bf16.mxu0 0
        %2700 = vmatpush1.bf16.msra.mxu0 0
        %2701 = vmatprep.subr.bf16.mxu0 0
        %2702 = vmatpush1.bf16.msra.mxu0 0
        %2703 = vmatprep.subr.bf16.mxu0 0
        %2704 = vmatpush1.bf16.msra.mxu0 0
        %2705 = vmatprep.subr.bf16.mxu0 0
        %2706 = vmatpush1.bf16.msra.mxu0 0
        %2707 = vmatprep.subr.bf16.mxu0 0
        %2708 = vmatpush1.bf16.msra.mxu0 0
        %2709 = vmatprep.subr.bf16.mxu0 0
        %2710 = vmatpush1.bf16.msra.mxu0 0
        %2711 = vmatprep.subr.bf16.mxu0 0
        %2712 = vmatpush1.bf16.msra.mxu0 0
        %2713 = vmatprep.subr.bf16.mxu0 0
        %2714 = vmatpush1.bf16.msra.mxu0 0
        %2715 = vmatprep.subr.bf16.mxu0 0
        %2716 = vmatpush1.bf16.msra.mxu0 0
        %2717 = vmatprep.subr.bf16.mxu0 0
        %2718 = vmatpush1.bf16.msra.mxu0 0
        %2719 = vmatprep.subr.bf16.mxu0 0
        %2720 = vmatpush1.bf16.msra.mxu0 0
        %2721 = vmatprep.mubr.bf16.mxu0 0
        %2722 = vmatmul.mubr.bf16.gmra.mrb[0].mxu0 %v2684
        %v2723 = vpop.f32.mrb[0].mxu0
        %v2724 = vadd.f32 0.0, %v2723
        %v2725 = vpop.f32.mrb[0].mxu0
        %v2726 = vpop.f32.mrb[0].mxu0
        %v2727 = vadd.f32 0.0, %v2726
        %v2728 = vpop.f32.mrb[0].mxu0
        %2729 = vmatprep.mubr.bf16.mxu0 0
        %2730 = vmatmul.mubr.bf16.gmra.mrb[0].mxu0 %v2687
        %v2731 = vpop.f32.mrb[0].mxu0
        %v2732 = vadd.f32 0.0, %v2731
        %v2733 = vpop.f32.mrb[0].mxu0
        %v2734 = vpop.f32.mrb[0].mxu0
        %v2735 = vadd.f32 0.0, %v2734
        %v2736 = vpop.f32.mrb[0].mxu0
        %2737 = vdwg.mxu0
        %v2738 = vpack.c.bf16 %v2727, %v2724
        %v2739 = vpack.c.bf16 %v2735, %v2732
        %s2740 = scalar_lea.vmem %s6, 256
        %v2741 = vld [vmem:[%s2740] sm:$0xf]
        %v2742 = vld [vmem:[%s2740 + $0x4] sm:$0xf]
        %v2743 = vld [vmem:[%s2740 + $0x8] sm:$0xf]
        %v2744 = vld [vmem:[%s2740 + $0xc] sm:$0x1]
        %v2749 = vunpack.c.l.b16 %v2741
        %v2750 = vunpack.c.l.b16 %v2742
        %v2751 = vunpack.c.l.b16 %v2743
        %v2752 = vunpack.c.l.b16 %v2744
        %v2753 = vpack.c.b16 %v2750, %v2749
        %v2754 = vpack.c.b16 %v2752, %v2751
        %v2756 = vsel %vm1595, %v2753, 0
        %v2759 = vsel %vm1595, %v2754, 0
        %2761 = vmatprep.subr.bf16.mxu0 0
        %2762 = vmatpush1.bf16.msra.mxu0 %v1579
        %2763 = vmatprep.subr.bf16.mxu0 0
        %2764 = vmatpush1.bf16.msra.mxu0 %v1607
        %2765 = vmatprep.subr.bf16.mxu0 0
        %2766 = vmatpush1.bf16.msra.mxu0 0
        %2767 = vmatprep.subr.bf16.mxu0 0
        %2768 = vmatpush1.bf16.msra.mxu0 0
        %2769 = vmatprep.subr.bf16.mxu0 0
        %2770 = vmatpush1.bf16.msra.mxu0 0
        %2771 = vmatprep.subr.bf16.mxu0 0
        %2772 = vmatpush1.bf16.msra.mxu0 0
        %2773 = vmatprep.subr.bf16.mxu0 0
        %2774 = vmatpush1.bf16.msra.mxu0 0
        %2775 = vmatprep.subr.bf16.mxu0 0
        %2776 = vmatpush1.bf16.msra.mxu0 0
        %2777 = vmatprep.subr.bf16.mxu0 0
        %2778 = vmatpush1.bf16.msra.mxu0 0
        %2779 = vmatprep.subr.bf16.mxu0 0
        %2780 = vmatpush1.bf16.msra.mxu0 0
        %2781 = vmatprep.subr.bf16.mxu0 0
        %2782 = vmatpush1.bf16.msra.mxu0 0
        %2783 = vmatprep.subr.bf16.mxu0 0
        %2784 = vmatpush1.bf16.msra.mxu0 0
        %2785 = vmatprep.subr.bf16.mxu0 0
        %2786 = vmatpush1.bf16.msra.mxu0 0
        %2787 = vmatprep.subr.bf16.mxu0 0
        %2788 = vmatpush1.bf16.msra.mxu0 0
        %2789 = vmatprep.subr.bf16.mxu0 0
        %2790 = vmatpush1.bf16.msra.mxu0 0
        %2791 = vmatprep.subr.bf16.mxu0 0
        %2792 = vmatpush1.bf16.msra.mxu0 0
        %2793 = vmatprep.mubr.bf16.mxu0 0
        %2794 = vmatmul.mubr.bf16.gmra.mrb[0].mxu0 %v2756
        %v2795 = vpop.f32.mrb[0].mxu0
        %v2796 = vadd.f32 0.0, %v2795
        %v2797 = vpop.f32.mrb[0].mxu0
        %v2798 = vpop.f32.mrb[0].mxu0
        %v2799 = vadd.f32 0.0, %v2798
        %v2800 = vpop.f32.mrb[0].mxu0
        %2801 = vmatprep.mubr.bf16.mxu0 0
        %2802 = vmatmul.mubr.bf16.gmra.mrb[0].mxu0 %v2759
        %v2803 = vpop.f32.mrb[0].mxu0
        %v2804 = vadd.f32 0.0, %v2803
        %v2805 = vpop.f32.mrb[0].mxu0
        %v2806 = vpop.f32.mrb[0].mxu0
        %v2807 = vadd.f32 0.0, %v2806
        %v2808 = vpop.f32.mrb[0].mxu0
        %2809 = vdwg.mxu0
        %v2810 = vpack.c.bf16 %v2799, %v2796
        %v2811 = vpack.c.bf16 %v2807, %v2804
        %s2812 = scalar_lea.vmem %s6, 272
        %v2813 = vld [vmem:[%s2812] sm:$0xf]
        %v2814 = vld [vmem:[%s2812 + $0x4] sm:$0xf]
        %v2815 = vld [vmem:[%s2812 + $0x8] sm:$0xf]
        %v2816 = vld [vmem:[%s2812 + $0xc] sm:$0x1]
        %v2821 = vunpack.c.l.b16 %v2813
        %v2822 = vunpack.c.l.b16 %v2814
        %v2823 = vunpack.c.l.b16 %v2815
        %v2824 = vunpack.c.l.b16 %v2816
        %v2825 = vpack.c.b16 %v2822, %v2821
        %v2826 = vpack.c.b16 %v2824, %v2823
        %v2828 = vsel %vm1595, %v2825, 0
        %v2831 = vsel %vm1595, %v2826, 0
        %2833 = vmatprep.subr.bf16.mxu0 0
        %2834 = vmatpush1.bf16.msra.mxu0 %v1579
        %2835 = vmatprep.subr.bf16.mxu0 0
        %2836 = vmatpush1.bf16.msra.mxu0 %v1607
        %2837 = vmatprep.subr.bf16.mxu0 0
        %2838 = vmatpush1.bf16.msra.mxu0 0
        %2839 = vmatprep.subr.bf16.mxu0 0
        %2840 = vmatpush1.bf16.msra.mxu0 0
        %2841 = vmatprep.subr.bf16.mxu0 0
        %2842 = vmatpush1.bf16.msra.mxu0 0
        %2843 = vmatprep.subr.bf16.mxu0 0
        %2844 = vmatpush1.bf16.msra.mxu0 0
        %2845 = vmatprep.subr.bf16.mxu0 0
        %2846 = vmatpush1.bf16.msra.mxu0 0
        %2847 = vmatprep.subr.bf16.mxu0 0
        %2848 = vmatpush1.bf16.msra.mxu0 0
        %2849 = vmatprep.subr.bf16.mxu0 0
        %2850 = vmatpush1.bf16.msra.mxu0 0
        %2851 = vmatprep.subr.bf16.mxu0 0
        %2852 = vmatpush1.bf16.msra.mxu0 0
        %2853 = vmatprep.subr.bf16.mxu0 0
        %2854 = vmatpush1.bf16.msra.mxu0 0
        %2855 = vmatprep.subr.bf16.mxu0 0
        %2856 = vmatpush1.bf16.msra.mxu0 0
        %2857 = vmatprep.subr.bf16.mxu0 0
        %2858 = vmatpush1.bf16.msra.mxu0 0
        %2859 = vmatprep.subr.bf16.mxu0 0
        %2860 = vmatpush1.bf16.msra.mxu0 0
        %2861 = vmatprep.subr.bf16.mxu0 0
        %2862 = vmatpush1.bf16.msra.mxu0 0
        %2863 = vmatprep.subr.bf16.mxu0 0
        %2864 = vmatpush1.bf16.msra.mxu0 0
        %2865 = vmatprep.mubr.bf16.mxu0 0
        %2866 = vmatmul.mubr.bf16.gmra.mrb[0].mxu0 %v2828
        %v2867 = vpop.f32.mrb[0].mxu0
        %v2868 = vadd.f32 0.0, %v2867
        %v2869 = vpop.f32.mrb[0].mxu0
        %v2870 = vpop.f32.mrb[0].mxu0
        %v2871 = vadd.f32 0.0, %v2870
        %v2872 = vpop.f32.mrb[0].mxu0
        %2873 = vmatprep.mubr.bf16.mxu0 0
        %2874 = vmatmul.mubr.bf16.gmra.mrb[0].mxu0 %v2831
        %v2875 = vpop.f32.mrb[0].mxu0
        %v2876 = vadd.f32 0.0, %v2875
        %v2877 = vpop.f32.mrb[0].mxu0
        %v2878 = vpop.f32.mrb[0].mxu0
        %v2879 = vadd.f32 0.0, %v2878
        %v2880 = vpop.f32.mrb[0].mxu0
        %2881 = vdwg.mxu0
        %v2882 = vpack.c.bf16 %v2871, %v2868
        %v2883 = vpack.c.bf16 %v2879, %v2876
        %s2884 = scalar_lea.vmem %s6, 288
        %v2885 = vld [vmem:[%s2884] sm:$0xf]
        %v2886 = vld [vmem:[%s2884 + $0x4] sm:$0xf]
        %v2887 = vld [vmem:[%s2884 + $0x8] sm:$0xf]
        %v2888 = vld [vmem:[%s2884 + $0xc] sm:$0x1]
        %v2893 = vunpack.c.l.b16 %v2885
        %v2894 = vunpack.c.l.b16 %v2886
        %v2895 = vunpack.c.l.b16 %v2887
        %v2896 = vunpack.c.l.b16 %v2888
        %v2897 = vpack.c.b16 %v2894, %v2893
        %v2898 = vpack.c.b16 %v2896, %v2895
        %v2900 = vsel %vm1595, %v2897, 0
        %v2903 = vsel %vm1595, %v2898, 0
        %2905 = vmatprep.subr.bf16.mxu0 0
        %2906 = vmatpush1.bf16.msra.mxu0 %v1579
        %2907 = vmatprep.subr.bf16.mxu0 0
        %2908 = vmatpush1.bf16.msra.mxu0 %v1607
        %2909 = vmatprep.subr.bf16.mxu0 0
        %2910 = vmatpush1.bf16.msra.mxu0 0
        %2911 = vmatprep.subr.bf16.mxu0 0
        %2912 = vmatpush1.bf16.msra.mxu0 0
        %2913 = vmatprep.subr.bf16.mxu0 0
        %2914 = vmatpush1.bf16.msra.mxu0 0
        %2915 = vmatprep.subr.bf16.mxu0 0
        %2916 = vmatpush1.bf16.msra.mxu0 0
        %2917 = vmatprep.subr.bf16.mxu0 0
        %2918 = vmatpush1.bf16.msra.mxu0 0
        %2919 = vmatprep.subr.bf16.mxu0 0
        %2920 = vmatpush1.bf16.msra.mxu0 0
        %2921 = vmatprep.subr.bf16.mxu0 0
        %2922 = vmatpush1.bf16.msra.mxu0 0
        %2923 = vmatprep.subr.bf16.mxu0 0
        %2924 = vmatpush1.bf16.msra.mxu0 0
        %2925 = vmatprep.subr.bf16.mxu0 0
        %2926 = vmatpush1.bf16.msra.mxu0 0
        %2927 = vmatprep.subr.bf16.mxu0 0
        %2928 = vmatpush1.bf16.msra.mxu0 0
        %2929 = vmatprep.subr.bf16.mxu0 0
        %2930 = vmatpush1.bf16.msra.mxu0 0
        %2931 = vmatprep.subr.bf16.mxu0 0
        %2932 = vmatpush1.bf16.msra.mxu0 0
        %2933 = vmatprep.subr.bf16.mxu0 0
        %2934 = vmatpush1.bf16.msra.mxu0 0
        %2935 = vmatprep.subr.bf16.mxu0 0
        %2936 = vmatpush1.bf16.msra.mxu0 0
        %2937 = vmatprep.mubr.bf16.mxu0 0
        %2938 = vmatmul.mubr.bf16.gmra.mrb[0].mxu0 %v2900
        %v2939 = vpop.f32.mrb[0].mxu0
        %v2940 = vadd.f32 0.0, %v2939
        %v2941 = vpop.f32.mrb[0].mxu0
        %v2942 = vpop.f32.mrb[0].mxu0
        %v2943 = vadd.f32 0.0, %v2942
        %v2944 = vpop.f32.mrb[0].mxu0
        %2945 = vmatprep.mubr.bf16.mxu0 0
        %2946 = vmatmul.mubr.bf16.gmra.mrb[0].mxu0 %v2903
        %v2947 = vpop.f32.mrb[0].mxu0
        %v2948 = vadd.f32 0.0, %v2947
        %v2949 = vpop.f32.mrb[0].mxu0
        %v2950 = vpop.f32.mrb[0].mxu0
        %v2951 = vadd.f32 0.0, %v2950
        %v2952 = vpop.f32.mrb[0].mxu0
        %2953 = vdwg.mxu0
        %v2954 = vpack.c.bf16 %v2943, %v2940
        %v2955 = vpack.c.bf16 %v2951, %v2948
        %s2956 = scalar_lea.vmem %s6, 304
        %v2957 = vld [vmem:[%s2956] sm:$0xf]
        %v2958 = vld [vmem:[%s2956 + $0x4] sm:$0xf]
        %v2959 = vld [vmem:[%s2956 + $0x8] sm:$0xf]
        %v2960 = vld [vmem:[%s2956 + $0xc] sm:$0x1]
        %v2965 = vunpack.c.l.b16 %v2957
        %v2966 = vunpack.c.l.b16 %v2958
        %v2967 = vunpack.c.l.b16 %v2959
        %v2968 = vunpack.c.l.b16 %v2960
        %v2969 = vpack.c.b16 %v2966, %v2965
        %v2970 = vpack.c.b16 %v2968, %v2967
        %v2972 = vsel %vm1595, %v2969, 0
        %v2975 = vsel %vm1595, %v2970, 0
        %2977 = vmatprep.subr.bf16.mxu0 0
        %2978 = vmatpush1.bf16.msra.mxu0 %v1579
        %2979 = vmatprep.subr.bf16.mxu0 0
        %2980 = vmatpush1.bf16.msra.mxu0 %v1607
        %2981 = vmatprep.subr.bf16.mxu0 0
        %2982 = vmatpush1.bf16.msra.mxu0 0
        %2983 = vmatprep.subr.bf16.mxu0 0
        %2984 = vmatpush1.bf16.msra.mxu0 0
        %2985 = vmatprep.subr.bf16.mxu0 0
        %2986 = vmatpush1.bf16.msra.mxu0 0
        %2987 = vmatprep.subr.bf16.mxu0 0
        %2988 = vmatpush1.bf16.msra.mxu0 0
        %2989 = vmatprep.subr.bf16.mxu0 0
        %2990 = vmatpush1.bf16.msra.mxu0 0
        %2991 = vmatprep.subr.bf16.mxu0 0
        %2992 = vmatpush1.bf16.msra.mxu0 0
        %2993 = vmatprep.subr.bf16.mxu0 0
        %2994 = vmatpush1.bf16.msra.mxu0 0
        %2995 = vmatprep.subr.bf16.mxu0 0
        %2996 = vmatpush1.bf16.msra.mxu0 0
        %2997 = vmatprep.subr.bf16.mxu0 0
        %2998 = vmatpush1.bf16.msra.mxu0 0
        %2999 = vmatprep.subr.bf16.mxu0 0
        %3000 = vmatpush1.bf16.msra.mxu0 0
        %3001 = vmatprep.subr.bf16.mxu0 0
        %3002 = vmatpush1.bf16.msra.mxu0 0
        %3003 = vmatprep.subr.bf16.mxu0 0
        %3004 = vmatpush1.bf16.msra.mxu0 0
        %3005 = vmatprep.subr.bf16.mxu0 0
        %3006 = vmatpush1.bf16.msra.mxu0 0
        %3007 = vmatprep.subr.bf16.mxu0 0
        %3008 = vmatpush1.bf16.msra.mxu0 0
        %3009 = vmatprep.mubr.bf16.mxu0 0
        %3010 = vmatmul.mubr.bf16.gmra.mrb[0].mxu0 %v2972
        %v3011 = vpop.f32.mrb[0].mxu0
        %v3012 = vadd.f32 0.0, %v3011
        %v3013 = vpop.f32.mrb[0].mxu0
        %v3014 = vpop.f32.mrb[0].mxu0
        %v3015 = vadd.f32 0.0, %v3014
        %v3016 = vpop.f32.mrb[0].mxu0
        %3017 = vmatprep.mubr.bf16.mxu0 0
        %3018 = vmatmul.mubr.bf16.gmra.mrb[0].mxu0 %v2975
        %v3019 = vpop.f32.mrb[0].mxu0
        %v3020 = vadd.f32 0.0, %v3019
        %v3021 = vpop.f32.mrb[0].mxu0
        %v3022 = vpop.f32.mrb[0].mxu0
        %v3023 = vadd.f32 0.0, %v3022
        %v3024 = vpop.f32.mrb[0].mxu0
        %3025 = vdwg.mxu0
        %v3026 = vpack.c.bf16 %v3015, %v3012
        %v3027 = vpack.c.bf16 %v3023, %v3020
        %s3028 = scalar_lea.vmem %s6, 320
        %v3029 = vld [vmem:[%s3028] sm:$0xf]
        %v3030 = vld [vmem:[%s3028 + $0x4] sm:$0xf]
        %v3031 = vld [vmem:[%s3028 + $0x8] sm:$0xf]
        %v3032 = vld [vmem:[%s3028 + $0xc] sm:$0x1]
        %v3037 = vunpack.c.l.b16 %v3029
        %v3038 = vunpack.c.l.b16 %v3030
        %v3039 = vunpack.c.l.b16 %v3031
        %v3040 = vunpack.c.l.b16 %v3032
        %v3041 = vpack.c.b16 %v3038, %v3037
        %v3042 = vpack.c.b16 %v3040, %v3039
        %v3044 = vsel %vm1595, %v3041, 0
        %v3047 = vsel %vm1595, %v3042, 0
        %3049 = vmatprep.subr.bf16.mxu0 0
        %3050 = vmatpush1.bf16.msra.mxu0 %v1579
        %3051 = vmatprep.subr.bf16.mxu0 0
        %3052 = vmatpush1.bf16.msra.mxu0 %v1607
        %3053 = vmatprep.subr.bf16.mxu0 0
        %3054 = vmatpush1.bf16.msra.mxu0 0
        %3055 = vmatprep.subr.bf16.mxu0 0
        %3056 = vmatpush1.bf16.msra.mxu0 0
        %3057 = vmatprep.subr.bf16.mxu0 0
        %3058 = vmatpush1.bf16.msra.mxu0 0
        %3059 = vmatprep.subr.bf16.mxu0 0
        %3060 = vmatpush1.bf16.msra.mxu0 0
        %3061 = vmatprep.subr.bf16.mxu0 0
        %3062 = vmatpush1.bf16.msra.mxu0 0
        %3063 = vmatprep.subr.bf16.mxu0 0
        %3064 = vmatpush1.bf16.msra.mxu0 0
        %3065 = vmatprep.subr.bf16.mxu0 0
        %3066 = vmatpush1.bf16.msra.mxu0 0
        %3067 = vmatprep.subr.bf16.mxu0 0
        %3068 = vmatpush1.bf16.msra.mxu0 0
        %3069 = vmatprep.subr.bf16.mxu0 0
        %3070 = vmatpush1.bf16.msra.mxu0 0
        %3071 = vmatprep.subr.bf16.mxu0 0
        %3072 = vmatpush1.bf16.msra.mxu0 0
        %3073 = vmatprep.subr.bf16.mxu0 0
        %3074 = vmatpush1.bf16.msra.mxu0 0
        %3075 = vmatprep.subr.bf16.mxu0 0
        %3076 = vmatpush1.bf16.msra.mxu0 0
        %3077 = vmatprep.subr.bf16.mxu0 0
        %3078 = vmatpush1.bf16.msra.mxu0 0
        %3079 = vmatprep.subr.bf16.mxu0 0
        %3080 = vmatpush1.bf16.msra.mxu0 0
        %3081 = vmatprep.mubr.bf16.mxu0 0
        %3082 = vmatmul.mubr.bf16.gmra.mrb[0].mxu0 %v3044
        %v3083 = vpop.f32.mrb[0].mxu0
        %v3084 = vadd.f32 0.0, %v3083
        %v3085 = vpop.f32.mrb[0].mxu0
        %v3086 = vpop.f32.mrb[0].mxu0
        %v3087 = vadd.f32 0.0, %v3086
        %v3088 = vpop.f32.mrb[0].mxu0
        %3089 = vmatprep.mubr.bf16.mxu0 0
        %3090 = vmatmul.mubr.bf16.gmra.mrb[0].mxu0 %v3047
        %v3091 = vpop.f32.mrb[0].mxu0
        %v3092 = vadd.f32 0.0, %v3091
        %v3093 = vpop.f32.mrb[0].mxu0
        %v3094 = vpop.f32.mrb[0].mxu0
        %v3095 = vadd.f32 0.0, %v3094
        %v3096 = vpop.f32.mrb[0].mxu0
        %3097 = vdwg.mxu0
        %v3098 = vpack.c.bf16 %v3087, %v3084
        %v3099 = vpack.c.bf16 %v3095, %v3092
        %s3100 = scalar_lea.vmem %s6, 336
        %v3101 = vld [vmem:[%s3100] sm:$0xf]
        %v3102 = vld [vmem:[%s3100 + $0x4] sm:$0xf]
        %v3103 = vld [vmem:[%s3100 + $0x8] sm:$0xf]
        %v3104 = vld [vmem:[%s3100 + $0xc] sm:$0x1]
        %v3109 = vunpack.c.l.b16 %v3101
        %v3110 = vunpack.c.l.b16 %v3102
        %v3111 = vunpack.c.l.b16 %v3103
        %v3112 = vunpack.c.l.b16 %v3104
        %v3113 = vpack.c.b16 %v3110, %v3109
        %v3114 = vpack.c.b16 %v3112, %v3111
        %v3116 = vsel %vm1595, %v3113, 0
        %v3119 = vsel %vm1595, %v3114, 0
        %3121 = vmatprep.subr.bf16.mxu0 0
        %3122 = vmatpush1.bf16.msra.mxu0 %v1579
        %3123 = vmatprep.subr.bf16.mxu0 0
        %3124 = vmatpush1.bf16.msra.mxu0 %v1607
        %3125 = vmatprep.subr.bf16.mxu0 0
        %3126 = vmatpush1.bf16.msra.mxu0 0
        %3127 = vmatprep.subr.bf16.mxu0 0
        %3128 = vmatpush1.bf16.msra.mxu0 0
        %3129 = vmatprep.subr.bf16.mxu0 0
        %3130 = vmatpush1.bf16.msra.mxu0 0
        %3131 = vmatprep.subr.bf16.mxu0 0
        %3132 = vmatpush1.bf16.msra.mxu0 0
        %3133 = vmatprep.subr.bf16.mxu0 0
        %3134 = vmatpush1.bf16.msra.mxu0 0
        %3135 = vmatprep.subr.bf16.mxu0 0
        %3136 = vmatpush1.bf16.msra.mxu0 0
        %3137 = vmatprep.subr.bf16.mxu0 0
        %3138 = vmatpush1.bf16.msra.mxu0 0
        %3139 = vmatprep.subr.bf16.mxu0 0
        %3140 = vmatpush1.bf16.msra.mxu0 0
        %3141 = vmatprep.subr.bf16.mxu0 0
        %3142 = vmatpush1.bf16.msra.mxu0 0
        %3143 = vmatprep.subr.bf16.mxu0 0
        %3144 = vmatpush1.bf16.msra.mxu0 0
        %3145 = vmatprep.subr.bf16.mxu0 0
        %3146 = vmatpush1.bf16.msra.mxu0 0
        %3147 = vmatprep.subr.bf16.mxu0 0
        %3148 = vmatpush1.bf16.msra.mxu0 0
        %3149 = vmatprep.subr.bf16.mxu0 0
        %3150 = vmatpush1.bf16.msra.mxu0 0
        %3151 = vmatprep.subr.bf16.mxu0 0
        %3152 = vmatpush1.bf16.msra.mxu0 0
        %3153 = vmatprep.mubr.bf16.mxu0 0
        %3154 = vmatmul.mubr.bf16.gmra.mrb[0].mxu0 %v3116
        %v3155 = vpop.f32.mrb[0].mxu0
        %v3156 = vadd.f32 0.0, %v3155
        %v3157 = vpop.f32.mrb[0].mxu0
        %v3158 = vpop.f32.mrb[0].mxu0
        %v3159 = vadd.f32 0.0, %v3158
        %v3160 = vpop.f32.mrb[0].mxu0
        %3161 = vmatprep.mubr.bf16.mxu0 0
        %3162 = vmatmul.mubr.bf16.gmra.mrb[0].mxu0 %v3119
        %v3163 = vpop.f32.mrb[0].mxu0
        %v3164 = vadd.f32 0.0, %v3163
        %v3165 = vpop.f32.mrb[0].mxu0
        %v3166 = vpop.f32.mrb[0].mxu0
        %v3167 = vadd.f32 0.0, %v3166
        %v3168 = vpop.f32.mrb[0].mxu0
        %3169 = vdwg.mxu0
        %v3170 = vpack.c.bf16 %v3159, %v3156
        %v3171 = vpack.c.bf16 %v3167, %v3164
        %s3172 = scalar_lea.vmem %s6, 352
        %v3173 = vld [vmem:[%s3172] sm:$0xf]
        %v3174 = vld [vmem:[%s3172 + $0x4] sm:$0xf]
        %v3175 = vld [vmem:[%s3172 + $0x8] sm:$0xf]
        %v3176 = vld [vmem:[%s3172 + $0xc] sm:$0x1]
        %v3181 = vunpack.c.l.b16 %v3173
        %v3182 = vunpack.c.l.b16 %v3174
        %v3183 = vunpack.c.l.b16 %v3175
        %v3184 = vunpack.c.l.b16 %v3176
        %v3185 = vpack.c.b16 %v3182, %v3181
        %v3186 = vpack.c.b16 %v3184, %v3183
        %v3188 = vsel %vm1595, %v3185, 0
        %v3191 = vsel %vm1595, %v3186, 0
        %3193 = vmatprep.subr.bf16.mxu0 0
        %3194 = vmatpush1.bf16.msra.mxu0 %v1579
        %3195 = vmatprep.subr.bf16.mxu0 0
        %3196 = vmatpush1.bf16.msra.mxu0 %v1607
        %3197 = vmatprep.subr.bf16.mxu0 0
        %3198 = vmatpush1.bf16.msra.mxu0 0
        %3199 = vmatprep.subr.bf16.mxu0 0
        %3200 = vmatpush1.bf16.msra.mxu0 0
        %3201 = vmatprep.subr.bf16.mxu0 0
        %3202 = vmatpush1.bf16.msra.mxu0 0
        %3203 = vmatprep.subr.bf16.mxu0 0
        %3204 = vmatpush1.bf16.msra.mxu0 0
        %3205 = vmatprep.subr.bf16.mxu0 0
        %3206 = vmatpush1.bf16.msra.mxu0 0
        %3207 = vmatprep.subr.bf16.mxu0 0
        %3208 = vmatpush1.bf16.msra.mxu0 0
        %3209 = vmatprep.subr.bf16.mxu0 0
        %3210 = vmatpush1.bf16.msra.mxu0 0
        %3211 = vmatprep.subr.bf16.mxu0 0
        %3212 = vmatpush1.bf16.msra.mxu0 0
        %3213 = vmatprep.subr.bf16.mxu0 0
        %3214 = vmatpush1.bf16.msra.mxu0 0
        %3215 = vmatprep.subr.bf16.mxu0 0
        %3216 = vmatpush1.bf16.msra.mxu0 0
        %3217 = vmatprep.subr.bf16.mxu0 0
        %3218 = vmatpush1.bf16.msra.mxu0 0
        %3219 = vmatprep.subr.bf16.mxu0 0
        %3220 = vmatpush1.bf16.msra.mxu0 0
        %3221 = vmatprep.subr.bf16.mxu0 0
        %3222 = vmatpush1.bf16.msra.mxu0 0
        %3223 = vmatprep.subr.bf16.mxu0 0
        %3224 = vmatpush1.bf16.msra.mxu0 0
        %3225 = vmatprep.mubr.bf16.mxu0 0
        %3226 = vmatmul.mubr.bf16.gmra.mrb[0].mxu0 %v3188
        %v3227 = vpop.f32.mrb[0].mxu0
        %v3228 = vadd.f32 0.0, %v3227
        %v3229 = vpop.f32.mrb[0].mxu0
        %v3230 = vpop.f32.mrb[0].mxu0
        %v3231 = vadd.f32 0.0, %v3230
        %v3232 = vpop.f32.mrb[0].mxu0
        %3233 = vmatprep.mubr.bf16.mxu0 0
        %3234 = vmatmul.mubr.bf16.gmra.mrb[0].mxu0 %v3191
        %v3235 = vpop.f32.mrb[0].mxu0
        %v3236 = vadd.f32 0.0, %v3235
        %v3237 = vpop.f32.mrb[0].mxu0
        %v3238 = vpop.f32.mrb[0].mxu0
        %v3239 = vadd.f32 0.0, %v3238
        %v3240 = vpop.f32.mrb[0].mxu0
        %3241 = vdwg.mxu0
        %v3242 = vpack.c.bf16 %v3231, %v3228
        %v3243 = vpack.c.bf16 %v3239, %v3236
        %s3244 = scalar_lea.vmem %s6, 368
        %v3245 = vld [vmem:[%s3244] sm:$0xf]
        %v3246 = vld [vmem:[%s3244 + $0x4] sm:$0xf]
        %v3247 = vld [vmem:[%s3244 + $0x8] sm:$0xf]
        %v3248 = vld [vmem:[%s3244 + $0xc] sm:$0x1]
        %v3253 = vunpack.c.l.b16 %v3245
        %v3254 = vunpack.c.l.b16 %v3246
        %v3255 = vunpack.c.l.b16 %v3247
        %v3256 = vunpack.c.l.b16 %v3248
        %v3257 = vpack.c.b16 %v3254, %v3253
        %v3258 = vpack.c.b16 %v3256, %v3255
        %v3260 = vsel %vm1595, %v3257, 0
        %v3263 = vsel %vm1595, %v3258, 0
        %3265 = vmatprep.subr.bf16.mxu0 0
        %3266 = vmatpush1.bf16.msra.mxu0 %v1579
        %3267 = vmatprep.subr.bf16.mxu0 0
        %3268 = vmatpush1.bf16.msra.mxu0 %v1607
        %3269 = vmatprep.subr.bf16.mxu0 0
        %3270 = vmatpush1.bf16.msra.mxu0 0
        %3271 = vmatprep.subr.bf16.mxu0 0
        %3272 = vmatpush1.bf16.msra.mxu0 0
        %3273 = vmatprep.subr.bf16.mxu0 0
        %3274 = vmatpush1.bf16.msra.mxu0 0
        %3275 = vmatprep.subr.bf16.mxu0 0
        %3276 = vmatpush1.bf16.msra.mxu0 0
        %3277 = vmatprep.subr.bf16.mxu0 0
        %3278 = vmatpush1.bf16.msra.mxu0 0
        %3279 = vmatprep.subr.bf16.mxu0 0
        %3280 = vmatpush1.bf16.msra.mxu0 0
        %3281 = vmatprep.subr.bf16.mxu0 0
        %3282 = vmatpush1.bf16.msra.mxu0 0
        %3283 = vmatprep.subr.bf16.mxu0 0
        %3284 = vmatpush1.bf16.msra.mxu0 0
        %3285 = vmatprep.subr.bf16.mxu0 0
        %3286 = vmatpush1.bf16.msra.mxu0 0
        %3287 = vmatprep.subr.bf16.mxu0 0
        %3288 = vmatpush1.bf16.msra.mxu0 0
        %3289 = vmatprep.subr.bf16.mxu0 0
        %3290 = vmatpush1.bf16.msra.mxu0 0
        %3291 = vmatprep.subr.bf16.mxu0 0
        %3292 = vmatpush1.bf16.msra.mxu0 0
        %3293 = vmatprep.subr.bf16.mxu0 0
        %3294 = vmatpush1.bf16.msra.mxu0 0
        %3295 = vmatprep.subr.bf16.mxu0 0
        %3296 = vmatpush1.bf16.msra.mxu0 0
        %3297 = vmatprep.mubr.bf16.mxu0 0
        %3298 = vmatmul.mubr.bf16.gmra.mrb[0].mxu0 %v3260
        %v3299 = vpop.f32.mrb[0].mxu0
        %v3300 = vadd.f32 0.0, %v3299
        %v3301 = vpop.f32.mrb[0].mxu0
        %v3302 = vpop.f32.mrb[0].mxu0
        %v3303 = vadd.f32 0.0, %v3302
        %v3304 = vpop.f32.mrb[0].mxu0
        %3305 = vmatprep.mubr.bf16.mxu0 0
        %3306 = vmatmul.mubr.bf16.gmra.mrb[0].mxu0 %v3263
        %v3307 = vpop.f32.mrb[0].mxu0
        %v3308 = vadd.f32 0.0, %v3307
        %v3309 = vpop.f32.mrb[0].mxu0
        %v3310 = vpop.f32.mrb[0].mxu0
        %v3311 = vadd.f32 0.0, %v3310
        %v3312 = vpop.f32.mrb[0].mxu0
        %3313 = vdwg.mxu0
        %v3314 = vpack.c.bf16 %v3303, %v3300
        %v3315 = vpack.c.bf16 %v3311, %v3308
        %s3316 = scalar_lea.vmem %s6, 384
        %v3317 = vld [vmem:[%s3316] sm:$0xf]
        %v3318 = vld [vmem:[%s3316 + $0x4] sm:$0xf]
        %v3319 = vld [vmem:[%s3316 + $0x8] sm:$0xf]
        %v3320 = vld [vmem:[%s3316 + $0xc] sm:$0x1]
        %v3325 = vunpack.c.l.b16 %v3317
        %v3326 = vunpack.c.l.b16 %v3318
        %v3327 = vunpack.c.l.b16 %v3319
        %v3328 = vunpack.c.l.b16 %v3320
        %v3329 = vpack.c.b16 %v3326, %v3325
        %v3330 = vpack.c.b16 %v3328, %v3327
        %v3332 = vsel %vm1595, %v3329, 0
        %v3335 = vsel %vm1595, %v3330, 0
        %3337 = vmatprep.subr.bf16.mxu0 0
        %3338 = vmatpush1.bf16.msra.mxu0 %v1579
        %3339 = vmatprep.subr.bf16.mxu0 0
        %3340 = vmatpush1.bf16.msra.mxu0 %v1607
        %3341 = vmatprep.subr.bf16.mxu0 0
        %3342 = vmatpush1.bf16.msra.mxu0 0
        %3343 = vmatprep.subr.bf16.mxu0 0
        %3344 = vmatpush1.bf16.msra.mxu0 0
        %3345 = vmatprep.subr.bf16.mxu0 0
        %3346 = vmatpush1.bf16.msra.mxu0 0
        %3347 = vmatprep.subr.bf16.mxu0 0
        %3348 = vmatpush1.bf16.msra.mxu0 0
        %3349 = vmatprep.subr.bf16.mxu0 0
        %3350 = vmatpush1.bf16.msra.mxu0 0
        %3351 = vmatprep.subr.bf16.mxu0 0
        %3352 = vmatpush1.bf16.msra.mxu0 0
        %3353 = vmatprep.subr.bf16.mxu0 0
        %3354 = vmatpush1.bf16.msra.mxu0 0
        %3355 = vmatprep.subr.bf16.mxu0 0
        %3356 = vmatpush1.bf16.msra.mxu0 0
        %3357 = vmatprep.subr.bf16.mxu0 0
        %3358 = vmatpush1.bf16.msra.mxu0 0
        %3359 = vmatprep.subr.bf16.mxu0 0
        %3360 = vmatpush1.bf16.msra.mxu0 0
        %3361 = vmatprep.subr.bf16.mxu0 0
        %3362 = vmatpush1.bf16.msra.mxu0 0
        %3363 = vmatprep.subr.bf16.mxu0 0
        %3364 = vmatpush1.bf16.msra.mxu0 0
        %3365 = vmatprep.subr.bf16.mxu0 0
        %3366 = vmatpush1.bf16.msra.mxu0 0
        %3367 = vmatprep.subr.bf16.mxu0 0
        %3368 = vmatpush1.bf16.msra.mxu0 0
        %3369 = vmatprep.mubr.bf16.mxu0 0
        %3370 = vmatmul.mubr.bf16.gmra.mrb[0].mxu0 %v3332
        %v3371 = vpop.f32.mrb[0].mxu0
        %v3372 = vadd.f32 0.0, %v3371
        %v3373 = vpop.f32.mrb[0].mxu0
        %v3374 = vpop.f32.mrb[0].mxu0
        %v3375 = vadd.f32 0.0, %v3374
        %v3376 = vpop.f32.mrb[0].mxu0
        %3377 = vmatprep.mubr.bf16.mxu0 0
        %3378 = vmatmul.mubr.bf16.gmra.mrb[0].mxu0 %v3335
        %v3379 = vpop.f32.mrb[0].mxu0
        %v3380 = vadd.f32 0.0, %v3379
        %v3381 = vpop.f32.mrb[0].mxu0
        %v3382 = vpop.f32.mrb[0].mxu0
        %v3383 = vadd.f32 0.0, %v3382
        %v3384 = vpop.f32.mrb[0].mxu0
        %3385 = vdwg.mxu0
        %v3386 = vpack.c.bf16 %v3375, %v3372
        %v3387 = vpack.c.bf16 %v3383, %v3380
        %v3388 = vld [vmem:[%s3] sm:$0xf]
        %v3389 = vld [vmem:[%s3 + $0x4] sm:$0xf]
        %v3390 = vld [vmem:[%s3 + $0x8] sm:$0xf]
        %v3391 = vld [vmem:[%s3 + $0xc] sm:$0xf]
        %v3392 = vld [vmem:[%s3 + $0x10] sm:$0xf]
        %v3393 = vld [vmem:[%s3 + $0x14] sm:$0xf]
        %v3394 = vld [vmem:[%s3 + $0x18] sm:$0xf]
        %v3395 = vld [vmem:[%s3 + $0x1c] sm:$0xf]
        %v3396 = vld [vmem:[%s3 + $0x20] sm:$0xf]
        %v3397 = vld [vmem:[%s3 + $0x24] sm:$0xf]
        %v3398 = vld [vmem:[%s3 + $0x28] sm:$0xf]
        %v3399 = vld [vmem:[%s3 + $0x2c] sm:$0xf]
        %v3400 = vld [vmem:[%s3 + $0x30] sm:$0xf]
        %v3401 = vld [vmem:[%s3 + $0x34] sm:$0xf]
        %v3402 = vld [vmem:[%s3 + $0x38] sm:$0xf]
        %v3403 = vld [vmem:[%s3 + $0x3c] sm:$0xf]
        %v3404 = vld [vmem:[%s3 + $0x40] sm:$0xf]
        %v3405 = vld [vmem:[%s3 + $0x44] sm:$0xf]
        %v3406 = vld [vmem:[%s3 + $0x48] sm:$0xf]
        %v3407 = vld [vmem:[%s3 + $0x4c] sm:$0xf]
        %v3408 = vld [vmem:[%s3 + $0x50] sm:$0xf]
        %v3409 = vld [vmem:[%s3 + $0x54] sm:$0xf]
        %v3410 = vld [vmem:[%s3 + $0x58] sm:$0xf]
        %v3411 = vld [vmem:[%s3 + $0x5c] sm:$0xf]
        %v3412 = vld [vmem:[%s3 + $0x60] sm:$0xf]
        %v3413 = vld [vmem:[%s3 + $0x64] sm:$0xf]
        %v3414 = vld [vmem:[%s3 + $0x68] sm:$0xf]
        %v3415 = vld [vmem:[%s3 + $0x6c] sm:$0xf]
        %v3416 = vld [vmem:[%s3 + $0x70] sm:$0xf]
        %v3417 = vld [vmem:[%s3 + $0x74] sm:$0xf]
        %v3418 = vld [vmem:[%s3 + $0x78] sm:$0xf]
        %v3419 = vld [vmem:[%s3 + $0x7c] sm:$0xf]
        %v3420 = vld [vmem:[%s3 + $0x80] sm:$0xf]
        %v3421 = vld [vmem:[%s3 + $0x84] sm:$0xf]
        %v3422 = vld [vmem:[%s3 + $0x88] sm:$0xf]
        %v3423 = vld [vmem:[%s3 + $0x8c] sm:$0xf]
        %v3424 = vld [vmem:[%s3 + $0x90] sm:$0xf]
        %v3425 = vld [vmem:[%s3 + $0x94] sm:$0xf]
        %v3426 = vld [vmem:[%s3 + $0x98] sm:$0xf]
        %v3427 = vld [vmem:[%s3 + $0x9c] sm:$0xf]
        %v3428 = vld [vmem:[%s3 + $0xa0] sm:$0xf]
        %v3429 = vld [vmem:[%s3 + $0xa4] sm:$0xf]
        %v3430 = vld [vmem:[%s3 + $0xa8] sm:$0xf]
        %v3431 = vld [vmem:[%s3 + $0xac] sm:$0xf]
        %v3432 = vld [vmem:[%s3 + $0xb0] sm:$0xf]
        %v3433 = vld [vmem:[%s3 + $0xb4] sm:$0xf]
        %v3434 = vld [vmem:[%s3 + $0xb8] sm:$0xf]
        %v3435 = vld [vmem:[%s3 + $0xbc] sm:$0xf]
        %v3436 = vld [vmem:[%s3 + $0xc0] sm:$0xf]
        %v3437 = vld [vmem:[%s3 + $0xc4] sm:$0xf]
        %v3438 = vld [vmem:[%s3 + $0xc8] sm:$0xf]
        %v3439 = vld [vmem:[%s3 + $0xcc] sm:$0xf]
        %v3440 = vld [vmem:[%s3 + $0xd0] sm:$0xf]
        %v3441 = vld [vmem:[%s3 + $0xd4] sm:$0xf]
        %v3442 = vld [vmem:[%s3 + $0xd8] sm:$0xf]
        %v3443 = vld [vmem:[%s3 + $0xdc] sm:$0xf]
        %v3444 = vld [vmem:[%s3 + $0xe0] sm:$0xf]
        %v3445 = vld [vmem:[%s3 + $0xe4] sm:$0xf]
        %v3446 = vld [vmem:[%s3 + $0xe8] sm:$0xf]
        %v3447 = vld [vmem:[%s3 + $0xec] sm:$0xf]
        %v3448 = vld [vmem:[%s3 + $0xf0] sm:$0xf]
        %v3449 = vld [vmem:[%s3 + $0xf4] sm:$0xf]
        %v3450 = vld [vmem:[%s3 + $0xf8] sm:$0xf]
        %v3451 = vld [vmem:[%s3 + $0xfc] sm:$0xf]
        %v3452 = vld [vmem:[%s3 + $0x100] sm:$0xf]
        %v3453 = vld [vmem:[%s3 + $0x104] sm:$0xf]
        %v3454 = vld [vmem:[%s3 + $0x108] sm:$0xf]
        %v3455 = vld [vmem:[%s3 + $0x10c] sm:$0xf]
        %v3456 = vld [vmem:[%s3 + $0x110] sm:$0xf]
        %v3457 = vld [vmem:[%s3 + $0x114] sm:$0xf]
        %v3458 = vld [vmem:[%s3 + $0x118] sm:$0xf]
        %v3459 = vld [vmem:[%s3 + $0x11c] sm:$0xf]
        %v3460 = vld [vmem:[%s3 + $0x120] sm:$0xf]
        %v3461 = vld [vmem:[%s3 + $0x124] sm:$0xf]
        %v3462 = vld [vmem:[%s3 + $0x128] sm:$0xf]
        %v3463 = vld [vmem:[%s3 + $0x12c] sm:$0xf]
        %v3464 = vld [vmem:[%s3 + $0x130] sm:$0xf]
        %v3465 = vld [vmem:[%s3 + $0x134] sm:$0xf]
        %v3466 = vld [vmem:[%s3 + $0x138] sm:$0xf]
        %v3467 = vld [vmem:[%s3 + $0x13c] sm:$0xf]
        %v3468 = vld [vmem:[%s3 + $0x140] sm:$0xf]
        %v3469 = vld [vmem:[%s3 + $0x144] sm:$0xf]
        %v3470 = vld [vmem:[%s3 + $0x148] sm:$0xf]
        %v3471 = vld [vmem:[%s3 + $0x14c] sm:$0xf]
        %v3472 = vld [vmem:[%s3 + $0x150] sm:$0xf]
        %v3473 = vld [vmem:[%s3 + $0x154] sm:$0xf]
        %v3474 = vld [vmem:[%s3 + $0x158] sm:$0xf]
        %v3475 = vld [vmem:[%s3 + $0x15c] sm:$0xf]
        %v3476 = vld [vmem:[%s3 + $0x160] sm:$0xf]
        %v3477 = vld [vmem:[%s3 + $0x164] sm:$0xf]
        %v3478 = vld [vmem:[%s3 + $0x168] sm:$0xf]
        %v3479 = vld [vmem:[%s3 + $0x16c] sm:$0xf]
        %v3480 = vld [vmem:[%s3 + $0x170] sm:$0xf]
        %v3481 = vld [vmem:[%s3 + $0x174] sm:$0xf]
        %v3482 = vld [vmem:[%s3 + $0x178] sm:$0xf]
        %v3483 = vld [vmem:[%s3 + $0x17c] sm:$0xf]
        %v3484 = vld [vmem:[%s3 + $0x180] sm:$0xf]
        %v3485 = vld [vmem:[%s3 + $0x184] sm:$0xf]
        %v3486 = vld [vmem:[%s3 + $0x188] sm:$0xf]
        %v3487 = vld [vmem:[%s3 + $0x18c] sm:$0xf]
        %v3488 = vld [vmem:[%s3 + $0x190] sm:$0xf]
        %v3489 = vld [vmem:[%s3 + $0x194] sm:$0xf]
        %v3490 = vld [vmem:[%s3 + $0x198] sm:$0xf]
        %v3491 = vld [vmem:[%s3 + $0x19c] sm:$0xf]
        %v3492 = vld [vmem:[%s3 + $0x1a0] sm:$0xf]
        %v3493 = vld [vmem:[%s3 + $0x1a4] sm:$0xf]
        %v3494 = vld [vmem:[%s3 + $0x1a8] sm:$0xf]
        %v3495 = vld [vmem:[%s3 + $0x1ac] sm:$0xf]
        %v3496 = vld [vmem:[%s3 + $0x1b0] sm:$0xf]
        %v3497 = vld [vmem:[%s3 + $0x1b4] sm:$0xf]
        %v3498 = vld [vmem:[%s3 + $0x1b8] sm:$0xf]
        %v3499 = vld [vmem:[%s3 + $0x1bc] sm:$0xf]
        %v3500 = vld [vmem:[%s3 + $0x1c0] sm:$0xf]
        %v3501 = vld [vmem:[%s3 + $0x1c4] sm:$0xf]
        %v3502 = vld [vmem:[%s3 + $0x1c8] sm:$0xf]
        %v3503 = vld [vmem:[%s3 + $0x1cc] sm:$0xf]
        %v3504 = vld [vmem:[%s3 + $0x1d0] sm:$0xf]
        %v3505 = vld [vmem:[%s3 + $0x1d4] sm:$0xf]
        %v3506 = vld [vmem:[%s3 + $0x1d8] sm:$0xf]
        %v3507 = vld [vmem:[%s3 + $0x1dc] sm:$0xf]
        %v3508 = vld [vmem:[%s3 + $0x1e0] sm:$0xf]
        %v3509 = vld [vmem:[%s3 + $0x1e4] sm:$0xf]
        %v3510 = vld [vmem:[%s3 + $0x1e8] sm:$0xf]
        %v3511 = vld [vmem:[%s3 + $0x1ec] sm:$0xf]
        %v3512 = vld [vmem:[%s3 + $0x1f0] sm:$0xf]
        %v3513 = vld [vmem:[%s3 + $0x1f4] sm:$0xf]
        %v3514 = vld [vmem:[%s3 + $0x1f8] sm:$0xf]
        %v3515 = vld [vmem:[%s3 + $0x1fc] sm:$0xf]
        %v3516 = vld [vmem:[%s3 + $0x200] sm:$0xf]
        %v3517 = vld [vmem:[%s3 + $0x204] sm:$0xf]
        %v3518 = vld [vmem:[%s3 + $0x208] sm:$0xf]
        %v3519 = vld [vmem:[%s3 + $0x20c] sm:$0xf]
        %v3520 = vld [vmem:[%s3 + $0x210] sm:$0xf]
        %v3521 = vld [vmem:[%s3 + $0x214] sm:$0xf]
        %v3522 = vld [vmem:[%s3 + $0x218] sm:$0xf]
        %v3523 = vld [vmem:[%s3 + $0x21c] sm:$0xf]
        %v3524 = vld [vmem:[%s3 + $0x220] sm:$0xf]
        %v3525 = vld [vmem:[%s3 + $0x224] sm:$0xf]
        %v3526 = vld [vmem:[%s3 + $0x228] sm:$0xf]
        %v3527 = vld [vmem:[%s3 + $0x22c] sm:$0xf]
        %v3528 = vld [vmem:[%s3 + $0x230] sm:$0xf]
        %v3529 = vld [vmem:[%s3 + $0x234] sm:$0xf]
        %v3530 = vld [vmem:[%s3 + $0x238] sm:$0xf]
        %v3531 = vld [vmem:[%s3 + $0x23c] sm:$0xf]
        %v3532 = vld [vmem:[%s3 + $0x240] sm:$0xf]
        %v3533 = vld [vmem:[%s3 + $0x244] sm:$0xf]
        %v3534 = vld [vmem:[%s3 + $0x248] sm:$0xf]
        %v3535 = vld [vmem:[%s3 + $0x24c] sm:$0xf]
        %v3536 = vld [vmem:[%s3 + $0x250] sm:$0xf]
        %v3537 = vld [vmem:[%s3 + $0x254] sm:$0xf]
        %v3538 = vld [vmem:[%s3 + $0x258] sm:$0xf]
        %v3539 = vld [vmem:[%s3 + $0x25c] sm:$0xf]
        %v3540 = vld [vmem:[%s3 + $0x260] sm:$0xf]
        %v3541 = vld [vmem:[%s3 + $0x264] sm:$0xf]
        %v3542 = vld [vmem:[%s3 + $0x268] sm:$0xf]
        %v3543 = vld [vmem:[%s3 + $0x26c] sm:$0xf]
        %v3544 = vld [vmem:[%s3 + $0x270] sm:$0xf]
        %v3545 = vld [vmem:[%s3 + $0x274] sm:$0xf]
        %v3546 = vld [vmem:[%s3 + $0x278] sm:$0xf]
        %v3547 = vld [vmem:[%s3 + $0x27c] sm:$0xf]
        %v3548 = vld [vmem:[%s3 + $0x280] sm:$0xf]
        %v3549 = vld [vmem:[%s3 + $0x284] sm:$0xf]
        %v3550 = vld [vmem:[%s3 + $0x288] sm:$0xf]
        %v3551 = vld [vmem:[%s3 + $0x28c] sm:$0xf]
        %v3552 = vld [vmem:[%s3 + $0x290] sm:$0xf]
        %v3553 = vld [vmem:[%s3 + $0x294] sm:$0xf]
        %v3554 = vld [vmem:[%s3 + $0x298] sm:$0xf]
        %v3555 = vld [vmem:[%s3 + $0x29c] sm:$0xf]
        %v3556 = vld [vmem:[%s3 + $0x2a0] sm:$0xf]
        %v3557 = vld [vmem:[%s3 + $0x2a4] sm:$0xf]
        %v3558 = vld [vmem:[%s3 + $0x2a8] sm:$0xf]
        %v3559 = vld [vmem:[%s3 + $0x2ac] sm:$0xf]
        %v3560 = vld [vmem:[%s3 + $0x2b0] sm:$0xf]
        %v3561 = vld [vmem:[%s3 + $0x2b4] sm:$0xf]
        %v3562 = vld [vmem:[%s3 + $0x2b8] sm:$0xf]
        %v3563 = vld [vmem:[%s3 + $0x2bc] sm:$0xf]
        %v3564 = vld [vmem:[%s3 + $0x2c0] sm:$0xf]
        %v3565 = vld [vmem:[%s3 + $0x2c4] sm:$0xf]
        %v3566 = vld [vmem:[%s3 + $0x2c8] sm:$0xf]
        %v3567 = vld [vmem:[%s3 + $0x2cc] sm:$0xf]
        %v3568 = vld [vmem:[%s3 + $0x2d0] sm:$0xf]
        %v3569 = vld [vmem:[%s3 + $0x2d4] sm:$0xf]
        %v3570 = vld [vmem:[%s3 + $0x2d8] sm:$0xf]
        %v3571 = vld [vmem:[%s3 + $0x2dc] sm:$0xf]
        %v3572 = vld [vmem:[%s3 + $0x2e0] sm:$0xf]
        %v3573 = vld [vmem:[%s3 + $0x2e4] sm:$0xf]
        %v3574 = vld [vmem:[%s3 + $0x2e8] sm:$0xf]
        %v3575 = vld [vmem:[%s3 + $0x2ec] sm:$0xf]
        %v3576 = vld [vmem:[%s3 + $0x2f0] sm:$0xf]
        %v3577 = vld [vmem:[%s3 + $0x2f4] sm:$0xf]
        %v3578 = vld [vmem:[%s3 + $0x2f8] sm:$0xf]
        %v3579 = vld [vmem:[%s3 + $0x2fc] sm:$0xf]
        %v3580 = vld [vmem:[%s3 + $0x300] sm:$0xf]
        %v3581 = vld [vmem:[%s3 + $0x304] sm:$0xf]
        %v3582 = vld [vmem:[%s3 + $0x308] sm:$0xf]
        %v3583 = vld [vmem:[%s3 + $0x30c] sm:$0xf]
        %v3584 = vld [vmem:[%s3 + $0x310] sm:$0xf]
        %v3585 = vld [vmem:[%s3 + $0x314] sm:$0xf]
        %v3586 = vld [vmem:[%s3 + $0x318] sm:$0xf]
        %v3587 = vld [vmem:[%s3 + $0x31c] sm:$0xf]
        %v3588 = vld [vmem:[%s3 + $0x320] sm:$0xf]
        %v3589 = vld [vmem:[%s3 + $0x324] sm:$0xf]
        %v3590 = vld [vmem:[%s3 + $0x328] sm:$0xf]
        %v3591 = vld [vmem:[%s3 + $0x32c] sm:$0xf]
        %v3592 = vld [vmem:[%s3 + $0x330] sm:$0xf]
        %v3593 = vld [vmem:[%s3 + $0x334] sm:$0xf]
        %v3594 = vld [vmem:[%s3 + $0x338] sm:$0xf]
        %v3595 = vld [vmem:[%s3 + $0x33c] sm:$0xf]
        %v3596 = vld [vmem:[%s3 + $0x340] sm:$0xf]
        %v3597 = vld [vmem:[%s3 + $0x344] sm:$0xf]
        %v3598 = vld [vmem:[%s3 + $0x348] sm:$0xf]
        %v3599 = vld [vmem:[%s3 + $0x34c] sm:$0xf]
        %v3600 = vld [vmem:[%s3 + $0x350] sm:$0xf]
        %v3601 = vld [vmem:[%s3 + $0x354] sm:$0xf]
        %v3602 = vld [vmem:[%s3 + $0x358] sm:$0xf]
        %v3603 = vld [vmem:[%s3 + $0x35c] sm:$0xf]
        %v3604 = vld [vmem:[%s3 + $0x360] sm:$0xf]
        %v3605 = vld [vmem:[%s3 + $0x364] sm:$0xf]
        %v3606 = vld [vmem:[%s3 + $0x368] sm:$0xf]
        %v3607 = vld [vmem:[%s3 + $0x36c] sm:$0xf]
        %v3608 = vld [vmem:[%s3 + $0x370] sm:$0xf]
        %v3609 = vld [vmem:[%s3 + $0x374] sm:$0xf]
        %v3610 = vld [vmem:[%s3 + $0x378] sm:$0xf]
        %v3611 = vld [vmem:[%s3 + $0x37c] sm:$0xf]
        %v3612 = vld [vmem:[%s3 + $0x380] sm:$0xf]
        %v3613 = vld [vmem:[%s3 + $0x384] sm:$0xf]
        %v3614 = vld [vmem:[%s3 + $0x388] sm:$0xf]
        %v3615 = vld [vmem:[%s3 + $0x38c] sm:$0xf]
        %v3616 = vld [vmem:[%s3 + $0x390] sm:$0xf]
        %v3617 = vld [vmem:[%s3 + $0x394] sm:$0xf]
        %v3618 = vld [vmem:[%s3 + $0x398] sm:$0xf]
        %v3619 = vld [vmem:[%s3 + $0x39c] sm:$0xf]
        %v3620 = vld [vmem:[%s3 + $0x3a0] sm:$0xf]
        %v3621 = vld [vmem:[%s3 + $0x3a4] sm:$0xf]
        %v3622 = vld [vmem:[%s3 + $0x3a8] sm:$0xf]
        %v3623 = vld [vmem:[%s3 + $0x3ac] sm:$0xf]
        %v3624 = vld [vmem:[%s3 + $0x3b0] sm:$0xf]
        %v3625 = vld [vmem:[%s3 + $0x3b4] sm:$0xf]
        %v3626 = vld [vmem:[%s3 + $0x3b8] sm:$0xf]
        %v3627 = vld [vmem:[%s3 + $0x3bc] sm:$0xf]
        %v3628 = vld [vmem:[%s3 + $0x3c0] sm:$0xf]
        %v3629 = vld [vmem:[%s3 + $0x3c4] sm:$0xf]
        %v3630 = vld [vmem:[%s3 + $0x3c8] sm:$0xf]
        %v3631 = vld [vmem:[%s3 + $0x3cc] sm:$0xf]
        %v3632 = vld [vmem:[%s3 + $0x3d0] sm:$0xf]
        %v3633 = vld [vmem:[%s3 + $0x3d4] sm:$0xf]
        %v3634 = vld [vmem:[%s3 + $0x3d8] sm:$0xf]
        %v3635 = vld [vmem:[%s3 + $0x3dc] sm:$0xf]
        %v3636 = vld [vmem:[%s3 + $0x3e0] sm:$0xf]
        %v3637 = vld [vmem:[%s3 + $0x3e4] sm:$0xf]
        %v3638 = vld [vmem:[%s3 + $0x3e8] sm:$0xf]
        %v3639 = vld [vmem:[%s3 + $0x3ec] sm:$0xf]
        %v3640 = vld [vmem:[%s3 + $0x3f0] sm:$0xf]
        %v3641 = vld [vmem:[%s3 + $0x3f4] sm:$0xf]
        %v3642 = vld [vmem:[%s3 + $0x3f8] sm:$0xf]
        %v3643 = vld [vmem:[%s3 + $0x3fc] sm:$0xf]
        %v3644 = vld [vmem:[%s3 + $0x400] sm:$0xf]
        %v3645 = vld [vmem:[%s3 + $0x404] sm:$0xf]
        %v3646 = vld [vmem:[%s3 + $0x408] sm:$0xf]
        %v3647 = vld [vmem:[%s3 + $0x40c] sm:$0xf]
        %v3648 = vld [vmem:[%s3 + $0x410] sm:$0xf]
        %v3649 = vld [vmem:[%s3 + $0x414] sm:$0xf]
        %v3650 = vld [vmem:[%s3 + $0x418] sm:$0xf]
        %v3651 = vld [vmem:[%s3 + $0x41c] sm:$0xf]
        %v3652 = vld [vmem:[%s3 + $0x420] sm:$0xf]
        %v3653 = vld [vmem:[%s3 + $0x424] sm:$0xf]
        %v3654 = vld [vmem:[%s3 + $0x428] sm:$0xf]
        %v3655 = vld [vmem:[%s3 + $0x42c] sm:$0xf]
        %v3656 = vld [vmem:[%s3 + $0x430] sm:$0xf]
        %v3657 = vld [vmem:[%s3 + $0x434] sm:$0xf]
        %v3658 = vld [vmem:[%s3 + $0x438] sm:$0xf]
        %v3659 = vld [vmem:[%s3 + $0x43c] sm:$0xf]
        %v3660 = vld [vmem:[%s3 + $0x440] sm:$0xf]
        %v3661 = vld [vmem:[%s3 + $0x444] sm:$0xf]
        %v3662 = vld [vmem:[%s3 + $0x448] sm:$0xf]
        %v3663 = vld [vmem:[%s3 + $0x44c] sm:$0xf]
        %v3664 = vld [vmem:[%s3 + $0x450] sm:$0xf]
        %v3665 = vld [vmem:[%s3 + $0x454] sm:$0xf]
        %v3666 = vld [vmem:[%s3 + $0x458] sm:$0xf]
        %v3667 = vld [vmem:[%s3 + $0x45c] sm:$0xf]
        %v3668 = vld [vmem:[%s3 + $0x460] sm:$0xf]
        %v3669 = vld [vmem:[%s3 + $0x464] sm:$0xf]
        %v3670 = vld [vmem:[%s3 + $0x468] sm:$0xf]
        %v3671 = vld [vmem:[%s3 + $0x46c] sm:$0xf]
        %v3672 = vld [vmem:[%s3 + $0x470] sm:$0xf]
        %v3673 = vld [vmem:[%s3 + $0x474] sm:$0xf]
        %v3674 = vld [vmem:[%s3 + $0x478] sm:$0xf]
        %v3675 = vld [vmem:[%s3 + $0x47c] sm:$0xf]
        %v3676 = vld [vmem:[%s3 + $0x480] sm:$0xf]
        %v3677 = vld [vmem:[%s3 + $0x484] sm:$0xf]
        %v3678 = vld [vmem:[%s3 + $0x488] sm:$0xf]
        %v3679 = vld [vmem:[%s3 + $0x48c] sm:$0xf]
        %v3680 = vld [vmem:[%s3 + $0x490] sm:$0xf]
        %v3681 = vld [vmem:[%s3 + $0x494] sm:$0xf]
        %v3682 = vld [vmem:[%s3 + $0x498] sm:$0xf]
        %v3683 = vld [vmem:[%s3 + $0x49c] sm:$0xf]
        %v3684 = vld [vmem:[%s3 + $0x4a0] sm:$0xf]
        %v3685 = vld [vmem:[%s3 + $0x4a4] sm:$0xf]
        %v3686 = vld [vmem:[%s3 + $0x4a8] sm:$0xf]
        %v3687 = vld [vmem:[%s3 + $0x4ac] sm:$0xf]
        %v3688 = vld [vmem:[%s3 + $0x4b0] sm:$0xf]
        %v3689 = vld [vmem:[%s3 + $0x4b4] sm:$0xf]
        %v3690 = vld [vmem:[%s3 + $0x4b8] sm:$0xf]
        %v3691 = vld [vmem:[%s3 + $0x4bc] sm:$0xf]
        %v3692 = vld [vmem:[%s3 + $0x4c0] sm:$0xf]
        %v3693 = vld [vmem:[%s3 + $0x4c4] sm:$0xf]
        %v3694 = vld [vmem:[%s3 + $0x4c8] sm:$0xf]
        %v3695 = vld [vmem:[%s3 + $0x4cc] sm:$0xf]
        %v3696 = vld [vmem:[%s3 + $0x4d0] sm:$0xf]
        %v3697 = vld [vmem:[%s3 + $0x4d4] sm:$0xf]
        %v3698 = vld [vmem:[%s3 + $0x4d8] sm:$0xf]
        %v3699 = vld [vmem:[%s3 + $0x4dc] sm:$0xf]
        %v3700 = vld [vmem:[%s3 + $0x4e0] sm:$0xf]
        %v3701 = vld [vmem:[%s3 + $0x4e4] sm:$0xf]
        %v3702 = vld [vmem:[%s3 + $0x4e8] sm:$0xf]
        %v3703 = vld [vmem:[%s3 + $0x4ec] sm:$0xf]
        %v3704 = vld [vmem:[%s3 + $0x4f0] sm:$0xf]
        %v3705 = vld [vmem:[%s3 + $0x4f4] sm:$0xf]
        %v3706 = vld [vmem:[%s3 + $0x4f8] sm:$0xf]
        %v3707 = vld [vmem:[%s3 + $0x4fc] sm:$0xf]
        %v3708 = vld [vmem:[%s3 + $0x500] sm:$0xf]
        %v3709 = vld [vmem:[%s3 + $0x504] sm:$0xf]
        %v3710 = vld [vmem:[%s3 + $0x508] sm:$0xf]
        %v3711 = vld [vmem:[%s3 + $0x50c] sm:$0xf]
        %v3712 = vld [vmem:[%s3 + $0x510] sm:$0xf]
        %v3713 = vld [vmem:[%s3 + $0x514] sm:$0xf]
        %v3714 = vld [vmem:[%s3 + $0x518] sm:$0xf]
        %v3715 = vld [vmem:[%s3 + $0x51c] sm:$0xf]
        %v3716 = vld [vmem:[%s3 + $0x520] sm:$0xf]
        %v3717 = vld [vmem:[%s3 + $0x524] sm:$0xf]
        %v3718 = vld [vmem:[%s3 + $0x528] sm:$0xf]
        %v3719 = vld [vmem:[%s3 + $0x52c] sm:$0xf]
        %v3720 = vld [vmem:[%s3 + $0x530] sm:$0xf]
        %v3721 = vld [vmem:[%s3 + $0x534] sm:$0xf]
        %v3722 = vld [vmem:[%s3 + $0x538] sm:$0xf]
        %v3723 = vld [vmem:[%s3 + $0x53c] sm:$0xf]
        %v3724 = vld [vmem:[%s3 + $0x540] sm:$0xf]
        %v3725 = vld [vmem:[%s3 + $0x544] sm:$0xf]
        %v3726 = vld [vmem:[%s3 + $0x548] sm:$0xf]
        %v3727 = vld [vmem:[%s3 + $0x54c] sm:$0xf]
        %v3728 = vld [vmem:[%s3 + $0x550] sm:$0xf]
        %v3729 = vld [vmem:[%s3 + $0x554] sm:$0xf]
        %v3730 = vld [vmem:[%s3 + $0x558] sm:$0xf]
        %v3731 = vld [vmem:[%s3 + $0x55c] sm:$0xf]
        %v3732 = vld [vmem:[%s3 + $0x560] sm:$0xf]
        %v3733 = vld [vmem:[%s3 + $0x564] sm:$0xf]
        %v3734 = vld [vmem:[%s3 + $0x568] sm:$0xf]
        %v3735 = vld [vmem:[%s3 + $0x56c] sm:$0xf]
        %v3736 = vld [vmem:[%s3 + $0x570] sm:$0xf]
        %v3737 = vld [vmem:[%s3 + $0x574] sm:$0xf]
        %v3738 = vld [vmem:[%s3 + $0x578] sm:$0xf]
        %v3739 = vld [vmem:[%s3 + $0x57c] sm:$0xf]
        %v3740 = vld [vmem:[%s3 + $0x580] sm:$0xf]
        %v3741 = vld [vmem:[%s3 + $0x584] sm:$0xf]
        %v3742 = vld [vmem:[%s3 + $0x588] sm:$0xf]
        %v3743 = vld [vmem:[%s3 + $0x58c] sm:$0xf]
        %v3744 = vld [vmem:[%s3 + $0x590] sm:$0xf]
        %v3745 = vld [vmem:[%s3 + $0x594] sm:$0xf]
        %v3746 = vld [vmem:[%s3 + $0x598] sm:$0xf]
        %v3747 = vld [vmem:[%s3 + $0x59c] sm:$0xf]
        %v3748 = vld [vmem:[%s3 + $0x5a0] sm:$0xf]
        %v3749 = vld [vmem:[%s3 + $0x5a4] sm:$0xf]
        %v3750 = vld [vmem:[%s3 + $0x5a8] sm:$0xf]
        %v3751 = vld [vmem:[%s3 + $0x5ac] sm:$0xf]
        %v3752 = vld [vmem:[%s3 + $0x5b0] sm:$0xf]
        %v3753 = vld [vmem:[%s3 + $0x5b4] sm:$0xf]
        %v3754 = vld [vmem:[%s3 + $0x5b8] sm:$0xf]
        %v3755 = vld [vmem:[%s3 + $0x5bc] sm:$0xf]
        %v3756 = vld [vmem:[%s3 + $0x5c0] sm:$0xf]
        %v3757 = vld [vmem:[%s3 + $0x5c4] sm:$0xf]
        %v3758 = vld [vmem:[%s3 + $0x5c8] sm:$0xf]
        %v3759 = vld [vmem:[%s3 + $0x5cc] sm:$0xf]
        %v3760 = vld [vmem:[%s3 + $0x5d0] sm:$0xf]
        %v3761 = vld [vmem:[%s3 + $0x5d4] sm:$0xf]
        %v3762 = vld [vmem:[%s3 + $0x5d8] sm:$0xf]
        %v3763 = vld [vmem:[%s3 + $0x5dc] sm:$0xf]
        %v3764 = vld [vmem:[%s3 + $0x5e0] sm:$0xf]
        %v3765 = vld [vmem:[%s3 + $0x5e4] sm:$0xf]
        %v3766 = vld [vmem:[%s3 + $0x5e8] sm:$0xf]
        %v3767 = vld [vmem:[%s3 + $0x5ec] sm:$0xf]
        %v3768 = vld [vmem:[%s3 + $0x5f0] sm:$0xf]
        %v3769 = vld [vmem:[%s3 + $0x5f4] sm:$0xf]
        %v3770 = vld [vmem:[%s3 + $0x5f8] sm:$0xf]
        %v3771 = vld [vmem:[%s3 + $0x5fc] sm:$0xf]
        %v3772 = vld [vmem:[%s3 + $0x600] sm:$0xf]
        %v3773 = vld [vmem:[%s3 + $0x604] sm:$0xf]
        %v3774 = vld [vmem:[%s3 + $0x608] sm:$0xf]
        %v3775 = vld [vmem:[%s3 + $0x60c] sm:$0xf]
        %v3776 = vld [vmem:[%s3 + $0x610] sm:$0xf]
        %v3777 = vld [vmem:[%s3 + $0x614] sm:$0xf]
        %v3778 = vld [vmem:[%s3 + $0x618] sm:$0xf]
        %v3779 = vld [vmem:[%s3 + $0x61c] sm:$0xf]
        %v3780 = vld [vmem:[%s3 + $0x620] sm:$0xf]
        %v3781 = vld [vmem:[%s3 + $0x624] sm:$0xf]
        %v3782 = vld [vmem:[%s3 + $0x628] sm:$0xf]
        %v3783 = vld [vmem:[%s3 + $0x62c] sm:$0xf]
        %v3784 = vld [vmem:[%s3 + $0x630] sm:$0xf]
        %v3785 = vld [vmem:[%s3 + $0x634] sm:$0xf]
        %v3786 = vld [vmem:[%s3 + $0x638] sm:$0xf]
        %v3787 = vld [vmem:[%s3 + $0x63c] sm:$0xf]
        %s3788 = scalar_lea.vmem %s2, 3
        %v3789 = vld [vmem:[%s3788] sm:$0x1]
        %v3791 = vlaneseq
        %v3792 = vshrl.u32 %v3791, 7
        %v3793 = vsub.s32 0, %v3792
        %v3794 = vrot.slane %v3789, %v3793
        %v4196 = vunpack.c.l.b16 %v3388
        %v4197 = vunpack.c.l.b16 %v3389
        %v4198 = vunpack.c.l.b16 %v3390
        %v4199 = vunpack.c.l.b16 %v3391
        %v4200 = vunpack.c.l.b16 %v3392
        %v4201 = vunpack.c.l.b16 %v3393
        %v4202 = vunpack.c.l.b16 %v3394
        %v4203 = vunpack.c.l.b16 %v3395
        %v4204 = vunpack.c.l.b16 %v3396
        %v4205 = vunpack.c.l.b16 %v3397
        %v4206 = vunpack.c.l.b16 %v3398
        %v4207 = vunpack.c.l.b16 %v3399
        %v4208 = vunpack.c.l.b16 %v3400
        %v4209 = vunpack.c.l.b16 %v3401
        %v4210 = vunpack.c.l.b16 %v3402
        %v4211 = vunpack.c.l.b16 %v3403
        %v4212 = vunpack.c.l.b16 %v3404
        %v4213 = vunpack.c.l.b16 %v3405
        %v4214 = vunpack.c.l.b16 %v3406
        %v4215 = vunpack.c.l.b16 %v3407
        %v4216 = vunpack.c.l.b16 %v3408
        %v4217 = vunpack.c.l.b16 %v3409
        %v4218 = vunpack.c.l.b16 %v3410
        %v4219 = vunpack.c.l.b16 %v3411
        %v4220 = vunpack.c.l.b16 %v3412
        %v4221 = vunpack.c.l.b16 %v3413
        %v4222 = vunpack.c.l.b16 %v3414
        %v4223 = vunpack.c.l.b16 %v3415
        %v4224 = vunpack.c.l.b16 %v3416
        %v4225 = vunpack.c.l.b16 %v3417
        %v4226 = vunpack.c.l.b16 %v3418
        %v4227 = vunpack.c.l.b16 %v3419
        %v4228 = vunpack.c.l.b16 %v3420
        %v4229 = vunpack.c.l.b16 %v3421
        %v4230 = vunpack.c.l.b16 %v3422
        %v4231 = vunpack.c.l.b16 %v3423
        %v4232 = vunpack.c.l.b16 %v3424
        %v4233 = vunpack.c.l.b16 %v3425
        %v4234 = vunpack.c.l.b16 %v3426
        %v4235 = vunpack.c.l.b16 %v3427
        %v4236 = vunpack.c.l.b16 %v3428
        %v4237 = vunpack.c.l.b16 %v3429
        %v4238 = vunpack.c.l.b16 %v3430
        %v4239 = vunpack.c.l.b16 %v3431
        %v4240 = vunpack.c.l.b16 %v3432
        %v4241 = vunpack.c.l.b16 %v3433
        %v4242 = vunpack.c.l.b16 %v3434
        %v4243 = vunpack.c.l.b16 %v3435
        %v4244 = vunpack.c.l.b16 %v3436
        %v4245 = vunpack.c.l.b16 %v3437
        %v4246 = vunpack.c.l.b16 %v3438
        %v4247 = vunpack.c.l.b16 %v3439
        %v4248 = vunpack.c.l.b16 %v3440
        %v4249 = vunpack.c.l.b16 %v3441
        %v4250 = vunpack.c.l.b16 %v3442
        %v4251 = vunpack.c.l.b16 %v3443
        %v4252 = vunpack.c.l.b16 %v3444
        %v4253 = vunpack.c.l.b16 %v3445
        %v4254 = vunpack.c.l.b16 %v3446
        %v4255 = vunpack.c.l.b16 %v3447
        %v4256 = vunpack.c.l.b16 %v3448
        %v4257 = vunpack.c.l.b16 %v3449
        %v4258 = vunpack.c.l.b16 %v3450
        %v4259 = vunpack.c.l.b16 %v3451
        %v4260 = vunpack.c.l.b16 %v3452
        %v4261 = vunpack.c.l.b16 %v3453
        %v4262 = vunpack.c.l.b16 %v3454
        %v4263 = vunpack.c.l.b16 %v3455
        %v4264 = vunpack.c.l.b16 %v3456
        %v4265 = vunpack.c.l.b16 %v3457
        %v4266 = vunpack.c.l.b16 %v3458
        %v4267 = vunpack.c.l.b16 %v3459
        %v4268 = vunpack.c.l.b16 %v3460
        %v4269 = vunpack.c.l.b16 %v3461
        %v4270 = vunpack.c.l.b16 %v3462
        %v4271 = vunpack.c.l.b16 %v3463
        %v4272 = vunpack.c.l.b16 %v3464
        %v4273 = vunpack.c.l.b16 %v3465
        %v4274 = vunpack.c.l.b16 %v3466
        %v4275 = vunpack.c.l.b16 %v3467
        %v4276 = vunpack.c.l.b16 %v3468
        %v4277 = vunpack.c.l.b16 %v3469
        %v4278 = vunpack.c.l.b16 %v3470
        %v4279 = vunpack.c.l.b16 %v3471
        %v4280 = vunpack.c.l.b16 %v3472
        %v4281 = vunpack.c.l.b16 %v3473
        %v4282 = vunpack.c.l.b16 %v3474
        %v4283 = vunpack.c.l.b16 %v3475
        %v4284 = vunpack.c.l.b16 %v3476
        %v4285 = vunpack.c.l.b16 %v3477
        %v4286 = vunpack.c.l.b16 %v3478
        %v4287 = vunpack.c.l.b16 %v3479
        %v4288 = vunpack.c.l.b16 %v3480
        %v4289 = vunpack.c.l.b16 %v3481
        %v4290 = vunpack.c.l.b16 %v3482
        %v4291 = vunpack.c.l.b16 %v3483
        %v4292 = vunpack.c.l.b16 %v3484
        %v4293 = vunpack.c.l.b16 %v3485
        %v4294 = vunpack.c.l.b16 %v3486
        %v4295 = vunpack.c.l.b16 %v3487
        %v4296 = vunpack.c.l.b16 %v3488
        %v4297 = vunpack.c.l.b16 %v3489
        %v4298 = vunpack.c.l.b16 %v3490
        %v4299 = vunpack.c.l.b16 %v3491
        %v4300 = vunpack.c.l.b16 %v3492
        %v4301 = vunpack.c.l.b16 %v3493
        %v4302 = vunpack.c.l.b16 %v3494
        %v4303 = vunpack.c.l.b16 %v3495
        %v4304 = vunpack.c.l.b16 %v3496
        %v4305 = vunpack.c.l.b16 %v3497
        %v4306 = vunpack.c.l.b16 %v3498
        %v4307 = vunpack.c.l.b16 %v3499
        %v4308 = vunpack.c.l.b16 %v3500
        %v4309 = vunpack.c.l.b16 %v3501
        %v4310 = vunpack.c.l.b16 %v3502
        %v4311 = vunpack.c.l.b16 %v3503
        %v4312 = vunpack.c.l.b16 %v3504
        %v4313 = vunpack.c.l.b16 %v3505
        %v4314 = vunpack.c.l.b16 %v3506
        %v4315 = vunpack.c.l.b16 %v3507
        %v4316 = vunpack.c.l.b16 %v3508
        %v4317 = vunpack.c.l.b16 %v3509
        %v4318 = vunpack.c.l.b16 %v3510
        %v4319 = vunpack.c.l.b16 %v3511
        %v4320 = vunpack.c.l.b16 %v3512
        %v4321 = vunpack.c.l.b16 %v3513
        %v4322 = vunpack.c.l.b16 %v3514
        %v4323 = vunpack.c.l.b16 %v3515
        %v4324 = vunpack.c.l.b16 %v3516
        %v4325 = vunpack.c.l.b16 %v3517
        %v4326 = vunpack.c.l.b16 %v3518
        %v4327 = vunpack.c.l.b16 %v3519
        %v4328 = vunpack.c.l.b16 %v3520
        %v4329 = vunpack.c.l.b16 %v3521
        %v4330 = vunpack.c.l.b16 %v3522
        %v4331 = vunpack.c.l.b16 %v3523
        %v4332 = vunpack.c.l.b16 %v3524
        %v4333 = vunpack.c.l.b16 %v3525
        %v4334 = vunpack.c.l.b16 %v3526
        %v4335 = vunpack.c.l.b16 %v3527
        %v4336 = vunpack.c.l.b16 %v3528
        %v4337 = vunpack.c.l.b16 %v3529
        %v4338 = vunpack.c.l.b16 %v3530
        %v4339 = vunpack.c.l.b16 %v3531
        %v4340 = vunpack.c.l.b16 %v3532
        %v4341 = vunpack.c.l.b16 %v3533
        %v4342 = vunpack.c.l.b16 %v3534
        %v4343 = vunpack.c.l.b16 %v3535
        %v4344 = vunpack.c.l.b16 %v3536
        %v4345 = vunpack.c.l.b16 %v3537
        %v4346 = vunpack.c.l.b16 %v3538
        %v4347 = vunpack.c.l.b16 %v3539
        %v4348 = vunpack.c.l.b16 %v3540
        %v4349 = vunpack.c.l.b16 %v3541
        %v4350 = vunpack.c.l.b16 %v3542
        %v4351 = vunpack.c.l.b16 %v3543
        %v4352 = vunpack.c.l.b16 %v3544
        %v4353 = vunpack.c.l.b16 %v3545
        %v4354 = vunpack.c.l.b16 %v3546
        %v4355 = vunpack.c.l.b16 %v3547
        %v4356 = vunpack.c.l.b16 %v3548
        %v4357 = vunpack.c.l.b16 %v3549
        %v4358 = vunpack.c.l.b16 %v3550
        %v4359 = vunpack.c.l.b16 %v3551
        %v4360 = vunpack.c.l.b16 %v3552
        %v4361 = vunpack.c.l.b16 %v3553
        %v4362 = vunpack.c.l.b16 %v3554
        %v4363 = vunpack.c.l.b16 %v3555
        %v4364 = vunpack.c.l.b16 %v3556
        %v4365 = vunpack.c.l.b16 %v3557
        %v4366 = vunpack.c.l.b16 %v3558
        %v4367 = vunpack.c.l.b16 %v3559
        %v4368 = vunpack.c.l.b16 %v3560
        %v4369 = vunpack.c.l.b16 %v3561
        %v4370 = vunpack.c.l.b16 %v3562
        %v4371 = vunpack.c.l.b16 %v3563
        %v4372 = vunpack.c.l.b16 %v3564
        %v4373 = vunpack.c.l.b16 %v3565
        %v4374 = vunpack.c.l.b16 %v3566
        %v4375 = vunpack.c.l.b16 %v3567
        %v4376 = vunpack.c.l.b16 %v3568
        %v4377 = vunpack.c.l.b16 %v3569
        %v4378 = vunpack.c.l.b16 %v3570
        %v4379 = vunpack.c.l.b16 %v3571
        %v4380 = vunpack.c.l.b16 %v3572
        %v4381 = vunpack.c.l.b16 %v3573
        %v4382 = vunpack.c.l.b16 %v3574
        %v4383 = vunpack.c.l.b16 %v3575
        %v4384 = vunpack.c.l.b16 %v3576
        %v4385 = vunpack.c.l.b16 %v3577
        %v4386 = vunpack.c.l.b16 %v3578
        %v4387 = vunpack.c.l.b16 %v3579
        %v4388 = vunpack.c.l.b16 %v3580
        %v4389 = vunpack.c.l.b16 %v3581
        %v4390 = vunpack.c.l.b16 %v3582
        %v4391 = vunpack.c.l.b16 %v3583
        %v4392 = vunpack.c.l.b16 %v3584
        %v4393 = vunpack.c.l.b16 %v3585
        %v4394 = vunpack.c.l.b16 %v3586
        %v4395 = vunpack.c.l.b16 %v3587
        %v4396 = vunpack.c.l.b16 %v3588
        %v4397 = vunpack.c.l.b16 %v3589
        %v4398 = vunpack.c.l.b16 %v3590
        %v4399 = vunpack.c.l.b16 %v3591
        %v4400 = vunpack.c.l.b16 %v3592
        %v4401 = vunpack.c.l.b16 %v3593
        %v4402 = vunpack.c.l.b16 %v3594
        %v4403 = vunpack.c.l.b16 %v3595
        %v4404 = vunpack.c.l.b16 %v3596
        %v4405 = vunpack.c.l.b16 %v3597
        %v4406 = vunpack.c.l.b16 %v3598
        %v4407 = vunpack.c.l.b16 %v3599
        %v4408 = vunpack.c.l.b16 %v3600
        %v4409 = vunpack.c.l.b16 %v3601
        %v4410 = vunpack.c.l.b16 %v3602
        %v4411 = vunpack.c.l.b16 %v3603
        %v4412 = vunpack.c.l.b16 %v3604
        %v4413 = vunpack.c.l.b16 %v3605
        %v4414 = vunpack.c.l.b16 %v3606
        %v4415 = vunpack.c.l.b16 %v3607
        %v4416 = vunpack.c.l.b16 %v3608
        %v4417 = vunpack.c.l.b16 %v3609
        %v4418 = vunpack.c.l.b16 %v3610
        %v4419 = vunpack.c.l.b16 %v3611
        %v4420 = vunpack.c.l.b16 %v3612
        %v4421 = vunpack.c.l.b16 %v3613
        %v4422 = vunpack.c.l.b16 %v3614
        %v4423 = vunpack.c.l.b16 %v3615
        %v4424 = vunpack.c.l.b16 %v3616
        %v4425 = vunpack.c.l.b16 %v3617
        %v4426 = vunpack.c.l.b16 %v3618
        %v4427 = vunpack.c.l.b16 %v3619
        %v4428 = vunpack.c.l.b16 %v3620
        %v4429 = vunpack.c.l.b16 %v3621
        %v4430 = vunpack.c.l.b16 %v3622
        %v4431 = vunpack.c.l.b16 %v3623
        %v4432 = vunpack.c.l.b16 %v3624
        %v4433 = vunpack.c.l.b16 %v3625
        %v4434 = vunpack.c.l.b16 %v3626
        %v4435 = vunpack.c.l.b16 %v3627
        %v4436 = vunpack.c.l.b16 %v3628
        %v4437 = vunpack.c.l.b16 %v3629
        %v4438 = vunpack.c.l.b16 %v3630
        %v4439 = vunpack.c.l.b16 %v3631
        %v4440 = vunpack.c.l.b16 %v3632
        %v4441 = vunpack.c.l.b16 %v3633
        %v4442 = vunpack.c.l.b16 %v3634
        %v4443 = vunpack.c.l.b16 %v3635
        %v4444 = vunpack.c.l.b16 %v3636
        %v4445 = vunpack.c.l.b16 %v3637
        %v4446 = vunpack.c.l.b16 %v3638
        %v4447 = vunpack.c.l.b16 %v3639
        %v4448 = vunpack.c.l.b16 %v3640
        %v4449 = vunpack.c.l.b16 %v3641
        %v4450 = vunpack.c.l.b16 %v3642
        %v4451 = vunpack.c.l.b16 %v3643
        %v4452 = vunpack.c.l.b16 %v3644
        %v4453 = vunpack.c.l.b16 %v3645
        %v4454 = vunpack.c.l.b16 %v3646
        %v4455 = vunpack.c.l.b16 %v3647
        %v4456 = vunpack.c.l.b16 %v3648
        %v4457 = vunpack.c.l.b16 %v3649
        %v4458 = vunpack.c.l.b16 %v3650
        %v4459 = vunpack.c.l.b16 %v3651
        %v4460 = vunpack.c.l.b16 %v3652
        %v4461 = vunpack.c.l.b16 %v3653
        %v4462 = vunpack.c.l.b16 %v3654
        %v4463 = vunpack.c.l.b16 %v3655
        %v4464 = vunpack.c.l.b16 %v3656
        %v4465 = vunpack.c.l.b16 %v3657
        %v4466 = vunpack.c.l.b16 %v3658
        %v4467 = vunpack.c.l.b16 %v3659
        %v4468 = vunpack.c.l.b16 %v3660
        %v4469 = vunpack.c.l.b16 %v3661
        %v4470 = vunpack.c.l.b16 %v3662
        %v4471 = vunpack.c.l.b16 %v3663
        %v4472 = vunpack.c.l.b16 %v3664
        %v4473 = vunpack.c.l.b16 %v3665
        %v4474 = vunpack.c.l.b16 %v3666
        %v4475 = vunpack.c.l.b16 %v3667
        %v4476 = vunpack.c.l.b16 %v3668
        %v4477 = vunpack.c.l.b16 %v3669
        %v4478 = vunpack.c.l.b16 %v3670
        %v4479 = vunpack.c.l.b16 %v3671
        %v4480 = vunpack.c.l.b16 %v3672
        %v4481 = vunpack.c.l.b16 %v3673
        %v4482 = vunpack.c.l.b16 %v3674
        %v4483 = vunpack.c.l.b16 %v3675
        %v4484 = vunpack.c.l.b16 %v3676
        %v4485 = vunpack.c.l.b16 %v3677
        %v4486 = vunpack.c.l.b16 %v3678
        %v4487 = vunpack.c.l.b16 %v3679
        %v4488 = vunpack.c.l.b16 %v3680
        %v4489 = vunpack.c.l.b16 %v3681
        %v4490 = vunpack.c.l.b16 %v3682
        %v4491 = vunpack.c.l.b16 %v3683
        %v4492 = vunpack.c.l.b16 %v3684
        %v4493 = vunpack.c.l.b16 %v3685
        %v4494 = vunpack.c.l.b16 %v3686
        %v4495 = vunpack.c.l.b16 %v3687
        %v4496 = vunpack.c.l.b16 %v3688
        %v4497 = vunpack.c.l.b16 %v3689
        %v4498 = vunpack.c.l.b16 %v3690
        %v4499 = vunpack.c.l.b16 %v3691
        %v4500 = vunpack.c.l.b16 %v3692
        %v4501 = vunpack.c.l.b16 %v3693
        %v4502 = vunpack.c.l.b16 %v3694
        %v4503 = vunpack.c.l.b16 %v3695
        %v4504 = vunpack.c.l.b16 %v3696
        %v4505 = vunpack.c.l.b16 %v3697
        %v4506 = vunpack.c.l.b16 %v3698
        %v4507 = vunpack.c.l.b16 %v3699
        %v4508 = vunpack.c.l.b16 %v3700
        %v4509 = vunpack.c.l.b16 %v3701
        %v4510 = vunpack.c.l.b16 %v3702
        %v4511 = vunpack.c.l.b16 %v3703
        %v4512 = vunpack.c.l.b16 %v3704
        %v4513 = vunpack.c.l.b16 %v3705
        %v4514 = vunpack.c.l.b16 %v3706
        %v4515 = vunpack.c.l.b16 %v3707
        %v4516 = vunpack.c.l.b16 %v3708
        %v4517 = vunpack.c.l.b16 %v3709
        %v4518 = vunpack.c.l.b16 %v3710
        %v4519 = vunpack.c.l.b16 %v3711
        %v4520 = vunpack.c.l.b16 %v3712
        %v4521 = vunpack.c.l.b16 %v3713
        %v4522 = vunpack.c.l.b16 %v3714
        %v4523 = vunpack.c.l.b16 %v3715
        %v4524 = vunpack.c.l.b16 %v3716
        %v4525 = vunpack.c.l.b16 %v3717
        %v4526 = vunpack.c.l.b16 %v3718
        %v4527 = vunpack.c.l.b16 %v3719
        %v4528 = vunpack.c.l.b16 %v3720
        %v4529 = vunpack.c.l.b16 %v3721
        %v4530 = vunpack.c.l.b16 %v3722
        %v4531 = vunpack.c.l.b16 %v3723
        %v4532 = vunpack.c.l.b16 %v3724
        %v4533 = vunpack.c.l.b16 %v3725
        %v4534 = vunpack.c.l.b16 %v3726
        %v4535 = vunpack.c.l.b16 %v3727
        %v4536 = vunpack.c.l.b16 %v3728
        %v4537 = vunpack.c.l.b16 %v3729
        %v4538 = vunpack.c.l.b16 %v3730
        %v4539 = vunpack.c.l.b16 %v3731
        %v4540 = vunpack.c.l.b16 %v3732
        %v4541 = vunpack.c.l.b16 %v3733
        %v4542 = vunpack.c.l.b16 %v3734
        %v4543 = vunpack.c.l.b16 %v3735
        %v4544 = vunpack.c.l.b16 %v3736
        %v4545 = vunpack.c.l.b16 %v3737
        %v4546 = vunpack.c.l.b16 %v3738
        %v4547 = vunpack.c.l.b16 %v3739
        %v4548 = vunpack.c.l.b16 %v3740
        %v4549 = vunpack.c.l.b16 %v3741
        %v4550 = vunpack.c.l.b16 %v3742
        %v4551 = vunpack.c.l.b16 %v3743
        %v4552 = vunpack.c.l.b16 %v3744
        %v4553 = vunpack.c.l.b16 %v3745
        %v4554 = vunpack.c.l.b16 %v3746
        %v4555 = vunpack.c.l.b16 %v3747
        %v4556 = vunpack.c.l.b16 %v3748
        %v4557 = vunpack.c.l.b16 %v3749
        %v4558 = vunpack.c.l.b16 %v3750
        %v4559 = vunpack.c.l.b16 %v3751
        %v4560 = vunpack.c.l.b16 %v3752
        %v4561 = vunpack.c.l.b16 %v3753
        %v4562 = vunpack.c.l.b16 %v3754
        %v4563 = vunpack.c.l.b16 %v3755
        %v4564 = vunpack.c.l.b16 %v3756
        %v4565 = vunpack.c.l.b16 %v3757
        %v4566 = vunpack.c.l.b16 %v3758
        %v4567 = vunpack.c.l.b16 %v3759
        %v4568 = vunpack.c.l.b16 %v3760
        %v4569 = vunpack.c.l.b16 %v3761
        %v4570 = vunpack.c.l.b16 %v3762
        %v4571 = vunpack.c.l.b16 %v3763
        %v4572 = vunpack.c.l.b16 %v3764
        %v4573 = vunpack.c.l.b16 %v3765
        %v4574 = vunpack.c.l.b16 %v3766
        %v4575 = vunpack.c.l.b16 %v3767
        %v4576 = vunpack.c.l.b16 %v3768
        %v4577 = vunpack.c.l.b16 %v3769
        %v4578 = vunpack.c.l.b16 %v3770
        %v4579 = vunpack.c.l.b16 %v3771
        %v4580 = vunpack.c.l.b16 %v3772
        %v4581 = vunpack.c.l.b16 %v3773
        %v4582 = vunpack.c.l.b16 %v3774
        %v4583 = vunpack.c.l.b16 %v3775
        %v4584 = vunpack.c.l.b16 %v3776
        %v4585 = vunpack.c.l.b16 %v3777
        %v4586 = vunpack.c.l.b16 %v3778
        %v4587 = vunpack.c.l.b16 %v3779
        %v4588 = vunpack.c.l.b16 %v3780
        %v4589 = vunpack.c.l.b16 %v3781
        %v4590 = vunpack.c.l.b16 %v3782
        %v4591 = vunpack.c.l.b16 %v3783
        %v4592 = vunpack.c.l.b16 %v3784
        %v4593 = vunpack.c.l.b16 %v3785
        %v4594 = vunpack.c.l.b16 %v3786
        %v4595 = vunpack.c.l.b16 %v3787
        %v4596 = vpack.c.b16 %v4197, %v4196
        %v4597 = vpack.c.b16 %v4199, %v4198
        %v4598 = vpack.c.b16 %v4201, %v4200
        %v4599 = vpack.c.b16 %v4203, %v4202
        %v4600 = vpack.c.b16 %v4205, %v4204
        %v4601 = vpack.c.b16 %v4207, %v4206
        %v4602 = vpack.c.b16 %v4209, %v4208
        %v4603 = vpack.c.b16 %v4211, %v4210
        %v4604 = vpack.c.b16 %v4213, %v4212
        %v4605 = vpack.c.b16 %v4215, %v4214
        %v4606 = vpack.c.b16 %v4217, %v4216
        %v4607 = vpack.c.b16 %v4219, %v4218
        %v4608 = vpack.c.b16 %v4221, %v4220
        %v4609 = vpack.c.b16 %v4223, %v4222
        %v4610 = vpack.c.b16 %v4225, %v4224
        %v4611 = vpack.c.b16 %v4227, %v4226
        %v4612 = vpack.c.b16 %v4229, %v4228
        %v4613 = vpack.c.b16 %v4231, %v4230
        %v4614 = vpack.c.b16 %v4233, %v4232
        %v4615 = vpack.c.b16 %v4235, %v4234
        %v4616 = vpack.c.b16 %v4237, %v4236
        %v4617 = vpack.c.b16 %v4239, %v4238
        %v4618 = vpack.c.b16 %v4241, %v4240
        %v4619 = vpack.c.b16 %v4243, %v4242
        %v4620 = vpack.c.b16 %v4245, %v4244
        %v4621 = vpack.c.b16 %v4247, %v4246
        %v4622 = vpack.c.b16 %v4249, %v4248
        %v4623 = vpack.c.b16 %v4251, %v4250
        %v4624 = vpack.c.b16 %v4253, %v4252
        %v4625 = vpack.c.b16 %v4255, %v4254
        %v4626 = vpack.c.b16 %v4257, %v4256
        %v4627 = vpack.c.b16 %v4259, %v4258
        %v4628 = vpack.c.b16 %v4261, %v4260
        %v4629 = vpack.c.b16 %v4263, %v4262
        %v4630 = vpack.c.b16 %v4265, %v4264
        %v4631 = vpack.c.b16 %v4267, %v4266
        %v4632 = vpack.c.b16 %v4269, %v4268
        %v4633 = vpack.c.b16 %v4271, %v4270
        %v4634 = vpack.c.b16 %v4273, %v4272
        %v4635 = vpack.c.b16 %v4275, %v4274
        %v4636 = vpack.c.b16 %v4277, %v4276
        %v4637 = vpack.c.b16 %v4279, %v4278
        %v4638 = vpack.c.b16 %v4281, %v4280
        %v4639 = vpack.c.b16 %v4283, %v4282
        %v4640 = vpack.c.b16 %v4285, %v4284
        %v4641 = vpack.c.b16 %v4287, %v4286
        %v4642 = vpack.c.b16 %v4289, %v4288
        %v4643 = vpack.c.b16 %v4291, %v4290
        %v4644 = vpack.c.b16 %v4293, %v4292
        %v4645 = vpack.c.b16 %v4295, %v4294
        %v4646 = vpack.c.b16 %v4297, %v4296
        %v4647 = vpack.c.b16 %v4299, %v4298
        %v4648 = vpack.c.b16 %v4301, %v4300
        %v4649 = vpack.c.b16 %v4303, %v4302
        %v4650 = vpack.c.b16 %v4305, %v4304
        %v4651 = vpack.c.b16 %v4307, %v4306
        %v4652 = vpack.c.b16 %v4309, %v4308
        %v4653 = vpack.c.b16 %v4311, %v4310
        %v4654 = vpack.c.b16 %v4313, %v4312
        %v4655 = vpack.c.b16 %v4315, %v4314
        %v4656 = vpack.c.b16 %v4317, %v4316
        %v4657 = vpack.c.b16 %v4319, %v4318
        %v4658 = vpack.c.b16 %v4321, %v4320
        %v4659 = vpack.c.b16 %v4323, %v4322
        %v4660 = vpack.c.b16 %v4325, %v4324
        %v4661 = vpack.c.b16 %v4327, %v4326
        %v4662 = vpack.c.b16 %v4329, %v4328
        %v4663 = vpack.c.b16 %v4331, %v4330
        %v4664 = vpack.c.b16 %v4333, %v4332
        %v4665 = vpack.c.b16 %v4335, %v4334
        %v4666 = vpack.c.b16 %v4337, %v4336
        %v4667 = vpack.c.b16 %v4339, %v4338
        %v4668 = vpack.c.b16 %v4341, %v4340
        %v4669 = vpack.c.b16 %v4343, %v4342
        %v4670 = vpack.c.b16 %v4345, %v4344
        %v4671 = vpack.c.b16 %v4347, %v4346
        %v4672 = vpack.c.b16 %v4349, %v4348
        %v4673 = vpack.c.b16 %v4351, %v4350
        %v4674 = vpack.c.b16 %v4353, %v4352
        %v4675 = vpack.c.b16 %v4355, %v4354
        %v4676 = vpack.c.b16 %v4357, %v4356
        %v4677 = vpack.c.b16 %v4359, %v4358
        %v4678 = vpack.c.b16 %v4361, %v4360
        %v4679 = vpack.c.b16 %v4363, %v4362
        %v4680 = vpack.c.b16 %v4365, %v4364
        %v4681 = vpack.c.b16 %v4367, %v4366
        %v4682 = vpack.c.b16 %v4369, %v4368
        %v4683 = vpack.c.b16 %v4371, %v4370
        %v4684 = vpack.c.b16 %v4373, %v4372
        %v4685 = vpack.c.b16 %v4375, %v4374
        %v4686 = vpack.c.b16 %v4377, %v4376
        %v4687 = vpack.c.b16 %v4379, %v4378
        %v4688 = vpack.c.b16 %v4381, %v4380
        %v4689 = vpack.c.b16 %v4383, %v4382
        %v4690 = vpack.c.b16 %v4385, %v4384
        %v4691 = vpack.c.b16 %v4387, %v4386
        %v4692 = vpack.c.b16 %v4389, %v4388
        %v4693 = vpack.c.b16 %v4391, %v4390
        %v4694 = vpack.c.b16 %v4393, %v4392
        %v4695 = vpack.c.b16 %v4395, %v4394
        %v4696 = vpack.c.b16 %v4397, %v4396
        %v4697 = vpack.c.b16 %v4399, %v4398
        %v4698 = vpack.c.b16 %v4401, %v4400
        %v4699 = vpack.c.b16 %v4403, %v4402
        %v4700 = vpack.c.b16 %v4405, %v4404
        %v4701 = vpack.c.b16 %v4407, %v4406
        %v4702 = vpack.c.b16 %v4409, %v4408
        %v4703 = vpack.c.b16 %v4411, %v4410
        %v4704 = vpack.c.b16 %v4413, %v4412
        %v4705 = vpack.c.b16 %v4415, %v4414
        %v4706 = vpack.c.b16 %v4417, %v4416
        %v4707 = vpack.c.b16 %v4419, %v4418
        %v4708 = vpack.c.b16 %v4421, %v4420
        %v4709 = vpack.c.b16 %v4423, %v4422
        %v4710 = vpack.c.b16 %v4425, %v4424
        %v4711 = vpack.c.b16 %v4427, %v4426
        %v4712 = vpack.c.b16 %v4429, %v4428
        %v4713 = vpack.c.b16 %v4431, %v4430
        %v4714 = vpack.c.b16 %v4433, %v4432
        %v4715 = vpack.c.b16 %v4435, %v4434
        %v4716 = vpack.c.b16 %v4437, %v4436
        %v4717 = vpack.c.b16 %v4439, %v4438
        %v4718 = vpack.c.b16 %v4441, %v4440
        %v4719 = vpack.c.b16 %v4443, %v4442
        %v4720 = vpack.c.b16 %v4445, %v4444
        %v4721 = vpack.c.b16 %v4447, %v4446
        %v4722 = vpack.c.b16 %v4449, %v4448
        %v4723 = vpack.c.b16 %v4451, %v4450
        %v4724 = vpack.c.b16 %v4453, %v4452
        %v4725 = vpack.c.b16 %v4455, %v4454
        %v4726 = vpack.c.b16 %v4457, %v4456
        %v4727 = vpack.c.b16 %v4459, %v4458
        %v4728 = vpack.c.b16 %v4461, %v4460
        %v4729 = vpack.c.b16 %v4463, %v4462
        %v4730 = vpack.c.b16 %v4465, %v4464
        %v4731 = vpack.c.b16 %v4467, %v4466
        %v4732 = vpack.c.b16 %v4469, %v4468
        %v4733 = vpack.c.b16 %v4471, %v4470
        %v4734 = vpack.c.b16 %v4473, %v4472
        %v4735 = vpack.c.b16 %v4475, %v4474
        %v4736 = vpack.c.b16 %v4477, %v4476
        %v4737 = vpack.c.b16 %v4479, %v4478
        %v4738 = vpack.c.b16 %v4481, %v4480
        %v4739 = vpack.c.b16 %v4483, %v4482
        %v4740 = vpack.c.b16 %v4485, %v4484
        %v4741 = vpack.c.b16 %v4487, %v4486
        %v4742 = vpack.c.b16 %v4489, %v4488
        %v4743 = vpack.c.b16 %v4491, %v4490
        %v4744 = vpack.c.b16 %v4493, %v4492
        %v4745 = vpack.c.b16 %v4495, %v4494
        %v4746 = vpack.c.b16 %v4497, %v4496
        %v4747 = vpack.c.b16 %v4499, %v4498
        %v4748 = vpack.c.b16 %v4501, %v4500
        %v4749 = vpack.c.b16 %v4503, %v4502
        %v4750 = vpack.c.b16 %v4505, %v4504
        %v4751 = vpack.c.b16 %v4507, %v4506
        %v4752 = vpack.c.b16 %v4509, %v4508
        %v4753 = vpack.c.b16 %v4511, %v4510
        %v4754 = vpack.c.b16 %v4513, %v4512
        %v4755 = vpack.c.b16 %v4515, %v4514
        %v4756 = vpack.c.b16 %v4517, %v4516
        %v4757 = vpack.c.b16 %v4519, %v4518
        %v4758 = vpack.c.b16 %v4521, %v4520
        %v4759 = vpack.c.b16 %v4523, %v4522
        %v4760 = vpack.c.b16 %v4525, %v4524
        %v4761 = vpack.c.b16 %v4527, %v4526
        %v4762 = vpack.c.b16 %v4529, %v4528
        %v4763 = vpack.c.b16 %v4531, %v4530
        %v4764 = vpack.c.b16 %v4533, %v4532
        %v4765 = vpack.c.b16 %v4535, %v4534
        %v4766 = vpack.c.b16 %v4537, %v4536
        %v4767 = vpack.c.b16 %v4539, %v4538
        %v4768 = vpack.c.b16 %v4541, %v4540
        %v4769 = vpack.c.b16 %v4543, %v4542
        %v4770 = vpack.c.b16 %v4545, %v4544
        %v4771 = vpack.c.b16 %v4547, %v4546
        %v4772 = vpack.c.b16 %v4549, %v4548
        %v4773 = vpack.c.b16 %v4551, %v4550
        %v4774 = vpack.c.b16 %v4553, %v4552
        %v4775 = vpack.c.b16 %v4555, %v4554
        %v4776 = vpack.c.b16 %v4557, %v4556
        %v4777 = vpack.c.b16 %v4559, %v4558
        %v4778 = vpack.c.b16 %v4561, %v4560
        %v4779 = vpack.c.b16 %v4563, %v4562
        %v4780 = vpack.c.b16 %v4565, %v4564
        %v4781 = vpack.c.b16 %v4567, %v4566
        %v4782 = vpack.c.b16 %v4569, %v4568
        %v4783 = vpack.c.b16 %v4571, %v4570
        %v4784 = vpack.c.b16 %v4573, %v4572
        %v4785 = vpack.c.b16 %v4575, %v4574
        %v4786 = vpack.c.b16 %v4577, %v4576
        %v4787 = vpack.c.b16 %v4579, %v4578
        %v4788 = vpack.c.b16 %v4581, %v4580
        %v4789 = vpack.c.b16 %v4583, %v4582
        %v4790 = vpack.c.b16 %v4585, %v4584
        %v4791 = vpack.c.b16 %v4587, %v4586
        %v4792 = vpack.c.b16 %v4589, %v4588
        %v4793 = vpack.c.b16 %v4591, %v4590
        %v4794 = vpack.c.b16 %v4593, %v4592
        %v4795 = vpack.c.b16 %v4595, %v4594
        %4996 = vmatprep.subr.bf16.mxu0 0
        %4997 = vmatpush1.bf16.msra.mxu0 %v4596
        %4998 = vmatprep.subr.bf16.mxu0 0
        %4999 = vmatpush1.bf16.msra.mxu0 %v4597
        %5000 = vmatprep.subr.bf16.mxu0 0
        %5001 = vmatpush1.bf16.msra.mxu0 %v4598
        %5002 = vmatprep.subr.bf16.mxu0 0
        %5003 = vmatpush1.bf16.msra.mxu0 %v4599
        %5004 = vmatprep.subr.bf16.mxu0 0
        %5005 = vmatpush1.bf16.msra.mxu0 %v4600
        %5006 = vmatprep.subr.bf16.mxu0 0
        %5007 = vmatpush1.bf16.msra.mxu0 %v4601
        %5008 = vmatprep.subr.bf16.mxu0 0
        %5009 = vmatpush1.bf16.msra.mxu0 %v4602
        %5010 = vmatprep.subr.bf16.mxu0 0
        %5011 = vmatpush1.bf16.msra.mxu0 %v4603
        %5012 = vmatprep.subr.bf16.mxu0 0
        %5013 = vmatpush1.bf16.msra.mxu0 %v4604
        %5014 = vmatprep.subr.bf16.mxu0 0
        %5015 = vmatpush1.bf16.msra.mxu0 %v4605
        %5016 = vmatprep.subr.bf16.mxu0 0
        %5017 = vmatpush1.bf16.msra.mxu0 %v4606
        %5018 = vmatprep.subr.bf16.mxu0 0
        %5019 = vmatpush1.bf16.msra.mxu0 %v4607
        %5020 = vmatprep.subr.bf16.mxu0 0
        %5021 = vmatpush1.bf16.msra.mxu0 %v4608
        %5022 = vmatprep.subr.bf16.mxu0 0
        %5023 = vmatpush1.bf16.msra.mxu0 %v4609
        %5024 = vmatprep.subr.bf16.mxu0 0
        %5025 = vmatpush1.bf16.msra.mxu0 %v4610
        %5026 = vmatprep.subr.bf16.mxu0 0
        %5027 = vmatpush1.bf16.msra.mxu0 %v4611
        %5028 = vmatprep.mubr.bf16.mxu0 %v1730
        %5029 = vmatmul.mubr.bf16.gmra.mrb[0].mxu0 %v1658
        %v5030 = vpop.f32.mrb[0].mxu0
        %v5031 = vadd.f32 %v3794, %v5030
        %v5032 = vpop.f32.mrb[0].mxu0
        %v5033 = vpop.f32.mrb[0].mxu0
        %v5034 = vadd.f32 %v3794, %v5033
        %v5035 = vpop.f32.mrb[0].mxu0
        %5036 = vmatprep.mubr.bf16.mxu0 %v1731
        %5037 = vmatmul.mubr.bf16.gmra.mrb[0].mxu0 %v1659
        %v5038 = vpop.f32.mrb[0].mxu0
        %v5039 = vadd.f32 %v3794, %v5038
        %v5040 = vpop.f32.mrb[0].mxu0
        %v5041 = vpop.f32.mrb[0].mxu0
        %v5042 = vadd.f32 %v3794, %v5041
        %v5043 = vpop.f32.mrb[0].mxu0
        %5044 = vdwg.mxu0
        %5045 = vmatprep.subr.bf16.mxu0 0
        %5046 = vmatpush1.bf16.msra.mxu0 %v4612
        %5047 = vmatprep.subr.bf16.mxu0 0
        %5048 = vmatpush1.bf16.msra.mxu0 %v4613
        %5049 = vmatprep.subr.bf16.mxu0 0
        %5050 = vmatpush1.bf16.msra.mxu0 %v4614
        %5051 = vmatprep.subr.bf16.mxu0 0
        %5052 = vmatpush1.bf16.msra.mxu0 %v4615
        %5053 = vmatprep.subr.bf16.mxu0 0
        %5054 = vmatpush1.bf16.msra.mxu0 %v4616
        %5055 = vmatprep.subr.bf16.mxu0 0
        %5056 = vmatpush1.bf16.msra.mxu0 %v4617
        %5057 = vmatprep.subr.bf16.mxu0 0
        %5058 = vmatpush1.bf16.msra.mxu0 %v4618
        %5059 = vmatprep.subr.bf16.mxu0 0
        %5060 = vmatpush1.bf16.msra.mxu0 %v4619
        %5061 = vmatprep.subr.bf16.mxu0 0
        %5062 = vmatpush1.bf16.msra.mxu0 %v4620
        %5063 = vmatprep.subr.bf16.mxu0 0
        %5064 = vmatpush1.bf16.msra.mxu0 %v4621
        %5065 = vmatprep.subr.bf16.mxu0 0
        %5066 = vmatpush1.bf16.msra.mxu0 %v4622
        %5067 = vmatprep.subr.bf16.mxu0 0
        %5068 = vmatpush1.bf16.msra.mxu0 %v4623
        %5069 = vmatprep.subr.bf16.mxu0 0
        %5070 = vmatpush1.bf16.msra.mxu0 %v4624
        %5071 = vmatprep.subr.bf16.mxu0 0
        %5072 = vmatpush1.bf16.msra.mxu0 %v4625
        %5073 = vmatprep.subr.bf16.mxu0 0
        %5074 = vmatpush1.bf16.msra.mxu0 %v4626
        %5075 = vmatprep.subr.bf16.mxu0 0
        %5076 = vmatpush1.bf16.msra.mxu0 %v4627
        %5077 = vmatprep.mubr.bf16.mxu0 %v1874
        %5078 = vmatmul.mubr.bf16.gmra.mrb[0].mxu0 %v1802
        %v5079 = vpop.f32.mrb[0].mxu0
        %v5080 = vadd.f32 %v5031, %v5079
        %v5081 = vpop.f32.mrb[0].mxu0
        %v5082 = vpop.f32.mrb[0].mxu0
        %v5083 = vadd.f32 %v5034, %v5082
        %v5084 = vpop.f32.mrb[0].mxu0
        %5085 = vmatprep.mubr.bf16.mxu0 %v1875
        %5086 = vmatmul.mubr.bf16.gmra.mrb[0].mxu0 %v1803
        %v5087 = vpop.f32.mrb[0].mxu0
        %v5088 = vadd.f32 %v5039, %v5087
        %v5089 = vpop.f32.mrb[0].mxu0
        %v5090 = vpop.f32.mrb[0].mxu0
        %v5091 = vadd.f32 %v5042, %v5090
        %v5092 = vpop.f32.mrb[0].mxu0
        %5093 = vdwg.mxu0
        %5094 = vmatprep.subr.bf16.mxu0 0
        %5095 = vmatpush1.bf16.msra.mxu0 %v4628
        %5096 = vmatprep.subr.bf16.mxu0 0
        %5097 = vmatpush1.bf16.msra.mxu0 %v4629
        %5098 = vmatprep.subr.bf16.mxu0 0
        %5099 = vmatpush1.bf16.msra.mxu0 %v4630
        %5100 = vmatprep.subr.bf16.mxu0 0
        %5101 = vmatpush1.bf16.msra.mxu0 %v4631
        %5102 = vmatprep.subr.bf16.mxu0 0
        %5103 = vmatpush1.bf16.msra.mxu0 %v4632
        %5104 = vmatprep.subr.bf16.mxu0 0
        %5105 = vmatpush1.bf16.msra.mxu0 %v4633
        %5106 = vmatprep.subr.bf16.mxu0 0
        %5107 = vmatpush1.bf16.msra.mxu0 %v4634
        %5108 = vmatprep.subr.bf16.mxu0 0
        %5109 = vmatpush1.bf16.msra.mxu0 %v4635
        %5110 = vmatprep.subr.bf16.mxu0 0
        %5111 = vmatpush1.bf16.msra.mxu0 %v4636
        %5112 = vmatprep.subr.bf16.mxu0 0
        %5113 = vmatpush1.bf16.msra.mxu0 %v4637
        %5114 = vmatprep.subr.bf16.mxu0 0
        %5115 = vmatpush1.bf16.msra.mxu0 %v4638
        %5116 = vmatprep.subr.bf16.mxu0 0
        %5117 = vmatpush1.bf16.msra.mxu0 %v4639
        %5118 = vmatprep.subr.bf16.mxu0 0
        %5119 = vmatpush1.bf16.msra.mxu0 %v4640
        %5120 = vmatprep.subr.bf16.mxu0 0
        %5121 = vmatpush1.bf16.msra.mxu0 %v4641
        %5122 = vmatprep.subr.bf16.mxu0 0
        %5123 = vmatpush1.bf16.msra.mxu0 %v4642
        %5124 = vmatprep.subr.bf16.mxu0 0
        %5125 = vmatpush1.bf16.msra.mxu0 %v4643
        %5126 = vmatprep.mubr.bf16.mxu0 %v2018
        %5127 = vmatmul.mubr.bf16.gmra.mrb[0].mxu0 %v1946
        %v5128 = vpop.f32.mrb[0].mxu0
        %v5129 = vadd.f32 %v5080, %v5128
        %v5130 = vpop.f32.mrb[0].mxu0
        %v5131 = vpop.f32.mrb[0].mxu0
        %v5132 = vadd.f32 %v5083, %v5131
        %v5133 = vpop.f32.mrb[0].mxu0
        %5134 = vmatprep.mubr.bf16.mxu0 %v2019
        %5135 = vmatmul.mubr.bf16.gmra.mrb[0].mxu0 %v1947
        %v5136 = vpop.f32.mrb[0].mxu0
        %v5137 = vadd.f32 %v5088, %v5136
        %v5138 = vpop.f32.mrb[0].mxu0
        %v5139 = vpop.f32.mrb[0].mxu0
        %v5140 = vadd.f32 %v5091, %v5139
        %v5141 = vpop.f32.mrb[0].mxu0
        %5142 = vdwg.mxu0
        %5143 = vmatprep.subr.bf16.mxu0 0
        %5144 = vmatpush1.bf16.msra.mxu0 %v4644
        %5145 = vmatprep.subr.bf16.mxu0 0
        %5146 = vmatpush1.bf16.msra.mxu0 %v4645
        %5147 = vmatprep.subr.bf16.mxu0 0
        %5148 = vmatpush1.bf16.msra.mxu0 %v4646
        %5149 = vmatprep.subr.bf16.mxu0 0
        %5150 = vmatpush1.bf16.msra.mxu0 %v4647
        %5151 = vmatprep.subr.bf16.mxu0 0
        %5152 = vmatpush1.bf16.msra.mxu0 %v4648
        %5153 = vmatprep.subr.bf16.mxu0 0
        %5154 = vmatpush1.bf16.msra.mxu0 %v4649
        %5155 = vmatprep.subr.bf16.mxu0 0
        %5156 = vmatpush1.bf16.msra.mxu0 %v4650
        %5157 = vmatprep.subr.bf16.mxu0 0
        %5158 = vmatpush1.bf16.msra.mxu0 %v4651
        %5159 = vmatprep.subr.bf16.mxu0 0
        %5160 = vmatpush1.bf16.msra.mxu0 %v4652
        %5161 = vmatprep.subr.bf16.mxu0 0
        %5162 = vmatpush1.bf16.msra.mxu0 %v4653
        %5163 = vmatprep.subr.bf16.mxu0 0
        %5164 = vmatpush1.bf16.msra.mxu0 %v4654
        %5165 = vmatprep.subr.bf16.mxu0 0
        %5166 = vmatpush1.bf16.msra.mxu0 %v4655
        %5167 = vmatprep.subr.bf16.mxu0 0
        %5168 = vmatpush1.bf16.msra.mxu0 %v4656
        %5169 = vmatprep.subr.bf16.mxu0 0
        %5170 = vmatpush1.bf16.msra.mxu0 %v4657
        %5171 = vmatprep.subr.bf16.mxu0 0
        %5172 = vmatpush1.bf16.msra.mxu0 %v4658
        %5173 = vmatprep.subr.bf16.mxu0 0
        %5174 = vmatpush1.bf16.msra.mxu0 %v4659
        %5175 = vmatprep.mubr.bf16.mxu0 %v2162
        %5176 = vmatmul.mubr.bf16.gmra.mrb[0].mxu0 %v2090
        %v5177 = vpop.f32.mrb[0].mxu0
        %v5178 = vadd.f32 %v5129, %v5177
        %v5179 = vpop.f32.mrb[0].mxu0
        %v5180 = vpop.f32.mrb[0].mxu0
        %v5181 = vadd.f32 %v5132, %v5180
        %v5182 = vpop.f32.mrb[0].mxu0
        %5183 = vmatprep.mubr.bf16.mxu0 %v2163
        %5184 = vmatmul.mubr.bf16.gmra.mrb[0].mxu0 %v2091
        %v5185 = vpop.f32.mrb[0].mxu0
        %v5186 = vadd.f32 %v5137, %v5185
        %v5187 = vpop.f32.mrb[0].mxu0
        %v5188 = vpop.f32.mrb[0].mxu0
        %v5189 = vadd.f32 %v5140, %v5188
        %v5190 = vpop.f32.mrb[0].mxu0
        %5191 = vdwg.mxu0
        %5192 = vmatprep.subr.bf16.mxu0 0
        %5193 = vmatpush1.bf16.msra.mxu0 %v4660
        %5194 = vmatprep.subr.bf16.mxu0 0
        %5195 = vmatpush1.bf16.msra.mxu0 %v4661
        %5196 = vmatprep.subr.bf16.mxu0 0
        %5197 = vmatpush1.bf16.msra.mxu0 %v4662
        %5198 = vmatprep.subr.bf16.mxu0 0
        %5199 = vmatpush1.bf16.msra.mxu0 %v4663
        %5200 = vmatprep.subr.bf16.mxu0 0
        %5201 = vmatpush1.bf16.msra.mxu0 %v4664
        %5202 = vmatprep.subr.bf16.mxu0 0
        %5203 = vmatpush1.bf16.msra.mxu0 %v4665
        %5204 = vmatprep.subr.bf16.mxu0 0
        %5205 = vmatpush1.bf16.msra.mxu0 %v4666
        %5206 = vmatprep.subr.bf16.mxu0 0
        %5207 = vmatpush1.bf16.msra.mxu0 %v4667
        %5208 = vmatprep.subr.bf16.mxu0 0
        %5209 = vmatpush1.bf16.msra.mxu0 %v4668
        %5210 = vmatprep.subr.bf16.mxu0 0
        %5211 = vmatpush1.bf16.msra.mxu0 %v4669
        %5212 = vmatprep.subr.bf16.mxu0 0
        %5213 = vmatpush1.bf16.msra.mxu0 %v4670
        %5214 = vmatprep.subr.bf16.mxu0 0
        %5215 = vmatpush1.bf16.msra.mxu0 %v4671
        %5216 = vmatprep.subr.bf16.mxu0 0
        %5217 = vmatpush1.bf16.msra.mxu0 %v4672
        %5218 = vmatprep.subr.bf16.mxu0 0
        %5219 = vmatpush1.bf16.msra.mxu0 %v4673
        %5220 = vmatprep.subr.bf16.mxu0 0
        %5221 = vmatpush1.bf16.msra.mxu0 %v4674
        %5222 = vmatprep.subr.bf16.mxu0 0
        %5223 = vmatpush1.bf16.msra.mxu0 %v4675
        %5224 = vmatprep.mubr.bf16.mxu0 %v2306
        %5225 = vmatmul.mubr.bf16.gmra.mrb[0].mxu0 %v2234
        %v5226 = vpop.f32.mrb[0].mxu0
        %v5227 = vadd.f32 %v5178, %v5226
        %v5228 = vpop.f32.mrb[0].mxu0
        %v5229 = vpop.f32.mrb[0].mxu0
        %v5230 = vadd.f32 %v5181, %v5229
        %v5231 = vpop.f32.mrb[0].mxu0
        %5232 = vmatprep.mubr.bf16.mxu0 %v2307
        %5233 = vmatmul.mubr.bf16.gmra.mrb[0].mxu0 %v2235
        %v5234 = vpop.f32.mrb[0].mxu0
        %v5235 = vadd.f32 %v5186, %v5234
        %v5236 = vpop.f32.mrb[0].mxu0
        %v5237 = vpop.f32.mrb[0].mxu0
        %v5238 = vadd.f32 %v5189, %v5237
        %v5239 = vpop.f32.mrb[0].mxu0
        %5240 = vdwg.mxu0
        %5241 = vmatprep.subr.bf16.mxu0 0
        %5242 = vmatpush1.bf16.msra.mxu0 %v4676
        %5243 = vmatprep.subr.bf16.mxu0 0
        %5244 = vmatpush1.bf16.msra.mxu0 %v4677
        %5245 = vmatprep.subr.bf16.mxu0 0
        %5246 = vmatpush1.bf16.msra.mxu0 %v4678
        %5247 = vmatprep.subr.bf16.mxu0 0
        %5248 = vmatpush1.bf16.msra.mxu0 %v4679
        %5249 = vmatprep.subr.bf16.mxu0 0
        %5250 = vmatpush1.bf16.msra.mxu0 %v4680
        %5251 = vmatprep.subr.bf16.mxu0 0
        %5252 = vmatpush1.bf16.msra.mxu0 %v4681
        %5253 = vmatprep.subr.bf16.mxu0 0
        %5254 = vmatpush1.bf16.msra.mxu0 %v4682
        %5255 = vmatprep.subr.bf16.mxu0 0
        %5256 = vmatpush1.bf16.msra.mxu0 %v4683
        %5257 = vmatprep.subr.bf16.mxu0 0
        %5258 = vmatpush1.bf16.msra.mxu0 %v4684
        %5259 = vmatprep.subr.bf16.mxu0 0
        %5260 = vmatpush1.bf16.msra.mxu0 %v4685
        %5261 = vmatprep.subr.bf16.mxu0 0
        %5262 = vmatpush1.bf16.msra.mxu0 %v4686
        %5263 = vmatprep.subr.bf16.mxu0 0
        %5264 = vmatpush1.bf16.msra.mxu0 %v4687
        %5265 = vmatprep.subr.bf16.mxu0 0
        %5266 = vmatpush1.bf16.msra.mxu0 %v4688
        %5267 = vmatprep.subr.bf16.mxu0 0
        %5268 = vmatpush1.bf16.msra.mxu0 %v4689
        %5269 = vmatprep.subr.bf16.mxu0 0
        %5270 = vmatpush1.bf16.msra.mxu0 %v4690
        %5271 = vmatprep.subr.bf16.mxu0 0
        %5272 = vmatpush1.bf16.msra.mxu0 %v4691
        %5273 = vmatprep.mubr.bf16.mxu0 %v2450
        %5274 = vmatmul.mubr.bf16.gmra.mrb[0].mxu0 %v2378
        %v5275 = vpop.f32.mrb[0].mxu0
        %v5276 = vadd.f32 %v5227, %v5275
        %v5277 = vpop.f32.mrb[0].mxu0
        %v5278 = vpop.f32.mrb[0].mxu0
        %v5279 = vadd.f32 %v5230, %v5278
        %v5280 = vpop.f32.mrb[0].mxu0
        %5281 = vmatprep.mubr.bf16.mxu0 %v2451
        %5282 = vmatmul.mubr.bf16.gmra.mrb[0].mxu0 %v2379
        %v5283 = vpop.f32.mrb[0].mxu0
        %v5284 = vadd.f32 %v5235, %v5283
        %v5285 = vpop.f32.mrb[0].mxu0
        %v5286 = vpop.f32.mrb[0].mxu0
        %v5287 = vadd.f32 %v5238, %v5286
        %v5288 = vpop.f32.mrb[0].mxu0
        %5289 = vdwg.mxu0
        %5290 = vmatprep.subr.bf16.mxu0 0
        %5291 = vmatpush1.bf16.msra.mxu0 %v4692
        %5292 = vmatprep.subr.bf16.mxu0 0
        %5293 = vmatpush1.bf16.msra.mxu0 %v4693
        %5294 = vmatprep.subr.bf16.mxu0 0
        %5295 = vmatpush1.bf16.msra.mxu0 %v4694
        %5296 = vmatprep.subr.bf16.mxu0 0
        %5297 = vmatpush1.bf16.msra.mxu0 %v4695
        %5298 = vmatprep.subr.bf16.mxu0 0
        %5299 = vmatpush1.bf16.msra.mxu0 %v4696
        %5300 = vmatprep.subr.bf16.mxu0 0
        %5301 = vmatpush1.bf16.msra.mxu0 %v4697
        %5302 = vmatprep.subr.bf16.mxu0 0
        %5303 = vmatpush1.bf16.msra.mxu0 %v4698
        %5304 = vmatprep.subr.bf16.mxu0 0
        %5305 = vmatpush1.bf16.msra.mxu0 %v4699
        %5306 = vmatprep.subr.bf16.mxu0 0
        %5307 = vmatpush1.bf16.msra.mxu0 %v4700
        %5308 = vmatprep.subr.bf16.mxu0 0
        %5309 = vmatpush1.bf16.msra.mxu0 %v4701
        %5310 = vmatprep.subr.bf16.mxu0 0
        %5311 = vmatpush1.bf16.msra.mxu0 %v4702
        %5312 = vmatprep.subr.bf16.mxu0 0
        %5313 = vmatpush1.bf16.msra.mxu0 %v4703
        %5314 = vmatprep.subr.bf16.mxu0 0
        %5315 = vmatpush1.bf16.msra.mxu0 %v4704
        %5316 = vmatprep.subr.bf16.mxu0 0
        %5317 = vmatpush1.bf16.msra.mxu0 %v4705
        %5318 = vmatprep.subr.bf16.mxu0 0
        %5319 = vmatpush1.bf16.msra.mxu0 %v4706
        %5320 = vmatprep.subr.bf16.mxu0 0
        %5321 = vmatpush1.bf16.msra.mxu0 %v4707
        %5322 = vmatprep.mubr.bf16.mxu0 %v2594
        %5323 = vmatmul.mubr.bf16.gmra.mrb[0].mxu0 %v2522
        %v5324 = vpop.f32.mrb[0].mxu0
        %v5325 = vadd.f32 %v5276, %v5324
        %v5326 = vpop.f32.mrb[0].mxu0
        %v5327 = vpop.f32.mrb[0].mxu0
        %v5328 = vadd.f32 %v5279, %v5327
        %v5329 = vpop.f32.mrb[0].mxu0
        %5330 = vmatprep.mubr.bf16.mxu0 %v2595
        %5331 = vmatmul.mubr.bf16.gmra.mrb[0].mxu0 %v2523
        %v5332 = vpop.f32.mrb[0].mxu0
        %v5333 = vadd.f32 %v5284, %v5332
        %v5334 = vpop.f32.mrb[0].mxu0
        %v5335 = vpop.f32.mrb[0].mxu0
        %v5336 = vadd.f32 %v5287, %v5335
        %v5337 = vpop.f32.mrb[0].mxu0
        %5338 = vdwg.mxu0
        %5339 = vmatprep.subr.bf16.mxu0 0
        %5340 = vmatpush1.bf16.msra.mxu0 %v4708
        %5341 = vmatprep.subr.bf16.mxu0 0
        %5342 = vmatpush1.bf16.msra.mxu0 %v4709
        %5343 = vmatprep.subr.bf16.mxu0 0
        %5344 = vmatpush1.bf16.msra.mxu0 %v4710
        %5345 = vmatprep.subr.bf16.mxu0 0
        %5346 = vmatpush1.bf16.msra.mxu0 %v4711
        %5347 = vmatprep.subr.bf16.mxu0 0
        %5348 = vmatpush1.bf16.msra.mxu0 %v4712
        %5349 = vmatprep.subr.bf16.mxu0 0
        %5350 = vmatpush1.bf16.msra.mxu0 %v4713
        %5351 = vmatprep.subr.bf16.mxu0 0
        %5352 = vmatpush1.bf16.msra.mxu0 %v4714
        %5353 = vmatprep.subr.bf16.mxu0 0
        %5354 = vmatpush1.bf16.msra.mxu0 %v4715
        %5355 = vmatprep.subr.bf16.mxu0 0
        %5356 = vmatpush1.bf16.msra.mxu0 %v4716
        %5357 = vmatprep.subr.bf16.mxu0 0
        %5358 = vmatpush1.bf16.msra.mxu0 %v4717
        %5359 = vmatprep.subr.bf16.mxu0 0
        %5360 = vmatpush1.bf16.msra.mxu0 %v4718
        %5361 = vmatprep.subr.bf16.mxu0 0
        %5362 = vmatpush1.bf16.msra.mxu0 %v4719
        %5363 = vmatprep.subr.bf16.mxu0 0
        %5364 = vmatpush1.bf16.msra.mxu0 %v4720
        %5365 = vmatprep.subr.bf16.mxu0 0
        %5366 = vmatpush1.bf16.msra.mxu0 %v4721
        %5367 = vmatprep.subr.bf16.mxu0 0
        %5368 = vmatpush1.bf16.msra.mxu0 %v4722
        %5369 = vmatprep.subr.bf16.mxu0 0
        %5370 = vmatpush1.bf16.msra.mxu0 %v4723
        %5371 = vmatprep.mubr.bf16.mxu0 %v2738
        %5372 = vmatmul.mubr.bf16.gmra.mrb[0].mxu0 %v2666
        %v5373 = vpop.f32.mrb[0].mxu0
        %v5374 = vadd.f32 %v5325, %v5373
        %v5375 = vpop.f32.mrb[0].mxu0
        %v5376 = vpop.f32.mrb[0].mxu0
        %v5377 = vadd.f32 %v5328, %v5376
        %v5378 = vpop.f32.mrb[0].mxu0
        %5379 = vmatprep.mubr.bf16.mxu0 %v2739
        %5380 = vmatmul.mubr.bf16.gmra.mrb[0].mxu0 %v2667
        %v5381 = vpop.f32.mrb[0].mxu0
        %v5382 = vadd.f32 %v5333, %v5381
        %v5383 = vpop.f32.mrb[0].mxu0
        %v5384 = vpop.f32.mrb[0].mxu0
        %v5385 = vadd.f32 %v5336, %v5384
        %v5386 = vpop.f32.mrb[0].mxu0
        %5387 = vdwg.mxu0
        %5388 = vmatprep.subr.bf16.mxu0 0
        %5389 = vmatpush1.bf16.msra.mxu0 %v4724
        %5390 = vmatprep.subr.bf16.mxu0 0
        %5391 = vmatpush1.bf16.msra.mxu0 %v4725
        %5392 = vmatprep.subr.bf16.mxu0 0
        %5393 = vmatpush1.bf16.msra.mxu0 %v4726
        %5394 = vmatprep.subr.bf16.mxu0 0
        %5395 = vmatpush1.bf16.msra.mxu0 %v4727
        %5396 = vmatprep.subr.bf16.mxu0 0
        %5397 = vmatpush1.bf16.msra.mxu0 %v4728
        %5398 = vmatprep.subr.bf16.mxu0 0
        %5399 = vmatpush1.bf16.msra.mxu0 %v4729
        %5400 = vmatprep.subr.bf16.mxu0 0
        %5401 = vmatpush1.bf16.msra.mxu0 %v4730
        %5402 = vmatprep.subr.bf16.mxu0 0
        %5403 = vmatpush1.bf16.msra.mxu0 %v4731
        %5404 = vmatprep.subr.bf16.mxu0 0
        %5405 = vmatpush1.bf16.msra.mxu0 %v4732
        %5406 = vmatprep.subr.bf16.mxu0 0
        %5407 = vmatpush1.bf16.msra.mxu0 %v4733
        %5408 = vmatprep.subr.bf16.mxu0 0
        %5409 = vmatpush1.bf16.msra.mxu0 %v4734
        %5410 = vmatprep.subr.bf16.mxu0 0
        %5411 = vmatpush1.bf16.msra.mxu0 %v4735
        %5412 = vmatprep.subr.bf16.mxu0 0
        %5413 = vmatpush1.bf16.msra.mxu0 %v4736
        %5414 = vmatprep.subr.bf16.mxu0 0
        %5415 = vmatpush1.bf16.msra.mxu0 %v4737
        %5416 = vmatprep.subr.bf16.mxu0 0
        %5417 = vmatpush1.bf16.msra.mxu0 %v4738
        %5418 = vmatprep.subr.bf16.mxu0 0
        %5419 = vmatpush1.bf16.msra.mxu0 %v4739
        %5420 = vmatprep.mubr.bf16.mxu0 %v2882
        %5421 = vmatmul.mubr.bf16.gmra.mrb[0].mxu0 %v2810
        %v5422 = vpop.f32.mrb[0].mxu0
        %v5423 = vadd.f32 %v5374, %v5422
        %v5424 = vpop.f32.mrb[0].mxu0
        %v5425 = vpop.f32.mrb[0].mxu0
        %v5426 = vadd.f32 %v5377, %v5425
        %v5427 = vpop.f32.mrb[0].mxu0
        %5428 = vmatprep.mubr.bf16.mxu0 %v2883
        %5429 = vmatmul.mubr.bf16.gmra.mrb[0].mxu0 %v2811
        %v5430 = vpop.f32.mrb[0].mxu0
        %v5431 = vadd.f32 %v5382, %v5430
        %v5432 = vpop.f32.mrb[0].mxu0
        %v5433 = vpop.f32.mrb[0].mxu0
        %v5434 = vadd.f32 %v5385, %v5433
        %v5435 = vpop.f32.mrb[0].mxu0
        %5436 = vdwg.mxu0
        %5437 = vmatprep.subr.bf16.mxu0 0
        %5438 = vmatpush1.bf16.msra.mxu0 %v4740
        %5439 = vmatprep.subr.bf16.mxu0 0
        %5440 = vmatpush1.bf16.msra.mxu0 %v4741
        %5441 = vmatprep.subr.bf16.mxu0 0
        %5442 = vmatpush1.bf16.msra.mxu0 %v4742
        %5443 = vmatprep.subr.bf16.mxu0 0
        %5444 = vmatpush1.bf16.msra.mxu0 %v4743
        %5445 = vmatprep.subr.bf16.mxu0 0
        %5446 = vmatpush1.bf16.msra.mxu0 %v4744
        %5447 = vmatprep.subr.bf16.mxu0 0
        %5448 = vmatpush1.bf16.msra.mxu0 %v4745
        %5449 = vmatprep.subr.bf16.mxu0 0
        %5450 = vmatpush1.bf16.msra.mxu0 %v4746
        %5451 = vmatprep.subr.bf16.mxu0 0
        %5452 = vmatpush1.bf16.msra.mxu0 %v4747
        %5453 = vmatprep.subr.bf16.mxu0 0
        %5454 = vmatpush1.bf16.msra.mxu0 %v4748
        %5455 = vmatprep.subr.bf16.mxu0 0
        %5456 = vmatpush1.bf16.msra.mxu0 %v4749
        %5457 = vmatprep.subr.bf16.mxu0 0
        %5458 = vmatpush1.bf16.msra.mxu0 %v4750
        %5459 = vmatprep.subr.bf16.mxu0 0
        %5460 = vmatpush1.bf16.msra.mxu0 %v4751
        %5461 = vmatprep.subr.bf16.mxu0 0
        %5462 = vmatpush1.bf16.msra.mxu0 %v4752
        %5463 = vmatprep.subr.bf16.mxu0 0
        %5464 = vmatpush1.bf16.msra.mxu0 %v4753
        %5465 = vmatprep.subr.bf16.mxu0 0
        %5466 = vmatpush1.bf16.msra.mxu0 %v4754
        %5467 = vmatprep.subr.bf16.mxu0 0
        %5468 = vmatpush1.bf16.msra.mxu0 %v4755
        %5469 = vmatprep.mubr.bf16.mxu0 %v3026
        %5470 = vmatmul.mubr.bf16.gmra.mrb[0].mxu0 %v2954
        %v5471 = vpop.f32.mrb[0].mxu0
        %v5472 = vadd.f32 %v5423, %v5471
        %v5473 = vpop.f32.mrb[0].mxu0
        %v5474 = vpop.f32.mrb[0].mxu0
        %v5475 = vadd.f32 %v5426, %v5474
        %v5476 = vpop.f32.mrb[0].mxu0
        %5477 = vmatprep.mubr.bf16.mxu0 %v3027
        %5478 = vmatmul.mubr.bf16.gmra.mrb[0].mxu0 %v2955
        %v5479 = vpop.f32.mrb[0].mxu0
        %v5480 = vadd.f32 %v5431, %v5479
        %v5481 = vpop.f32.mrb[0].mxu0
        %v5482 = vpop.f32.mrb[0].mxu0
        %v5483 = vadd.f32 %v5434, %v5482
        %v5484 = vpop.f32.mrb[0].mxu0
        %5485 = vdwg.mxu0
        %5486 = vmatprep.subr.bf16.mxu0 0
        %5487 = vmatpush1.bf16.msra.mxu0 %v4756
        %5488 = vmatprep.subr.bf16.mxu0 0
        %5489 = vmatpush1.bf16.msra.mxu0 %v4757
        %5490 = vmatprep.subr.bf16.mxu0 0
        %5491 = vmatpush1.bf16.msra.mxu0 %v4758
        %5492 = vmatprep.subr.bf16.mxu0 0
        %5493 = vmatpush1.bf16.msra.mxu0 %v4759
        %5494 = vmatprep.subr.bf16.mxu0 0
        %5495 = vmatpush1.bf16.msra.mxu0 %v4760
        %5496 = vmatprep.subr.bf16.mxu0 0
        %5497 = vmatpush1.bf16.msra.mxu0 %v4761
        %5498 = vmatprep.subr.bf16.mxu0 0
        %5499 = vmatpush1.bf16.msra.mxu0 %v4762
        %5500 = vmatprep.subr.bf16.mxu0 0
        %5501 = vmatpush1.bf16.msra.mxu0 %v4763
        %5502 = vmatprep.subr.bf16.mxu0 0
        %5503 = vmatpush1.bf16.msra.mxu0 %v4764
        %5504 = vmatprep.subr.bf16.mxu0 0
        %5505 = vmatpush1.bf16.msra.mxu0 %v4765
        %5506 = vmatprep.subr.bf16.mxu0 0
        %5507 = vmatpush1.bf16.msra.mxu0 %v4766
        %5508 = vmatprep.subr.bf16.mxu0 0
        %5509 = vmatpush1.bf16.msra.mxu0 %v4767
        %5510 = vmatprep.subr.bf16.mxu0 0
        %5511 = vmatpush1.bf16.msra.mxu0 %v4768
        %5512 = vmatprep.subr.bf16.mxu0 0
        %5513 = vmatpush1.bf16.msra.mxu0 %v4769
        %5514 = vmatprep.subr.bf16.mxu0 0
        %5515 = vmatpush1.bf16.msra.mxu0 %v4770
        %5516 = vmatprep.subr.bf16.mxu0 0
        %5517 = vmatpush1.bf16.msra.mxu0 %v4771
        %5518 = vmatprep.mubr.bf16.mxu0 %v3170
        %5519 = vmatmul.mubr.bf16.gmra.mrb[0].mxu0 %v3098
        %v5520 = vpop.f32.mrb[0].mxu0
        %v5521 = vadd.f32 %v5472, %v5520
        %v5522 = vpop.f32.mrb[0].mxu0
        %v5523 = vpop.f32.mrb[0].mxu0
        %v5524 = vadd.f32 %v5475, %v5523
        %v5525 = vpop.f32.mrb[0].mxu0
        %5526 = vmatprep.mubr.bf16.mxu0 %v3171
        %5527 = vmatmul.mubr.bf16.gmra.mrb[0].mxu0 %v3099
        %v5528 = vpop.f32.mrb[0].mxu0
        %v5529 = vadd.f32 %v5480, %v5528
        %v5530 = vpop.f32.mrb[0].mxu0
        %v5531 = vpop.f32.mrb[0].mxu0
        %v5532 = vadd.f32 %v5483, %v5531
        %v5533 = vpop.f32.mrb[0].mxu0
        %5534 = vdwg.mxu0
        %5535 = vmatprep.subr.bf16.mxu0 0
        %5536 = vmatpush1.bf16.msra.mxu0 %v4772
        %5537 = vmatprep.subr.bf16.mxu0 0
        %5538 = vmatpush1.bf16.msra.mxu0 %v4773
        %5539 = vmatprep.subr.bf16.mxu0 0
        %5540 = vmatpush1.bf16.msra.mxu0 %v4774
        %5541 = vmatprep.subr.bf16.mxu0 0
        %5542 = vmatpush1.bf16.msra.mxu0 %v4775
        %5543 = vmatprep.subr.bf16.mxu0 0
        %5544 = vmatpush1.bf16.msra.mxu0 %v4776
        %5545 = vmatprep.subr.bf16.mxu0 0
        %5546 = vmatpush1.bf16.msra.mxu0 %v4777
        %5547 = vmatprep.subr.bf16.mxu0 0
        %5548 = vmatpush1.bf16.msra.mxu0 %v4778
        %5549 = vmatprep.subr.bf16.mxu0 0
        %5550 = vmatpush1.bf16.msra.mxu0 %v4779
        %5551 = vmatprep.subr.bf16.mxu0 0
        %5552 = vmatpush1.bf16.msra.mxu0 %v4780
        %5553 = vmatprep.subr.bf16.mxu0 0
        %5554 = vmatpush1.bf16.msra.mxu0 %v4781
        %5555 = vmatprep.subr.bf16.mxu0 0
        %5556 = vmatpush1.bf16.msra.mxu0 %v4782
        %5557 = vmatprep.subr.bf16.mxu0 0
        %5558 = vmatpush1.bf16.msra.mxu0 %v4783
        %5559 = vmatprep.subr.bf16.mxu0 0
        %5560 = vmatpush1.bf16.msra.mxu0 %v4784
        %5561 = vmatprep.subr.bf16.mxu0 0
        %5562 = vmatpush1.bf16.msra.mxu0 %v4785
        %5563 = vmatprep.subr.bf16.mxu0 0
        %5564 = vmatpush1.bf16.msra.mxu0 %v4786
        %5565 = vmatprep.subr.bf16.mxu0 0
        %5566 = vmatpush1.bf16.msra.mxu0 %v4787
        %5567 = vmatprep.mubr.bf16.mxu0 %v3314
        %5568 = vmatmul.mubr.bf16.gmra.mrb[0].mxu0 %v3242
        %v5569 = vpop.f32.mrb[0].mxu0
        %v5570 = vadd.f32 %v5521, %v5569
        %v5571 = vpop.f32.mrb[0].mxu0
        %v5572 = vpop.f32.mrb[0].mxu0
        %v5573 = vadd.f32 %v5524, %v5572
        %v5574 = vpop.f32.mrb[0].mxu0
        %5575 = vmatprep.mubr.bf16.mxu0 %v3315
        %5576 = vmatmul.mubr.bf16.gmra.mrb[0].mxu0 %v3243
        %v5577 = vpop.f32.mrb[0].mxu0
        %v5578 = vadd.f32 %v5529, %v5577
        %v5579 = vpop.f32.mrb[0].mxu0
        %v5580 = vpop.f32.mrb[0].mxu0
        %v5581 = vadd.f32 %v5532, %v5580
        %v5582 = vpop.f32.mrb[0].mxu0
        %5583 = vdwg.mxu0
        %5584 = vmatprep.subr.bf16.mxu0 0
        %5585 = vmatpush1.bf16.msra.mxu0 %v4788
        %5586 = vmatprep.subr.bf16.mxu0 0
        %5587 = vmatpush1.bf16.msra.mxu0 %v4789
        %5588 = vmatprep.subr.bf16.mxu0 0
        %5589 = vmatpush1.bf16.msra.mxu0 %v4790
        %5590 = vmatprep.subr.bf16.mxu0 0
        %5591 = vmatpush1.bf16.msra.mxu0 %v4791
        %5592 = vmatprep.subr.bf16.mxu0 0
        %5593 = vmatpush1.bf16.msra.mxu0 %v4792
        %5594 = vmatprep.subr.bf16.mxu0 0
        %5595 = vmatpush1.bf16.msra.mxu0 %v4793
        %5596 = vmatprep.subr.bf16.mxu0 0
        %5597 = vmatpush1.bf16.msra.mxu0 %v4794
        %5598 = vmatprep.subr.bf16.mxu0 0
        %5599 = vmatpush1.bf16.msra.mxu0 %v4795
        %5600 = vmatprep.subr.bf16.mxu0 0
        %5601 = vmatpush1.bf16.msra.mxu0 0
        %5602 = vmatprep.subr.bf16.mxu0 0
        %5603 = vmatpush1.bf16.msra.mxu0 0
        %5604 = vmatprep.subr.bf16.mxu0 0
        %5605 = vmatpush1.bf16.msra.mxu0 0
        %5606 = vmatprep.subr.bf16.mxu0 0
        %5607 = vmatpush1.bf16.msra.mxu0 0
        %5608 = vmatprep.subr.bf16.mxu0 0
        %5609 = vmatpush1.bf16.msra.mxu0 0
        %5610 = vmatprep.subr.bf16.mxu0 0
        %5611 = vmatpush1.bf16.msra.mxu0 0
        %5612 = vmatprep.subr.bf16.mxu0 0
        %5613 = vmatpush1.bf16.msra.mxu0 0
        %5614 = vmatprep.subr.bf16.mxu0 0
        %5615 = vmatpush1.bf16.msra.mxu0 0
        %5616 = vmatprep.mubr.bf16.mxu0 0
        %5617 = vmatmul.mubr.bf16.gmra.mrb[0].mxu0 %v3386
        %v5618 = vpop.f32.mrb[0].mxu0
        %v5619 = vadd.f32 %v5570, %v5618
        %v5620 = vpop.f32.mrb[0].mxu0
        %v5621 = vpop.f32.mrb[0].mxu0
        %v5622 = vadd.f32 %v5573, %v5621
        %v5623 = vpop.f32.mrb[0].mxu0
        %5624 = vmatprep.mubr.bf16.mxu0 0
        %5625 = vmatmul.mubr.bf16.gmra.mrb[0].mxu0 %v3387
        %v5626 = vpop.f32.mrb[0].mxu0
        %v5627 = vadd.f32 %v5578, %v5626
        %v5628 = vpop.f32.mrb[0].mxu0
        %v5629 = vpop.f32.mrb[0].mxu0
        %v5630 = vadd.f32 %v5581, %v5629
        %v5631 = vpop.f32.mrb[0].mxu0
        %5632 = vdwg.mxu0
        %v5633 = vmax.f32 %v5619, 0.0
        %v5634 = vmax.f32 %v5622, 0.0
        %v5635 = vmax.f32 %v5627, 0.0
        %v5636 = vmax.f32 %v5630, 0.0
        %v5637 = vpack.c.bf16 %v5634, %v5633
        %v5638 = vpack.c.bf16 %v5636, %v5635
        %s5639 = scalar_lea.vmem %s1, 192
        %v5640 = vld [vmem:[%s5639] sm:$0xf]
        %v5641 = vld [vmem:[%s5639 + $0x4] sm:$0xf]
        %v5642 = vld [vmem:[%s5639 + $0x8] sm:$0xf]
        %v5643 = vld [vmem:[%s5639 + $0xc] sm:$0xf]
        %v5644 = vld [vmem:[%s5639 + $0x10] sm:$0xf]
        %v5645 = vld [vmem:[%s5639 + $0x14] sm:$0xf]
        %v5646 = vld [vmem:[%s5639 + $0x18] sm:$0xf]
        %v5647 = vld [vmem:[%s5639 + $0x1c] sm:$0xf]
        %v5648 = vld [vmem:[%s5639 + $0x20] sm:$0xf]
        %v5649 = vld [vmem:[%s5639 + $0x24] sm:$0xf]
        %v5650 = vld [vmem:[%s5639 + $0x28] sm:$0xf]
        %v5651 = vld [vmem:[%s5639 + $0x2c] sm:$0xf]
        %v5652 = vld [vmem:[%s5639 + $0x30] sm:$0xf]
        %v5653 = vld [vmem:[%s5639 + $0x34] sm:$0xf]
        %v5654 = vld [vmem:[%s5639 + $0x38] sm:$0xf]
        %v5655 = vld [vmem:[%s5639 + $0x3c] sm:$0xf]
        %s5656 = scalar_lea.vmem %s2, 4
        %v5657 = vld [vmem:[%s5656] sm:$0x1]
        %v5659 = vlaneseq
        %v5660 = vshrl.u32 %v5659, 7
        %v5661 = vsub.s32 0, %v5660
        %v5662 = vrot.slane %v5657, %v5661
        %v5680 = vunpack.c.l.b16 %v5640
        %v5681 = vunpack.c.l.b16 %v5641
        %v5682 = vunpack.c.l.b16 %v5642
        %v5683 = vunpack.c.l.b16 %v5643
        %v5684 = vunpack.c.l.b16 %v5644
        %v5685 = vunpack.c.l.b16 %v5645
        %v5686 = vunpack.c.l.b16 %v5646
        %v5687 = vunpack.c.l.b16 %v5647
        %v5688 = vunpack.c.l.b16 %v5648
        %v5689 = vunpack.c.l.b16 %v5649
        %v5690 = vunpack.c.l.b16 %v5650
        %v5691 = vunpack.c.l.b16 %v5651
        %v5692 = vunpack.c.l.b16 %v5652
        %v5693 = vunpack.c.l.b16 %v5653
        %v5694 = vunpack.c.l.b16 %v5654
        %v5695 = vunpack.c.l.b16 %v5655
        %v5696 = vpack.c.b16 %v5681, %v5680
        %v5697 = vpack.c.b16 %v5683, %v5682
        %v5698 = vpack.c.b16 %v5685, %v5684
        %v5699 = vpack.c.b16 %v5687, %v5686
        %v5700 = vpack.c.b16 %v5689, %v5688
        %v5701 = vpack.c.b16 %v5691, %v5690
        %v5702 = vpack.c.b16 %v5693, %v5692
        %v5703 = vpack.c.b16 %v5695, %v5694
        %5712 = vmatprep.subr.bf16.mxu0 0
        %5713 = vmatpush1.bf16.msra.mxu0 %v5696
        %5714 = vmatprep.subr.bf16.mxu0 0
        %5715 = vmatpush1.bf16.msra.mxu0 %v5697
        %5716 = vmatprep.subr.bf16.mxu0 0
        %5717 = vmatpush1.bf16.msra.mxu0 %v5698
        %5718 = vmatprep.subr.bf16.mxu0 0
        %5719 = vmatpush1.bf16.msra.mxu0 %v5699
        %5720 = vmatprep.subr.bf16.mxu0 0
        %5721 = vmatpush1.bf16.msra.mxu0 %v5700
        %5722 = vmatprep.subr.bf16.mxu0 0
        %5723 = vmatpush1.bf16.msra.mxu0 %v5701
        %5724 = vmatprep.subr.bf16.mxu0 0
        %5725 = vmatpush1.bf16.msra.mxu0 %v5702
        %5726 = vmatprep.subr.bf16.mxu0 0
        %5727 = vmatpush1.bf16.msra.mxu0 %v5703
        %5728 = vmatprep.subr.bf16.mxu0 0
        %5729 = vmatpush1.bf16.msra.mxu0 0
        %5730 = vmatprep.subr.bf16.mxu0 0
        %5731 = vmatpush1.bf16.msra.mxu0 0
        %5732 = vmatprep.subr.bf16.mxu0 0
        %5733 = vmatpush1.bf16.msra.mxu0 0
        %5734 = vmatprep.subr.bf16.mxu0 0
        %5735 = vmatpush1.bf16.msra.mxu0 0
        %5736 = vmatprep.subr.bf16.mxu0 0
        %5737 = vmatpush1.bf16.msra.mxu0 0
        %5738 = vmatprep.subr.bf16.mxu0 0
        %5739 = vmatpush1.bf16.msra.mxu0 0
        %5740 = vmatprep.subr.bf16.mxu0 0
        %5741 = vmatpush1.bf16.msra.mxu0 0
        %5742 = vmatprep.subr.bf16.mxu0 0
        %5743 = vmatpush1.bf16.msra.mxu0 0
        %5744 = vmatprep.mubr.bf16.mxu0 0
        %5745 = vmatmul.mubr.bf16.gmra.mrb[0].mxu0 %v5637
        %v5746 = vpop.f32.mrb[0].mxu0
        %v5747 = vadd.f32 %v5662, %v5746
        %v5748 = vpop.f32.mrb[0].mxu0
        %v5749 = vpop.f32.mrb[0].mxu0
        %v5750 = vadd.f32 %v5662, %v5749
        %v5751 = vpop.f32.mrb[0].mxu0
        %5752 = vmatprep.mubr.bf16.mxu0 0
        %5753 = vmatmul.mubr.bf16.gmra.mrb[0].mxu0 %v5638
        %v5754 = vpop.f32.mrb[0].mxu0
        %v5755 = vadd.f32 %v5662, %v5754
        %v5756 = vpop.f32.mrb[0].mxu0
        %v5757 = vpop.f32.mrb[0].mxu0
        %v5758 = vadd.f32 %v5662, %v5757
        %v5759 = vpop.f32.mrb[0].mxu0
        %5760 = vdwg.mxu0
        %v5761 = vmax.f32 %v5747, 0.0
        %v5762 = vmax.f32 %v5750, 0.0
        %v5763 = vmax.f32 %v5755, 0.0
        %v5764 = vmax.f32 %v5758, 0.0
        %v5765 = vpack.c.bf16 %v5762, %v5761
        %v5766 = vpack.c.bf16 %v5764, %v5763
        %s5767 = scalar_lea.vmem %s1, 256
        %v5768 = vld [vmem:[%s5767] sm:$0xf]
        %v5769 = vld [vmem:[%s5767 + $0x4] sm:$0xf]
        %v5770 = vld [vmem:[%s5767 + $0x8] sm:$0xf]
        %v5771 = vld [vmem:[%s5767 + $0xc] sm:$0xf]
        %v5772 = vld [vmem:[%s5767 + $0x10] sm:$0xf]
        %v5773 = vld [vmem:[%s5767 + $0x14] sm:$0xf]
        %v5774 = vld [vmem:[%s5767 + $0x18] sm:$0xf]
        %v5775 = vld [vmem:[%s5767 + $0x1c] sm:$0xf]
        %v5776 = vld [vmem:[%s5767 + $0x20] sm:$0xf]
        %v5777 = vld [vmem:[%s5767 + $0x24] sm:$0xf]
        %v5778 = vld [vmem:[%s5767 + $0x28] sm:$0xf]
        %v5779 = vld [vmem:[%s5767 + $0x2c] sm:$0xf]
        %v5780 = vld [vmem:[%s5767 + $0x30] sm:$0xf]
        %v5781 = vld [vmem:[%s5767 + $0x34] sm:$0xf]
        %v5782 = vld [vmem:[%s5767 + $0x38] sm:$0xf]
        %v5783 = vld [vmem:[%s5767 + $0x3c] sm:$0xf]
        %s5784 = scalar_lea.vmem %s2, 5
        %v5785 = vld [vmem:[%s5784] sm:$0x1]
        %v5787 = vlaneseq
        %v5788 = vshrl.u32 %v5787, 7
        %v5789 = vsub.s32 0, %v5788
        %v5790 = vrot.slane %v5785, %v5789
        %v5808 = vunpack.c.l.b16 %v5768
        %v5809 = vunpack.c.l.b16 %v5769
        %v5810 = vunpack.c.l.b16 %v5770
        %v5811 = vunpack.c.l.b16 %v5771
        %v5812 = vunpack.c.l.b16 %v5772
        %v5813 = vunpack.c.l.b16 %v5773
        %v5814 = vunpack.c.l.b16 %v5774
        %v5815 = vunpack.c.l.b16 %v5775
        %v5816 = vunpack.c.l.b16 %v5776
        %v5817 = vunpack.c.l.b16 %v5777
        %v5818 = vunpack.c.l.b16 %v5778
        %v5819 = vunpack.c.l.b16 %v5779
        %v5820 = vunpack.c.l.b16 %v5780
        %v5821 = vunpack.c.l.b16 %v5781
        %v5822 = vunpack.c.l.b16 %v5782
        %v5823 = vunpack.c.l.b16 %v5783
        %v5824 = vpack.c.b16 %v5809, %v5808
        %v5825 = vpack.c.b16 %v5811, %v5810
        %v5826 = vpack.c.b16 %v5813, %v5812
        %v5827 = vpack.c.b16 %v5815, %v5814
        %v5828 = vpack.c.b16 %v5817, %v5816
        %v5829 = vpack.c.b16 %v5819, %v5818
        %v5830 = vpack.c.b16 %v5821, %v5820
        %v5831 = vpack.c.b16 %v5823, %v5822
        %5840 = vmatprep.subr.bf16.mxu0 0
        %5841 = vmatpush1.bf16.msra.mxu0 %v5824
        %5842 = vmatprep.subr.bf16.mxu0 0
        %5843 = vmatpush1.bf16.msra.mxu0 %v5825
        %5844 = vmatprep.subr.bf16.mxu0 0
        %5845 = vmatpush1.bf16.msra.mxu0 %v5826
        %5846 = vmatprep.subr.bf16.mxu0 0
        %5847 = vmatpush1.bf16.msra.mxu0 %v5827
        %5848 = vmatprep.subr.bf16.mxu0 0
        %5849 = vmatpush1.bf16.msra.mxu0 %v5828
        %5850 = vmatprep.subr.bf16.mxu0 0
        %5851 = vmatpush1.bf16.msra.mxu0 %v5829
        %5852 = vmatprep.subr.bf16.mxu0 0
        %5853 = vmatpush1.bf16.msra.mxu0 %v5830
        %5854 = vmatprep.subr.bf16.mxu0 0
        %5855 = vmatpush1.bf16.msra.mxu0 %v5831
        %5856 = vmatprep.subr.bf16.mxu0 0
        %5857 = vmatpush1.bf16.msra.mxu0 0
        %5858 = vmatprep.subr.bf16.mxu0 0
        %5859 = vmatpush1.bf16.msra.mxu0 0
        %5860 = vmatprep.subr.bf16.mxu0 0
        %5861 = vmatpush1.bf16.msra.mxu0 0
        %5862 = vmatprep.subr.bf16.mxu0 0
        %5863 = vmatpush1.bf16.msra.mxu0 0
        %5864 = vmatprep.subr.bf16.mxu0 0
        %5865 = vmatpush1.bf16.msra.mxu0 0
        %5866 = vmatprep.subr.bf16.mxu0 0
        %5867 = vmatpush1.bf16.msra.mxu0 0
        %5868 = vmatprep.subr.bf16.mxu0 0
        %5869 = vmatpush1.bf16.msra.mxu0 0
        %5870 = vmatprep.subr.bf16.mxu0 0
        %5871 = vmatpush1.bf16.msra.mxu0 0
        %5872 = vmatprep.mubr.bf16.mxu0 0
        %5873 = vmatmul.mubr.bf16.gmra.mrb[0].mxu0 %v5765
        %v5874 = vpop.f32.mrb[0].mxu0
        %v5875 = vadd.f32 %v5790, %v5874
        %v5876 = vpop.f32.mrb[0].mxu0
        %v5877 = vpop.f32.mrb[0].mxu0
        %v5878 = vadd.f32 %v5790, %v5877
        %v5879 = vpop.f32.mrb[0].mxu0
        %5880 = vmatprep.mubr.bf16.mxu0 0
        %5881 = vmatmul.mubr.bf16.gmra.mrb[0].mxu0 %v5766
        %v5882 = vpop.f32.mrb[0].mxu0
        %v5883 = vadd.f32 %v5790, %v5882
        %v5884 = vpop.f32.mrb[0].mxu0
        %v5885 = vpop.f32.mrb[0].mxu0
        %v5886 = vadd.f32 %v5790, %v5885
        %v5887 = vpop.f32.mrb[0].mxu0
        %5888 = vdwg.mxu0
        %v5889 = vmax.f32 %v5875, 0.0
        %v5890 = vmax.f32 %v5878, 0.0
        %v5891 = vmax.f32 %v5883, 0.0
        %v5892 = vmax.f32 %v5886, 0.0
        %v5893 = vpack.c.bf16 %v5890, %v5889
        %v5894 = vpack.c.bf16 %v5892, %v5891
        %v5895 = vld [vmem:[%s7] sm:$0xf]
        %v5896 = vld [vmem:[%s7 + $0x4] sm:$0x1]
        %v5899 = vunpack.c.l.b16 %v5895
        %v5900 = vunpack.c.l.b16 %v5896
        %v5901 = vpack.c.b16 %v5900, %v5899
        %v5903 = vsel %vm1595, %v5901, 0
        %v5906 = vand.u32 %v5894, %v1605
        %5908 = vmatprep.subr.bf16.mxu0 0
        %5909 = vmatpush1.bf16.msra.mxu0 %v5893
        %5910 = vmatprep.subr.bf16.mxu0 0
        %5911 = vmatpush1.bf16.msra.mxu0 %v5906
        %5912 = vmatprep.subr.bf16.mxu0 0
        %5913 = vmatpush1.bf16.msra.mxu0 0
        %5914 = vmatprep.subr.bf16.mxu0 0
        %5915 = vmatpush1.bf16.msra.mxu0 0
        %5916 = vmatprep.subr.bf16.mxu0 0
        %5917 = vmatpush1.bf16.msra.mxu0 0
        %5918 = vmatprep.subr.bf16.mxu0 0
        %5919 = vmatpush1.bf16.msra.mxu0 0
        %5920 = vmatprep.subr.bf16.mxu0 0
        %5921 = vmatpush1.bf16.msra.mxu0 0
        %5922 = vmatprep.subr.bf16.mxu0 0
        %5923 = vmatpush1.bf16.msra.mxu0 0
        %5924 = vmatprep.subr.bf16.mxu0 0
        %5925 = vmatpush1.bf16.msra.mxu0 0
        %5926 = vmatprep.subr.bf16.mxu0 0
        %5927 = vmatpush1.bf16.msra.mxu0 0
        %5928 = vmatprep.subr.bf16.mxu0 0
        %5929 = vmatpush1.bf16.msra.mxu0 0
        %5930 = vmatprep.subr.bf16.mxu0 0
        %5931 = vmatpush1.bf16.msra.mxu0 0
        %5932 = vmatprep.subr.bf16.mxu0 0
        %5933 = vmatpush1.bf16.msra.mxu0 0
        %5934 = vmatprep.subr.bf16.mxu0 0
        %5935 = vmatpush1.bf16.msra.mxu0 0
        %5936 = vmatprep.subr.bf16.mxu0 0
        %5937 = vmatpush1.bf16.msra.mxu0 0
        %5938 = vmatprep.subr.bf16.mxu0 0
        %5939 = vmatpush1.bf16.msra.mxu0 0
        %5940 = vmatprep.mubr.bf16.mxu0 0
        %5941 = vmatmul.mubr.bf16.gmra.mrb[0].mxu0 %v5903
        %v5942 = vpop.f32.mrb[0].mxu0
        %v5943 = vadd.f32 0.0, %v5942
        %v5944 = vpop.f32.mrb[0].mxu0
        %v5945 = vpop.f32.mrb[0].mxu0
        %v5946 = vadd.f32 0.0, %v5945
        %v5947 = vpop.f32.mrb[0].mxu0
        %5948 = vdwg.mxu0
        %s5949 = scalar_lea.vmem %s7, 8
        %v5950 = vld [vmem:[%s5949] sm:$0xf]
        %v5951 = vld [vmem:[%s5949 + $0x4] sm:$0x1]
        %v5954 = vunpack.c.l.b16 %v5950
        %v5955 = vunpack.c.l.b16 %v5951
        %v5956 = vpack.c.b16 %v5955, %v5954
        %v5958 = vsel %vm1595, %v5956, 0
        %5960 = vmatprep.subr.bf16.mxu0 0
        %5961 = vmatpush1.bf16.msra.mxu0 %v5893
        %5962 = vmatprep.subr.bf16.mxu0 0
        %5963 = vmatpush1.bf16.msra.mxu0 %v5906
        %5964 = vmatprep.subr.bf16.mxu0 0
        %5965 = vmatpush1.bf16.msra.mxu0 0
        %5966 = vmatprep.subr.bf16.mxu0 0
        %5967 = vmatpush1.bf16.msra.mxu0 0
        %5968 = vmatprep.subr.bf16.mxu0 0
        %5969 = vmatpush1.bf16.msra.mxu0 0
        %5970 = vmatprep.subr.bf16.mxu0 0
        %5971 = vmatpush1.bf16.msra.mxu0 0
        %5972 = vmatprep.subr.bf16.mxu0 0
        %5973 = vmatpush1.bf16.msra.mxu0 0
        %5974 = vmatprep.subr.bf16.mxu0 0
        %5975 = vmatpush1.bf16.msra.mxu0 0
        %5976 = vmatprep.subr.bf16.mxu0 0
        %5977 = vmatpush1.bf16.msra.mxu0 0
        %5978 = vmatprep.subr.bf16.mxu0 0
        %5979 = vmatpush1.bf16.msra.mxu0 0
        %5980 = vmatprep.subr.bf16.mxu0 0
        %5981 = vmatpush1.bf16.msra.mxu0 0
        %5982 = vmatprep.subr.bf16.mxu0 0
        %5983 = vmatpush1.bf16.msra.mxu0 0
        %5984 = vmatprep.subr.bf16.mxu0 0
        %5985 = vmatpush1.bf16.msra.mxu0 0
        %5986 = vmatprep.subr.bf16.mxu0 0
        %5987 = vmatpush1.bf16.msra.mxu0 0
        %5988 = vmatprep.subr.bf16.mxu0 0
        %5989 = vmatpush1.bf16.msra.mxu0 0
        %5990 = vmatprep.subr.bf16.mxu0 0
        %5991 = vmatpush1.bf16.msra.mxu0 0
        %5992 = vmatprep.mubr.bf16.mxu0 0
        %5993 = vmatmul.mubr.bf16.gmra.mrb[0].mxu0 %v5958
        %v5994 = vpop.f32.mrb[0].mxu0
        %v5995 = vadd.f32 0.0, %v5994
        %v5996 = vpop.f32.mrb[0].mxu0
        %v5997 = vpop.f32.mrb[0].mxu0
        %v5998 = vadd.f32 0.0, %v5997
        %v5999 = vpop.f32.mrb[0].mxu0
        %6000 = vdwg.mxu0
        %s6001 = scalar_lea.vmem %s7, 16
        %v6002 = vld [vmem:[%s6001] sm:$0xf]
        %v6003 = vld [vmem:[%s6001 + $0x4] sm:$0x1]
        %v6006 = vunpack.c.l.b16 %v6002
        %v6007 = vunpack.c.l.b16 %v6003
        %v6008 = vpack.c.b16 %v6007, %v6006
        %v6010 = vsel %vm1595, %v6008, 0
        %6012 = vmatprep.subr.bf16.mxu0 0
        %6013 = vmatpush1.bf16.msra.mxu0 %v5893
        %6014 = vmatprep.subr.bf16.mxu0 0
        %6015 = vmatpush1.bf16.msra.mxu0 %v5906
        %6016 = vmatprep.subr.bf16.mxu0 0
        %6017 = vmatpush1.bf16.msra.mxu0 0
        %6018 = vmatprep.subr.bf16.mxu0 0
        %6019 = vmatpush1.bf16.msra.mxu0 0
        %6020 = vmatprep.subr.bf16.mxu0 0
        %6021 = vmatpush1.bf16.msra.mxu0 0
        %6022 = vmatprep.subr.bf16.mxu0 0
        %6023 = vmatpush1.bf16.msra.mxu0 0
        %6024 = vmatprep.subr.bf16.mxu0 0
        %6025 = vmatpush1.bf16.msra.mxu0 0
        %6026 = vmatprep.subr.bf16.mxu0 0
        %6027 = vmatpush1.bf16.msra.mxu0 0
        %6028 = vmatprep.subr.bf16.mxu0 0
        %6029 = vmatpush1.bf16.msra.mxu0 0
        %6030 = vmatprep.subr.bf16.mxu0 0
        %6031 = vmatpush1.bf16.msra.mxu0 0
        %6032 = vmatprep.subr.bf16.mxu0 0
        %6033 = vmatpush1.bf16.msra.mxu0 0
        %6034 = vmatprep.subr.bf16.mxu0 0
        %6035 = vmatpush1.bf16.msra.mxu0 0
        %6036 = vmatprep.subr.bf16.mxu0 0
        %6037 = vmatpush1.bf16.msra.mxu0 0
        %6038 = vmatprep.subr.bf16.mxu0 0
        %6039 = vmatpush1.bf16.msra.mxu0 0
        %6040 = vmatprep.subr.bf16.mxu0 0
        %6041 = vmatpush1.bf16.msra.mxu0 0
        %6042 = vmatprep.subr.bf16.mxu0 0
        %6043 = vmatpush1.bf16.msra.mxu0 0
        %6044 = vmatprep.mubr.bf16.mxu0 0
        %6045 = vmatmul.mubr.bf16.gmra.mrb[0].mxu0 %v6010
        %v6046 = vpop.f32.mrb[0].mxu0
        %v6047 = vadd.f32 0.0, %v6046
        %v6048 = vpop.f32.mrb[0].mxu0
        %v6049 = vpop.f32.mrb[0].mxu0
        %v6050 = vadd.f32 0.0, %v6049
        %v6051 = vpop.f32.mrb[0].mxu0
        %6052 = vdwg.mxu0
        %s6053 = scalar_lea.vmem %s7, 24
        %v6054 = vld [vmem:[%s6053] sm:$0xf]
        %v6055 = vld [vmem:[%s6053 + $0x4] sm:$0x1]
        %v6058 = vunpack.c.l.b16 %v6054
        %v6059 = vunpack.c.l.b16 %v6055
        %v6060 = vpack.c.b16 %v6059, %v6058
        %v6062 = vsel %vm1595, %v6060, 0
        %6064 = vmatprep.subr.bf16.mxu0 0
        %6065 = vmatpush1.bf16.msra.mxu0 %v5893
        %6066 = vmatprep.subr.bf16.mxu0 0
        %6067 = vmatpush1.bf16.msra.mxu0 %v5906
        %6068 = vmatprep.subr.bf16.mxu0 0
        %6069 = vmatpush1.bf16.msra.mxu0 0
        %6070 = vmatprep.subr.bf16.mxu0 0
        %6071 = vmatpush1.bf16.msra.mxu0 0
        %6072 = vmatprep.subr.bf16.mxu0 0
        %6073 = vmatpush1.bf16.msra.mxu0 0
        %6074 = vmatprep.subr.bf16.mxu0 0
        %6075 = vmatpush1.bf16.msra.mxu0 0
        %6076 = vmatprep.subr.bf16.mxu0 0
        %6077 = vmatpush1.bf16.msra.mxu0 0
        %6078 = vmatprep.subr.bf16.mxu0 0
        %6079 = vmatpush1.bf16.msra.mxu0 0
        %6080 = vmatprep.subr.bf16.mxu0 0
        %6081 = vmatpush1.bf16.msra.mxu0 0
        %6082 = vmatprep.subr.bf16.mxu0 0
        %6083 = vmatpush1.bf16.msra.mxu0 0
        %6084 = vmatprep.subr.bf16.mxu0 0
        %6085 = vmatpush1.bf16.msra.mxu0 0
        %6086 = vmatprep.subr.bf16.mxu0 0
        %6087 = vmatpush1.bf16.msra.mxu0 0
        %6088 = vmatprep.subr.bf16.mxu0 0
        %6089 = vmatpush1.bf16.msra.mxu0 0
        %6090 = vmatprep.subr.bf16.mxu0 0
        %6091 = vmatpush1.bf16.msra.mxu0 0
        %6092 = vmatprep.subr.bf16.mxu0 0
        %6093 = vmatpush1.bf16.msra.mxu0 0
        %6094 = vmatprep.subr.bf16.mxu0 0
        %6095 = vmatpush1.bf16.msra.mxu0 0
        %6096 = vmatprep.mubr.bf16.mxu0 0
        %6097 = vmatmul.mubr.bf16.gmra.mrb[0].mxu0 %v6062
        %v6098 = vpop.f32.mrb[0].mxu0
        %v6099 = vadd.f32 0.0, %v6098
        %v6100 = vpop.f32.mrb[0].mxu0
        %v6101 = vpop.f32.mrb[0].mxu0
        %v6102 = vadd.f32 0.0, %v6101
        %v6103 = vpop.f32.mrb[0].mxu0
        %6104 = vdwg.mxu0
        %s6105 = scalar_lea.vmem %s7, 32
        %v6106 = vld [vmem:[%s6105] sm:$0xf]
        %v6107 = vld [vmem:[%s6105 + $0x4] sm:$0x1]
        %v6110 = vunpack.c.l.b16 %v6106
        %v6111 = vunpack.c.l.b16 %v6107
        %v6112 = vpack.c.b16 %v6111, %v6110
        %v6114 = vsel %vm1595, %v6112, 0
        %6116 = vmatprep.subr.bf16.mxu0 0
        %6117 = vmatpush1.bf16.msra.mxu0 %v5893
        %6118 = vmatprep.subr.bf16.mxu0 0
        %6119 = vmatpush1.bf16.msra.mxu0 %v5906
        %6120 = vmatprep.subr.bf16.mxu0 0
        %6121 = vmatpush1.bf16.msra.mxu0 0
        %6122 = vmatprep.subr.bf16.mxu0 0
        %6123 = vmatpush1.bf16.msra.mxu0 0
        %6124 = vmatprep.subr.bf16.mxu0 0
        %6125 = vmatpush1.bf16.msra.mxu0 0
        %6126 = vmatprep.subr.bf16.mxu0 0
        %6127 = vmatpush1.bf16.msra.mxu0 0
        %6128 = vmatprep.subr.bf16.mxu0 0
        %6129 = vmatpush1.bf16.msra.mxu0 0
        %6130 = vmatprep.subr.bf16.mxu0 0
        %6131 = vmatpush1.bf16.msra.mxu0 0
        %6132 = vmatprep.subr.bf16.mxu0 0
        %6133 = vmatpush1.bf16.msra.mxu0 0
        %6134 = vmatprep.subr.bf16.mxu0 0
        %6135 = vmatpush1.bf16.msra.mxu0 0
        %6136 = vmatprep.subr.bf16.mxu0 0
        %6137 = vmatpush1.bf16.msra.mxu0 0
        %6138 = vmatprep.subr.bf16.mxu0 0
        %6139 = vmatpush1.bf16.msra.mxu0 0
        %6140 = vmatprep.subr.bf16.mxu0 0
        %6141 = vmatpush1.bf16.msra.mxu0 0
        %6142 = vmatprep.subr.bf16.mxu0 0
        %6143 = vmatpush1.bf16.msra.mxu0 0
        %6144 = vmatprep.subr.bf16.mxu0 0
        %6145 = vmatpush1.bf16.msra.mxu0 0
        %6146 = vmatprep.subr.bf16.mxu0 0
        %6147 = vmatpush1.bf16.msra.mxu0 0
        %6148 = vmatprep.mubr.bf16.mxu0 0
        %6149 = vmatmul.mubr.bf16.gmra.mrb[0].mxu0 %v6114
        %v6150 = vpop.f32.mrb[0].mxu0
        %v6151 = vadd.f32 0.0, %v6150
        %v6152 = vpop.f32.mrb[0].mxu0
        %v6153 = vpop.f32.mrb[0].mxu0
        %v6154 = vadd.f32 0.0, %v6153
        %v6155 = vpop.f32.mrb[0].mxu0
        %6156 = vdwg.mxu0
        %s6157 = scalar_lea.vmem %s7, 40
        %v6158 = vld [vmem:[%s6157] sm:$0xf]
        %v6159 = vld [vmem:[%s6157 + $0x4] sm:$0x1]
        %v6162 = vunpack.c.l.b16 %v6158
        %v6163 = vunpack.c.l.b16 %v6159
        %v6164 = vpack.c.b16 %v6163, %v6162
        %v6166 = vsel %vm1595, %v6164, 0
        %6168 = vmatprep.subr.bf16.mxu0 0
        %6169 = vmatpush1.bf16.msra.mxu0 %v5893
        %6170 = vmatprep.subr.bf16.mxu0 0
        %6171 = vmatpush1.bf16.msra.mxu0 %v5906
        %6172 = vmatprep.subr.bf16.mxu0 0
        %6173 = vmatpush1.bf16.msra.mxu0 0
        %6174 = vmatprep.subr.bf16.mxu0 0
        %6175 = vmatpush1.bf16.msra.mxu0 0
        %6176 = vmatprep.subr.bf16.mxu0 0
        %6177 = vmatpush1.bf16.msra.mxu0 0
        %6178 = vmatprep.subr.bf16.mxu0 0
        %6179 = vmatpush1.bf16.msra.mxu0 0
        %6180 = vmatprep.subr.bf16.mxu0 0
        %6181 = vmatpush1.bf16.msra.mxu0 0
        %6182 = vmatprep.subr.bf16.mxu0 0
        %6183 = vmatpush1.bf16.msra.mxu0 0
        %6184 = vmatprep.subr.bf16.mxu0 0
        %6185 = vmatpush1.bf16.msra.mxu0 0
        %6186 = vmatprep.subr.bf16.mxu0 0
        %6187 = vmatpush1.bf16.msra.mxu0 0
        %6188 = vmatprep.subr.bf16.mxu0 0
        %6189 = vmatpush1.bf16.msra.mxu0 0
        %6190 = vmatprep.subr.bf16.mxu0 0
        %6191 = vmatpush1.bf16.msra.mxu0 0
        %6192 = vmatprep.subr.bf16.mxu0 0
        %6193 = vmatpush1.bf16.msra.mxu0 0
        %6194 = vmatprep.subr.bf16.mxu0 0
        %6195 = vmatpush1.bf16.msra.mxu0 0
        %6196 = vmatprep.subr.bf16.mxu0 0
        %6197 = vmatpush1.bf16.msra.mxu0 0
        %6198 = vmatprep.subr.bf16.mxu0 0
        %6199 = vmatpush1.bf16.msra.mxu0 0
        %6200 = vmatprep.mubr.bf16.mxu0 0
        %6201 = vmatmul.mubr.bf16.gmra.mrb[0].mxu0 %v6166
        %v6202 = vpop.f32.mrb[0].mxu0
        %v6203 = vadd.f32 0.0, %v6202
        %v6204 = vpop.f32.mrb[0].mxu0
        %v6205 = vpop.f32.mrb[0].mxu0
        %v6206 = vadd.f32 0.0, %v6205
        %v6207 = vpop.f32.mrb[0].mxu0
        %6208 = vdwg.mxu0
        %s6209 = scalar_lea.vmem %s7, 48
        %v6210 = vld [vmem:[%s6209] sm:$0xf]
        %v6211 = vld [vmem:[%s6209 + $0x4] sm:$0x1]
        %v6214 = vunpack.c.l.b16 %v6210
        %v6215 = vunpack.c.l.b16 %v6211
        %v6216 = vpack.c.b16 %v6215, %v6214
        %v6218 = vsel %vm1595, %v6216, 0
        %6220 = vmatprep.subr.bf16.mxu0 0
        %6221 = vmatpush1.bf16.msra.mxu0 %v5893
        %6222 = vmatprep.subr.bf16.mxu0 0
        %6223 = vmatpush1.bf16.msra.mxu0 %v5906
        %6224 = vmatprep.subr.bf16.mxu0 0
        %6225 = vmatpush1.bf16.msra.mxu0 0
        %6226 = vmatprep.subr.bf16.mxu0 0
        %6227 = vmatpush1.bf16.msra.mxu0 0
        %6228 = vmatprep.subr.bf16.mxu0 0
        %6229 = vmatpush1.bf16.msra.mxu0 0
        %6230 = vmatprep.subr.bf16.mxu0 0
        %6231 = vmatpush1.bf16.msra.mxu0 0
        %6232 = vmatprep.subr.bf16.mxu0 0
        %6233 = vmatpush1.bf16.msra.mxu0 0
        %6234 = vmatprep.subr.bf16.mxu0 0
        %6235 = vmatpush1.bf16.msra.mxu0 0
        %6236 = vmatprep.subr.bf16.mxu0 0
        %6237 = vmatpush1.bf16.msra.mxu0 0
        %6238 = vmatprep.subr.bf16.mxu0 0
        %6239 = vmatpush1.bf16.msra.mxu0 0
        %6240 = vmatprep.subr.bf16.mxu0 0
        %6241 = vmatpush1.bf16.msra.mxu0 0
        %6242 = vmatprep.subr.bf16.mxu0 0
        %6243 = vmatpush1.bf16.msra.mxu0 0
        %6244 = vmatprep.subr.bf16.mxu0 0
        %6245 = vmatpush1.bf16.msra.mxu0 0
        %6246 = vmatprep.subr.bf16.mxu0 0
        %6247 = vmatpush1.bf16.msra.mxu0 0
        %6248 = vmatprep.subr.bf16.mxu0 0
        %6249 = vmatpush1.bf16.msra.mxu0 0
        %6250 = vmatprep.subr.bf16.mxu0 0
        %6251 = vmatpush1.bf16.msra.mxu0 0
        %6252 = vmatprep.mubr.bf16.mxu0 0
        %6253 = vmatmul.mubr.bf16.gmra.mrb[0].mxu0 %v6218
        %v6254 = vpop.f32.mrb[0].mxu0
        %v6255 = vadd.f32 0.0, %v6254
        %v6256 = vpop.f32.mrb[0].mxu0
        %v6257 = vpop.f32.mrb[0].mxu0
        %v6258 = vadd.f32 0.0, %v6257
        %v6259 = vpop.f32.mrb[0].mxu0
        %6260 = vdwg.mxu0
        %s6261 = scalar_lea.vmem %s7, 56
        %v6262 = vld [vmem:[%s6261] sm:$0xf]
        %v6263 = vld [vmem:[%s6261 + $0x4] sm:$0x1]
        %v6266 = vunpack.c.l.b16 %v6262
        %v6267 = vunpack.c.l.b16 %v6263
        %v6268 = vpack.c.b16 %v6267, %v6266
        %v6270 = vsel %vm1595, %v6268, 0
        %6272 = vmatprep.subr.bf16.mxu0 0
        %6273 = vmatpush1.bf16.msra.mxu0 %v5893
        %6274 = vmatprep.subr.bf16.mxu0 0
        %6275 = vmatpush1.bf16.msra.mxu0 %v5906
        %6276 = vmatprep.subr.bf16.mxu0 0
        %6277 = vmatpush1.bf16.msra.mxu0 0
        %6278 = vmatprep.subr.bf16.mxu0 0
        %6279 = vmatpush1.bf16.msra.mxu0 0
        %6280 = vmatprep.subr.bf16.mxu0 0
        %6281 = vmatpush1.bf16.msra.mxu0 0
        %6282 = vmatprep.subr.bf16.mxu0 0
        %6283 = vmatpush1.bf16.msra.mxu0 0
        %6284 = vmatprep.subr.bf16.mxu0 0
        %6285 = vmatpush1.bf16.msra.mxu0 0
        %6286 = vmatprep.subr.bf16.mxu0 0
        %6287 = vmatpush1.bf16.msra.mxu0 0
        %6288 = vmatprep.subr.bf16.mxu0 0
        %6289 = vmatpush1.bf16.msra.mxu0 0
        %6290 = vmatprep.subr.bf16.mxu0 0
        %6291 = vmatpush1.bf16.msra.mxu0 0
        %6292 = vmatprep.subr.bf16.mxu0 0
        %6293 = vmatpush1.bf16.msra.mxu0 0
        %6294 = vmatprep.subr.bf16.mxu0 0
        %6295 = vmatpush1.bf16.msra.mxu0 0
        %6296 = vmatprep.subr.bf16.mxu0 0
        %6297 = vmatpush1.bf16.msra.mxu0 0
        %6298 = vmatprep.subr.bf16.mxu0 0
        %6299 = vmatpush1.bf16.msra.mxu0 0
        %6300 = vmatprep.subr.bf16.mxu0 0
        %6301 = vmatpush1.bf16.msra.mxu0 0
        %6302 = vmatprep.subr.bf16.mxu0 0
        %6303 = vmatpush1.bf16.msra.mxu0 0
        %6304 = vmatprep.mubr.bf16.mxu0 0
        %6305 = vmatmul.mubr.bf16.gmra.mrb[0].mxu0 %v6270
        %v6306 = vpop.f32.mrb[0].mxu0
        %v6307 = vadd.f32 0.0, %v6306
        %v6308 = vpop.f32.mrb[0].mxu0
        %v6309 = vpop.f32.mrb[0].mxu0
        %v6310 = vadd.f32 0.0, %v6309
        %v6311 = vpop.f32.mrb[0].mxu0
        %6312 = vdwg.mxu0
        %s6313 = scalar_lea.vmem %s7, 64
        %v6314 = vld [vmem:[%s6313] sm:$0xf]
        %v6315 = vld [vmem:[%s6313 + $0x4] sm:$0x1]
        %v6318 = vunpack.c.l.b16 %v6314
        %v6319 = vunpack.c.l.b16 %v6315
        %v6320 = vpack.c.b16 %v6319, %v6318
        %v6322 = vsel %vm1595, %v6320, 0
        %6324 = vmatprep.subr.bf16.mxu0 0
        %6325 = vmatpush1.bf16.msra.mxu0 %v5893
        %6326 = vmatprep.subr.bf16.mxu0 0
        %6327 = vmatpush1.bf16.msra.mxu0 %v5906
        %6328 = vmatprep.subr.bf16.mxu0 0
        %6329 = vmatpush1.bf16.msra.mxu0 0
        %6330 = vmatprep.subr.bf16.mxu0 0
        %6331 = vmatpush1.bf16.msra.mxu0 0
        %6332 = vmatprep.subr.bf16.mxu0 0
        %6333 = vmatpush1.bf16.msra.mxu0 0
        %6334 = vmatprep.subr.bf16.mxu0 0
        %6335 = vmatpush1.bf16.msra.mxu0 0
        %6336 = vmatprep.subr.bf16.mxu0 0
        %6337 = vmatpush1.bf16.msra.mxu0 0
        %6338 = vmatprep.subr.bf16.mxu0 0
        %6339 = vmatpush1.bf16.msra.mxu0 0
        %6340 = vmatprep.subr.bf16.mxu0 0
        %6341 = vmatpush1.bf16.msra.mxu0 0
        %6342 = vmatprep.subr.bf16.mxu0 0
        %6343 = vmatpush1.bf16.msra.mxu0 0
        %6344 = vmatprep.subr.bf16.mxu0 0
        %6345 = vmatpush1.bf16.msra.mxu0 0
        %6346 = vmatprep.subr.bf16.mxu0 0
        %6347 = vmatpush1.bf16.msra.mxu0 0
        %6348 = vmatprep.subr.bf16.mxu0 0
        %6349 = vmatpush1.bf16.msra.mxu0 0
        %6350 = vmatprep.subr.bf16.mxu0 0
        %6351 = vmatpush1.bf16.msra.mxu0 0
        %6352 = vmatprep.subr.bf16.mxu0 0
        %6353 = vmatpush1.bf16.msra.mxu0 0
        %6354 = vmatprep.subr.bf16.mxu0 0
        %6355 = vmatpush1.bf16.msra.mxu0 0
        %6356 = vmatprep.mubr.bf16.mxu0 0
        %6357 = vmatmul.mubr.bf16.gmra.mrb[0].mxu0 %v6322
        %v6358 = vpop.f32.mrb[0].mxu0
        %v6359 = vadd.f32 0.0, %v6358
        %v6360 = vpop.f32.mrb[0].mxu0
        %v6361 = vpop.f32.mrb[0].mxu0
        %v6362 = vadd.f32 0.0, %v6361
        %v6363 = vpop.f32.mrb[0].mxu0
        %6364 = vdwg.mxu0
        %v6365 = vmax.f32 %v5943, %v5995
        %v6366 = vmax.f32 %v5946, %v5998
        %v6367 = vmax.f32 %v6047, %v6099
        %v6368 = vmax.f32 %v6050, %v6102
        %v6369 = vmax.f32 %v6151, %v6203
        %v6370 = vmax.f32 %v6154, %v6206
        %v6371 = vmax.f32 %v6255, %v6307
        %v6372 = vmax.f32 %v6258, %v6310
        %v6373 = vmax.f32 %v6365, %v6367
        %v6374 = vmax.f32 %v6366, %v6368
        %v6375 = vmax.f32 %v6369, %v6371
        %v6376 = vmax.f32 %v6370, %v6372
        %v6377 = vmax.f32 %v6373, %v6375
        %v6378 = vmax.f32 %v6374, %v6376
        %v6379 = vmax.f32 %v6377, %v6359
        %v6380 = vmax.f32 %v6378, %v6362
        %v6381 = vpack.c.bf16 %v6380, %v6379
        %v6382 = vld [vmem:[%s8] sm:$0xf]
        %v6383 = vld [vmem:[%s8 + $0x4] sm:$0x1]
        %v6386 = vunpack.c.l.b16 %v6382
        %v6387 = vunpack.c.l.b16 %v6383
        %v6388 = vpack.c.b16 %v6387, %v6386
        %vm6389 = vcmask 72704
        %v6391 = vsel %vm6389, %v6388, 0
        %v6394 = vand.u32 %v6381, %v1605
        %6396 = vmatprep.subr.bf16.mxu0 0
        %6397 = vmatpush1.bf16.msra.mxu0 %v6394
        %6398 = vmatprep.subr.bf16.mxu0 0
        %6399 = vmatpush1.bf16.msra.mxu0 0
        %6400 = vmatprep.subr.bf16.mxu0 0
        %6401 = vmatpush1.bf16.msra.mxu0 0
        %6402 = vmatprep.subr.bf16.mxu0 0
        %6403 = vmatpush1.bf16.msra.mxu0 0
        %6404 = vmatprep.subr.bf16.mxu0 0
        %6405 = vmatpush1.bf16.msra.mxu0 0
        %6406 = vmatprep.subr.bf16.mxu0 0
        %6407 = vmatpush1.bf16.msra.mxu0 0
        %6408 = vmatprep.subr.bf16.mxu0 0
        %6409 = vmatpush1.bf16.msra.mxu0 0
        %6410 = vmatprep.subr.bf16.mxu0 0
        %6411 = vmatpush1.bf16.msra.mxu0 0
        %6412 = vmatprep.subr.bf16.mxu0 0
        %6413 = vmatpush1.bf16.msra.mxu0 0
        %6414 = vmatprep.subr.bf16.mxu0 0
        %6415 = vmatpush1.bf16.msra.mxu0 0
        %6416 = vmatprep.subr.bf16.mxu0 0
        %6417 = vmatpush1.bf16.msra.mxu0 0
        %6418 = vmatprep.subr.bf16.mxu0 0
        %6419 = vmatpush1.bf16.msra.mxu0 0
        %6420 = vmatprep.subr.bf16.mxu0 0
        %6421 = vmatpush1.bf16.msra.mxu0 0
        %6422 = vmatprep.subr.bf16.mxu0 0
        %6423 = vmatpush1.bf16.msra.mxu0 0
        %6424 = vmatprep.subr.bf16.mxu0 0
        %6425 = vmatpush1.bf16.msra.mxu0 0
        %6426 = vmatprep.subr.bf16.mxu0 0
        %6427 = vmatpush1.bf16.msra.mxu0 0
        %6428 = vmatprep.mubr.bf16.mxu0 0
        %6429 = vmatmul.mubr.bf16.gmra.mrb[0].mxu0 %v6391
        %v6430 = vpop.f32.mrb[0].mxu0
        %v6431 = vadd.f32 0.0, %v6430
        %v6432 = vpop.f32.mrb[0].mxu0
        %v6433 = vpop.f32.mrb[0].mxu0
        %v6434 = vadd.f32 0.0, %v6433
        %v6435 = vpop.f32.mrb[0].mxu0
        %6436 = vdwg.mxu0
        %v6437 = vpack.c.bf16 %v6434, %v6431
        %s6438 = scalar_lea.vmem %s8, 8
        %v6439 = vld [vmem:[%s6438] sm:$0xf]
        %v6440 = vld [vmem:[%s6438 + $0x4] sm:$0x1]
        %v6443 = vunpack.c.l.b16 %v6439
        %v6444 = vunpack.c.l.b16 %v6440
        %v6445 = vpack.c.b16 %v6444, %v6443
        %v6447 = vsel %vm6389, %v6445, 0
        %6449 = vmatprep.subr.bf16.mxu0 0
        %6450 = vmatpush1.bf16.msra.mxu0 %v6394
        %6451 = vmatprep.subr.bf16.mxu0 0
        %6452 = vmatpush1.bf16.msra.mxu0 0
        %6453 = vmatprep.subr.bf16.mxu0 0
        %6454 = vmatpush1.bf16.msra.mxu0 0
        %6455 = vmatprep.subr.bf16.mxu0 0
        %6456 = vmatpush1.bf16.msra.mxu0 0
        %6457 = vmatprep.subr.bf16.mxu0 0
        %6458 = vmatpush1.bf16.msra.mxu0 0
        %6459 = vmatprep.subr.bf16.mxu0 0
        %6460 = vmatpush1.bf16.msra.mxu0 0
        %6461 = vmatprep.subr.bf16.mxu0 0
        %6462 = vmatpush1.bf16.msra.mxu0 0
        %6463 = vmatprep.subr.bf16.mxu0 0
        %6464 = vmatpush1.bf16.msra.mxu0 0
        %6465 = vmatprep.subr.bf16.mxu0 0
        %6466 = vmatpush1.bf16.msra.mxu0 0
        %6467 = vmatprep.subr.bf16.mxu0 0
        %6468 = vmatpush1.bf16.msra.mxu0 0
        %6469 = vmatprep.subr.bf16.mxu0 0
        %6470 = vmatpush1.bf16.msra.mxu0 0
        %6471 = vmatprep.subr.bf16.mxu0 0
        %6472 = vmatpush1.bf16.msra.mxu0 0
        %6473 = vmatprep.subr.bf16.mxu0 0
        %6474 = vmatpush1.bf16.msra.mxu0 0
        %6475 = vmatprep.subr.bf16.mxu0 0
        %6476 = vmatpush1.bf16.msra.mxu0 0
        %6477 = vmatprep.subr.bf16.mxu0 0
        %6478 = vmatpush1.bf16.msra.mxu0 0
        %6479 = vmatprep.subr.bf16.mxu0 0
        %6480 = vmatpush1.bf16.msra.mxu0 0
        %6481 = vmatprep.mubr.bf16.mxu0 0
        %6482 = vmatmul.mubr.bf16.gmra.mrb[0].mxu0 %v6447
        %v6483 = vpop.f32.mrb[0].mxu0
        %v6484 = vadd.f32 0.0, %v6483
        %v6485 = vpop.f32.mrb[0].mxu0
        %v6486 = vpop.f32.mrb[0].mxu0
        %v6487 = vadd.f32 0.0, %v6486
        %v6488 = vpop.f32.mrb[0].mxu0
        %6489 = vdwg.mxu0
        %v6490 = vpack.c.bf16 %v6487, %v6484
        %s6491 = scalar_lea.vmem %s8, 16
        %v6492 = vld [vmem:[%s6491] sm:$0xf]
        %v6493 = vld [vmem:[%s6491 + $0x4] sm:$0x1]
        %v6496 = vunpack.c.l.b16 %v6492
        %v6497 = vunpack.c.l.b16 %v6493
        %v6498 = vpack.c.b16 %v6497, %v6496
        %v6500 = vsel %vm6389, %v6498, 0
        %6502 = vmatprep.subr.bf16.mxu0 0
        %6503 = vmatpush1.bf16.msra.mxu0 %v6394
        %6504 = vmatprep.subr.bf16.mxu0 0
        %6505 = vmatpush1.bf16.msra.mxu0 0
        %6506 = vmatprep.subr.bf16.mxu0 0
        %6507 = vmatpush1.bf16.msra.mxu0 0
        %6508 = vmatprep.subr.bf16.mxu0 0
        %6509 = vmatpush1.bf16.msra.mxu0 0
        %6510 = vmatprep.subr.bf16.mxu0 0
        %6511 = vmatpush1.bf16.msra.mxu0 0
        %6512 = vmatprep.subr.bf16.mxu0 0
        %6513 = vmatpush1.bf16.msra.mxu0 0
        %6514 = vmatprep.subr.bf16.mxu0 0
        %6515 = vmatpush1.bf16.msra.mxu0 0
        %6516 = vmatprep.subr.bf16.mxu0 0
        %6517 = vmatpush1.bf16.msra.mxu0 0
        %6518 = vmatprep.subr.bf16.mxu0 0
        %6519 = vmatpush1.bf16.msra.mxu0 0
        %6520 = vmatprep.subr.bf16.mxu0 0
        %6521 = vmatpush1.bf16.msra.mxu0 0
        %6522 = vmatprep.subr.bf16.mxu0 0
        %6523 = vmatpush1.bf16.msra.mxu0 0
        %6524 = vmatprep.subr.bf16.mxu0 0
        %6525 = vmatpush1.bf16.msra.mxu0 0
        %6526 = vmatprep.subr.bf16.mxu0 0
        %6527 = vmatpush1.bf16.msra.mxu0 0
        %6528 = vmatprep.subr.bf16.mxu0 0
        %6529 = vmatpush1.bf16.msra.mxu0 0
        %6530 = vmatprep.subr.bf16.mxu0 0
        %6531 = vmatpush1.bf16.msra.mxu0 0
        %6532 = vmatprep.subr.bf16.mxu0 0
        %6533 = vmatpush1.bf16.msra.mxu0 0
        %6534 = vmatprep.mubr.bf16.mxu0 0
        %6535 = vmatmul.mubr.bf16.gmra.mrb[0].mxu0 %v6500
        %v6536 = vpop.f32.mrb[0].mxu0
        %v6537 = vadd.f32 0.0, %v6536
        %v6538 = vpop.f32.mrb[0].mxu0
        %v6539 = vpop.f32.mrb[0].mxu0
        %v6540 = vadd.f32 0.0, %v6539
        %v6541 = vpop.f32.mrb[0].mxu0
        %6542 = vdwg.mxu0
        %v6543 = vpack.c.bf16 %v6540, %v6537
        %s6544 = scalar_lea.vmem %s8, 24
        %v6545 = vld [vmem:[%s6544] sm:$0xf]
        %v6546 = vld [vmem:[%s6544 + $0x4] sm:$0x1]
        %v6549 = vunpack.c.l.b16 %v6545
        %v6550 = vunpack.c.l.b16 %v6546
        %v6551 = vpack.c.b16 %v6550, %v6549
        %v6553 = vsel %vm6389, %v6551, 0
        %6555 = vmatprep.subr.bf16.mxu0 0
        %6556 = vmatpush1.bf16.msra.mxu0 %v6394
        %6557 = vmatprep.subr.bf16.mxu0 0
        %6558 = vmatpush1.bf16.msra.mxu0 0
        %6559 = vmatprep.subr.bf16.mxu0 0
        %6560 = vmatpush1.bf16.msra.mxu0 0
        %6561 = vmatprep.subr.bf16.mxu0 0
        %6562 = vmatpush1.bf16.msra.mxu0 0
        %6563 = vmatprep.subr.bf16.mxu0 0
        %6564 = vmatpush1.bf16.msra.mxu0 0
        %6565 = vmatprep.subr.bf16.mxu0 0
        %6566 = vmatpush1.bf16.msra.mxu0 0
        %6567 = vmatprep.subr.bf16.mxu0 0
        %6568 = vmatpush1.bf16.msra.mxu0 0
        %6569 = vmatprep.subr.bf16.mxu0 0
        %6570 = vmatpush1.bf16.msra.mxu0 0
        %6571 = vmatprep.subr.bf16.mxu0 0
        %6572 = vmatpush1.bf16.msra.mxu0 0
        %6573 = vmatprep.subr.bf16.mxu0 0
        %6574 = vmatpush1.bf16.msra.mxu0 0
        %6575 = vmatprep.subr.bf16.mxu0 0
        %6576 = vmatpush1.bf16.msra.mxu0 0
        %6577 = vmatprep.subr.bf16.mxu0 0
        %6578 = vmatpush1.bf16.msra.mxu0 0
        %6579 = vmatprep.subr.bf16.mxu0 0
        %6580 = vmatpush1.bf16.msra.mxu0 0
        %6581 = vmatprep.subr.bf16.mxu0 0
        %6582 = vmatpush1.bf16.msra.mxu0 0
        %6583 = vmatprep.subr.bf16.mxu0 0
        %6584 = vmatpush1.bf16.msra.mxu0 0
        %6585 = vmatprep.subr.bf16.mxu0 0
        %6586 = vmatpush1.bf16.msra.mxu0 0
        %6587 = vmatprep.mubr.bf16.mxu0 0
        %6588 = vmatmul.mubr.bf16.gmra.mrb[0].mxu0 %v6553
        %v6589 = vpop.f32.mrb[0].mxu0
        %v6590 = vadd.f32 0.0, %v6589
        %v6591 = vpop.f32.mrb[0].mxu0
        %v6592 = vpop.f32.mrb[0].mxu0
        %v6593 = vadd.f32 0.0, %v6592
        %v6594 = vpop.f32.mrb[0].mxu0
        %6595 = vdwg.mxu0
        %v6596 = vpack.c.bf16 %v6593, %v6590
        %s6597 = scalar_lea.vmem %s8, 32
        %v6598 = vld [vmem:[%s6597] sm:$0xf]
        %v6599 = vld [vmem:[%s6597 + $0x4] sm:$0x1]
        %v6602 = vunpack.c.l.b16 %v6598
        %v6603 = vunpack.c.l.b16 %v6599
        %v6604 = vpack.c.b16 %v6603, %v6602
        %v6606 = vsel %vm6389, %v6604, 0
        %6608 = vmatprep.subr.bf16.mxu0 0
        %6609 = vmatpush1.bf16.msra.mxu0 %v6394
        %6610 = vmatprep.subr.bf16.mxu0 0
        %6611 = vmatpush1.bf16.msra.mxu0 0
        %6612 = vmatprep.subr.bf16.mxu0 0
        %6613 = vmatpush1.bf16.msra.mxu0 0
        %6614 = vmatprep.subr.bf16.mxu0 0
        %6615 = vmatpush1.bf16.msra.mxu0 0
        %6616 = vmatprep.subr.bf16.mxu0 0
        %6617 = vmatpush1.bf16.msra.mxu0 0
        %6618 = vmatprep.subr.bf16.mxu0 0
        %6619 = vmatpush1.bf16.msra.mxu0 0
        %6620 = vmatprep.subr.bf16.mxu0 0
        %6621 = vmatpush1.bf16.msra.mxu0 0
        %6622 = vmatprep.subr.bf16.mxu0 0
        %6623 = vmatpush1.bf16.msra.mxu0 0
        %6624 = vmatprep.subr.bf16.mxu0 0
        %6625 = vmatpush1.bf16.msra.mxu0 0
        %6626 = vmatprep.subr.bf16.mxu0 0
        %6627 = vmatpush1.bf16.msra.mxu0 0
        %6628 = vmatprep.subr.bf16.mxu0 0
        %6629 = vmatpush1.bf16.msra.mxu0 0
        %6630 = vmatprep.subr.bf16.mxu0 0
        %6631 = vmatpush1.bf16.msra.mxu0 0
        %6632 = vmatprep.subr.bf16.mxu0 0
        %6633 = vmatpush1.bf16.msra.mxu0 0
        %6634 = vmatprep.subr.bf16.mxu0 0
        %6635 = vmatpush1.bf16.msra.mxu0 0
        %6636 = vmatprep.subr.bf16.mxu0 0
        %6637 = vmatpush1.bf16.msra.mxu0 0
        %6638 = vmatprep.subr.bf16.mxu0 0
        %6639 = vmatpush1.bf16.msra.mxu0 0
        %6640 = vmatprep.mubr.bf16.mxu0 0
        %6641 = vmatmul.mubr.bf16.gmra.mrb[0].mxu0 %v6606
        %v6642 = vpop.f32.mrb[0].mxu0
        %v6643 = vadd.f32 0.0, %v6642
        %v6644 = vpop.f32.mrb[0].mxu0
        %v6645 = vpop.f32.mrb[0].mxu0
        %v6646 = vadd.f32 0.0, %v6645
        %v6647 = vpop.f32.mrb[0].mxu0
        %6648 = vdwg.mxu0
        %v6649 = vpack.c.bf16 %v6646, %v6643
        %s6650 = scalar_lea.vmem %s8, 40
        %v6651 = vld [vmem:[%s6650] sm:$0xf]
        %v6652 = vld [vmem:[%s6650 + $0x4] sm:$0x1]
        %v6655 = vunpack.c.l.b16 %v6651
        %v6656 = vunpack.c.l.b16 %v6652
        %v6657 = vpack.c.b16 %v6656, %v6655
        %v6659 = vsel %vm6389, %v6657, 0
        %6661 = vmatprep.subr.bf16.mxu0 0
        %6662 = vmatpush1.bf16.msra.mxu0 %v6394
        %6663 = vmatprep.subr.bf16.mxu0 0
        %6664 = vmatpush1.bf16.msra.mxu0 0
        %6665 = vmatprep.subr.bf16.mxu0 0
        %6666 = vmatpush1.bf16.msra.mxu0 0
        %6667 = vmatprep.subr.bf16.mxu0 0
        %6668 = vmatpush1.bf16.msra.mxu0 0
        %6669 = vmatprep.subr.bf16.mxu0 0
        %6670 = vmatpush1.bf16.msra.mxu0 0
        %6671 = vmatprep.subr.bf16.mxu0 0
        %6672 = vmatpush1.bf16.msra.mxu0 0
        %6673 = vmatprep.subr.bf16.mxu0 0
        %6674 = vmatpush1.bf16.msra.mxu0 0
        %6675 = vmatprep.subr.bf16.mxu0 0
        %6676 = vmatpush1.bf16.msra.mxu0 0
        %6677 = vmatprep.subr.bf16.mxu0 0
        %6678 = vmatpush1.bf16.msra.mxu0 0
        %6679 = vmatprep.subr.bf16.mxu0 0
        %6680 = vmatpush1.bf16.msra.mxu0 0
        %6681 = vmatprep.subr.bf16.mxu0 0
        %6682 = vmatpush1.bf16.msra.mxu0 0
        %6683 = vmatprep.subr.bf16.mxu0 0
        %6684 = vmatpush1.bf16.msra.mxu0 0
        %6685 = vmatprep.subr.bf16.mxu0 0
        %6686 = vmatpush1.bf16.msra.mxu0 0
        %6687 = vmatprep.subr.bf16.mxu0 0
        %6688 = vmatpush1.bf16.msra.mxu0 0
        %6689 = vmatprep.subr.bf16.mxu0 0
        %6690 = vmatpush1.bf16.msra.mxu0 0
        %6691 = vmatprep.subr.bf16.mxu0 0
        %6692 = vmatpush1.bf16.msra.mxu0 0
        %6693 = vmatprep.mubr.bf16.mxu0 0
        %6694 = vmatmul.mubr.bf16.gmra.mrb[0].mxu0 %v6659
        %v6695 = vpop.f32.mrb[0].mxu0
        %v6696 = vadd.f32 0.0, %v6695
        %v6697 = vpop.f32.mrb[0].mxu0
        %v6698 = vpop.f32.mrb[0].mxu0
        %v6699 = vadd.f32 0.0, %v6698
        %v6700 = vpop.f32.mrb[0].mxu0
        %6701 = vdwg.mxu0
        %v6702 = vpack.c.bf16 %v6699, %v6696
        %s6703 = scalar_lea.vmem %s8, 48
        %v6704 = vld [vmem:[%s6703] sm:$0xf]
        %v6705 = vld [vmem:[%s6703 + $0x4] sm:$0x1]
        %v6708 = vunpack.c.l.b16 %v6704
        %v6709 = vunpack.c.l.b16 %v6705
        %v6710 = vpack.c.b16 %v6709, %v6708
        %v6712 = vsel %vm6389, %v6710, 0
        %6714 = vmatprep.subr.bf16.mxu0 0
        %6715 = vmatpush1.bf16.msra.mxu0 %v6394
        %6716 = vmatprep.subr.bf16.mxu0 0
        %6717 = vmatpush1.bf16.msra.mxu0 0
        %6718 = vmatprep.subr.bf16.mxu0 0
        %6719 = vmatpush1.bf16.msra.mxu0 0
        %6720 = vmatprep.subr.bf16.mxu0 0
        %6721 = vmatpush1.bf16.msra.mxu0 0
        %6722 = vmatprep.subr.bf16.mxu0 0
        %6723 = vmatpush1.bf16.msra.mxu0 0
        %6724 = vmatprep.subr.bf16.mxu0 0
        %6725 = vmatpush1.bf16.msra.mxu0 0
        %6726 = vmatprep.subr.bf16.mxu0 0
        %6727 = vmatpush1.bf16.msra.mxu0 0
        %6728 = vmatprep.subr.bf16.mxu0 0
        %6729 = vmatpush1.bf16.msra.mxu0 0
        %6730 = vmatprep.subr.bf16.mxu0 0
        %6731 = vmatpush1.bf16.msra.mxu0 0
        %6732 = vmatprep.subr.bf16.mxu0 0
        %6733 = vmatpush1.bf16.msra.mxu0 0
        %6734 = vmatprep.subr.bf16.mxu0 0
        %6735 = vmatpush1.bf16.msra.mxu0 0
        %6736 = vmatprep.subr.bf16.mxu0 0
        %6737 = vmatpush1.bf16.msra.mxu0 0
        %6738 = vmatprep.subr.bf16.mxu0 0
        %6739 = vmatpush1.bf16.msra.mxu0 0
        %6740 = vmatprep.subr.bf16.mxu0 0
        %6741 = vmatpush1.bf16.msra.mxu0 0
        %6742 = vmatprep.subr.bf16.mxu0 0
        %6743 = vmatpush1.bf16.msra.mxu0 0
        %6744 = vmatprep.subr.bf16.mxu0 0
        %6745 = vmatpush1.bf16.msra.mxu0 0
        %6746 = vmatprep.mubr.bf16.mxu0 0
        %6747 = vmatmul.mubr.bf16.gmra.mrb[0].mxu0 %v6712
        %v6748 = vpop.f32.mrb[0].mxu0
        %v6749 = vadd.f32 0.0, %v6748
        %v6750 = vpop.f32.mrb[0].mxu0
        %v6751 = vpop.f32.mrb[0].mxu0
        %v6752 = vadd.f32 0.0, %v6751
        %v6753 = vpop.f32.mrb[0].mxu0
        %6754 = vdwg.mxu0
        %v6755 = vpack.c.bf16 %v6752, %v6749
        %s6756 = scalar_lea.vmem %s8, 56
        %v6757 = vld [vmem:[%s6756] sm:$0xf]
        %v6758 = vld [vmem:[%s6756 + $0x4] sm:$0x1]
        %v6761 = vunpack.c.l.b16 %v6757
        %v6762 = vunpack.c.l.b16 %v6758
        %v6763 = vpack.c.b16 %v6762, %v6761
        %v6765 = vsel %vm6389, %v6763, 0
        %6767 = vmatprep.subr.bf16.mxu0 0
        %6768 = vmatpush1.bf16.msra.mxu0 %v6394
        %6769 = vmatprep.subr.bf16.mxu0 0
        %6770 = vmatpush1.bf16.msra.mxu0 0
        %6771 = vmatprep.subr.bf16.mxu0 0
        %6772 = vmatpush1.bf16.msra.mxu0 0
        %6773 = vmatprep.subr.bf16.mxu0 0
        %6774 = vmatpush1.bf16.msra.mxu0 0
        %6775 = vmatprep.subr.bf16.mxu0 0
        %6776 = vmatpush1.bf16.msra.mxu0 0
        %6777 = vmatprep.subr.bf16.mxu0 0
        %6778 = vmatpush1.bf16.msra.mxu0 0
        %6779 = vmatprep.subr.bf16.mxu0 0
        %6780 = vmatpush1.bf16.msra.mxu0 0
        %6781 = vmatprep.subr.bf16.mxu0 0
        %6782 = vmatpush1.bf16.msra.mxu0 0
        %6783 = vmatprep.subr.bf16.mxu0 0
        %6784 = vmatpush1.bf16.msra.mxu0 0
        %6785 = vmatprep.subr.bf16.mxu0 0
        %6786 = vmatpush1.bf16.msra.mxu0 0
        %6787 = vmatprep.subr.bf16.mxu0 0
        %6788 = vmatpush1.bf16.msra.mxu0 0
        %6789 = vmatprep.subr.bf16.mxu0 0
        %6790 = vmatpush1.bf16.msra.mxu0 0
        %6791 = vmatprep.subr.bf16.mxu0 0
        %6792 = vmatpush1.bf16.msra.mxu0 0
        %6793 = vmatprep.subr.bf16.mxu0 0
        %6794 = vmatpush1.bf16.msra.mxu0 0
        %6795 = vmatprep.subr.bf16.mxu0 0
        %6796 = vmatpush1.bf16.msra.mxu0 0
        %6797 = vmatprep.subr.bf16.mxu0 0
        %6798 = vmatpush1.bf16.msra.mxu0 0
        %6799 = vmatprep.mubr.bf16.mxu0 0
        %6800 = vmatmul.mubr.bf16.gmra.mrb[0].mxu0 %v6765
        %v6801 = vpop.f32.mrb[0].mxu0
        %v6802 = vadd.f32 0.0, %v6801
        %v6803 = vpop.f32.mrb[0].mxu0
        %v6804 = vpop.f32.mrb[0].mxu0
        %v6805 = vadd.f32 0.0, %v6804
        %v6806 = vpop.f32.mrb[0].mxu0
        %6807 = vdwg.mxu0
        %v6808 = vpack.c.bf16 %v6805, %v6802
        %s6809 = scalar_lea.vmem %s8, 64
        %v6810 = vld [vmem:[%s6809] sm:$0xf]
        %v6811 = vld [vmem:[%s6809 + $0x4] sm:$0x1]
        %v6814 = vunpack.c.l.b16 %v6810
        %v6815 = vunpack.c.l.b16 %v6811
        %v6816 = vpack.c.b16 %v6815, %v6814
        %v6818 = vsel %vm6389, %v6816, 0
        %6820 = vmatprep.subr.bf16.mxu0 0
        %6821 = vmatpush1.bf16.msra.mxu0 %v6394
        %6822 = vmatprep.subr.bf16.mxu0 0
        %6823 = vmatpush1.bf16.msra.mxu0 0
        %6824 = vmatprep.subr.bf16.mxu0 0
        %6825 = vmatpush1.bf16.msra.mxu0 0
        %6826 = vmatprep.subr.bf16.mxu0 0
        %6827 = vmatpush1.bf16.msra.mxu0 0
        %6828 = vmatprep.subr.bf16.mxu0 0
        %6829 = vmatpush1.bf16.msra.mxu0 0
        %6830 = vmatprep.subr.bf16.mxu0 0
        %6831 = vmatpush1.bf16.msra.mxu0 0
        %6832 = vmatprep.subr.bf16.mxu0 0
        %6833 = vmatpush1.bf16.msra.mxu0 0
        %6834 = vmatprep.subr.bf16.mxu0 0
        %6835 = vmatpush1.bf16.msra.mxu0 0
        %6836 = vmatprep.subr.bf16.mxu0 0
        %6837 = vmatpush1.bf16.msra.mxu0 0
        %6838 = vmatprep.subr.bf16.mxu0 0
        %6839 = vmatpush1.bf16.msra.mxu0 0
        %6840 = vmatprep.subr.bf16.mxu0 0
        %6841 = vmatpush1.bf16.msra.mxu0 0
        %6842 = vmatprep.subr.bf16.mxu0 0
        %6843 = vmatpush1.bf16.msra.mxu0 0
        %6844 = vmatprep.subr.bf16.mxu0 0
        %6845 = vmatpush1.bf16.msra.mxu0 0
        %6846 = vmatprep.subr.bf16.mxu0 0
        %6847 = vmatpush1.bf16.msra.mxu0 0
        %6848 = vmatprep.subr.bf16.mxu0 0
        %6849 = vmatpush1.bf16.msra.mxu0 0
        %6850 = vmatprep.subr.bf16.mxu0 0
        %6851 = vmatpush1.bf16.msra.mxu0 0
        %6852 = vmatprep.mubr.bf16.mxu0 0
        %6853 = vmatmul.mubr.bf16.gmra.mrb[0].mxu0 %v6818
        %v6854 = vpop.f32.mrb[0].mxu0
        %v6855 = vadd.f32 0.0, %v6854
        %v6856 = vpop.f32.mrb[0].mxu0
        %v6857 = vpop.f32.mrb[0].mxu0
        %v6858 = vadd.f32 0.0, %v6857
        %v6859 = vpop.f32.mrb[0].mxu0
        %6860 = vdwg.mxu0
        %v6861 = vpack.c.bf16 %v6858, %v6855
        %s6862 = scalar_lea.vmem %s8, 72
        %v6863 = vld [vmem:[%s6862] sm:$0xf]
        %v6864 = vld [vmem:[%s6862 + $0x4] sm:$0x1]
        %v6867 = vunpack.c.l.b16 %v6863
        %v6868 = vunpack.c.l.b16 %v6864
        %v6869 = vpack.c.b16 %v6868, %v6867
        %v6871 = vsel %vm6389, %v6869, 0
        %6873 = vmatprep.subr.bf16.mxu0 0
        %6874 = vmatpush1.bf16.msra.mxu0 %v6394
        %6875 = vmatprep.subr.bf16.mxu0 0
        %6876 = vmatpush1.bf16.msra.mxu0 0
        %6877 = vmatprep.subr.bf16.mxu0 0
        %6878 = vmatpush1.bf16.msra.mxu0 0
        %6879 = vmatprep.subr.bf16.mxu0 0
        %6880 = vmatpush1.bf16.msra.mxu0 0
        %6881 = vmatprep.subr.bf16.mxu0 0
        %6882 = vmatpush1.bf16.msra.mxu0 0
        %6883 = vmatprep.subr.bf16.mxu0 0
        %6884 = vmatpush1.bf16.msra.mxu0 0
        %6885 = vmatprep.subr.bf16.mxu0 0
        %6886 = vmatpush1.bf16.msra.mxu0 0
        %6887 = vmatprep.subr.bf16.mxu0 0
        %6888 = vmatpush1.bf16.msra.mxu0 0
        %6889 = vmatprep.subr.bf16.mxu0 0
        %6890 = vmatpush1.bf16.msra.mxu0 0
        %6891 = vmatprep.subr.bf16.mxu0 0
        %6892 = vmatpush1.bf16.msra.mxu0 0
        %6893 = vmatprep.subr.bf16.mxu0 0
        %6894 = vmatpush1.bf16.msra.mxu0 0
        %6895 = vmatprep.subr.bf16.mxu0 0
        %6896 = vmatpush1.bf16.msra.mxu0 0
        %6897 = vmatprep.subr.bf16.mxu0 0
        %6898 = vmatpush1.bf16.msra.mxu0 0
        %6899 = vmatprep.subr.bf16.mxu0 0
        %6900 = vmatpush1.bf16.msra.mxu0 0
        %6901 = vmatprep.subr.bf16.mxu0 0
        %6902 = vmatpush1.bf16.msra.mxu0 0
        %6903 = vmatprep.subr.bf16.mxu0 0
        %6904 = vmatpush1.bf16.msra.mxu0 0
        %6905 = vmatprep.mubr.bf16.mxu0 0
        %6906 = vmatmul.mubr.bf16.gmra.mrb[0].mxu0 %v6871
        %v6907 = vpop.f32.mrb[0].mxu0
        %v6908 = vadd.f32 0.0, %v6907
        %v6909 = vpop.f32.mrb[0].mxu0
        %v6910 = vpop.f32.mrb[0].mxu0
        %v6911 = vadd.f32 0.0, %v6910
        %v6912 = vpop.f32.mrb[0].mxu0
        %6913 = vdwg.mxu0
        %v6914 = vpack.c.bf16 %v6911, %v6908
        %s6915 = scalar_lea.vmem %s8, 80
        %v6916 = vld [vmem:[%s6915] sm:$0xf]
        %v6917 = vld [vmem:[%s6915 + $0x4] sm:$0x1]
        %v6920 = vunpack.c.l.b16 %v6916
        %v6921 = vunpack.c.l.b16 %v6917
        %v6922 = vpack.c.b16 %v6921, %v6920
        %v6924 = vsel %vm6389, %v6922, 0
        %6926 = vmatprep.subr.bf16.mxu0 0
        %6927 = vmatpush1.bf16.msra.mxu0 %v6394
        %6928 = vmatprep.subr.bf16.mxu0 0
        %6929 = vmatpush1.bf16.msra.mxu0 0
        %6930 = vmatprep.subr.bf16.mxu0 0
        %6931 = vmatpush1.bf16.msra.mxu0 0
        %6932 = vmatprep.subr.bf16.mxu0 0
        %6933 = vmatpush1.bf16.msra.mxu0 0
        %6934 = vmatprep.subr.bf16.mxu0 0
        %6935 = vmatpush1.bf16.msra.mxu0 0
        %6936 = vmatprep.subr.bf16.mxu0 0
        %6937 = vmatpush1.bf16.msra.mxu0 0
        %6938 = vmatprep.subr.bf16.mxu0 0
        %6939 = vmatpush1.bf16.msra.mxu0 0
        %6940 = vmatprep.subr.bf16.mxu0 0
        %6941 = vmatpush1.bf16.msra.mxu0 0
        %6942 = vmatprep.subr.bf16.mxu0 0
        %6943 = vmatpush1.bf16.msra.mxu0 0
        %6944 = vmatprep.subr.bf16.mxu0 0
        %6945 = vmatpush1.bf16.msra.mxu0 0
        %6946 = vmatprep.subr.bf16.mxu0 0
        %6947 = vmatpush1.bf16.msra.mxu0 0
        %6948 = vmatprep.subr.bf16.mxu0 0
        %6949 = vmatpush1.bf16.msra.mxu0 0
        %6950 = vmatprep.subr.bf16.mxu0 0
        %6951 = vmatpush1.bf16.msra.mxu0 0
        %6952 = vmatprep.subr.bf16.mxu0 0
        %6953 = vmatpush1.bf16.msra.mxu0 0
        %6954 = vmatprep.subr.bf16.mxu0 0
        %6955 = vmatpush1.bf16.msra.mxu0 0
        %6956 = vmatprep.subr.bf16.mxu0 0
        %6957 = vmatpush1.bf16.msra.mxu0 0
        %6958 = vmatprep.mubr.bf16.mxu0 0
        %6959 = vmatmul.mubr.bf16.gmra.mrb[0].mxu0 %v6924
        %v6960 = vpop.f32.mrb[0].mxu0
        %v6961 = vadd.f32 0.0, %v6960
        %v6962 = vpop.f32.mrb[0].mxu0
        %v6963 = vpop.f32.mrb[0].mxu0
        %v6964 = vadd.f32 0.0, %v6963
        %v6965 = vpop.f32.mrb[0].mxu0
        %6966 = vdwg.mxu0
        %v6967 = vpack.c.bf16 %v6964, %v6961
        %s6968 = scalar_lea.vmem %s8, 88
        %v6969 = vld [vmem:[%s6968] sm:$0xf]
        %v6970 = vld [vmem:[%s6968 + $0x4] sm:$0x1]
        %v6973 = vunpack.c.l.b16 %v6969
        %v6974 = vunpack.c.l.b16 %v6970
        %v6975 = vpack.c.b16 %v6974, %v6973
        %v6977 = vsel %vm6389, %v6975, 0
        %6979 = vmatprep.subr.bf16.mxu0 0
        %6980 = vmatpush1.bf16.msra.mxu0 %v6394
        %6981 = vmatprep.subr.bf16.mxu0 0
        %6982 = vmatpush1.bf16.msra.mxu0 0
        %6983 = vmatprep.subr.bf16.mxu0 0
        %6984 = vmatpush1.bf16.msra.mxu0 0
        %6985 = vmatprep.subr.bf16.mxu0 0
        %6986 = vmatpush1.bf16.msra.mxu0 0
        %6987 = vmatprep.subr.bf16.mxu0 0
        %6988 = vmatpush1.bf16.msra.mxu0 0
        %6989 = vmatprep.subr.bf16.mxu0 0
        %6990 = vmatpush1.bf16.msra.mxu0 0
        %6991 = vmatprep.subr.bf16.mxu0 0
        %6992 = vmatpush1.bf16.msra.mxu0 0
        %6993 = vmatprep.subr.bf16.mxu0 0
        %6994 = vmatpush1.bf16.msra.mxu0 0
        %6995 = vmatprep.subr.bf16.mxu0 0
        %6996 = vmatpush1.bf16.msra.mxu0 0
        %6997 = vmatprep.subr.bf16.mxu0 0
        %6998 = vmatpush1.bf16.msra.mxu0 0
        %6999 = vmatprep.subr.bf16.mxu0 0
        %7000 = vmatpush1.bf16.msra.mxu0 0
        %7001 = vmatprep.subr.bf16.mxu0 0
        %7002 = vmatpush1.bf16.msra.mxu0 0
        %7003 = vmatprep.subr.bf16.mxu0 0
        %7004 = vmatpush1.bf16.msra.mxu0 0
        %7005 = vmatprep.subr.bf16.mxu0 0
        %7006 = vmatpush1.bf16.msra.mxu0 0
        %7007 = vmatprep.subr.bf16.mxu0 0
        %7008 = vmatpush1.bf16.msra.mxu0 0
        %7009 = vmatprep.subr.bf16.mxu0 0
        %7010 = vmatpush1.bf16.msra.mxu0 0
        %7011 = vmatprep.mubr.bf16.mxu0 0
        %7012 = vmatmul.mubr.bf16.gmra.mrb[0].mxu0 %v6977
        %v7013 = vpop.f32.mrb[0].mxu0
        %v7014 = vadd.f32 0.0, %v7013
        %v7015 = vpop.f32.mrb[0].mxu0
        %v7016 = vpop.f32.mrb[0].mxu0
        %v7017 = vadd.f32 0.0, %v7016
        %v7018 = vpop.f32.mrb[0].mxu0
        %7019 = vdwg.mxu0
        %v7020 = vpack.c.bf16 %v7017, %v7014
        %s7021 = scalar_lea.vmem %s8, 96
        %v7022 = vld [vmem:[%s7021] sm:$0xf]
        %v7023 = vld [vmem:[%s7021 + $0x4] sm:$0x1]
        %v7026 = vunpack.c.l.b16 %v7022
        %v7027 = vunpack.c.l.b16 %v7023
        %v7028 = vpack.c.b16 %v7027, %v7026
        %v7030 = vsel %vm6389, %v7028, 0
        %7032 = vmatprep.subr.bf16.mxu0 0
        %7033 = vmatpush1.bf16.msra.mxu0 %v6394
        %7034 = vmatprep.subr.bf16.mxu0 0
        %7035 = vmatpush1.bf16.msra.mxu0 0
        %7036 = vmatprep.subr.bf16.mxu0 0
        %7037 = vmatpush1.bf16.msra.mxu0 0
        %7038 = vmatprep.subr.bf16.mxu0 0
        %7039 = vmatpush1.bf16.msra.mxu0 0
        %7040 = vmatprep.subr.bf16.mxu0 0
        %7041 = vmatpush1.bf16.msra.mxu0 0
        %7042 = vmatprep.subr.bf16.mxu0 0
        %7043 = vmatpush1.bf16.msra.mxu0 0
        %7044 = vmatprep.subr.bf16.mxu0 0
        %7045 = vmatpush1.bf16.msra.mxu0 0
        %7046 = vmatprep.subr.bf16.mxu0 0
        %7047 = vmatpush1.bf16.msra.mxu0 0
        %7048 = vmatprep.subr.bf16.mxu0 0
        %7049 = vmatpush1.bf16.msra.mxu0 0
        %7050 = vmatprep.subr.bf16.mxu0 0
        %7051 = vmatpush1.bf16.msra.mxu0 0
        %7052 = vmatprep.subr.bf16.mxu0 0
        %7053 = vmatpush1.bf16.msra.mxu0 0
        %7054 = vmatprep.subr.bf16.mxu0 0
        %7055 = vmatpush1.bf16.msra.mxu0 0
        %7056 = vmatprep.subr.bf16.mxu0 0
        %7057 = vmatpush1.bf16.msra.mxu0 0
        %7058 = vmatprep.subr.bf16.mxu0 0
        %7059 = vmatpush1.bf16.msra.mxu0 0
        %7060 = vmatprep.subr.bf16.mxu0 0
        %7061 = vmatpush1.bf16.msra.mxu0 0
        %7062 = vmatprep.subr.bf16.mxu0 0
        %7063 = vmatpush1.bf16.msra.mxu0 0
        %7064 = vmatprep.mubr.bf16.mxu0 0
        %7065 = vmatmul.mubr.bf16.gmra.mrb[0].mxu0 %v7030
        %v7066 = vpop.f32.mrb[0].mxu0
        %v7067 = vadd.f32 0.0, %v7066
        %v7068 = vpop.f32.mrb[0].mxu0
        %v7069 = vpop.f32.mrb[0].mxu0
        %v7070 = vadd.f32 0.0, %v7069
        %v7071 = vpop.f32.mrb[0].mxu0
        %7072 = vdwg.mxu0
        %v7073 = vpack.c.bf16 %v7070, %v7067
        %s7074 = scalar_lea.vmem %s8, 104
        %v7075 = vld [vmem:[%s7074] sm:$0xf]
        %v7076 = vld [vmem:[%s7074 + $0x4] sm:$0x1]
        %v7079 = vunpack.c.l.b16 %v7075
        %v7080 = vunpack.c.l.b16 %v7076
        %v7081 = vpack.c.b16 %v7080, %v7079
        %v7083 = vsel %vm6389, %v7081, 0
        %7085 = vmatprep.subr.bf16.mxu0 0
        %7086 = vmatpush1.bf16.msra.mxu0 %v6394
        %7087 = vmatprep.subr.bf16.mxu0 0
        %7088 = vmatpush1.bf16.msra.mxu0 0
        %7089 = vmatprep.subr.bf16.mxu0 0
        %7090 = vmatpush1.bf16.msra.mxu0 0
        %7091 = vmatprep.subr.bf16.mxu0 0
        %7092 = vmatpush1.bf16.msra.mxu0 0
        %7093 = vmatprep.subr.bf16.mxu0 0
        %7094 = vmatpush1.bf16.msra.mxu0 0
        %7095 = vmatprep.subr.bf16.mxu0 0
        %7096 = vmatpush1.bf16.msra.mxu0 0
        %7097 = vmatprep.subr.bf16.mxu0 0
        %7098 = vmatpush1.bf16.msra.mxu0 0
        %7099 = vmatprep.subr.bf16.mxu0 0
        %7100 = vmatpush1.bf16.msra.mxu0 0
        %7101 = vmatprep.subr.bf16.mxu0 0
        %7102 = vmatpush1.bf16.msra.mxu0 0
        %7103 = vmatprep.subr.bf16.mxu0 0
        %7104 = vmatpush1.bf16.msra.mxu0 0
        %7105 = vmatprep.subr.bf16.mxu0 0
        %7106 = vmatpush1.bf16.msra.mxu0 0
        %7107 = vmatprep.subr.bf16.mxu0 0
        %7108 = vmatpush1.bf16.msra.mxu0 0
        %7109 = vmatprep.subr.bf16.mxu0 0
        %7110 = vmatpush1.bf16.msra.mxu0 0
        %7111 = vmatprep.subr.bf16.mxu0 0
        %7112 = vmatpush1.bf16.msra.mxu0 0
        %7113 = vmatprep.subr.bf16.mxu0 0
        %7114 = vmatpush1.bf16.msra.mxu0 0
        %7115 = vmatprep.subr.bf16.mxu0 0
        %7116 = vmatpush1.bf16.msra.mxu0 0
        %7117 = vmatprep.mubr.bf16.mxu0 0
        %7118 = vmatmul.mubr.bf16.gmra.mrb[0].mxu0 %v7083
        %v7119 = vpop.f32.mrb[0].mxu0
        %v7120 = vadd.f32 0.0, %v7119
        %v7121 = vpop.f32.mrb[0].mxu0
        %v7122 = vpop.f32.mrb[0].mxu0
        %v7123 = vadd.f32 0.0, %v7122
        %v7124 = vpop.f32.mrb[0].mxu0
        %7125 = vdwg.mxu0
        %v7126 = vpack.c.bf16 %v7123, %v7120
        %s7127 = scalar_lea.vmem %s8, 112
        %v7128 = vld [vmem:[%s7127] sm:$0xf]
        %v7129 = vld [vmem:[%s7127 + $0x4] sm:$0x1]
        %v7132 = vunpack.c.l.b16 %v7128
        %v7133 = vunpack.c.l.b16 %v7129
        %v7134 = vpack.c.b16 %v7133, %v7132
        %v7136 = vsel %vm6389, %v7134, 0
        %7138 = vmatprep.subr.bf16.mxu0 0
        %7139 = vmatpush1.bf16.msra.mxu0 %v6394
        %7140 = vmatprep.subr.bf16.mxu0 0
        %7141 = vmatpush1.bf16.msra.mxu0 0
        %7142 = vmatprep.subr.bf16.mxu0 0
        %7143 = vmatpush1.bf16.msra.mxu0 0
        %7144 = vmatprep.subr.bf16.mxu0 0
        %7145 = vmatpush1.bf16.msra.mxu0 0
        %7146 = vmatprep.subr.bf16.mxu0 0
        %7147 = vmatpush1.bf16.msra.mxu0 0
        %7148 = vmatprep.subr.bf16.mxu0 0
        %7149 = vmatpush1.bf16.msra.mxu0 0
        %7150 = vmatprep.subr.bf16.mxu0 0
        %7151 = vmatpush1.bf16.msra.mxu0 0
        %7152 = vmatprep.subr.bf16.mxu0 0
        %7153 = vmatpush1.bf16.msra.mxu0 0
        %7154 = vmatprep.subr.bf16.mxu0 0
        %7155 = vmatpush1.bf16.msra.mxu0 0
        %7156 = vmatprep.subr.bf16.mxu0 0
        %7157 = vmatpush1.bf16.msra.mxu0 0
        %7158 = vmatprep.subr.bf16.mxu0 0
        %7159 = vmatpush1.bf16.msra.mxu0 0
        %7160 = vmatprep.subr.bf16.mxu0 0
        %7161 = vmatpush1.bf16.msra.mxu0 0
        %7162 = vmatprep.subr.bf16.mxu0 0
        %7163 = vmatpush1.bf16.msra.mxu0 0
        %7164 = vmatprep.subr.bf16.mxu0 0
        %7165 = vmatpush1.bf16.msra.mxu0 0
        %7166 = vmatprep.subr.bf16.mxu0 0
        %7167 = vmatpush1.bf16.msra.mxu0 0
        %7168 = vmatprep.subr.bf16.mxu0 0
        %7169 = vmatpush1.bf16.msra.mxu0 0
        %7170 = vmatprep.mubr.bf16.mxu0 0
        %7171 = vmatmul.mubr.bf16.gmra.mrb[0].mxu0 %v7136
        %v7172 = vpop.f32.mrb[0].mxu0
        %v7173 = vadd.f32 0.0, %v7172
        %v7174 = vpop.f32.mrb[0].mxu0
        %v7175 = vpop.f32.mrb[0].mxu0
        %v7176 = vadd.f32 0.0, %v7175
        %v7177 = vpop.f32.mrb[0].mxu0
        %7178 = vdwg.mxu0
        %v7179 = vpack.c.bf16 %v7176, %v7173
        %s7180 = scalar_lea.vmem %s8, 120
        %v7181 = vld [vmem:[%s7180] sm:$0xf]
        %v7182 = vld [vmem:[%s7180 + $0x4] sm:$0x1]
        %v7185 = vunpack.c.l.b16 %v7181
        %v7186 = vunpack.c.l.b16 %v7182
        %v7187 = vpack.c.b16 %v7186, %v7185
        %v7189 = vsel %vm6389, %v7187, 0
        %7191 = vmatprep.subr.bf16.mxu0 0
        %7192 = vmatpush1.bf16.msra.mxu0 %v6394
        %7193 = vmatprep.subr.bf16.mxu0 0
        %7194 = vmatpush1.bf16.msra.mxu0 0
        %7195 = vmatprep.subr.bf16.mxu0 0
        %7196 = vmatpush1.bf16.msra.mxu0 0
        %7197 = vmatprep.subr.bf16.mxu0 0
        %7198 = vmatpush1.bf16.msra.mxu0 0
        %7199 = vmatprep.subr.bf16.mxu0 0
        %7200 = vmatpush1.bf16.msra.mxu0 0
        %7201 = vmatprep.subr.bf16.mxu0 0
        %7202 = vmatpush1.bf16.msra.mxu0 0
        %7203 = vmatprep.subr.bf16.mxu0 0
        %7204 = vmatpush1.bf16.msra.mxu0 0
        %7205 = vmatprep.subr.bf16.mxu0 0
        %7206 = vmatpush1.bf16.msra.mxu0 0
        %7207 = vmatprep.subr.bf16.mxu0 0
        %7208 = vmatpush1.bf16.msra.mxu0 0
        %7209 = vmatprep.subr.bf16.mxu0 0
        %7210 = vmatpush1.bf16.msra.mxu0 0
        %7211 = vmatprep.subr.bf16.mxu0 0
        %7212 = vmatpush1.bf16.msra.mxu0 0
        %7213 = vmatprep.subr.bf16.mxu0 0
        %7214 = vmatpush1.bf16.msra.mxu0 0
        %7215 = vmatprep.subr.bf16.mxu0 0
        %7216 = vmatpush1.bf16.msra.mxu0 0
        %7217 = vmatprep.subr.bf16.mxu0 0
        %7218 = vmatpush1.bf16.msra.mxu0 0
        %7219 = vmatprep.subr.bf16.mxu0 0
        %7220 = vmatpush1.bf16.msra.mxu0 0
        %7221 = vmatprep.subr.bf16.mxu0 0
        %7222 = vmatpush1.bf16.msra.mxu0 0
        %7223 = vmatprep.mubr.bf16.mxu0 0
        %7224 = vmatmul.mubr.bf16.gmra.mrb[0].mxu0 %v7189
        %v7225 = vpop.f32.mrb[0].mxu0
        %v7226 = vadd.f32 0.0, %v7225
        %v7227 = vpop.f32.mrb[0].mxu0
        %v7228 = vpop.f32.mrb[0].mxu0
        %v7229 = vadd.f32 0.0, %v7228
        %v7230 = vpop.f32.mrb[0].mxu0
        %7231 = vdwg.mxu0
        %v7232 = vpack.c.bf16 %v7229, %v7226
        %s7233 = scalar_lea.vmem %s8, 128
        %v7234 = vld [vmem:[%s7233] sm:$0xf]
        %v7235 = vld [vmem:[%s7233 + $0x4] sm:$0x1]
        %v7238 = vunpack.c.l.b16 %v7234
        %v7239 = vunpack.c.l.b16 %v7235
        %v7240 = vpack.c.b16 %v7239, %v7238
        %v7242 = vsel %vm6389, %v7240, 0
        %7244 = vmatprep.subr.bf16.mxu0 0
        %7245 = vmatpush1.bf16.msra.mxu0 %v6394
        %7246 = vmatprep.subr.bf16.mxu0 0
        %7247 = vmatpush1.bf16.msra.mxu0 0
        %7248 = vmatprep.subr.bf16.mxu0 0
        %7249 = vmatpush1.bf16.msra.mxu0 0
        %7250 = vmatprep.subr.bf16.mxu0 0
        %7251 = vmatpush1.bf16.msra.mxu0 0
        %7252 = vmatprep.subr.bf16.mxu0 0
        %7253 = vmatpush1.bf16.msra.mxu0 0
        %7254 = vmatprep.subr.bf16.mxu0 0
        %7255 = vmatpush1.bf16.msra.mxu0 0
        %7256 = vmatprep.subr.bf16.mxu0 0
        %7257 = vmatpush1.bf16.msra.mxu0 0
        %7258 = vmatprep.subr.bf16.mxu0 0
        %7259 = vmatpush1.bf16.msra.mxu0 0
        %7260 = vmatprep.subr.bf16.mxu0 0
        %7261 = vmatpush1.bf16.msra.mxu0 0
        %7262 = vmatprep.subr.bf16.mxu0 0
        %7263 = vmatpush1.bf16.msra.mxu0 0
        %7264 = vmatprep.subr.bf16.mxu0 0
        %7265 = vmatpush1.bf16.msra.mxu0 0
        %7266 = vmatprep.subr.bf16.mxu0 0
        %7267 = vmatpush1.bf16.msra.mxu0 0
        %7268 = vmatprep.subr.bf16.mxu0 0
        %7269 = vmatpush1.bf16.msra.mxu0 0
        %7270 = vmatprep.subr.bf16.mxu0 0
        %7271 = vmatpush1.bf16.msra.mxu0 0
        %7272 = vmatprep.subr.bf16.mxu0 0
        %7273 = vmatpush1.bf16.msra.mxu0 0
        %7274 = vmatprep.subr.bf16.mxu0 0
        %7275 = vmatpush1.bf16.msra.mxu0 0
        %7276 = vmatprep.mubr.bf16.mxu0 0
        %7277 = vmatmul.mubr.bf16.gmra.mrb[0].mxu0 %v7242
        %v7278 = vpop.f32.mrb[0].mxu0
        %v7279 = vadd.f32 0.0, %v7278
        %v7280 = vpop.f32.mrb[0].mxu0
        %v7281 = vpop.f32.mrb[0].mxu0
        %v7282 = vadd.f32 0.0, %v7281
        %v7283 = vpop.f32.mrb[0].mxu0
        %7284 = vdwg.mxu0
        %v7285 = vpack.c.bf16 %v7282, %v7279
        %s7286 = scalar_lea.vmem %s8, 136
        %v7287 = vld [vmem:[%s7286] sm:$0xf]
        %v7288 = vld [vmem:[%s7286 + $0x4] sm:$0x1]
        %v7291 = vunpack.c.l.b16 %v7287
        %v7292 = vunpack.c.l.b16 %v7288
        %v7293 = vpack.c.b16 %v7292, %v7291
        %v7295 = vsel %vm6389, %v7293, 0
        %7297 = vmatprep.subr.bf16.mxu0 0
        %7298 = vmatpush1.bf16.msra.mxu0 %v6394
        %7299 = vmatprep.subr.bf16.mxu0 0
        %7300 = vmatpush1.bf16.msra.mxu0 0
        %7301 = vmatprep.subr.bf16.mxu0 0
        %7302 = vmatpush1.bf16.msra.mxu0 0
        %7303 = vmatprep.subr.bf16.mxu0 0
        %7304 = vmatpush1.bf16.msra.mxu0 0
        %7305 = vmatprep.subr.bf16.mxu0 0
        %7306 = vmatpush1.bf16.msra.mxu0 0
        %7307 = vmatprep.subr.bf16.mxu0 0
        %7308 = vmatpush1.bf16.msra.mxu0 0
        %7309 = vmatprep.subr.bf16.mxu0 0
        %7310 = vmatpush1.bf16.msra.mxu0 0
        %7311 = vmatprep.subr.bf16.mxu0 0
        %7312 = vmatpush1.bf16.msra.mxu0 0
        %7313 = vmatprep.subr.bf16.mxu0 0
        %7314 = vmatpush1.bf16.msra.mxu0 0
        %7315 = vmatprep.subr.bf16.mxu0 0
        %7316 = vmatpush1.bf16.msra.mxu0 0
        %7317 = vmatprep.subr.bf16.mxu0 0
        %7318 = vmatpush1.bf16.msra.mxu0 0
        %7319 = vmatprep.subr.bf16.mxu0 0
        %7320 = vmatpush1.bf16.msra.mxu0 0
        %7321 = vmatprep.subr.bf16.mxu0 0
        %7322 = vmatpush1.bf16.msra.mxu0 0
        %7323 = vmatprep.subr.bf16.mxu0 0
        %7324 = vmatpush1.bf16.msra.mxu0 0
        %7325 = vmatprep.subr.bf16.mxu0 0
        %7326 = vmatpush1.bf16.msra.mxu0 0
        %7327 = vmatprep.subr.bf16.mxu0 0
        %7328 = vmatpush1.bf16.msra.mxu0 0
        %7329 = vmatprep.mubr.bf16.mxu0 0
        %7330 = vmatmul.mubr.bf16.gmra.mrb[0].mxu0 %v7295
        %v7331 = vpop.f32.mrb[0].mxu0
        %v7332 = vadd.f32 0.0, %v7331
        %v7333 = vpop.f32.mrb[0].mxu0
        %v7334 = vpop.f32.mrb[0].mxu0
        %v7335 = vadd.f32 0.0, %v7334
        %v7336 = vpop.f32.mrb[0].mxu0
        %7337 = vdwg.mxu0
        %v7338 = vpack.c.bf16 %v7335, %v7332
        %s7339 = scalar_lea.vmem %s8, 144
        %v7340 = vld [vmem:[%s7339] sm:$0xf]
        %v7341 = vld [vmem:[%s7339 + $0x4] sm:$0x1]
        %v7344 = vunpack.c.l.b16 %v7340
        %v7345 = vunpack.c.l.b16 %v7341
        %v7346 = vpack.c.b16 %v7345, %v7344
        %v7348 = vsel %vm6389, %v7346, 0
        %7350 = vmatprep.subr.bf16.mxu0 0
        %7351 = vmatpush1.bf16.msra.mxu0 %v6394
        %7352 = vmatprep.subr.bf16.mxu0 0
        %7353 = vmatpush1.bf16.msra.mxu0 0
        %7354 = vmatprep.subr.bf16.mxu0 0
        %7355 = vmatpush1.bf16.msra.mxu0 0
        %7356 = vmatprep.subr.bf16.mxu0 0
        %7357 = vmatpush1.bf16.msra.mxu0 0
        %7358 = vmatprep.subr.bf16.mxu0 0
        %7359 = vmatpush1.bf16.msra.mxu0 0
        %7360 = vmatprep.subr.bf16.mxu0 0
        %7361 = vmatpush1.bf16.msra.mxu0 0
        %7362 = vmatprep.subr.bf16.mxu0 0
        %7363 = vmatpush1.bf16.msra.mxu0 0
        %7364 = vmatprep.subr.bf16.mxu0 0
        %7365 = vmatpush1.bf16.msra.mxu0 0
        %7366 = vmatprep.subr.bf16.mxu0 0
        %7367 = vmatpush1.bf16.msra.mxu0 0
        %7368 = vmatprep.subr.bf16.mxu0 0
        %7369 = vmatpush1.bf16.msra.mxu0 0
        %7370 = vmatprep.subr.bf16.mxu0 0
        %7371 = vmatpush1.bf16.msra.mxu0 0
        %7372 = vmatprep.subr.bf16.mxu0 0
        %7373 = vmatpush1.bf16.msra.mxu0 0
        %7374 = vmatprep.subr.bf16.mxu0 0
        %7375 = vmatpush1.bf16.msra.mxu0 0
        %7376 = vmatprep.subr.bf16.mxu0 0
        %7377 = vmatpush1.bf16.msra.mxu0 0
        %7378 = vmatprep.subr.bf16.mxu0 0
        %7379 = vmatpush1.bf16.msra.mxu0 0
        %7380 = vmatprep.subr.bf16.mxu0 0
        %7381 = vmatpush1.bf16.msra.mxu0 0
        %7382 = vmatprep.mubr.bf16.mxu0 0
        %7383 = vmatmul.mubr.bf16.gmra.mrb[0].mxu0 %v7348
        %v7384 = vpop.f32.mrb[0].mxu0
        %v7385 = vadd.f32 0.0, %v7384
        %v7386 = vpop.f32.mrb[0].mxu0
        %v7387 = vpop.f32.mrb[0].mxu0
        %v7388 = vadd.f32 0.0, %v7387
        %v7389 = vpop.f32.mrb[0].mxu0
        %7390 = vdwg.mxu0
        %v7391 = vpack.c.bf16 %v7388, %v7385
        %s7392 = scalar_lea.vmem %s8, 152
        %v7393 = vld [vmem:[%s7392] sm:$0xf]
        %v7394 = vld [vmem:[%s7392 + $0x4] sm:$0x1]
        %v7397 = vunpack.c.l.b16 %v7393
        %v7398 = vunpack.c.l.b16 %v7394
        %v7399 = vpack.c.b16 %v7398, %v7397
        %v7401 = vsel %vm6389, %v7399, 0
        %7403 = vmatprep.subr.bf16.mxu0 0
        %7404 = vmatpush1.bf16.msra.mxu0 %v6394
        %7405 = vmatprep.subr.bf16.mxu0 0
        %7406 = vmatpush1.bf16.msra.mxu0 0
        %7407 = vmatprep.subr.bf16.mxu0 0
        %7408 = vmatpush1.bf16.msra.mxu0 0
        %7409 = vmatprep.subr.bf16.mxu0 0
        %7410 = vmatpush1.bf16.msra.mxu0 0
        %7411 = vmatprep.subr.bf16.mxu0 0
        %7412 = vmatpush1.bf16.msra.mxu0 0
        %7413 = vmatprep.subr.bf16.mxu0 0
        %7414 = vmatpush1.bf16.msra.mxu0 0
        %7415 = vmatprep.subr.bf16.mxu0 0
        %7416 = vmatpush1.bf16.msra.mxu0 0
        %7417 = vmatprep.subr.bf16.mxu0 0
        %7418 = vmatpush1.bf16.msra.mxu0 0
        %7419 = vmatprep.subr.bf16.mxu0 0
        %7420 = vmatpush1.bf16.msra.mxu0 0
        %7421 = vmatprep.subr.bf16.mxu0 0
        %7422 = vmatpush1.bf16.msra.mxu0 0
        %7423 = vmatprep.subr.bf16.mxu0 0
        %7424 = vmatpush1.bf16.msra.mxu0 0
        %7425 = vmatprep.subr.bf16.mxu0 0
        %7426 = vmatpush1.bf16.msra.mxu0 0
        %7427 = vmatprep.subr.bf16.mxu0 0
        %7428 = vmatpush1.bf16.msra.mxu0 0
        %7429 = vmatprep.subr.bf16.mxu0 0
        %7430 = vmatpush1.bf16.msra.mxu0 0
        %7431 = vmatprep.subr.bf16.mxu0 0
        %7432 = vmatpush1.bf16.msra.mxu0 0
        %7433 = vmatprep.subr.bf16.mxu0 0
        %7434 = vmatpush1.bf16.msra.mxu0 0
        %7435 = vmatprep.mubr.bf16.mxu0 0
        %7436 = vmatmul.mubr.bf16.gmra.mrb[0].mxu0 %v7401
        %v7437 = vpop.f32.mrb[0].mxu0
        %v7438 = vadd.f32 0.0, %v7437
        %v7439 = vpop.f32.mrb[0].mxu0
        %v7440 = vpop.f32.mrb[0].mxu0
        %v7441 = vadd.f32 0.0, %v7440
        %v7442 = vpop.f32.mrb[0].mxu0
        %7443 = vdwg.mxu0
        %v7444 = vpack.c.bf16 %v7441, %v7438
        %s7445 = scalar_lea.vmem %s8, 160
        %v7446 = vld [vmem:[%s7445] sm:$0xf]
        %v7447 = vld [vmem:[%s7445 + $0x4] sm:$0x1]
        %v7450 = vunpack.c.l.b16 %v7446
        %v7451 = vunpack.c.l.b16 %v7447
        %v7452 = vpack.c.b16 %v7451, %v7450
        %v7454 = vsel %vm6389, %v7452, 0
        %7456 = vmatprep.subr.bf16.mxu0 0
        %7457 = vmatpush1.bf16.msra.mxu0 %v6394
        %7458 = vmatprep.subr.bf16.mxu0 0
        %7459 = vmatpush1.bf16.msra.mxu0 0
        %7460 = vmatprep.subr.bf16.mxu0 0
        %7461 = vmatpush1.bf16.msra.mxu0 0
        %7462 = vmatprep.subr.bf16.mxu0 0
        %7463 = vmatpush1.bf16.msra.mxu0 0
        %7464 = vmatprep.subr.bf16.mxu0 0
        %7465 = vmatpush1.bf16.msra.mxu0 0
        %7466 = vmatprep.subr.bf16.mxu0 0
        %7467 = vmatpush1.bf16.msra.mxu0 0
        %7468 = vmatprep.subr.bf16.mxu0 0
        %7469 = vmatpush1.bf16.msra.mxu0 0
        %7470 = vmatprep.subr.bf16.mxu0 0
        %7471 = vmatpush1.bf16.msra.mxu0 0
        %7472 = vmatprep.subr.bf16.mxu0 0
        %7473 = vmatpush1.bf16.msra.mxu0 0
        %7474 = vmatprep.subr.bf16.mxu0 0
        %7475 = vmatpush1.bf16.msra.mxu0 0
        %7476 = vmatprep.subr.bf16.mxu0 0
        %7477 = vmatpush1.bf16.msra.mxu0 0
        %7478 = vmatprep.subr.bf16.mxu0 0
        %7479 = vmatpush1.bf16.msra.mxu0 0
        %7480 = vmatprep.subr.bf16.mxu0 0
        %7481 = vmatpush1.bf16.msra.mxu0 0
        %7482 = vmatprep.subr.bf16.mxu0 0
        %7483 = vmatpush1.bf16.msra.mxu0 0
        %7484 = vmatprep.subr.bf16.mxu0 0
        %7485 = vmatpush1.bf16.msra.mxu0 0
        %7486 = vmatprep.subr.bf16.mxu0 0
        %7487 = vmatpush1.bf16.msra.mxu0 0
        %7488 = vmatprep.mubr.bf16.mxu0 0
        %7489 = vmatmul.mubr.bf16.gmra.mrb[0].mxu0 %v7454
        %v7490 = vpop.f32.mrb[0].mxu0
        %v7491 = vadd.f32 0.0, %v7490
        %v7492 = vpop.f32.mrb[0].mxu0
        %v7493 = vpop.f32.mrb[0].mxu0
        %v7494 = vadd.f32 0.0, %v7493
        %v7495 = vpop.f32.mrb[0].mxu0
        %7496 = vdwg.mxu0
        %v7497 = vpack.c.bf16 %v7494, %v7491
        %s7498 = scalar_lea.vmem %s8, 168
        %v7499 = vld [vmem:[%s7498] sm:$0xf]
        %v7500 = vld [vmem:[%s7498 + $0x4] sm:$0x1]
        %v7503 = vunpack.c.l.b16 %v7499
        %v7504 = vunpack.c.l.b16 %v7500
        %v7505 = vpack.c.b16 %v7504, %v7503
        %v7507 = vsel %vm6389, %v7505, 0
        %7509 = vmatprep.subr.bf16.mxu0 0
        %7510 = vmatpush1.bf16.msra.mxu0 %v6394
        %7511 = vmatprep.subr.bf16.mxu0 0
        %7512 = vmatpush1.bf16.msra.mxu0 0
        %7513 = vmatprep.subr.bf16.mxu0 0
        %7514 = vmatpush1.bf16.msra.mxu0 0
        %7515 = vmatprep.subr.bf16.mxu0 0
        %7516 = vmatpush1.bf16.msra.mxu0 0
        %7517 = vmatprep.subr.bf16.mxu0 0
        %7518 = vmatpush1.bf16.msra.mxu0 0
        %7519 = vmatprep.subr.bf16.mxu0 0
        %7520 = vmatpush1.bf16.msra.mxu0 0
        %7521 = vmatprep.subr.bf16.mxu0 0
        %7522 = vmatpush1.bf16.msra.mxu0 0
        %7523 = vmatprep.subr.bf16.mxu0 0
        %7524 = vmatpush1.bf16.msra.mxu0 0
        %7525 = vmatprep.subr.bf16.mxu0 0
        %7526 = vmatpush1.bf16.msra.mxu0 0
        %7527 = vmatprep.subr.bf16.mxu0 0
        %7528 = vmatpush1.bf16.msra.mxu0 0
        %7529 = vmatprep.subr.bf16.mxu0 0
        %7530 = vmatpush1.bf16.msra.mxu0 0
        %7531 = vmatprep.subr.bf16.mxu0 0
        %7532 = vmatpush1.bf16.msra.mxu0 0
        %7533 = vmatprep.subr.bf16.mxu0 0
        %7534 = vmatpush1.bf16.msra.mxu0 0
        %7535 = vmatprep.subr.bf16.mxu0 0
        %7536 = vmatpush1.bf16.msra.mxu0 0
        %7537 = vmatprep.subr.bf16.mxu0 0
        %7538 = vmatpush1.bf16.msra.mxu0 0
        %7539 = vmatprep.subr.bf16.mxu0 0
        %7540 = vmatpush1.bf16.msra.mxu0 0
        %7541 = vmatprep.mubr.bf16.mxu0 0
        %7542 = vmatmul.mubr.bf16.gmra.mrb[0].mxu0 %v7507
        %v7543 = vpop.f32.mrb[0].mxu0
        %v7544 = vadd.f32 0.0, %v7543
        %v7545 = vpop.f32.mrb[0].mxu0
        %v7546 = vpop.f32.mrb[0].mxu0
        %v7547 = vadd.f32 0.0, %v7546
        %v7548 = vpop.f32.mrb[0].mxu0
        %7549 = vdwg.mxu0
        %v7550 = vpack.c.bf16 %v7547, %v7544
        %s7551 = scalar_lea.vmem %s8, 176
        %v7552 = vld [vmem:[%s7551] sm:$0xf]
        %v7553 = vld [vmem:[%s7551 + $0x4] sm:$0x1]
        %v7556 = vunpack.c.l.b16 %v7552
        %v7557 = vunpack.c.l.b16 %v7553
        %v7558 = vpack.c.b16 %v7557, %v7556
        %v7560 = vsel %vm6389, %v7558, 0
        %7562 = vmatprep.subr.bf16.mxu0 0
        %7563 = vmatpush1.bf16.msra.mxu0 %v6394
        %7564 = vmatprep.subr.bf16.mxu0 0
        %7565 = vmatpush1.bf16.msra.mxu0 0
        %7566 = vmatprep.subr.bf16.mxu0 0
        %7567 = vmatpush1.bf16.msra.mxu0 0
        %7568 = vmatprep.subr.bf16.mxu0 0
        %7569 = vmatpush1.bf16.msra.mxu0 0
        %7570 = vmatprep.subr.bf16.mxu0 0
        %7571 = vmatpush1.bf16.msra.mxu0 0
        %7572 = vmatprep.subr.bf16.mxu0 0
        %7573 = vmatpush1.bf16.msra.mxu0 0
        %7574 = vmatprep.subr.bf16.mxu0 0
        %7575 = vmatpush1.bf16.msra.mxu0 0
        %7576 = vmatprep.subr.bf16.mxu0 0
        %7577 = vmatpush1.bf16.msra.mxu0 0
        %7578 = vmatprep.subr.bf16.mxu0 0
        %7579 = vmatpush1.bf16.msra.mxu0 0
        %7580 = vmatprep.subr.bf16.mxu0 0
        %7581 = vmatpush1.bf16.msra.mxu0 0
        %7582 = vmatprep.subr.bf16.mxu0 0
        %7583 = vmatpush1.bf16.msra.mxu0 0
        %7584 = vmatprep.subr.bf16.mxu0 0
        %7585 = vmatpush1.bf16.msra.mxu0 0
        %7586 = vmatprep.subr.bf16.mxu0 0
        %7587 = vmatpush1.bf16.msra.mxu0 0
        %7588 = vmatprep.subr.bf16.mxu0 0
        %7589 = vmatpush1.bf16.msra.mxu0 0
        %7590 = vmatprep.subr.bf16.mxu0 0
        %7591 = vmatpush1.bf16.msra.mxu0 0
        %7592 = vmatprep.subr.bf16.mxu0 0
        %7593 = vmatpush1.bf16.msra.mxu0 0
        %7594 = vmatprep.mubr.bf16.mxu0 0
        %7595 = vmatmul.mubr.bf16.gmra.mrb[0].mxu0 %v7560
        %v7596 = vpop.f32.mrb[0].mxu0
        %v7597 = vadd.f32 0.0, %v7596
        %v7598 = vpop.f32.mrb[0].mxu0
        %v7599 = vpop.f32.mrb[0].mxu0
        %v7600 = vadd.f32 0.0, %v7599
        %v7601 = vpop.f32.mrb[0].mxu0
        %7602 = vdwg.mxu0
        %v7603 = vpack.c.bf16 %v7600, %v7597
        %s7604 = scalar_lea.vmem %s8, 184
        %v7605 = vld [vmem:[%s7604] sm:$0xf]
        %v7606 = vld [vmem:[%s7604 + $0x4] sm:$0x1]
        %v7609 = vunpack.c.l.b16 %v7605
        %v7610 = vunpack.c.l.b16 %v7606
        %v7611 = vpack.c.b16 %v7610, %v7609
        %v7613 = vsel %vm6389, %v7611, 0
        %7615 = vmatprep.subr.bf16.mxu0 0
        %7616 = vmatpush1.bf16.msra.mxu0 %v6394
        %7617 = vmatprep.subr.bf16.mxu0 0
        %7618 = vmatpush1.bf16.msra.mxu0 0
        %7619 = vmatprep.subr.bf16.mxu0 0
        %7620 = vmatpush1.bf16.msra.mxu0 0
        %7621 = vmatprep.subr.bf16.mxu0 0
        %7622 = vmatpush1.bf16.msra.mxu0 0
        %7623 = vmatprep.subr.bf16.mxu0 0
        %7624 = vmatpush1.bf16.msra.mxu0 0
        %7625 = vmatprep.subr.bf16.mxu0 0
        %7626 = vmatpush1.bf16.msra.mxu0 0
        %7627 = vmatprep.subr.bf16.mxu0 0
        %7628 = vmatpush1.bf16.msra.mxu0 0
        %7629 = vmatprep.subr.bf16.mxu0 0
        %7630 = vmatpush1.bf16.msra.mxu0 0
        %7631 = vmatprep.subr.bf16.mxu0 0
        %7632 = vmatpush1.bf16.msra.mxu0 0
        %7633 = vmatprep.subr.bf16.mxu0 0
        %7634 = vmatpush1.bf16.msra.mxu0 0
        %7635 = vmatprep.subr.bf16.mxu0 0
        %7636 = vmatpush1.bf16.msra.mxu0 0
        %7637 = vmatprep.subr.bf16.mxu0 0
        %7638 = vmatpush1.bf16.msra.mxu0 0
        %7639 = vmatprep.subr.bf16.mxu0 0
        %7640 = vmatpush1.bf16.msra.mxu0 0
        %7641 = vmatprep.subr.bf16.mxu0 0
        %7642 = vmatpush1.bf16.msra.mxu0 0
        %7643 = vmatprep.subr.bf16.mxu0 0
        %7644 = vmatpush1.bf16.msra.mxu0 0
        %7645 = vmatprep.subr.bf16.mxu0 0
        %7646 = vmatpush1.bf16.msra.mxu0 0
        %7647 = vmatprep.mubr.bf16.mxu0 0
        %7648 = vmatmul.mubr.bf16.gmra.mrb[0].mxu0 %v7613
        %v7649 = vpop.f32.mrb[0].mxu0
        %v7650 = vadd.f32 0.0, %v7649
        %v7651 = vpop.f32.mrb[0].mxu0
        %v7652 = vpop.f32.mrb[0].mxu0
        %v7653 = vadd.f32 0.0, %v7652
        %v7654 = vpop.f32.mrb[0].mxu0
        %7655 = vdwg.mxu0
        %v7656 = vpack.c.bf16 %v7653, %v7650
        %s7657 = scalar_lea.vmem %s8, 192
        %v7658 = vld [vmem:[%s7657] sm:$0xf]
        %v7659 = vld [vmem:[%s7657 + $0x4] sm:$0x1]
        %v7662 = vunpack.c.l.b16 %v7658
        %v7663 = vunpack.c.l.b16 %v7659
        %v7664 = vpack.c.b16 %v7663, %v7662
        %v7666 = vsel %vm6389, %v7664, 0
        %7668 = vmatprep.subr.bf16.mxu0 0
        %7669 = vmatpush1.bf16.msra.mxu0 %v6394
        %7670 = vmatprep.subr.bf16.mxu0 0
        %7671 = vmatpush1.bf16.msra.mxu0 0
        %7672 = vmatprep.subr.bf16.mxu0 0
        %7673 = vmatpush1.bf16.msra.mxu0 0
        %7674 = vmatprep.subr.bf16.mxu0 0
        %7675 = vmatpush1.bf16.msra.mxu0 0
        %7676 = vmatprep.subr.bf16.mxu0 0
        %7677 = vmatpush1.bf16.msra.mxu0 0
        %7678 = vmatprep.subr.bf16.mxu0 0
        %7679 = vmatpush1.bf16.msra.mxu0 0
        %7680 = vmatprep.subr.bf16.mxu0 0
        %7681 = vmatpush1.bf16.msra.mxu0 0
        %7682 = vmatprep.subr.bf16.mxu0 0
        %7683 = vmatpush1.bf16.msra.mxu0 0
        %7684 = vmatprep.subr.bf16.mxu0 0
        %7685 = vmatpush1.bf16.msra.mxu0 0
        %7686 = vmatprep.subr.bf16.mxu0 0
        %7687 = vmatpush1.bf16.msra.mxu0 0
        %7688 = vmatprep.subr.bf16.mxu0 0
        %7689 = vmatpush1.bf16.msra.mxu0 0
        %7690 = vmatprep.subr.bf16.mxu0 0
        %7691 = vmatpush1.bf16.msra.mxu0 0
        %7692 = vmatprep.subr.bf16.mxu0 0
        %7693 = vmatpush1.bf16.msra.mxu0 0
        %7694 = vmatprep.subr.bf16.mxu0 0
        %7695 = vmatpush1.bf16.msra.mxu0 0
        %7696 = vmatprep.subr.bf16.mxu0 0
        %7697 = vmatpush1.bf16.msra.mxu0 0
        %7698 = vmatprep.subr.bf16.mxu0 0
        %7699 = vmatpush1.bf16.msra.mxu0 0
        %7700 = vmatprep.mubr.bf16.mxu0 0
        %7701 = vmatmul.mubr.bf16.gmra.mrb[0].mxu0 %v7666
        %v7702 = vpop.f32.mrb[0].mxu0
        %v7703 = vadd.f32 0.0, %v7702
        %v7704 = vpop.f32.mrb[0].mxu0
        %v7705 = vpop.f32.mrb[0].mxu0
        %v7706 = vadd.f32 0.0, %v7705
        %v7707 = vpop.f32.mrb[0].mxu0
        %7708 = vdwg.mxu0
        %v7709 = vpack.c.bf16 %v7706, %v7703
        %v7710 = vld [vmem:[%s4] sm:$0xf]
        %v7711 = vld [vmem:[%s4 + $0x4] sm:$0xf]
        %v7712 = vld [vmem:[%s4 + $0x8] sm:$0xf]
        %v7713 = vld [vmem:[%s4 + $0xc] sm:$0xf]
        %v7714 = vld [vmem:[%s4 + $0x10] sm:$0xf]
        %v7715 = vld [vmem:[%s4 + $0x14] sm:$0xf]
        %v7716 = vld [vmem:[%s4 + $0x18] sm:$0xf]
        %v7717 = vld [vmem:[%s4 + $0x1c] sm:$0xf]
        %v7718 = vld [vmem:[%s4 + $0x20] sm:$0xf]
        %v7719 = vld [vmem:[%s4 + $0x24] sm:$0xf]
        %v7720 = vld [vmem:[%s4 + $0x28] sm:$0xf]
        %v7721 = vld [vmem:[%s4 + $0x2c] sm:$0xf]
        %v7722 = vld [vmem:[%s4 + $0x30] sm:$0xf]
        %v7723 = vld [vmem:[%s4 + $0x34] sm:$0xf]
        %v7724 = vld [vmem:[%s4 + $0x38] sm:$0xf]
        %v7725 = vld [vmem:[%s4 + $0x3c] sm:$0xf]
        %v7726 = vld [vmem:[%s4 + $0x40] sm:$0xf]
        %v7727 = vld [vmem:[%s4 + $0x44] sm:$0xf]
        %v7728 = vld [vmem:[%s4 + $0x48] sm:$0xf]
        %v7729 = vld [vmem:[%s4 + $0x4c] sm:$0xf]
        %v7730 = vld [vmem:[%s4 + $0x50] sm:$0xf]
        %v7731 = vld [vmem:[%s4 + $0x54] sm:$0xf]
        %v7732 = vld [vmem:[%s4 + $0x58] sm:$0xf]
        %v7733 = vld [vmem:[%s4 + $0x5c] sm:$0xf]
        %v7734 = vld [vmem:[%s4 + $0x60] sm:$0xf]
        %v7735 = vld [vmem:[%s4 + $0x64] sm:$0xf]
        %v7736 = vld [vmem:[%s4 + $0x68] sm:$0xf]
        %v7737 = vld [vmem:[%s4 + $0x6c] sm:$0xf]
        %v7738 = vld [vmem:[%s4 + $0x70] sm:$0xf]
        %v7739 = vld [vmem:[%s4 + $0x74] sm:$0xf]
        %v7740 = vld [vmem:[%s4 + $0x78] sm:$0xf]
        %v7741 = vld [vmem:[%s4 + $0x7c] sm:$0xf]
        %v7742 = vld [vmem:[%s4 + $0x80] sm:$0xf]
        %v7743 = vld [vmem:[%s4 + $0x84] sm:$0xf]
        %v7744 = vld [vmem:[%s4 + $0x88] sm:$0xf]
        %v7745 = vld [vmem:[%s4 + $0x8c] sm:$0xf]
        %v7746 = vld [vmem:[%s4 + $0x90] sm:$0xf]
        %v7747 = vld [vmem:[%s4 + $0x94] sm:$0xf]
        %v7748 = vld [vmem:[%s4 + $0x98] sm:$0xf]
        %v7749 = vld [vmem:[%s4 + $0x9c] sm:$0xf]
        %v7750 = vld [vmem:[%s4 + $0xa0] sm:$0xf]
        %v7751 = vld [vmem:[%s4 + $0xa4] sm:$0xf]
        %v7752 = vld [vmem:[%s4 + $0xa8] sm:$0xf]
        %v7753 = vld [vmem:[%s4 + $0xac] sm:$0xf]
        %v7754 = vld [vmem:[%s4 + $0xb0] sm:$0xf]
        %v7755 = vld [vmem:[%s4 + $0xb4] sm:$0xf]
        %v7756 = vld [vmem:[%s4 + $0xb8] sm:$0xf]
        %v7757 = vld [vmem:[%s4 + $0xbc] sm:$0xf]
        %v7758 = vld [vmem:[%s4 + $0xc0] sm:$0xf]
        %v7759 = vld [vmem:[%s4 + $0xc4] sm:$0xf]
        %v7760 = vld [vmem:[%s4 + $0xc8] sm:$0xf]
        %v7761 = vld [vmem:[%s4 + $0xcc] sm:$0xf]
        %v7762 = vld [vmem:[%s4 + $0xd0] sm:$0xf]
        %v7763 = vld [vmem:[%s4 + $0xd4] sm:$0xf]
        %v7764 = vld [vmem:[%s4 + $0xd8] sm:$0xf]
        %v7765 = vld [vmem:[%s4 + $0xdc] sm:$0xf]
        %v7766 = vld [vmem:[%s4 + $0xe0] sm:$0xf]
        %v7767 = vld [vmem:[%s4 + $0xe4] sm:$0xf]
        %v7768 = vld [vmem:[%s4 + $0xe8] sm:$0xf]
        %v7769 = vld [vmem:[%s4 + $0xec] sm:$0xf]
        %v7770 = vld [vmem:[%s4 + $0xf0] sm:$0xf]
        %v7771 = vld [vmem:[%s4 + $0xf4] sm:$0xf]
        %v7772 = vld [vmem:[%s4 + $0xf8] sm:$0xf]
        %v7773 = vld [vmem:[%s4 + $0xfc] sm:$0xf]
        %v7774 = vld [vmem:[%s4 + $0x100] sm:$0xf]
        %v7775 = vld [vmem:[%s4 + $0x104] sm:$0xf]
        %v7776 = vld [vmem:[%s4 + $0x108] sm:$0xf]
        %v7777 = vld [vmem:[%s4 + $0x10c] sm:$0xf]
        %v7778 = vld [vmem:[%s4 + $0x110] sm:$0xf]
        %v7779 = vld [vmem:[%s4 + $0x114] sm:$0xf]
        %v7780 = vld [vmem:[%s4 + $0x118] sm:$0xf]
        %v7781 = vld [vmem:[%s4 + $0x11c] sm:$0xf]
        %v7782 = vld [vmem:[%s4 + $0x120] sm:$0xf]
        %v7783 = vld [vmem:[%s4 + $0x124] sm:$0xf]
        %v7784 = vld [vmem:[%s4 + $0x128] sm:$0xf]
        %v7785 = vld [vmem:[%s4 + $0x12c] sm:$0xf]
        %v7786 = vld [vmem:[%s4 + $0x130] sm:$0xf]
        %v7787 = vld [vmem:[%s4 + $0x134] sm:$0xf]
        %v7788 = vld [vmem:[%s4 + $0x138] sm:$0xf]
        %v7789 = vld [vmem:[%s4 + $0x13c] sm:$0xf]
        %v7790 = vld [vmem:[%s4 + $0x140] sm:$0xf]
        %v7791 = vld [vmem:[%s4 + $0x144] sm:$0xf]
        %v7792 = vld [vmem:[%s4 + $0x148] sm:$0xf]
        %v7793 = vld [vmem:[%s4 + $0x14c] sm:$0xf]
        %v7794 = vld [vmem:[%s4 + $0x150] sm:$0xf]
        %v7795 = vld [vmem:[%s4 + $0x154] sm:$0xf]
        %v7796 = vld [vmem:[%s4 + $0x158] sm:$0xf]
        %v7797 = vld [vmem:[%s4 + $0x15c] sm:$0xf]
        %v7798 = vld [vmem:[%s4 + $0x160] sm:$0xf]
        %v7799 = vld [vmem:[%s4 + $0x164] sm:$0xf]
        %v7800 = vld [vmem:[%s4 + $0x168] sm:$0xf]
        %v7801 = vld [vmem:[%s4 + $0x16c] sm:$0xf]
        %v7802 = vld [vmem:[%s4 + $0x170] sm:$0xf]
        %v7803 = vld [vmem:[%s4 + $0x174] sm:$0xf]
        %v7804 = vld [vmem:[%s4 + $0x178] sm:$0xf]
        %v7805 = vld [vmem:[%s4 + $0x17c] sm:$0xf]
        %v7806 = vld [vmem:[%s4 + $0x180] sm:$0xf]
        %v7807 = vld [vmem:[%s4 + $0x184] sm:$0xf]
        %v7808 = vld [vmem:[%s4 + $0x188] sm:$0xf]
        %v7809 = vld [vmem:[%s4 + $0x18c] sm:$0xf]
        %v7810 = vld [vmem:[%s4 + $0x190] sm:$0xf]
        %v7811 = vld [vmem:[%s4 + $0x194] sm:$0xf]
        %v7812 = vld [vmem:[%s4 + $0x198] sm:$0xf]
        %v7813 = vld [vmem:[%s4 + $0x19c] sm:$0xf]
        %v7814 = vld [vmem:[%s4 + $0x1a0] sm:$0xf]
        %v7815 = vld [vmem:[%s4 + $0x1a4] sm:$0xf]
        %v7816 = vld [vmem:[%s4 + $0x1a8] sm:$0xf]
        %v7817 = vld [vmem:[%s4 + $0x1ac] sm:$0xf]
        %v7818 = vld [vmem:[%s4 + $0x1b0] sm:$0xf]
        %v7819 = vld [vmem:[%s4 + $0x1b4] sm:$0xf]
        %v7820 = vld [vmem:[%s4 + $0x1b8] sm:$0xf]
        %v7821 = vld [vmem:[%s4 + $0x1bc] sm:$0xf]
        %v7822 = vld [vmem:[%s4 + $0x1c0] sm:$0xf]
        %v7823 = vld [vmem:[%s4 + $0x1c4] sm:$0xf]
        %v7824 = vld [vmem:[%s4 + $0x1c8] sm:$0xf]
        %v7825 = vld [vmem:[%s4 + $0x1cc] sm:$0xf]
        %v7826 = vld [vmem:[%s4 + $0x1d0] sm:$0xf]
        %v7827 = vld [vmem:[%s4 + $0x1d4] sm:$0xf]
        %v7828 = vld [vmem:[%s4 + $0x1d8] sm:$0xf]
        %v7829 = vld [vmem:[%s4 + $0x1dc] sm:$0xf]
        %v7830 = vld [vmem:[%s4 + $0x1e0] sm:$0xf]
        %v7831 = vld [vmem:[%s4 + $0x1e4] sm:$0xf]
        %v7832 = vld [vmem:[%s4 + $0x1e8] sm:$0xf]
        %v7833 = vld [vmem:[%s4 + $0x1ec] sm:$0xf]
        %v7834 = vld [vmem:[%s4 + $0x1f0] sm:$0xf]
        %v7835 = vld [vmem:[%s4 + $0x1f4] sm:$0xf]
        %v7836 = vld [vmem:[%s4 + $0x1f8] sm:$0xf]
        %v7837 = vld [vmem:[%s4 + $0x1fc] sm:$0xf]
        %v7838 = vld [vmem:[%s4 + $0x200] sm:$0xf]
        %v7839 = vld [vmem:[%s4 + $0x204] sm:$0xf]
        %v7840 = vld [vmem:[%s4 + $0x208] sm:$0xf]
        %v7841 = vld [vmem:[%s4 + $0x20c] sm:$0xf]
        %v7842 = vld [vmem:[%s4 + $0x210] sm:$0xf]
        %v7843 = vld [vmem:[%s4 + $0x214] sm:$0xf]
        %v7844 = vld [vmem:[%s4 + $0x218] sm:$0xf]
        %v7845 = vld [vmem:[%s4 + $0x21c] sm:$0xf]
        %v7846 = vld [vmem:[%s4 + $0x220] sm:$0xf]
        %v7847 = vld [vmem:[%s4 + $0x224] sm:$0xf]
        %v7848 = vld [vmem:[%s4 + $0x228] sm:$0xf]
        %v7849 = vld [vmem:[%s4 + $0x22c] sm:$0xf]
        %v7850 = vld [vmem:[%s4 + $0x230] sm:$0xf]
        %v7851 = vld [vmem:[%s4 + $0x234] sm:$0xf]
        %v7852 = vld [vmem:[%s4 + $0x238] sm:$0xf]
        %v7853 = vld [vmem:[%s4 + $0x23c] sm:$0xf]
        %v7854 = vld [vmem:[%s4 + $0x240] sm:$0xf]
        %v7855 = vld [vmem:[%s4 + $0x244] sm:$0xf]
        %v7856 = vld [vmem:[%s4 + $0x248] sm:$0xf]
        %v7857 = vld [vmem:[%s4 + $0x24c] sm:$0xf]
        %v7858 = vld [vmem:[%s4 + $0x250] sm:$0xf]
        %v7859 = vld [vmem:[%s4 + $0x254] sm:$0xf]
        %v7860 = vld [vmem:[%s4 + $0x258] sm:$0xf]
        %v7861 = vld [vmem:[%s4 + $0x25c] sm:$0xf]
        %v7862 = vld [vmem:[%s4 + $0x260] sm:$0xf]
        %v7863 = vld [vmem:[%s4 + $0x264] sm:$0xf]
        %v7864 = vld [vmem:[%s4 + $0x268] sm:$0xf]
        %v7865 = vld [vmem:[%s4 + $0x26c] sm:$0xf]
        %v7866 = vld [vmem:[%s4 + $0x270] sm:$0xf]
        %v7867 = vld [vmem:[%s4 + $0x274] sm:$0xf]
        %v7868 = vld [vmem:[%s4 + $0x278] sm:$0xf]
        %v7869 = vld [vmem:[%s4 + $0x27c] sm:$0xf]
        %v7870 = vld [vmem:[%s4 + $0x280] sm:$0xf]
        %v7871 = vld [vmem:[%s4 + $0x284] sm:$0xf]
        %v7872 = vld [vmem:[%s4 + $0x288] sm:$0xf]
        %v7873 = vld [vmem:[%s4 + $0x28c] sm:$0xf]
        %v7874 = vld [vmem:[%s4 + $0x290] sm:$0xf]
        %v7875 = vld [vmem:[%s4 + $0x294] sm:$0xf]
        %v7876 = vld [vmem:[%s4 + $0x298] sm:$0xf]
        %v7877 = vld [vmem:[%s4 + $0x29c] sm:$0xf]
        %v7878 = vld [vmem:[%s4 + $0x2a0] sm:$0xf]
        %v7879 = vld [vmem:[%s4 + $0x2a4] sm:$0xf]
        %v7880 = vld [vmem:[%s4 + $0x2a8] sm:$0xf]
        %v7881 = vld [vmem:[%s4 + $0x2ac] sm:$0xf]
        %v7882 = vld [vmem:[%s4 + $0x2b0] sm:$0xf]
        %v7883 = vld [vmem:[%s4 + $0x2b4] sm:$0xf]
        %v7884 = vld [vmem:[%s4 + $0x2b8] sm:$0xf]
        %v7885 = vld [vmem:[%s4 + $0x2bc] sm:$0xf]
        %v7886 = vld [vmem:[%s4 + $0x2c0] sm:$0xf]
        %v7887 = vld [vmem:[%s4 + $0x2c4] sm:$0xf]
        %v7888 = vld [vmem:[%s4 + $0x2c8] sm:$0xf]
        %v7889 = vld [vmem:[%s4 + $0x2cc] sm:$0xf]
        %v7890 = vld [vmem:[%s4 + $0x2d0] sm:$0xf]
        %v7891 = vld [vmem:[%s4 + $0x2d4] sm:$0xf]
        %v7892 = vld [vmem:[%s4 + $0x2d8] sm:$0xf]
        %v7893 = vld [vmem:[%s4 + $0x2dc] sm:$0xf]
        %v7894 = vld [vmem:[%s4 + $0x2e0] sm:$0xf]
        %v7895 = vld [vmem:[%s4 + $0x2e4] sm:$0xf]
        %v7896 = vld [vmem:[%s4 + $0x2e8] sm:$0xf]
        %v7897 = vld [vmem:[%s4 + $0x2ec] sm:$0xf]
        %v7898 = vld [vmem:[%s4 + $0x2f0] sm:$0xf]
        %v7899 = vld [vmem:[%s4 + $0x2f4] sm:$0xf]
        %v7900 = vld [vmem:[%s4 + $0x2f8] sm:$0xf]
        %v7901 = vld [vmem:[%s4 + $0x2fc] sm:$0xf]
        %v7902 = vld [vmem:[%s4 + $0x300] sm:$0xf]
        %v7903 = vld [vmem:[%s4 + $0x304] sm:$0xf]
        %v7904 = vld [vmem:[%s4 + $0x308] sm:$0xf]
        %v7905 = vld [vmem:[%s4 + $0x30c] sm:$0xf]
        %v7906 = vld [vmem:[%s4 + $0x310] sm:$0xf]
        %v7907 = vld [vmem:[%s4 + $0x314] sm:$0xf]
        %v7908 = vld [vmem:[%s4 + $0x318] sm:$0xf]
        %v7909 = vld [vmem:[%s4 + $0x31c] sm:$0xf]
        %v7910 = vld [vmem:[%s4 + $0x320] sm:$0xf]
        %v7911 = vld [vmem:[%s4 + $0x324] sm:$0xf]
        %v7912 = vld [vmem:[%s4 + $0x328] sm:$0xf]
        %v7913 = vld [vmem:[%s4 + $0x32c] sm:$0xf]
        %v7914 = vld [vmem:[%s4 + $0x330] sm:$0xf]
        %v7915 = vld [vmem:[%s4 + $0x334] sm:$0xf]
        %v7916 = vld [vmem:[%s4 + $0x338] sm:$0xf]
        %v7917 = vld [vmem:[%s4 + $0x33c] sm:$0xf]
        %v7918 = vld [vmem:[%s4 + $0x340] sm:$0xf]
        %v7919 = vld [vmem:[%s4 + $0x344] sm:$0xf]
        %v7920 = vld [vmem:[%s4 + $0x348] sm:$0xf]
        %v7921 = vld [vmem:[%s4 + $0x34c] sm:$0xf]
        %v7922 = vld [vmem:[%s4 + $0x350] sm:$0xf]
        %v7923 = vld [vmem:[%s4 + $0x354] sm:$0xf]
        %v7924 = vld [vmem:[%s4 + $0x358] sm:$0xf]
        %v7925 = vld [vmem:[%s4 + $0x35c] sm:$0xf]
        %v7926 = vld [vmem:[%s4 + $0x360] sm:$0xf]
        %v7927 = vld [vmem:[%s4 + $0x364] sm:$0xf]
        %v7928 = vld [vmem:[%s4 + $0x368] sm:$0xf]
        %v7929 = vld [vmem:[%s4 + $0x36c] sm:$0xf]
        %v7930 = vld [vmem:[%s4 + $0x370] sm:$0xf]
        %v7931 = vld [vmem:[%s4 + $0x374] sm:$0xf]
        %v7932 = vld [vmem:[%s4 + $0x378] sm:$0xf]
        %v7933 = vld [vmem:[%s4 + $0x37c] sm:$0xf]
        %v7934 = vld [vmem:[%s4 + $0x380] sm:$0xf]
        %v7935 = vld [vmem:[%s4 + $0x384] sm:$0xf]
        %v7936 = vld [vmem:[%s4 + $0x388] sm:$0xf]
        %v7937 = vld [vmem:[%s4 + $0x38c] sm:$0xf]
        %v7938 = vld [vmem:[%s4 + $0x390] sm:$0xf]
        %v7939 = vld [vmem:[%s4 + $0x394] sm:$0xf]
        %v7940 = vld [vmem:[%s4 + $0x398] sm:$0xf]
        %v7941 = vld [vmem:[%s4 + $0x39c] sm:$0xf]
        %v7942 = vld [vmem:[%s4 + $0x3a0] sm:$0xf]
        %v7943 = vld [vmem:[%s4 + $0x3a4] sm:$0xf]
        %v7944 = vld [vmem:[%s4 + $0x3a8] sm:$0xf]
        %v7945 = vld [vmem:[%s4 + $0x3ac] sm:$0xf]
        %v7946 = vld [vmem:[%s4 + $0x3b0] sm:$0xf]
        %v7947 = vld [vmem:[%s4 + $0x3b4] sm:$0xf]
        %v7948 = vld [vmem:[%s4 + $0x3b8] sm:$0xf]
        %v7949 = vld [vmem:[%s4 + $0x3bc] sm:$0xf]
        %v7950 = vld [vmem:[%s4 + $0x3c0] sm:$0xf]
        %v7951 = vld [vmem:[%s4 + $0x3c4] sm:$0xf]
        %v7952 = vld [vmem:[%s4 + $0x3c8] sm:$0xf]
        %v7953 = vld [vmem:[%s4 + $0x3cc] sm:$0xf]
        %v7954 = vld [vmem:[%s4 + $0x3d0] sm:$0xf]
        %v7955 = vld [vmem:[%s4 + $0x3d4] sm:$0xf]
        %v7956 = vld [vmem:[%s4 + $0x3d8] sm:$0xf]
        %v7957 = vld [vmem:[%s4 + $0x3dc] sm:$0xf]
        %v7958 = vld [vmem:[%s4 + $0x3e0] sm:$0xf]
        %v7959 = vld [vmem:[%s4 + $0x3e4] sm:$0xf]
        %v7960 = vld [vmem:[%s4 + $0x3e8] sm:$0xf]
        %v7961 = vld [vmem:[%s4 + $0x3ec] sm:$0xf]
        %v7962 = vld [vmem:[%s4 + $0x3f0] sm:$0xf]
        %v7963 = vld [vmem:[%s4 + $0x3f4] sm:$0xf]
        %v7964 = vld [vmem:[%s4 + $0x3f8] sm:$0xf]
        %v7965 = vld [vmem:[%s4 + $0x3fc] sm:$0xf]
        %v7966 = vld [vmem:[%s4 + $0x400] sm:$0xf]
        %v7967 = vld [vmem:[%s4 + $0x404] sm:$0xf]
        %v7968 = vld [vmem:[%s4 + $0x408] sm:$0xf]
        %v7969 = vld [vmem:[%s4 + $0x40c] sm:$0xf]
        %v7970 = vld [vmem:[%s4 + $0x410] sm:$0xf]
        %v7971 = vld [vmem:[%s4 + $0x414] sm:$0xf]
        %v7972 = vld [vmem:[%s4 + $0x418] sm:$0xf]
        %v7973 = vld [vmem:[%s4 + $0x41c] sm:$0xf]
        %v7974 = vld [vmem:[%s4 + $0x420] sm:$0xf]
        %v7975 = vld [vmem:[%s4 + $0x424] sm:$0xf]
        %v7976 = vld [vmem:[%s4 + $0x428] sm:$0xf]
        %v7977 = vld [vmem:[%s4 + $0x42c] sm:$0xf]
        %v7978 = vld [vmem:[%s4 + $0x430] sm:$0xf]
        %v7979 = vld [vmem:[%s4 + $0x434] sm:$0xf]
        %v7980 = vld [vmem:[%s4 + $0x438] sm:$0xf]
        %v7981 = vld [vmem:[%s4 + $0x43c] sm:$0xf]
        %v7982 = vld [vmem:[%s4 + $0x440] sm:$0xf]
        %v7983 = vld [vmem:[%s4 + $0x444] sm:$0xf]
        %v7984 = vld [vmem:[%s4 + $0x448] sm:$0xf]
        %v7985 = vld [vmem:[%s4 + $0x44c] sm:$0xf]
        %v7986 = vld [vmem:[%s4 + $0x450] sm:$0xf]
        %v7987 = vld [vmem:[%s4 + $0x454] sm:$0xf]
        %v7988 = vld [vmem:[%s4 + $0x458] sm:$0xf]
        %v7989 = vld [vmem:[%s4 + $0x45c] sm:$0xf]
        %v7990 = vld [vmem:[%s4 + $0x460] sm:$0xf]
        %v7991 = vld [vmem:[%s4 + $0x464] sm:$0xf]
        %v7992 = vld [vmem:[%s4 + $0x468] sm:$0xf]
        %v7993 = vld [vmem:[%s4 + $0x46c] sm:$0xf]
        %v7994 = vld [vmem:[%s4 + $0x470] sm:$0xf]
        %v7995 = vld [vmem:[%s4 + $0x474] sm:$0xf]
        %v7996 = vld [vmem:[%s4 + $0x478] sm:$0xf]
        %v7997 = vld [vmem:[%s4 + $0x47c] sm:$0xf]
        %v7998 = vld [vmem:[%s4 + $0x480] sm:$0xf]
        %v7999 = vld [vmem:[%s4 + $0x484] sm:$0xf]
        %v8000 = vld [vmem:[%s4 + $0x488] sm:$0xf]
        %v8001 = vld [vmem:[%s4 + $0x48c] sm:$0xf]
        %v8002 = vld [vmem:[%s4 + $0x490] sm:$0xf]
        %v8003 = vld [vmem:[%s4 + $0x494] sm:$0xf]
        %v8004 = vld [vmem:[%s4 + $0x498] sm:$0xf]
        %v8005 = vld [vmem:[%s4 + $0x49c] sm:$0xf]
        %v8006 = vld [vmem:[%s4 + $0x4a0] sm:$0xf]
        %v8007 = vld [vmem:[%s4 + $0x4a4] sm:$0xf]
        %v8008 = vld [vmem:[%s4 + $0x4a8] sm:$0xf]
        %v8009 = vld [vmem:[%s4 + $0x4ac] sm:$0xf]
        %v8010 = vld [vmem:[%s4 + $0x4b0] sm:$0xf]
        %v8011 = vld [vmem:[%s4 + $0x4b4] sm:$0xf]
        %v8012 = vld [vmem:[%s4 + $0x4b8] sm:$0xf]
        %v8013 = vld [vmem:[%s4 + $0x4bc] sm:$0xf]
        %v8014 = vld [vmem:[%s4 + $0x4c0] sm:$0xf]
        %v8015 = vld [vmem:[%s4 + $0x4c4] sm:$0xf]
        %v8016 = vld [vmem:[%s4 + $0x4c8] sm:$0xf]
        %v8017 = vld [vmem:[%s4 + $0x4cc] sm:$0xf]
        %v8018 = vld [vmem:[%s4 + $0x4d0] sm:$0xf]
        %v8019 = vld [vmem:[%s4 + $0x4d4] sm:$0xf]
        %v8020 = vld [vmem:[%s4 + $0x4d8] sm:$0xf]
        %v8021 = vld [vmem:[%s4 + $0x4dc] sm:$0xf]
        %v8022 = vld [vmem:[%s4 + $0x4e0] sm:$0xf]
        %v8023 = vld [vmem:[%s4 + $0x4e4] sm:$0xf]
        %v8024 = vld [vmem:[%s4 + $0x4e8] sm:$0xf]
        %v8025 = vld [vmem:[%s4 + $0x4ec] sm:$0xf]
        %v8026 = vld [vmem:[%s4 + $0x4f0] sm:$0xf]
        %v8027 = vld [vmem:[%s4 + $0x4f4] sm:$0xf]
        %v8028 = vld [vmem:[%s4 + $0x4f8] sm:$0xf]
        %v8029 = vld [vmem:[%s4 + $0x4fc] sm:$0xf]
        %v8030 = vld [vmem:[%s4 + $0x500] sm:$0xf]
        %v8031 = vld [vmem:[%s4 + $0x504] sm:$0xf]
        %v8032 = vld [vmem:[%s4 + $0x508] sm:$0xf]
        %v8033 = vld [vmem:[%s4 + $0x50c] sm:$0xf]
        %v8034 = vld [vmem:[%s4 + $0x510] sm:$0xf]
        %v8035 = vld [vmem:[%s4 + $0x514] sm:$0xf]
        %v8036 = vld [vmem:[%s4 + $0x518] sm:$0xf]
        %v8037 = vld [vmem:[%s4 + $0x51c] sm:$0xf]
        %v8038 = vld [vmem:[%s4 + $0x520] sm:$0xf]
        %v8039 = vld [vmem:[%s4 + $0x524] sm:$0xf]
        %v8040 = vld [vmem:[%s4 + $0x528] sm:$0xf]
        %v8041 = vld [vmem:[%s4 + $0x52c] sm:$0xf]
        %v8042 = vld [vmem:[%s4 + $0x530] sm:$0xf]
        %v8043 = vld [vmem:[%s4 + $0x534] sm:$0xf]
        %v8044 = vld [vmem:[%s4 + $0x538] sm:$0xf]
        %v8045 = vld [vmem:[%s4 + $0x53c] sm:$0xf]
        %v8046 = vld [vmem:[%s4 + $0x540] sm:$0xf]
        %v8047 = vld [vmem:[%s4 + $0x544] sm:$0xf]
        %v8048 = vld [vmem:[%s4 + $0x548] sm:$0xf]
        %v8049 = vld [vmem:[%s4 + $0x54c] sm:$0xf]
        %v8050 = vld [vmem:[%s4 + $0x550] sm:$0xf]
        %v8051 = vld [vmem:[%s4 + $0x554] sm:$0xf]
        %v8052 = vld [vmem:[%s4 + $0x558] sm:$0xf]
        %v8053 = vld [vmem:[%s4 + $0x55c] sm:$0xf]
        %v8054 = vld [vmem:[%s4 + $0x560] sm:$0xf]
        %v8055 = vld [vmem:[%s4 + $0x564] sm:$0xf]
        %v8056 = vld [vmem:[%s4 + $0x568] sm:$0xf]
        %v8057 = vld [vmem:[%s4 + $0x56c] sm:$0xf]
        %v8058 = vld [vmem:[%s4 + $0x570] sm:$0xf]
        %v8059 = vld [vmem:[%s4 + $0x574] sm:$0xf]
        %v8060 = vld [vmem:[%s4 + $0x578] sm:$0xf]
        %v8061 = vld [vmem:[%s4 + $0x57c] sm:$0xf]
        %v8062 = vld [vmem:[%s4 + $0x580] sm:$0xf]
        %v8063 = vld [vmem:[%s4 + $0x584] sm:$0xf]
        %v8064 = vld [vmem:[%s4 + $0x588] sm:$0xf]
        %v8065 = vld [vmem:[%s4 + $0x58c] sm:$0xf]
        %v8066 = vld [vmem:[%s4 + $0x590] sm:$0xf]
        %v8067 = vld [vmem:[%s4 + $0x594] sm:$0xf]
        %v8068 = vld [vmem:[%s4 + $0x598] sm:$0xf]
        %v8069 = vld [vmem:[%s4 + $0x59c] sm:$0xf]
        %v8070 = vld [vmem:[%s4 + $0x5a0] sm:$0xf]
        %v8071 = vld [vmem:[%s4 + $0x5a4] sm:$0xf]
        %v8072 = vld [vmem:[%s4 + $0x5a8] sm:$0xf]
        %v8073 = vld [vmem:[%s4 + $0x5ac] sm:$0xf]
        %v8074 = vld [vmem:[%s4 + $0x5b0] sm:$0xf]
        %v8075 = vld [vmem:[%s4 + $0x5b4] sm:$0xf]
        %v8076 = vld [vmem:[%s4 + $0x5b8] sm:$0xf]
        %v8077 = vld [vmem:[%s4 + $0x5bc] sm:$0xf]
        %v8078 = vld [vmem:[%s4 + $0x5c0] sm:$0xf]
        %v8079 = vld [vmem:[%s4 + $0x5c4] sm:$0xf]
        %v8080 = vld [vmem:[%s4 + $0x5c8] sm:$0xf]
        %v8081 = vld [vmem:[%s4 + $0x5cc] sm:$0xf]
        %v8082 = vld [vmem:[%s4 + $0x5d0] sm:$0xf]
        %v8083 = vld [vmem:[%s4 + $0x5d4] sm:$0xf]
        %v8084 = vld [vmem:[%s4 + $0x5d8] sm:$0xf]
        %v8085 = vld [vmem:[%s4 + $0x5dc] sm:$0xf]
        %v8086 = vld [vmem:[%s4 + $0x5e0] sm:$0xf]
        %v8087 = vld [vmem:[%s4 + $0x5e4] sm:$0xf]
        %v8088 = vld [vmem:[%s4 + $0x5e8] sm:$0xf]
        %v8089 = vld [vmem:[%s4 + $0x5ec] sm:$0xf]
        %v8090 = vld [vmem:[%s4 + $0x5f0] sm:$0xf]
        %v8091 = vld [vmem:[%s4 + $0x5f4] sm:$0xf]
        %v8092 = vld [vmem:[%s4 + $0x5f8] sm:$0xf]
        %v8093 = vld [vmem:[%s4 + $0x5fc] sm:$0xf]
        %v8094 = vld [vmem:[%s4 + $0x600] sm:$0xf]
        %v8095 = vld [vmem:[%s4 + $0x604] sm:$0xf]
        %v8096 = vld [vmem:[%s4 + $0x608] sm:$0xf]
        %v8097 = vld [vmem:[%s4 + $0x60c] sm:$0xf]
        %v8098 = vld [vmem:[%s4 + $0x610] sm:$0xf]
        %v8099 = vld [vmem:[%s4 + $0x614] sm:$0xf]
        %v8100 = vld [vmem:[%s4 + $0x618] sm:$0xf]
        %v8101 = vld [vmem:[%s4 + $0x61c] sm:$0xf]
        %v8102 = vld [vmem:[%s4 + $0x620] sm:$0xf]
        %v8103 = vld [vmem:[%s4 + $0x624] sm:$0xf]
        %v8104 = vld [vmem:[%s4 + $0x628] sm:$0xf]
        %v8105 = vld [vmem:[%s4 + $0x62c] sm:$0xf]
        %v8106 = vld [vmem:[%s4 + $0x630] sm:$0xf]
        %v8107 = vld [vmem:[%s4 + $0x634] sm:$0xf]
        %v8108 = vld [vmem:[%s4 + $0x638] sm:$0xf]
        %v8109 = vld [vmem:[%s4 + $0x63c] sm:$0xf]
        %s8110 = scalar_lea.vmem %s2, 6
        %v8111 = vld [vmem:[%s8110] sm:$0x1]
        %v8113 = vlaneseq
        %v8114 = vshrl.u32 %v8113, 7
        %v8115 = vsub.s32 0, %v8114
        %v8116 = vrot.slane %v8111, %v8115
        %v8518 = vunpack.c.l.b16 %v7710
        %v8519 = vunpack.c.l.b16 %v7711
        %v8520 = vunpack.c.l.b16 %v7712
        %v8521 = vunpack.c.l.b16 %v7713
        %v8522 = vunpack.c.l.b16 %v7714
        %v8523 = vunpack.c.l.b16 %v7715
        %v8524 = vunpack.c.l.b16 %v7716
        %v8525 = vunpack.c.l.b16 %v7717
        %v8526 = vunpack.c.l.b16 %v7718
        %v8527 = vunpack.c.l.b16 %v7719
        %v8528 = vunpack.c.l.b16 %v7720
        %v8529 = vunpack.c.l.b16 %v7721
        %v8530 = vunpack.c.l.b16 %v7722
        %v8531 = vunpack.c.l.b16 %v7723
        %v8532 = vunpack.c.l.b16 %v7724
        %v8533 = vunpack.c.l.b16 %v7725
        %v8534 = vunpack.c.l.b16 %v7726
        %v8535 = vunpack.c.l.b16 %v7727
        %v8536 = vunpack.c.l.b16 %v7728
        %v8537 = vunpack.c.l.b16 %v7729
        %v8538 = vunpack.c.l.b16 %v7730
        %v8539 = vunpack.c.l.b16 %v7731
        %v8540 = vunpack.c.l.b16 %v7732
        %v8541 = vunpack.c.l.b16 %v7733
        %v8542 = vunpack.c.l.b16 %v7734
        %v8543 = vunpack.c.l.b16 %v7735
        %v8544 = vunpack.c.l.b16 %v7736
        %v8545 = vunpack.c.l.b16 %v7737
        %v8546 = vunpack.c.l.b16 %v7738
        %v8547 = vunpack.c.l.b16 %v7739
        %v8548 = vunpack.c.l.b16 %v7740
        %v8549 = vunpack.c.l.b16 %v7741
        %v8550 = vunpack.c.l.b16 %v7742
        %v8551 = vunpack.c.l.b16 %v7743
        %v8552 = vunpack.c.l.b16 %v7744
        %v8553 = vunpack.c.l.b16 %v7745
        %v8554 = vunpack.c.l.b16 %v7746
        %v8555 = vunpack.c.l.b16 %v7747
        %v8556 = vunpack.c.l.b16 %v7748
        %v8557 = vunpack.c.l.b16 %v7749
        %v8558 = vunpack.c.l.b16 %v7750
        %v8559 = vunpack.c.l.b16 %v7751
        %v8560 = vunpack.c.l.b16 %v7752
        %v8561 = vunpack.c.l.b16 %v7753
        %v8562 = vunpack.c.l.b16 %v7754
        %v8563 = vunpack.c.l.b16 %v7755
        %v8564 = vunpack.c.l.b16 %v7756
        %v8565 = vunpack.c.l.b16 %v7757
        %v8566 = vunpack.c.l.b16 %v7758
        %v8567 = vunpack.c.l.b16 %v7759
        %v8568 = vunpack.c.l.b16 %v7760
        %v8569 = vunpack.c.l.b16 %v7761
        %v8570 = vunpack.c.l.b16 %v7762
        %v8571 = vunpack.c.l.b16 %v7763
        %v8572 = vunpack.c.l.b16 %v7764
        %v8573 = vunpack.c.l.b16 %v7765
        %v8574 = vunpack.c.l.b16 %v7766
        %v8575 = vunpack.c.l.b16 %v7767
        %v8576 = vunpack.c.l.b16 %v7768
        %v8577 = vunpack.c.l.b16 %v7769
        %v8578 = vunpack.c.l.b16 %v7770
        %v8579 = vunpack.c.l.b16 %v7771
        %v8580 = vunpack.c.l.b16 %v7772
        %v8581 = vunpack.c.l.b16 %v7773
        %v8582 = vunpack.c.l.b16 %v7774
        %v8583 = vunpack.c.l.b16 %v7775
        %v8584 = vunpack.c.l.b16 %v7776
        %v8585 = vunpack.c.l.b16 %v7777
        %v8586 = vunpack.c.l.b16 %v7778
        %v8587 = vunpack.c.l.b16 %v7779
        %v8588 = vunpack.c.l.b16 %v7780
        %v8589 = vunpack.c.l.b16 %v7781
        %v8590 = vunpack.c.l.b16 %v7782
        %v8591 = vunpack.c.l.b16 %v7783
        %v8592 = vunpack.c.l.b16 %v7784
        %v8593 = vunpack.c.l.b16 %v7785
        %v8594 = vunpack.c.l.b16 %v7786
        %v8595 = vunpack.c.l.b16 %v7787
        %v8596 = vunpack.c.l.b16 %v7788
        %v8597 = vunpack.c.l.b16 %v7789
        %v8598 = vunpack.c.l.b16 %v7790
        %v8599 = vunpack.c.l.b16 %v7791
        %v8600 = vunpack.c.l.b16 %v7792
        %v8601 = vunpack.c.l.b16 %v7793
        %v8602 = vunpack.c.l.b16 %v7794
        %v8603 = vunpack.c.l.b16 %v7795
        %v8604 = vunpack.c.l.b16 %v7796
        %v8605 = vunpack.c.l.b16 %v7797
        %v8606 = vunpack.c.l.b16 %v7798
        %v8607 = vunpack.c.l.b16 %v7799
        %v8608 = vunpack.c.l.b16 %v7800
        %v8609 = vunpack.c.l.b16 %v7801
        %v8610 = vunpack.c.l.b16 %v7802
        %v8611 = vunpack.c.l.b16 %v7803
        %v8612 = vunpack.c.l.b16 %v7804
        %v8613 = vunpack.c.l.b16 %v7805
        %v8614 = vunpack.c.l.b16 %v7806
        %v8615 = vunpack.c.l.b16 %v7807
        %v8616 = vunpack.c.l.b16 %v7808
        %v8617 = vunpack.c.l.b16 %v7809
        %v8618 = vunpack.c.l.b16 %v7810
        %v8619 = vunpack.c.l.b16 %v7811
        %v8620 = vunpack.c.l.b16 %v7812
        %v8621 = vunpack.c.l.b16 %v7813
        %v8622 = vunpack.c.l.b16 %v7814
        %v8623 = vunpack.c.l.b16 %v7815
        %v8624 = vunpack.c.l.b16 %v7816
        %v8625 = vunpack.c.l.b16 %v7817
        %v8626 = vunpack.c.l.b16 %v7818
        %v8627 = vunpack.c.l.b16 %v7819
        %v8628 = vunpack.c.l.b16 %v7820
        %v8629 = vunpack.c.l.b16 %v7821
        %v8630 = vunpack.c.l.b16 %v7822
        %v8631 = vunpack.c.l.b16 %v7823
        %v8632 = vunpack.c.l.b16 %v7824
        %v8633 = vunpack.c.l.b16 %v7825
        %v8634 = vunpack.c.l.b16 %v7826
        %v8635 = vunpack.c.l.b16 %v7827
        %v8636 = vunpack.c.l.b16 %v7828
        %v8637 = vunpack.c.l.b16 %v7829
        %v8638 = vunpack.c.l.b16 %v7830
        %v8639 = vunpack.c.l.b16 %v7831
        %v8640 = vunpack.c.l.b16 %v7832
        %v8641 = vunpack.c.l.b16 %v7833
        %v8642 = vunpack.c.l.b16 %v7834
        %v8643 = vunpack.c.l.b16 %v7835
        %v8644 = vunpack.c.l.b16 %v7836
        %v8645 = vunpack.c.l.b16 %v7837
        %v8646 = vunpack.c.l.b16 %v7838
        %v8647 = vunpack.c.l.b16 %v7839
        %v8648 = vunpack.c.l.b16 %v7840
        %v8649 = vunpack.c.l.b16 %v7841
        %v8650 = vunpack.c.l.b16 %v7842
        %v8651 = vunpack.c.l.b16 %v7843
        %v8652 = vunpack.c.l.b16 %v7844
        %v8653 = vunpack.c.l.b16 %v7845
        %v8654 = vunpack.c.l.b16 %v7846
        %v8655 = vunpack.c.l.b16 %v7847
        %v8656 = vunpack.c.l.b16 %v7848
        %v8657 = vunpack.c.l.b16 %v7849
        %v8658 = vunpack.c.l.b16 %v7850
        %v8659 = vunpack.c.l.b16 %v7851
        %v8660 = vunpack.c.l.b16 %v7852
        %v8661 = vunpack.c.l.b16 %v7853
        %v8662 = vunpack.c.l.b16 %v7854
        %v8663 = vunpack.c.l.b16 %v7855
        %v8664 = vunpack.c.l.b16 %v7856
        %v8665 = vunpack.c.l.b16 %v7857
        %v8666 = vunpack.c.l.b16 %v7858
        %v8667 = vunpack.c.l.b16 %v7859
        %v8668 = vunpack.c.l.b16 %v7860
        %v8669 = vunpack.c.l.b16 %v7861
        %v8670 = vunpack.c.l.b16 %v7862
        %v8671 = vunpack.c.l.b16 %v7863
        %v8672 = vunpack.c.l.b16 %v7864
        %v8673 = vunpack.c.l.b16 %v7865
        %v8674 = vunpack.c.l.b16 %v7866
        %v8675 = vunpack.c.l.b16 %v7867
        %v8676 = vunpack.c.l.b16 %v7868
        %v8677 = vunpack.c.l.b16 %v7869
        %v8678 = vunpack.c.l.b16 %v7870
        %v8679 = vunpack.c.l.b16 %v7871
        %v8680 = vunpack.c.l.b16 %v7872
        %v8681 = vunpack.c.l.b16 %v7873
        %v8682 = vunpack.c.l.b16 %v7874
        %v8683 = vunpack.c.l.b16 %v7875
        %v8684 = vunpack.c.l.b16 %v7876
        %v8685 = vunpack.c.l.b16 %v7877
        %v8686 = vunpack.c.l.b16 %v7878
        %v8687 = vunpack.c.l.b16 %v7879
        %v8688 = vunpack.c.l.b16 %v7880
        %v8689 = vunpack.c.l.b16 %v7881
        %v8690 = vunpack.c.l.b16 %v7882
        %v8691 = vunpack.c.l.b16 %v7883
        %v8692 = vunpack.c.l.b16 %v7884
        %v8693 = vunpack.c.l.b16 %v7885
        %v8694 = vunpack.c.l.b16 %v7886
        %v8695 = vunpack.c.l.b16 %v7887
        %v8696 = vunpack.c.l.b16 %v7888
        %v8697 = vunpack.c.l.b16 %v7889
        %v8698 = vunpack.c.l.b16 %v7890
        %v8699 = vunpack.c.l.b16 %v7891
        %v8700 = vunpack.c.l.b16 %v7892
        %v8701 = vunpack.c.l.b16 %v7893
        %v8702 = vunpack.c.l.b16 %v7894
        %v8703 = vunpack.c.l.b16 %v7895
        %v8704 = vunpack.c.l.b16 %v7896
        %v8705 = vunpack.c.l.b16 %v7897
        %v8706 = vunpack.c.l.b16 %v7898
        %v8707 = vunpack.c.l.b16 %v7899
        %v8708 = vunpack.c.l.b16 %v7900
        %v8709 = vunpack.c.l.b16 %v7901
        %v8710 = vunpack.c.l.b16 %v7902
        %v8711 = vunpack.c.l.b16 %v7903
        %v8712 = vunpack.c.l.b16 %v7904
        %v8713 = vunpack.c.l.b16 %v7905
        %v8714 = vunpack.c.l.b16 %v7906
        %v8715 = vunpack.c.l.b16 %v7907
        %v8716 = vunpack.c.l.b16 %v7908
        %v8717 = vunpack.c.l.b16 %v7909
        %v8718 = vunpack.c.l.b16 %v7910
        %v8719 = vunpack.c.l.b16 %v7911
        %v8720 = vunpack.c.l.b16 %v7912
        %v8721 = vunpack.c.l.b16 %v7913
        %v8722 = vunpack.c.l.b16 %v7914
        %v8723 = vunpack.c.l.b16 %v7915
        %v8724 = vunpack.c.l.b16 %v7916
        %v8725 = vunpack.c.l.b16 %v7917
        %v8726 = vunpack.c.l.b16 %v7918
        %v8727 = vunpack.c.l.b16 %v7919
        %v8728 = vunpack.c.l.b16 %v7920
        %v8729 = vunpack.c.l.b16 %v7921
        %v8730 = vunpack.c.l.b16 %v7922
        %v8731 = vunpack.c.l.b16 %v7923
        %v8732 = vunpack.c.l.b16 %v7924
        %v8733 = vunpack.c.l.b16 %v7925
        %v8734 = vunpack.c.l.b16 %v7926
        %v8735 = vunpack.c.l.b16 %v7927
        %v8736 = vunpack.c.l.b16 %v7928
        %v8737 = vunpack.c.l.b16 %v7929
        %v8738 = vunpack.c.l.b16 %v7930
        %v8739 = vunpack.c.l.b16 %v7931
        %v8740 = vunpack.c.l.b16 %v7932
        %v8741 = vunpack.c.l.b16 %v7933
        %v8742 = vunpack.c.l.b16 %v7934
        %v8743 = vunpack.c.l.b16 %v7935
        %v8744 = vunpack.c.l.b16 %v7936
        %v8745 = vunpack.c.l.b16 %v7937
        %v8746 = vunpack.c.l.b16 %v7938
        %v8747 = vunpack.c.l.b16 %v7939
        %v8748 = vunpack.c.l.b16 %v7940
        %v8749 = vunpack.c.l.b16 %v7941
        %v8750 = vunpack.c.l.b16 %v7942
        %v8751 = vunpack.c.l.b16 %v7943
        %v8752 = vunpack.c.l.b16 %v7944
        %v8753 = vunpack.c.l.b16 %v7945
        %v8754 = vunpack.c.l.b16 %v7946
        %v8755 = vunpack.c.l.b16 %v7947
        %v8756 = vunpack.c.l.b16 %v7948
        %v8757 = vunpack.c.l.b16 %v7949
        %v8758 = vunpack.c.l.b16 %v7950
        %v8759 = vunpack.c.l.b16 %v7951
        %v8760 = vunpack.c.l.b16 %v7952
        %v8761 = vunpack.c.l.b16 %v7953
        %v8762 = vunpack.c.l.b16 %v7954
        %v8763 = vunpack.c.l.b16 %v7955
        %v8764 = vunpack.c.l.b16 %v7956
        %v8765 = vunpack.c.l.b16 %v7957
        %v8766 = vunpack.c.l.b16 %v7958
        %v8767 = vunpack.c.l.b16 %v7959
        %v8768 = vunpack.c.l.b16 %v7960
        %v8769 = vunpack.c.l.b16 %v7961
        %v8770 = vunpack.c.l.b16 %v7962
        %v8771 = vunpack.c.l.b16 %v7963
        %v8772 = vunpack.c.l.b16 %v7964
        %v8773 = vunpack.c.l.b16 %v7965
        %v8774 = vunpack.c.l.b16 %v7966
        %v8775 = vunpack.c.l.b16 %v7967
        %v8776 = vunpack.c.l.b16 %v7968
        %v8777 = vunpack.c.l.b16 %v7969
        %v8778 = vunpack.c.l.b16 %v7970
        %v8779 = vunpack.c.l.b16 %v7971
        %v8780 = vunpack.c.l.b16 %v7972
        %v8781 = vunpack.c.l.b16 %v7973
        %v8782 = vunpack.c.l.b16 %v7974
        %v8783 = vunpack.c.l.b16 %v7975
        %v8784 = vunpack.c.l.b16 %v7976
        %v8785 = vunpack.c.l.b16 %v7977
        %v8786 = vunpack.c.l.b16 %v7978
        %v8787 = vunpack.c.l.b16 %v7979
        %v8788 = vunpack.c.l.b16 %v7980
        %v8789 = vunpack.c.l.b16 %v7981
        %v8790 = vunpack.c.l.b16 %v7982
        %v8791 = vunpack.c.l.b16 %v7983
        %v8792 = vunpack.c.l.b16 %v7984
        %v8793 = vunpack.c.l.b16 %v7985
        %v8794 = vunpack.c.l.b16 %v7986
        %v8795 = vunpack.c.l.b16 %v7987
        %v8796 = vunpack.c.l.b16 %v7988
        %v8797 = vunpack.c.l.b16 %v7989
        %v8798 = vunpack.c.l.b16 %v7990
        %v8799 = vunpack.c.l.b16 %v7991
        %v8800 = vunpack.c.l.b16 %v7992
        %v8801 = vunpack.c.l.b16 %v7993
        %v8802 = vunpack.c.l.b16 %v7994
        %v8803 = vunpack.c.l.b16 %v7995
        %v8804 = vunpack.c.l.b16 %v7996
        %v8805 = vunpack.c.l.b16 %v7997
        %v8806 = vunpack.c.l.b16 %v7998
        %v8807 = vunpack.c.l.b16 %v7999
        %v8808 = vunpack.c.l.b16 %v8000
        %v8809 = vunpack.c.l.b16 %v8001
        %v8810 = vunpack.c.l.b16 %v8002
        %v8811 = vunpack.c.l.b16 %v8003
        %v8812 = vunpack.c.l.b16 %v8004
        %v8813 = vunpack.c.l.b16 %v8005
        %v8814 = vunpack.c.l.b16 %v8006
        %v8815 = vunpack.c.l.b16 %v8007
        %v8816 = vunpack.c.l.b16 %v8008
        %v8817 = vunpack.c.l.b16 %v8009
        %v8818 = vunpack.c.l.b16 %v8010
        %v8819 = vunpack.c.l.b16 %v8011
        %v8820 = vunpack.c.l.b16 %v8012
        %v8821 = vunpack.c.l.b16 %v8013
        %v8822 = vunpack.c.l.b16 %v8014
        %v8823 = vunpack.c.l.b16 %v8015
        %v8824 = vunpack.c.l.b16 %v8016
        %v8825 = vunpack.c.l.b16 %v8017
        %v8826 = vunpack.c.l.b16 %v8018
        %v8827 = vunpack.c.l.b16 %v8019
        %v8828 = vunpack.c.l.b16 %v8020
        %v8829 = vunpack.c.l.b16 %v8021
        %v8830 = vunpack.c.l.b16 %v8022
        %v8831 = vunpack.c.l.b16 %v8023
        %v8832 = vunpack.c.l.b16 %v8024
        %v8833 = vunpack.c.l.b16 %v8025
        %v8834 = vunpack.c.l.b16 %v8026
        %v8835 = vunpack.c.l.b16 %v8027
        %v8836 = vunpack.c.l.b16 %v8028
        %v8837 = vunpack.c.l.b16 %v8029
        %v8838 = vunpack.c.l.b16 %v8030
        %v8839 = vunpack.c.l.b16 %v8031
        %v8840 = vunpack.c.l.b16 %v8032
        %v8841 = vunpack.c.l.b16 %v8033
        %v8842 = vunpack.c.l.b16 %v8034
        %v8843 = vunpack.c.l.b16 %v8035
        %v8844 = vunpack.c.l.b16 %v8036
        %v8845 = vunpack.c.l.b16 %v8037
        %v8846 = vunpack.c.l.b16 %v8038
        %v8847 = vunpack.c.l.b16 %v8039
        %v8848 = vunpack.c.l.b16 %v8040
        %v8849 = vunpack.c.l.b16 %v8041
        %v8850 = vunpack.c.l.b16 %v8042
        %v8851 = vunpack.c.l.b16 %v8043
        %v8852 = vunpack.c.l.b16 %v8044
        %v8853 = vunpack.c.l.b16 %v8045
        %v8854 = vunpack.c.l.b16 %v8046
        %v8855 = vunpack.c.l.b16 %v8047
        %v8856 = vunpack.c.l.b16 %v8048
        %v8857 = vunpack.c.l.b16 %v8049
        %v8858 = vunpack.c.l.b16 %v8050
        %v8859 = vunpack.c.l.b16 %v8051
        %v8860 = vunpack.c.l.b16 %v8052
        %v8861 = vunpack.c.l.b16 %v8053
        %v8862 = vunpack.c.l.b16 %v8054
        %v8863 = vunpack.c.l.b16 %v8055
        %v8864 = vunpack.c.l.b16 %v8056
        %v8865 = vunpack.c.l.b16 %v8057
        %v8866 = vunpack.c.l.b16 %v8058
        %v8867 = vunpack.c.l.b16 %v8059
        %v8868 = vunpack.c.l.b16 %v8060
        %v8869 = vunpack.c.l.b16 %v8061
        %v8870 = vunpack.c.l.b16 %v8062
        %v8871 = vunpack.c.l.b16 %v8063
        %v8872 = vunpack.c.l.b16 %v8064
        %v8873 = vunpack.c.l.b16 %v8065
        %v8874 = vunpack.c.l.b16 %v8066
        %v8875 = vunpack.c.l.b16 %v8067
        %v8876 = vunpack.c.l.b16 %v8068
        %v8877 = vunpack.c.l.b16 %v8069
        %v8878 = vunpack.c.l.b16 %v8070
        %v8879 = vunpack.c.l.b16 %v8071
        %v8880 = vunpack.c.l.b16 %v8072
        %v8881 = vunpack.c.l.b16 %v8073
        %v8882 = vunpack.c.l.b16 %v8074
        %v8883 = vunpack.c.l.b16 %v8075
        %v8884 = vunpack.c.l.b16 %v8076
        %v8885 = vunpack.c.l.b16 %v8077
        %v8886 = vunpack.c.l.b16 %v8078
        %v8887 = vunpack.c.l.b16 %v8079
        %v8888 = vunpack.c.l.b16 %v8080
        %v8889 = vunpack.c.l.b16 %v8081
        %v8890 = vunpack.c.l.b16 %v8082
        %v8891 = vunpack.c.l.b16 %v8083
        %v8892 = vunpack.c.l.b16 %v8084
        %v8893 = vunpack.c.l.b16 %v8085
        %v8894 = vunpack.c.l.b16 %v8086
        %v8895 = vunpack.c.l.b16 %v8087
        %v8896 = vunpack.c.l.b16 %v8088
        %v8897 = vunpack.c.l.b16 %v8089
        %v8898 = vunpack.c.l.b16 %v8090
        %v8899 = vunpack.c.l.b16 %v8091
        %v8900 = vunpack.c.l.b16 %v8092
        %v8901 = vunpack.c.l.b16 %v8093
        %v8902 = vunpack.c.l.b16 %v8094
        %v8903 = vunpack.c.l.b16 %v8095
        %v8904 = vunpack.c.l.b16 %v8096
        %v8905 = vunpack.c.l.b16 %v8097
        %v8906 = vunpack.c.l.b16 %v8098
        %v8907 = vunpack.c.l.b16 %v8099
        %v8908 = vunpack.c.l.b16 %v8100
        %v8909 = vunpack.c.l.b16 %v8101
        %v8910 = vunpack.c.l.b16 %v8102
        %v8911 = vunpack.c.l.b16 %v8103
        %v8912 = vunpack.c.l.b16 %v8104
        %v8913 = vunpack.c.l.b16 %v8105
        %v8914 = vunpack.c.l.b16 %v8106
        %v8915 = vunpack.c.l.b16 %v8107
        %v8916 = vunpack.c.l.b16 %v8108
        %v8917 = vunpack.c.l.b16 %v8109
        %v8918 = vpack.c.b16 %v8519, %v8518
        %v8919 = vpack.c.b16 %v8521, %v8520
        %v8920 = vpack.c.b16 %v8523, %v8522
        %v8921 = vpack.c.b16 %v8525, %v8524
        %v8922 = vpack.c.b16 %v8527, %v8526
        %v8923 = vpack.c.b16 %v8529, %v8528
        %v8924 = vpack.c.b16 %v8531, %v8530
        %v8925 = vpack.c.b16 %v8533, %v8532
        %v8926 = vpack.c.b16 %v8535, %v8534
        %v8927 = vpack.c.b16 %v8537, %v8536
        %v8928 = vpack.c.b16 %v8539, %v8538
        %v8929 = vpack.c.b16 %v8541, %v8540
        %v8930 = vpack.c.b16 %v8543, %v8542
        %v8931 = vpack.c.b16 %v8545, %v8544
        %v8932 = vpack.c.b16 %v8547, %v8546
        %v8933 = vpack.c.b16 %v8549, %v8548
        %v8934 = vpack.c.b16 %v8551, %v8550
        %v8935 = vpack.c.b16 %v8553, %v8552
        %v8936 = vpack.c.b16 %v8555, %v8554
        %v8937 = vpack.c.b16 %v8557, %v8556
        %v8938 = vpack.c.b16 %v8559, %v8558
        %v8939 = vpack.c.b16 %v8561, %v8560
        %v8940 = vpack.c.b16 %v8563, %v8562
        %v8941 = vpack.c.b16 %v8565, %v8564
        %v8942 = vpack.c.b16 %v8567, %v8566
        %v8943 = vpack.c.b16 %v8569, %v8568
        %v8944 = vpack.c.b16 %v8571, %v8570
        %v8945 = vpack.c.b16 %v8573, %v8572
        %v8946 = vpack.c.b16 %v8575, %v8574
        %v8947 = vpack.c.b16 %v8577, %v8576
        %v8948 = vpack.c.b16 %v8579, %v8578
        %v8949 = vpack.c.b16 %v8581, %v8580
        %v8950 = vpack.c.b16 %v8583, %v8582
        %v8951 = vpack.c.b16 %v8585, %v8584
        %v8952 = vpack.c.b16 %v8587, %v8586
        %v8953 = vpack.c.b16 %v8589, %v8588
        %v8954 = vpack.c.b16 %v8591, %v8590
        %v8955 = vpack.c.b16 %v8593, %v8592
        %v8956 = vpack.c.b16 %v8595, %v8594
        %v8957 = vpack.c.b16 %v8597, %v8596
        %v8958 = vpack.c.b16 %v8599, %v8598
        %v8959 = vpack.c.b16 %v8601, %v8600
        %v8960 = vpack.c.b16 %v8603, %v8602
        %v8961 = vpack.c.b16 %v8605, %v8604
        %v8962 = vpack.c.b16 %v8607, %v8606
        %v8963 = vpack.c.b16 %v8609, %v8608
        %v8964 = vpack.c.b16 %v8611, %v8610
        %v8965 = vpack.c.b16 %v8613, %v8612
        %v8966 = vpack.c.b16 %v8615, %v8614
        %v8967 = vpack.c.b16 %v8617, %v8616
        %v8968 = vpack.c.b16 %v8619, %v8618
        %v8969 = vpack.c.b16 %v8621, %v8620
        %v8970 = vpack.c.b16 %v8623, %v8622
        %v8971 = vpack.c.b16 %v8625, %v8624
        %v8972 = vpack.c.b16 %v8627, %v8626
        %v8973 = vpack.c.b16 %v8629, %v8628
        %v8974 = vpack.c.b16 %v8631, %v8630
        %v8975 = vpack.c.b16 %v8633, %v8632
        %v8976 = vpack.c.b16 %v8635, %v8634
        %v8977 = vpack.c.b16 %v8637, %v8636
        %v8978 = vpack.c.b16 %v8639, %v8638
        %v8979 = vpack.c.b16 %v8641, %v8640
        %v8980 = vpack.c.b16 %v8643, %v8642
        %v8981 = vpack.c.b16 %v8645, %v8644
        %v8982 = vpack.c.b16 %v8647, %v8646
        %v8983 = vpack.c.b16 %v8649, %v8648
        %v8984 = vpack.c.b16 %v8651, %v8650
        %v8985 = vpack.c.b16 %v8653, %v8652
        %v8986 = vpack.c.b16 %v8655, %v8654
        %v8987 = vpack.c.b16 %v8657, %v8656
        %v8988 = vpack.c.b16 %v8659, %v8658
        %v8989 = vpack.c.b16 %v8661, %v8660
        %v8990 = vpack.c.b16 %v8663, %v8662
        %v8991 = vpack.c.b16 %v8665, %v8664
        %v8992 = vpack.c.b16 %v8667, %v8666
        %v8993 = vpack.c.b16 %v8669, %v8668
        %v8994 = vpack.c.b16 %v8671, %v8670
        %v8995 = vpack.c.b16 %v8673, %v8672
        %v8996 = vpack.c.b16 %v8675, %v8674
        %v8997 = vpack.c.b16 %v8677, %v8676
        %v8998 = vpack.c.b16 %v8679, %v8678
        %v8999 = vpack.c.b16 %v8681, %v8680
        %v9000 = vpack.c.b16 %v8683, %v8682
        %v9001 = vpack.c.b16 %v8685, %v8684
        %v9002 = vpack.c.b16 %v8687, %v8686
        %v9003 = vpack.c.b16 %v8689, %v8688
        %v9004 = vpack.c.b16 %v8691, %v8690
        %v9005 = vpack.c.b16 %v8693, %v8692
        %v9006 = vpack.c.b16 %v8695, %v8694
        %v9007 = vpack.c.b16 %v8697, %v8696
        %v9008 = vpack.c.b16 %v8699, %v8698
        %v9009 = vpack.c.b16 %v8701, %v8700
        %v9010 = vpack.c.b16 %v8703, %v8702
        %v9011 = vpack.c.b16 %v8705, %v8704
        %v9012 = vpack.c.b16 %v8707, %v8706
        %v9013 = vpack.c.b16 %v8709, %v8708
        %v9014 = vpack.c.b16 %v8711, %v8710
        %v9015 = vpack.c.b16 %v8713, %v8712
        %v9016 = vpack.c.b16 %v8715, %v8714
        %v9017 = vpack.c.b16 %v8717, %v8716
        %v9018 = vpack.c.b16 %v8719, %v8718
        %v9019 = vpack.c.b16 %v8721, %v8720
        %v9020 = vpack.c.b16 %v8723, %v8722
        %v9021 = vpack.c.b16 %v8725, %v8724
        %v9022 = vpack.c.b16 %v8727, %v8726
        %v9023 = vpack.c.b16 %v8729, %v8728
        %v9024 = vpack.c.b16 %v8731, %v8730
        %v9025 = vpack.c.b16 %v8733, %v8732
        %v9026 = vpack.c.b16 %v8735, %v8734
        %v9027 = vpack.c.b16 %v8737, %v8736
        %v9028 = vpack.c.b16 %v8739, %v8738
        %v9029 = vpack.c.b16 %v8741, %v8740
        %v9030 = vpack.c.b16 %v8743, %v8742
        %v9031 = vpack.c.b16 %v8745, %v8744
        %v9032 = vpack.c.b16 %v8747, %v8746
        %v9033 = vpack.c.b16 %v8749, %v8748
        %v9034 = vpack.c.b16 %v8751, %v8750
        %v9035 = vpack.c.b16 %v8753, %v8752
        %v9036 = vpack.c.b16 %v8755, %v8754
        %v9037 = vpack.c.b16 %v8757, %v8756
        %v9038 = vpack.c.b16 %v8759, %v8758
        %v9039 = vpack.c.b16 %v8761, %v8760
        %v9040 = vpack.c.b16 %v8763, %v8762
        %v9041 = vpack.c.b16 %v8765, %v8764
        %v9042 = vpack.c.b16 %v8767, %v8766
        %v9043 = vpack.c.b16 %v8769, %v8768
        %v9044 = vpack.c.b16 %v8771, %v8770
        %v9045 = vpack.c.b16 %v8773, %v8772
        %v9046 = vpack.c.b16 %v8775, %v8774
        %v9047 = vpack.c.b16 %v8777, %v8776
        %v9048 = vpack.c.b16 %v8779, %v8778
        %v9049 = vpack.c.b16 %v8781, %v8780
        %v9050 = vpack.c.b16 %v8783, %v8782
        %v9051 = vpack.c.b16 %v8785, %v8784
        %v9052 = vpack.c.b16 %v8787, %v8786
        %v9053 = vpack.c.b16 %v8789, %v8788
        %v9054 = vpack.c.b16 %v8791, %v8790
        %v9055 = vpack.c.b16 %v8793, %v8792
        %v9056 = vpack.c.b16 %v8795, %v8794
        %v9057 = vpack.c.b16 %v8797, %v8796
        %v9058 = vpack.c.b16 %v8799, %v8798
        %v9059 = vpack.c.b16 %v8801, %v8800
        %v9060 = vpack.c.b16 %v8803, %v8802
        %v9061 = vpack.c.b16 %v8805, %v8804
        %v9062 = vpack.c.b16 %v8807, %v8806
        %v9063 = vpack.c.b16 %v8809, %v8808
        %v9064 = vpack.c.b16 %v8811, %v8810
        %v9065 = vpack.c.b16 %v8813, %v8812
        %v9066 = vpack.c.b16 %v8815, %v8814
        %v9067 = vpack.c.b16 %v8817, %v8816
        %v9068 = vpack.c.b16 %v8819, %v8818
        %v9069 = vpack.c.b16 %v8821, %v8820
        %v9070 = vpack.c.b16 %v8823, %v8822
        %v9071 = vpack.c.b16 %v8825, %v8824
        %v9072 = vpack.c.b16 %v8827, %v8826
        %v9073 = vpack.c.b16 %v8829, %v8828
        %v9074 = vpack.c.b16 %v8831, %v8830
        %v9075 = vpack.c.b16 %v8833, %v8832
        %v9076 = vpack.c.b16 %v8835, %v8834
        %v9077 = vpack.c.b16 %v8837, %v8836
        %v9078 = vpack.c.b16 %v8839, %v8838
        %v9079 = vpack.c.b16 %v8841, %v8840
        %v9080 = vpack.c.b16 %v8843, %v8842
        %v9081 = vpack.c.b16 %v8845, %v8844
        %v9082 = vpack.c.b16 %v8847, %v8846
        %v9083 = vpack.c.b16 %v8849, %v8848
        %v9084 = vpack.c.b16 %v8851, %v8850
        %v9085 = vpack.c.b16 %v8853, %v8852
        %v9086 = vpack.c.b16 %v8855, %v8854
        %v9087 = vpack.c.b16 %v8857, %v8856
        %v9088 = vpack.c.b16 %v8859, %v8858
        %v9089 = vpack.c.b16 %v8861, %v8860
        %v9090 = vpack.c.b16 %v8863, %v8862
        %v9091 = vpack.c.b16 %v8865, %v8864
        %v9092 = vpack.c.b16 %v8867, %v8866
        %v9093 = vpack.c.b16 %v8869, %v8868
        %v9094 = vpack.c.b16 %v8871, %v8870
        %v9095 = vpack.c.b16 %v8873, %v8872
        %v9096 = vpack.c.b16 %v8875, %v8874
        %v9097 = vpack.c.b16 %v8877, %v8876
        %v9098 = vpack.c.b16 %v8879, %v8878
        %v9099 = vpack.c.b16 %v8881, %v8880
        %v9100 = vpack.c.b16 %v8883, %v8882
        %v9101 = vpack.c.b16 %v8885, %v8884
        %v9102 = vpack.c.b16 %v8887, %v8886
        %v9103 = vpack.c.b16 %v8889, %v8888
        %v9104 = vpack.c.b16 %v8891, %v8890
        %v9105 = vpack.c.b16 %v8893, %v8892
        %v9106 = vpack.c.b16 %v8895, %v8894
        %v9107 = vpack.c.b16 %v8897, %v8896
        %v9108 = vpack.c.b16 %v8899, %v8898
        %v9109 = vpack.c.b16 %v8901, %v8900
        %v9110 = vpack.c.b16 %v8903, %v8902
        %v9111 = vpack.c.b16 %v8905, %v8904
        %v9112 = vpack.c.b16 %v8907, %v8906
        %v9113 = vpack.c.b16 %v8909, %v8908
        %v9114 = vpack.c.b16 %v8911, %v8910
        %v9115 = vpack.c.b16 %v8913, %v8912
        %v9116 = vpack.c.b16 %v8915, %v8914
        %v9117 = vpack.c.b16 %v8917, %v8916
        %9318 = vmatprep.subr.bf16.mxu0 0
        %9319 = vmatpush1.bf16.msra.mxu0 %v8918
        %9320 = vmatprep.subr.bf16.mxu0 0
        %9321 = vmatpush1.bf16.msra.mxu0 %v8919
        %9322 = vmatprep.subr.bf16.mxu0 0
        %9323 = vmatpush1.bf16.msra.mxu0 %v8920
        %9324 = vmatprep.subr.bf16.mxu0 0
        %9325 = vmatpush1.bf16.msra.mxu0 %v8921
        %9326 = vmatprep.subr.bf16.mxu0 0
        %9327 = vmatpush1.bf16.msra.mxu0 %v8922
        %9328 = vmatprep.subr.bf16.mxu0 0
        %9329 = vmatpush1.bf16.msra.mxu0 %v8923
        %9330 = vmatprep.subr.bf16.mxu0 0
        %9331 = vmatpush1.bf16.msra.mxu0 %v8924
        %9332 = vmatprep.subr.bf16.mxu0 0
        %9333 = vmatpush1.bf16.msra.mxu0 %v8925
        %9334 = vmatprep.subr.bf16.mxu0 0
        %9335 = vmatpush1.bf16.msra.mxu0 %v8926
        %9336 = vmatprep.subr.bf16.mxu0 0
        %9337 = vmatpush1.bf16.msra.mxu0 %v8927
        %9338 = vmatprep.subr.bf16.mxu0 0
        %9339 = vmatpush1.bf16.msra.mxu0 %v8928
        %9340 = vmatprep.subr.bf16.mxu0 0
        %9341 = vmatpush1.bf16.msra.mxu0 %v8929
        %9342 = vmatprep.subr.bf16.mxu0 0
        %9343 = vmatpush1.bf16.msra.mxu0 %v8930
        %9344 = vmatprep.subr.bf16.mxu0 0
        %9345 = vmatpush1.bf16.msra.mxu0 %v8931
        %9346 = vmatprep.subr.bf16.mxu0 0
        %9347 = vmatpush1.bf16.msra.mxu0 %v8932
        %9348 = vmatprep.subr.bf16.mxu0 0
        %9349 = vmatpush1.bf16.msra.mxu0 %v8933
        %9350 = vmatprep.mubr.bf16.mxu0 %v6490
        %9351 = vmatmul.mubr.bf16.gmra.mrb[0].mxu0 %v6437
        %v9352 = vpop.f32.mrb[0].mxu0
        %v9353 = vadd.f32 %v8116, %v9352
        %v9354 = vpop.f32.mrb[0].mxu0
        %v9355 = vpop.f32.mrb[0].mxu0
        %v9356 = vadd.f32 %v8116, %v9355
        %v9357 = vpop.f32.mrb[0].mxu0
        %9358 = vdwg.mxu0
        %9359 = vmatprep.subr.bf16.mxu0 0
        %9360 = vmatpush1.bf16.msra.mxu0 %v8934
        %9361 = vmatprep.subr.bf16.mxu0 0
        %9362 = vmatpush1.bf16.msra.mxu0 %v8935
        %9363 = vmatprep.subr.bf16.mxu0 0
        %9364 = vmatpush1.bf16.msra.mxu0 %v8936
        %9365 = vmatprep.subr.bf16.mxu0 0
        %9366 = vmatpush1.bf16.msra.mxu0 %v8937
        %9367 = vmatprep.subr.bf16.mxu0 0
        %9368 = vmatpush1.bf16.msra.mxu0 %v8938
        %9369 = vmatprep.subr.bf16.mxu0 0
        %9370 = vmatpush1.bf16.msra.mxu0 %v8939
        %9371 = vmatprep.subr.bf16.mxu0 0
        %9372 = vmatpush1.bf16.msra.mxu0 %v8940
        %9373 = vmatprep.subr.bf16.mxu0 0
        %9374 = vmatpush1.bf16.msra.mxu0 %v8941
        %9375 = vmatprep.subr.bf16.mxu0 0
        %9376 = vmatpush1.bf16.msra.mxu0 %v8942
        %9377 = vmatprep.subr.bf16.mxu0 0
        %9378 = vmatpush1.bf16.msra.mxu0 %v8943
        %9379 = vmatprep.subr.bf16.mxu0 0
        %9380 = vmatpush1.bf16.msra.mxu0 %v8944
        %9381 = vmatprep.subr.bf16.mxu0 0
        %9382 = vmatpush1.bf16.msra.mxu0 %v8945
        %9383 = vmatprep.subr.bf16.mxu0 0
        %9384 = vmatpush1.bf16.msra.mxu0 %v8946
        %9385 = vmatprep.subr.bf16.mxu0 0
        %9386 = vmatpush1.bf16.msra.mxu0 %v8947
        %9387 = vmatprep.subr.bf16.mxu0 0
        %9388 = vmatpush1.bf16.msra.mxu0 %v8948
        %9389 = vmatprep.subr.bf16.mxu0 0
        %9390 = vmatpush1.bf16.msra.mxu0 %v8949
        %9391 = vmatprep.mubr.bf16.mxu0 %v6596
        %9392 = vmatmul.mubr.bf16.gmra.mrb[0].mxu0 %v6543
        %v9393 = vpop.f32.mrb[0].mxu0
        %v9394 = vadd.f32 %v9353, %v9393
        %v9395 = vpop.f32.mrb[0].mxu0
        %v9396 = vpop.f32.mrb[0].mxu0
        %v9397 = vadd.f32 %v9356, %v9396
        %v9398 = vpop.f32.mrb[0].mxu0
        %9399 = vdwg.mxu0
        %9400 = vmatprep.subr.bf16.mxu0 0
        %9401 = vmatpush1.bf16.msra.mxu0 %v8950
        %9402 = vmatprep.subr.bf16.mxu0 0
        %9403 = vmatpush1.bf16.msra.mxu0 %v8951
        %9404 = vmatprep.subr.bf16.mxu0 0
        %9405 = vmatpush1.bf16.msra.mxu0 %v8952
        %9406 = vmatprep.subr.bf16.mxu0 0
        %9407 = vmatpush1.bf16.msra.mxu0 %v8953
        %9408 = vmatprep.subr.bf16.mxu0 0
        %9409 = vmatpush1.bf16.msra.mxu0 %v8954
        %9410 = vmatprep.subr.bf16.mxu0 0
        %9411 = vmatpush1.bf16.msra.mxu0 %v8955
        %9412 = vmatprep.subr.bf16.mxu0 0
        %9413 = vmatpush1.bf16.msra.mxu0 %v8956
        %9414 = vmatprep.subr.bf16.mxu0 0
        %9415 = vmatpush1.bf16.msra.mxu0 %v8957
        %9416 = vmatprep.subr.bf16.mxu0 0
        %9417 = vmatpush1.bf16.msra.mxu0 %v8958
        %9418 = vmatprep.subr.bf16.mxu0 0
        %9419 = vmatpush1.bf16.msra.mxu0 %v8959
        %9420 = vmatprep.subr.bf16.mxu0 0
        %9421 = vmatpush1.bf16.msra.mxu0 %v8960
        %9422 = vmatprep.subr.bf16.mxu0 0
        %9423 = vmatpush1.bf16.msra.mxu0 %v8961
        %9424 = vmatprep.subr.bf16.mxu0 0
        %9425 = vmatpush1.bf16.msra.mxu0 %v8962
        %9426 = vmatprep.subr.bf16.mxu0 0
        %9427 = vmatpush1.bf16.msra.mxu0 %v8963
        %9428 = vmatprep.subr.bf16.mxu0 0
        %9429 = vmatpush1.bf16.msra.mxu0 %v8964
        %9430 = vmatprep.subr.bf16.mxu0 0
        %9431 = vmatpush1.bf16.msra.mxu0 %v8965
        %9432 = vmatprep.mubr.bf16.mxu0 %v6702
        %9433 = vmatmul.mubr.bf16.gmra.mrb[0].mxu0 %v6649
        %v9434 = vpop.f32.mrb[0].mxu0
        %v9435 = vadd.f32 %v9394, %v9434
        %v9436 = vpop.f32.mrb[0].mxu0
        %v9437 = vpop.f32.mrb[0].mxu0
        %v9438 = vadd.f32 %v9397, %v9437
        %v9439 = vpop.f32.mrb[0].mxu0
        %9440 = vdwg.mxu0
        %9441 = vmatprep.subr.bf16.mxu0 0
        %9442 = vmatpush1.bf16.msra.mxu0 %v8966
        %9443 = vmatprep.subr.bf16.mxu0 0
        %9444 = vmatpush1.bf16.msra.mxu0 %v8967
        %9445 = vmatprep.subr.bf16.mxu0 0
        %9446 = vmatpush1.bf16.msra.mxu0 %v8968
        %9447 = vmatprep.subr.bf16.mxu0 0
        %9448 = vmatpush1.bf16.msra.mxu0 %v8969
        %9449 = vmatprep.subr.bf16.mxu0 0
        %9450 = vmatpush1.bf16.msra.mxu0 %v8970
        %9451 = vmatprep.subr.bf16.mxu0 0
        %9452 = vmatpush1.bf16.msra.mxu0 %v8971
        %9453 = vmatprep.subr.bf16.mxu0 0
        %9454 = vmatpush1.bf16.msra.mxu0 %v8972
        %9455 = vmatprep.subr.bf16.mxu0 0
        %9456 = vmatpush1.bf16.msra.mxu0 %v8973
        %9457 = vmatprep.subr.bf16.mxu0 0
        %9458 = vmatpush1.bf16.msra.mxu0 %v8974
        %9459 = vmatprep.subr.bf16.mxu0 0
        %9460 = vmatpush1.bf16.msra.mxu0 %v8975
        %9461 = vmatprep.subr.bf16.mxu0 0
        %9462 = vmatpush1.bf16.msra.mxu0 %v8976
        %9463 = vmatprep.subr.bf16.mxu0 0
        %9464 = vmatpush1.bf16.msra.mxu0 %v8977
        %9465 = vmatprep.subr.bf16.mxu0 0
        %9466 = vmatpush1.bf16.msra.mxu0 %v8978
        %9467 = vmatprep.subr.bf16.mxu0 0
        %9468 = vmatpush1.bf16.msra.mxu0 %v8979
        %9469 = vmatprep.subr.bf16.mxu0 0
        %9470 = vmatpush1.bf16.msra.mxu0 %v8980
        %9471 = vmatprep.subr.bf16.mxu0 0
        %9472 = vmatpush1.bf16.msra.mxu0 %v8981
        %9473 = vmatprep.mubr.bf16.mxu0 %v6808
        %9474 = vmatmul.mubr.bf16.gmra.mrb[0].mxu0 %v6755
        %v9475 = vpop.f32.mrb[0].mxu0
        %v9476 = vadd.f32 %v9435, %v9475
        %v9477 = vpop.f32.mrb[0].mxu0
        %v9478 = vpop.f32.mrb[0].mxu0
        %v9479 = vadd.f32 %v9438, %v9478
        %v9480 = vpop.f32.mrb[0].mxu0
        %9481 = vdwg.mxu0
        %9482 = vmatprep.subr.bf16.mxu0 0
        %9483 = vmatpush1.bf16.msra.mxu0 %v8982
        %9484 = vmatprep.subr.bf16.mxu0 0
        %9485 = vmatpush1.bf16.msra.mxu0 %v8983
        %9486 = vmatprep.subr.bf16.mxu0 0
        %9487 = vmatpush1.bf16.msra.mxu0 %v8984
        %9488 = vmatprep.subr.bf16.mxu0 0
        %9489 = vmatpush1.bf16.msra.mxu0 %v8985
        %9490 = vmatprep.subr.bf16.mxu0 0
        %9491 = vmatpush1.bf16.msra.mxu0 %v8986
        %9492 = vmatprep.subr.bf16.mxu0 0
        %9493 = vmatpush1.bf16.msra.mxu0 %v8987
        %9494 = vmatprep.subr.bf16.mxu0 0
        %9495 = vmatpush1.bf16.msra.mxu0 %v8988
        %9496 = vmatprep.subr.bf16.mxu0 0
        %9497 = vmatpush1.bf16.msra.mxu0 %v8989
        %9498 = vmatprep.subr.bf16.mxu0 0
        %9499 = vmatpush1.bf16.msra.mxu0 %v8990
        %9500 = vmatprep.subr.bf16.mxu0 0
        %9501 = vmatpush1.bf16.msra.mxu0 %v8991
        %9502 = vmatprep.subr.bf16.mxu0 0
        %9503 = vmatpush1.bf16.msra.mxu0 %v8992
        %9504 = vmatprep.subr.bf16.mxu0 0
        %9505 = vmatpush1.bf16.msra.mxu0 %v8993
        %9506 = vmatprep.subr.bf16.mxu0 0
        %9507 = vmatpush1.bf16.msra.mxu0 %v8994
        %9508 = vmatprep.subr.bf16.mxu0 0
        %9509 = vmatpush1.bf16.msra.mxu0 %v8995
        %9510 = vmatprep.subr.bf16.mxu0 0
        %9511 = vmatpush1.bf16.msra.mxu0 %v8996
        %9512 = vmatprep.subr.bf16.mxu0 0
        %9513 = vmatpush1.bf16.msra.mxu0 %v8997
        %9514 = vmatprep.mubr.bf16.mxu0 %v6914
        %9515 = vmatmul.mubr.bf16.gmra.mrb[0].mxu0 %v6861
        %v9516 = vpop.f32.mrb[0].mxu0
        %v9517 = vadd.f32 %v9476, %v9516
        %v9518 = vpop.f32.mrb[0].mxu0
        %v9519 = vpop.f32.mrb[0].mxu0
        %v9520 = vadd.f32 %v9479, %v9519
        %v9521 = vpop.f32.mrb[0].mxu0
        %9522 = vdwg.mxu0
        %9523 = vmatprep.subr.bf16.mxu0 0
        %9524 = vmatpush1.bf16.msra.mxu0 %v8998
        %9525 = vmatprep.subr.bf16.mxu0 0
        %9526 = vmatpush1.bf16.msra.mxu0 %v8999
        %9527 = vmatprep.subr.bf16.mxu0 0
        %9528 = vmatpush1.bf16.msra.mxu0 %v9000
        %9529 = vmatprep.subr.bf16.mxu0 0
        %9530 = vmatpush1.bf16.msra.mxu0 %v9001
        %9531 = vmatprep.subr.bf16.mxu0 0
        %9532 = vmatpush1.bf16.msra.mxu0 %v9002
        %9533 = vmatprep.subr.bf16.mxu0 0
        %9534 = vmatpush1.bf16.msra.mxu0 %v9003
        %9535 = vmatprep.subr.bf16.mxu0 0
        %9536 = vmatpush1.bf16.msra.mxu0 %v9004
        %9537 = vmatprep.subr.bf16.mxu0 0
        %9538 = vmatpush1.bf16.msra.mxu0 %v9005
        %9539 = vmatprep.subr.bf16.mxu0 0
        %9540 = vmatpush1.bf16.msra.mxu0 %v9006
        %9541 = vmatprep.subr.bf16.mxu0 0
        %9542 = vmatpush1.bf16.msra.mxu0 %v9007
        %9543 = vmatprep.subr.bf16.mxu0 0
        %9544 = vmatpush1.bf16.msra.mxu0 %v9008
        %9545 = vmatprep.subr.bf16.mxu0 0
        %9546 = vmatpush1.bf16.msra.mxu0 %v9009
        %9547 = vmatprep.subr.bf16.mxu0 0
        %9548 = vmatpush1.bf16.msra.mxu0 %v9010
        %9549 = vmatprep.subr.bf16.mxu0 0
        %9550 = vmatpush1.bf16.msra.mxu0 %v9011
        %9551 = vmatprep.subr.bf16.mxu0 0
        %9552 = vmatpush1.bf16.msra.mxu0 %v9012
        %9553 = vmatprep.subr.bf16.mxu0 0
        %9554 = vmatpush1.bf16.msra.mxu0 %v9013
        %9555 = vmatprep.mubr.bf16.mxu0 %v7020
        %9556 = vmatmul.mubr.bf16.gmra.mrb[0].mxu0 %v6967
        %v9557 = vpop.f32.mrb[0].mxu0
        %v9558 = vadd.f32 %v9517, %v9557
        %v9559 = vpop.f32.mrb[0].mxu0
        %v9560 = vpop.f32.mrb[0].mxu0
        %v9561 = vadd.f32 %v9520, %v9560
        %v9562 = vpop.f32.mrb[0].mxu0
        %9563 = vdwg.mxu0
        %9564 = vmatprep.subr.bf16.mxu0 0
        %9565 = vmatpush1.bf16.msra.mxu0 %v9014
        %9566 = vmatprep.subr.bf16.mxu0 0
        %9567 = vmatpush1.bf16.msra.mxu0 %v9015
        %9568 = vmatprep.subr.bf16.mxu0 0
        %9569 = vmatpush1.bf16.msra.mxu0 %v9016
        %9570 = vmatprep.subr.bf16.mxu0 0
        %9571 = vmatpush1.bf16.msra.mxu0 %v9017
        %9572 = vmatprep.subr.bf16.mxu0 0
        %9573 = vmatpush1.bf16.msra.mxu0 %v9018
        %9574 = vmatprep.subr.bf16.mxu0 0
        %9575 = vmatpush1.bf16.msra.mxu0 %v9019
        %9576 = vmatprep.subr.bf16.mxu0 0
        %9577 = vmatpush1.bf16.msra.mxu0 %v9020
        %9578 = vmatprep.subr.bf16.mxu0 0
        %9579 = vmatpush1.bf16.msra.mxu0 %v9021
        %9580 = vmatprep.subr.bf16.mxu0 0
        %9581 = vmatpush1.bf16.msra.mxu0 %v9022
        %9582 = vmatprep.subr.bf16.mxu0 0
        %9583 = vmatpush1.bf16.msra.mxu0 %v9023
        %9584 = vmatprep.subr.bf16.mxu0 0
        %9585 = vmatpush1.bf16.msra.mxu0 %v9024
        %9586 = vmatprep.subr.bf16.mxu0 0
        %9587 = vmatpush1.bf16.msra.mxu0 %v9025
        %9588 = vmatprep.subr.bf16.mxu0 0
        %9589 = vmatpush1.bf16.msra.mxu0 %v9026
        %9590 = vmatprep.subr.bf16.mxu0 0
        %9591 = vmatpush1.bf16.msra.mxu0 %v9027
        %9592 = vmatprep.subr.bf16.mxu0 0
        %9593 = vmatpush1.bf16.msra.mxu0 %v9028
        %9594 = vmatprep.subr.bf16.mxu0 0
        %9595 = vmatpush1.bf16.msra.mxu0 %v9029
        %9596 = vmatprep.mubr.bf16.mxu0 %v7126
        %9597 = vmatmul.mubr.bf16.gmra.mrb[0].mxu0 %v7073
        %v9598 = vpop.f32.mrb[0].mxu0
        %v9599 = vadd.f32 %v9558, %v9598
        %v9600 = vpop.f32.mrb[0].mxu0
        %v9601 = vpop.f32.mrb[0].mxu0
        %v9602 = vadd.f32 %v9561, %v9601
        %v9603 = vpop.f32.mrb[0].mxu0
        %9604 = vdwg.mxu0
        %9605 = vmatprep.subr.bf16.mxu0 0
        %9606 = vmatpush1.bf16.msra.mxu0 %v9030
        %9607 = vmatprep.subr.bf16.mxu0 0
        %9608 = vmatpush1.bf16.msra.mxu0 %v9031
        %9609 = vmatprep.subr.bf16.mxu0 0
        %9610 = vmatpush1.bf16.msra.mxu0 %v9032
        %9611 = vmatprep.subr.bf16.mxu0 0
        %9612 = vmatpush1.bf16.msra.mxu0 %v9033
        %9613 = vmatprep.subr.bf16.mxu0 0
        %9614 = vmatpush1.bf16.msra.mxu0 %v9034
        %9615 = vmatprep.subr.bf16.mxu0 0
        %9616 = vmatpush1.bf16.msra.mxu0 %v9035
        %9617 = vmatprep.subr.bf16.mxu0 0
        %9618 = vmatpush1.bf16.msra.mxu0 %v9036
        %9619 = vmatprep.subr.bf16.mxu0 0
        %9620 = vmatpush1.bf16.msra.mxu0 %v9037
        %9621 = vmatprep.subr.bf16.mxu0 0
        %9622 = vmatpush1.bf16.msra.mxu0 %v9038
        %9623 = vmatprep.subr.bf16.mxu0 0
        %9624 = vmatpush1.bf16.msra.mxu0 %v9039
        %9625 = vmatprep.subr.bf16.mxu0 0
        %9626 = vmatpush1.bf16.msra.mxu0 %v9040
        %9627 = vmatprep.subr.bf16.mxu0 0
        %9628 = vmatpush1.bf16.msra.mxu0 %v9041
        %9629 = vmatprep.subr.bf16.mxu0 0
        %9630 = vmatpush1.bf16.msra.mxu0 %v9042
        %9631 = vmatprep.subr.bf16.mxu0 0
        %9632 = vmatpush1.bf16.msra.mxu0 %v9043
        %9633 = vmatprep.subr.bf16.mxu0 0
        %9634 = vmatpush1.bf16.msra.mxu0 %v9044
        %9635 = vmatprep.subr.bf16.mxu0 0
        %9636 = vmatpush1.bf16.msra.mxu0 %v9045
        %9637 = vmatprep.mubr.bf16.mxu0 %v7232
        %9638 = vmatmul.mubr.bf16.gmra.mrb[0].mxu0 %v7179
        %v9639 = vpop.f32.mrb[0].mxu0
        %v9640 = vadd.f32 %v9599, %v9639
        %v9641 = vpop.f32.mrb[0].mxu0
        %v9642 = vpop.f32.mrb[0].mxu0
        %v9643 = vadd.f32 %v9602, %v9642
        %v9644 = vpop.f32.mrb[0].mxu0
        %9645 = vdwg.mxu0
        %9646 = vmatprep.subr.bf16.mxu0 0
        %9647 = vmatpush1.bf16.msra.mxu0 %v9046
        %9648 = vmatprep.subr.bf16.mxu0 0
        %9649 = vmatpush1.bf16.msra.mxu0 %v9047
        %9650 = vmatprep.subr.bf16.mxu0 0
        %9651 = vmatpush1.bf16.msra.mxu0 %v9048
        %9652 = vmatprep.subr.bf16.mxu0 0
        %9653 = vmatpush1.bf16.msra.mxu0 %v9049
        %9654 = vmatprep.subr.bf16.mxu0 0
        %9655 = vmatpush1.bf16.msra.mxu0 %v9050
        %9656 = vmatprep.subr.bf16.mxu0 0
        %9657 = vmatpush1.bf16.msra.mxu0 %v9051
        %9658 = vmatprep.subr.bf16.mxu0 0
        %9659 = vmatpush1.bf16.msra.mxu0 %v9052
        %9660 = vmatprep.subr.bf16.mxu0 0
        %9661 = vmatpush1.bf16.msra.mxu0 %v9053
        %9662 = vmatprep.subr.bf16.mxu0 0
        %9663 = vmatpush1.bf16.msra.mxu0 %v9054
        %9664 = vmatprep.subr.bf16.mxu0 0
        %9665 = vmatpush1.bf16.msra.mxu0 %v9055
        %9666 = vmatprep.subr.bf16.mxu0 0
        %9667 = vmatpush1.bf16.msra.mxu0 %v9056
        %9668 = vmatprep.subr.bf16.mxu0 0
        %9669 = vmatpush1.bf16.msra.mxu0 %v9057
        %9670 = vmatprep.subr.bf16.mxu0 0
        %9671 = vmatpush1.bf16.msra.mxu0 %v9058
        %9672 = vmatprep.subr.bf16.mxu0 0
        %9673 = vmatpush1.bf16.msra.mxu0 %v9059
        %9674 = vmatprep.subr.bf16.mxu0 0
        %9675 = vmatpush1.bf16.msra.mxu0 %v9060
        %9676 = vmatprep.subr.bf16.mxu0 0
        %9677 = vmatpush1.bf16.msra.mxu0 %v9061
        %9678 = vmatprep.mubr.bf16.mxu0 %v7338
        %9679 = vmatmul.mubr.bf16.gmra.mrb[0].mxu0 %v7285
        %v9680 = vpop.f32.mrb[0].mxu0
        %v9681 = vadd.f32 %v9640, %v9680
        %v9682 = vpop.f32.mrb[0].mxu0
        %v9683 = vpop.f32.mrb[0].mxu0
        %v9684 = vadd.f32 %v9643, %v9683
        %v9685 = vpop.f32.mrb[0].mxu0
        %9686 = vdwg.mxu0
        %9687 = vmatprep.subr.bf16.mxu0 0
        %9688 = vmatpush1.bf16.msra.mxu0 %v9062
        %9689 = vmatprep.subr.bf16.mxu0 0
        %9690 = vmatpush1.bf16.msra.mxu0 %v9063
        %9691 = vmatprep.subr.bf16.mxu0 0
        %9692 = vmatpush1.bf16.msra.mxu0 %v9064
        %9693 = vmatprep.subr.bf16.mxu0 0
        %9694 = vmatpush1.bf16.msra.mxu0 %v9065
        %9695 = vmatprep.subr.bf16.mxu0 0
        %9696 = vmatpush1.bf16.msra.mxu0 %v9066
        %9697 = vmatprep.subr.bf16.mxu0 0
        %9698 = vmatpush1.bf16.msra.mxu0 %v9067
        %9699 = vmatprep.subr.bf16.mxu0 0
        %9700 = vmatpush1.bf16.msra.mxu0 %v9068
        %9701 = vmatprep.subr.bf16.mxu0 0
        %9702 = vmatpush1.bf16.msra.mxu0 %v9069
        %9703 = vmatprep.subr.bf16.mxu0 0
        %9704 = vmatpush1.bf16.msra.mxu0 %v9070
        %9705 = vmatprep.subr.bf16.mxu0 0
        %9706 = vmatpush1.bf16.msra.mxu0 %v9071
        %9707 = vmatprep.subr.bf16.mxu0 0
        %9708 = vmatpush1.bf16.msra.mxu0 %v9072
        %9709 = vmatprep.subr.bf16.mxu0 0
        %9710 = vmatpush1.bf16.msra.mxu0 %v9073
        %9711 = vmatprep.subr.bf16.mxu0 0
        %9712 = vmatpush1.bf16.msra.mxu0 %v9074
        %9713 = vmatprep.subr.bf16.mxu0 0
        %9714 = vmatpush1.bf16.msra.mxu0 %v9075
        %9715 = vmatprep.subr.bf16.mxu0 0
        %9716 = vmatpush1.bf16.msra.mxu0 %v9076
        %9717 = vmatprep.subr.bf16.mxu0 0
        %9718 = vmatpush1.bf16.msra.mxu0 %v9077
        %9719 = vmatprep.mubr.bf16.mxu0 %v7444
        %9720 = vmatmul.mubr.bf16.gmra.mrb[0].mxu0 %v7391
        %v9721 = vpop.f32.mrb[0].mxu0
        %v9722 = vadd.f32 %v9681, %v9721
        %v9723 = vpop.f32.mrb[0].mxu0
        %v9724 = vpop.f32.mrb[0].mxu0
        %v9725 = vadd.f32 %v9684, %v9724
        %v9726 = vpop.f32.mrb[0].mxu0
        %9727 = vdwg.mxu0
        %9728 = vmatprep.subr.bf16.mxu0 0
        %9729 = vmatpush1.bf16.msra.mxu0 %v9078
        %9730 = vmatprep.subr.bf16.mxu0 0
        %9731 = vmatpush1.bf16.msra.mxu0 %v9079
        %9732 = vmatprep.subr.bf16.mxu0 0
        %9733 = vmatpush1.bf16.msra.mxu0 %v9080
        %9734 = vmatprep.subr.bf16.mxu0 0
        %9735 = vmatpush1.bf16.msra.mxu0 %v9081
        %9736 = vmatprep.subr.bf16.mxu0 0
        %9737 = vmatpush1.bf16.msra.mxu0 %v9082
        %9738 = vmatprep.subr.bf16.mxu0 0
        %9739 = vmatpush1.bf16.msra.mxu0 %v9083
        %9740 = vmatprep.subr.bf16.mxu0 0
        %9741 = vmatpush1.bf16.msra.mxu0 %v9084
        %9742 = vmatprep.subr.bf16.mxu0 0
        %9743 = vmatpush1.bf16.msra.mxu0 %v9085
        %9744 = vmatprep.subr.bf16.mxu0 0
        %9745 = vmatpush1.bf16.msra.mxu0 %v9086
        %9746 = vmatprep.subr.bf16.mxu0 0
        %9747 = vmatpush1.bf16.msra.mxu0 %v9087
        %9748 = vmatprep.subr.bf16.mxu0 0
        %9749 = vmatpush1.bf16.msra.mxu0 %v9088
        %9750 = vmatprep.subr.bf16.mxu0 0
        %9751 = vmatpush1.bf16.msra.mxu0 %v9089
        %9752 = vmatprep.subr.bf16.mxu0 0
        %9753 = vmatpush1.bf16.msra.mxu0 %v9090
        %9754 = vmatprep.subr.bf16.mxu0 0
        %9755 = vmatpush1.bf16.msra.mxu0 %v9091
        %9756 = vmatprep.subr.bf16.mxu0 0
        %9757 = vmatpush1.bf16.msra.mxu0 %v9092
        %9758 = vmatprep.subr.bf16.mxu0 0
        %9759 = vmatpush1.bf16.msra.mxu0 %v9093
        %9760 = vmatprep.mubr.bf16.mxu0 %v7550
        %9761 = vmatmul.mubr.bf16.gmra.mrb[0].mxu0 %v7497
        %v9762 = vpop.f32.mrb[0].mxu0
        %v9763 = vadd.f32 %v9722, %v9762
        %v9764 = vpop.f32.mrb[0].mxu0
        %v9765 = vpop.f32.mrb[0].mxu0
        %v9766 = vadd.f32 %v9725, %v9765
        %v9767 = vpop.f32.mrb[0].mxu0
        %9768 = vdwg.mxu0
        %9769 = vmatprep.subr.bf16.mxu0 0
        %9770 = vmatpush1.bf16.msra.mxu0 %v9094
        %9771 = vmatprep.subr.bf16.mxu0 0
        %9772 = vmatpush1.bf16.msra.mxu0 %v9095
        %9773 = vmatprep.subr.bf16.mxu0 0
        %9774 = vmatpush1.bf16.msra.mxu0 %v9096
        %9775 = vmatprep.subr.bf16.mxu0 0
        %9776 = vmatpush1.bf16.msra.mxu0 %v9097
        %9777 = vmatprep.subr.bf16.mxu0 0
        %9778 = vmatpush1.bf16.msra.mxu0 %v9098
        %9779 = vmatprep.subr.bf16.mxu0 0
        %9780 = vmatpush1.bf16.msra.mxu0 %v9099
        %9781 = vmatprep.subr.bf16.mxu0 0
        %9782 = vmatpush1.bf16.msra.mxu0 %v9100
        %9783 = vmatprep.subr.bf16.mxu0 0
        %9784 = vmatpush1.bf16.msra.mxu0 %v9101
        %9785 = vmatprep.subr.bf16.mxu0 0
        %9786 = vmatpush1.bf16.msra.mxu0 %v9102
        %9787 = vmatprep.subr.bf16.mxu0 0
        %9788 = vmatpush1.bf16.msra.mxu0 %v9103
        %9789 = vmatprep.subr.bf16.mxu0 0
        %9790 = vmatpush1.bf16.msra.mxu0 %v9104
        %9791 = vmatprep.subr.bf16.mxu0 0
        %9792 = vmatpush1.bf16.msra.mxu0 %v9105
        %9793 = vmatprep.subr.bf16.mxu0 0
        %9794 = vmatpush1.bf16.msra.mxu0 %v9106
        %9795 = vmatprep.subr.bf16.mxu0 0
        %9796 = vmatpush1.bf16.msra.mxu0 %v9107
        %9797 = vmatprep.subr.bf16.mxu0 0
        %9798 = vmatpush1.bf16.msra.mxu0 %v9108
        %9799 = vmatprep.subr.bf16.mxu0 0
        %9800 = vmatpush1.bf16.msra.mxu0 %v9109
        %9801 = vmatprep.mubr.bf16.mxu0 %v7656
        %9802 = vmatmul.mubr.bf16.gmra.mrb[0].mxu0 %v7603
        %v9803 = vpop.f32.mrb[0].mxu0
        %v9804 = vadd.f32 %v9763, %v9803
        %v9805 = vpop.f32.mrb[0].mxu0
        %v9806 = vpop.f32.mrb[0].mxu0
        %v9807 = vadd.f32 %v9766, %v9806
        %v9808 = vpop.f32.mrb[0].mxu0
        %9809 = vdwg.mxu0
        %9810 = vmatprep.subr.bf16.mxu0 0
        %9811 = vmatpush1.bf16.msra.mxu0 %v9110
        %9812 = vmatprep.subr.bf16.mxu0 0
        %9813 = vmatpush1.bf16.msra.mxu0 %v9111
        %9814 = vmatprep.subr.bf16.mxu0 0
        %9815 = vmatpush1.bf16.msra.mxu0 %v9112
        %9816 = vmatprep.subr.bf16.mxu0 0
        %9817 = vmatpush1.bf16.msra.mxu0 %v9113
        %9818 = vmatprep.subr.bf16.mxu0 0
        %9819 = vmatpush1.bf16.msra.mxu0 %v9114
        %9820 = vmatprep.subr.bf16.mxu0 0
        %9821 = vmatpush1.bf16.msra.mxu0 %v9115
        %9822 = vmatprep.subr.bf16.mxu0 0
        %9823 = vmatpush1.bf16.msra.mxu0 %v9116
        %9824 = vmatprep.subr.bf16.mxu0 0
        %9825 = vmatpush1.bf16.msra.mxu0 %v9117
        %9826 = vmatprep.subr.bf16.mxu0 0
        %9827 = vmatpush1.bf16.msra.mxu0 0
        %9828 = vmatprep.subr.bf16.mxu0 0
        %9829 = vmatpush1.bf16.msra.mxu0 0
        %9830 = vmatprep.subr.bf16.mxu0 0
        %9831 = vmatpush1.bf16.msra.mxu0 0
        %9832 = vmatprep.subr.bf16.mxu0 0
        %9833 = vmatpush1.bf16.msra.mxu0 0
        %9834 = vmatprep.subr.bf16.mxu0 0
        %9835 = vmatpush1.bf16.msra.mxu0 0
        %9836 = vmatprep.subr.bf16.mxu0 0
        %9837 = vmatpush1.bf16.msra.mxu0 0
        %9838 = vmatprep.subr.bf16.mxu0 0
        %9839 = vmatpush1.bf16.msra.mxu0 0
        %9840 = vmatprep.subr.bf16.mxu0 0
        %9841 = vmatpush1.bf16.msra.mxu0 0
        %9842 = vmatprep.mubr.bf16.mxu0 0
        %9843 = vmatmul.mubr.bf16.gmra.mrb[0].mxu0 %v7709
        %v9844 = vpop.f32.mrb[0].mxu0
        %v9845 = vadd.f32 %v9804, %v9844
        %v9846 = vpop.f32.mrb[0].mxu0
        %v9847 = vpop.f32.mrb[0].mxu0
        %v9848 = vadd.f32 %v9807, %v9847
        %v9849 = vpop.f32.mrb[0].mxu0
        %9850 = vdwg.mxu0
        %v9851 = vmax.f32 %v9845, 0.0
        %v9852 = vmax.f32 %v9848, 0.0
        %v9853 = vpack.c.bf16 %v9852, %v9851
        %s9854 = scalar_lea.vmem %s1, 320
        %v9855 = vld [vmem:[%s9854] sm:$0xf]
        %v9856 = vld [vmem:[%s9854 + $0x4] sm:$0xf]
        %v9857 = vld [vmem:[%s9854 + $0x8] sm:$0xf]
        %v9858 = vld [vmem:[%s9854 + $0xc] sm:$0xf]
        %v9859 = vld [vmem:[%s9854 + $0x10] sm:$0xf]
        %v9860 = vld [vmem:[%s9854 + $0x14] sm:$0xf]
        %v9861 = vld [vmem:[%s9854 + $0x18] sm:$0xf]
        %v9862 = vld [vmem:[%s9854 + $0x1c] sm:$0xf]
        %v9863 = vld [vmem:[%s9854 + $0x20] sm:$0xf]
        %v9864 = vld [vmem:[%s9854 + $0x24] sm:$0xf]
        %v9865 = vld [vmem:[%s9854 + $0x28] sm:$0xf]
        %v9866 = vld [vmem:[%s9854 + $0x2c] sm:$0xf]
        %v9867 = vld [vmem:[%s9854 + $0x30] sm:$0xf]
        %v9868 = vld [vmem:[%s9854 + $0x34] sm:$0xf]
        %v9869 = vld [vmem:[%s9854 + $0x38] sm:$0xf]
        %v9870 = vld [vmem:[%s9854 + $0x3c] sm:$0xf]
        %s9871 = scalar_lea.vmem %s2, 7
        %v9872 = vld [vmem:[%s9871] sm:$0x1]
        %v9874 = vlaneseq
        %v9875 = vshrl.u32 %v9874, 7
        %v9876 = vsub.s32 0, %v9875
        %v9877 = vrot.slane %v9872, %v9876
        %v9895 = vunpack.c.l.b16 %v9855
        %v9896 = vunpack.c.l.b16 %v9856
        %v9897 = vunpack.c.l.b16 %v9857
        %v9898 = vunpack.c.l.b16 %v9858
        %v9899 = vunpack.c.l.b16 %v9859
        %v9900 = vunpack.c.l.b16 %v9860
        %v9901 = vunpack.c.l.b16 %v9861
        %v9902 = vunpack.c.l.b16 %v9862
        %v9903 = vunpack.c.l.b16 %v9863
        %v9904 = vunpack.c.l.b16 %v9864
        %v9905 = vunpack.c.l.b16 %v9865
        %v9906 = vunpack.c.l.b16 %v9866
        %v9907 = vunpack.c.l.b16 %v9867
        %v9908 = vunpack.c.l.b16 %v9868
        %v9909 = vunpack.c.l.b16 %v9869
        %v9910 = vunpack.c.l.b16 %v9870
        %v9911 = vpack.c.b16 %v9896, %v9895
        %v9912 = vpack.c.b16 %v9898, %v9897
        %v9913 = vpack.c.b16 %v9900, %v9899
        %v9914 = vpack.c.b16 %v9902, %v9901
        %v9915 = vpack.c.b16 %v9904, %v9903
        %v9916 = vpack.c.b16 %v9906, %v9905
        %v9917 = vpack.c.b16 %v9908, %v9907
        %v9918 = vpack.c.b16 %v9910, %v9909
        %9927 = vmatprep.subr.bf16.mxu0 0
        %9928 = vmatpush1.bf16.msra.mxu0 %v9911
        %9929 = vmatprep.subr.bf16.mxu0 0
        %9930 = vmatpush1.bf16.msra.mxu0 %v9912
        %9931 = vmatprep.subr.bf16.mxu0 0
        %9932 = vmatpush1.bf16.msra.mxu0 %v9913
        %9933 = vmatprep.subr.bf16.mxu0 0
        %9934 = vmatpush1.bf16.msra.mxu0 %v9914
        %9935 = vmatprep.subr.bf16.mxu0 0
        %9936 = vmatpush1.bf16.msra.mxu0 %v9915
        %9937 = vmatprep.subr.bf16.mxu0 0
        %9938 = vmatpush1.bf16.msra.mxu0 %v9916
        %9939 = vmatprep.subr.bf16.mxu0 0
        %9940 = vmatpush1.bf16.msra.mxu0 %v9917
        %9941 = vmatprep.subr.bf16.mxu0 0
        %9942 = vmatpush1.bf16.msra.mxu0 %v9918
        %9943 = vmatprep.subr.bf16.mxu0 0
        %9944 = vmatpush1.bf16.msra.mxu0 0
        %9945 = vmatprep.subr.bf16.mxu0 0
        %9946 = vmatpush1.bf16.msra.mxu0 0
        %9947 = vmatprep.subr.bf16.mxu0 0
        %9948 = vmatpush1.bf16.msra.mxu0 0
        %9949 = vmatprep.subr.bf16.mxu0 0
        %9950 = vmatpush1.bf16.msra.mxu0 0
        %9951 = vmatprep.subr.bf16.mxu0 0
        %9952 = vmatpush1.bf16.msra.mxu0 0
        %9953 = vmatprep.subr.bf16.mxu0 0
        %9954 = vmatpush1.bf16.msra.mxu0 0
        %9955 = vmatprep.subr.bf16.mxu0 0
        %9956 = vmatpush1.bf16.msra.mxu0 0
        %9957 = vmatprep.subr.bf16.mxu0 0
        %9958 = vmatpush1.bf16.msra.mxu0 0
        %9959 = vmatprep.mubr.bf16.mxu0 0
        %9960 = vmatmul.mubr.bf16.gmra.mrb[0].mxu0 %v9853
        %v9961 = vpop.f32.mrb[0].mxu0
        %v9962 = vadd.f32 %v9877, %v9961
        %v9963 = vpop.f32.mrb[0].mxu0
        %v9964 = vpop.f32.mrb[0].mxu0
        %v9965 = vadd.f32 %v9877, %v9964
        %v9966 = vpop.f32.mrb[0].mxu0
        %9967 = vdwg.mxu0
        %v9968 = vmax.f32 %v9962, 0.0
        %v9969 = vmax.f32 %v9965, 0.0
        %v9970 = vpack.c.bf16 %v9969, %v9968
        %s9971 = scalar_lea.vmem %s1, 384
        %v9972 = vld [vmem:[%s9971] sm:$0xf]
        %v9973 = vld [vmem:[%s9971 + $0x4] sm:$0xf]
        %v9974 = vld [vmem:[%s9971 + $0x8] sm:$0xf]
        %v9975 = vld [vmem:[%s9971 + $0xc] sm:$0xf]
        %v9976 = vld [vmem:[%s9971 + $0x10] sm:$0xf]
        %v9977 = vld [vmem:[%s9971 + $0x14] sm:$0xf]
        %v9978 = vld [vmem:[%s9971 + $0x18] sm:$0xf]
        %v9979 = vld [vmem:[%s9971 + $0x1c] sm:$0xf]
        %v9980 = vld [vmem:[%s9971 + $0x20] sm:$0xf]
        %v9981 = vld [vmem:[%s9971 + $0x24] sm:$0xf]
        %v9982 = vld [vmem:[%s9971 + $0x28] sm:$0xf]
        %v9983 = vld [vmem:[%s9971 + $0x2c] sm:$0xf]
        %v9984 = vld [vmem:[%s9971 + $0x30] sm:$0xf]
        %v9985 = vld [vmem:[%s9971 + $0x34] sm:$0xf]
        %v9986 = vld [vmem:[%s9971 + $0x38] sm:$0xf]
        %v9987 = vld [vmem:[%s9971 + $0x3c] sm:$0xf]
        %s9988 = scalar_lea.vmem %s2, 8
        %v9989 = vld [vmem:[%s9988] sm:$0x1]
        %v9991 = vlaneseq
        %v9992 = vshrl.u32 %v9991, 7
        %v9993 = vsub.s32 0, %v9992
        %v9994 = vrot.slane %v9989, %v9993
        %v10012 = vunpack.c.l.b16 %v9972
        %v10013 = vunpack.c.l.b16 %v9973
        %v10014 = vunpack.c.l.b16 %v9974
        %v10015 = vunpack.c.l.b16 %v9975
        %v10016 = vunpack.c.l.b16 %v9976
        %v10017 = vunpack.c.l.b16 %v9977
        %v10018 = vunpack.c.l.b16 %v9978
        %v10019 = vunpack.c.l.b16 %v9979
        %v10020 = vunpack.c.l.b16 %v9980
        %v10021 = vunpack.c.l.b16 %v9981
        %v10022 = vunpack.c.l.b16 %v9982
        %v10023 = vunpack.c.l.b16 %v9983
        %v10024 = vunpack.c.l.b16 %v9984
        %v10025 = vunpack.c.l.b16 %v9985
        %v10026 = vunpack.c.l.b16 %v9986
        %v10027 = vunpack.c.l.b16 %v9987
        %v10028 = vpack.c.b16 %v10013, %v10012
        %v10029 = vpack.c.b16 %v10015, %v10014
        %v10030 = vpack.c.b16 %v10017, %v10016
        %v10031 = vpack.c.b16 %v10019, %v10018
        %v10032 = vpack.c.b16 %v10021, %v10020
        %v10033 = vpack.c.b16 %v10023, %v10022
        %v10034 = vpack.c.b16 %v10025, %v10024
        %v10035 = vpack.c.b16 %v10027, %v10026
        %10044 = vmatprep.subr.bf16.mxu0 0
        %10045 = vmatpush1.bf16.msra.mxu0 %v10028
        %10046 = vmatprep.subr.bf16.mxu0 0
        %10047 = vmatpush1.bf16.msra.mxu0 %v10029
        %10048 = vmatprep.subr.bf16.mxu0 0
        %10049 = vmatpush1.bf16.msra.mxu0 %v10030
        %10050 = vmatprep.subr.bf16.mxu0 0
        %10051 = vmatpush1.bf16.msra.mxu0 %v10031
        %10052 = vmatprep.subr.bf16.mxu0 0
        %10053 = vmatpush1.bf16.msra.mxu0 %v10032
        %10054 = vmatprep.subr.bf16.mxu0 0
        %10055 = vmatpush1.bf16.msra.mxu0 %v10033
        %10056 = vmatprep.subr.bf16.mxu0 0
        %10057 = vmatpush1.bf16.msra.mxu0 %v10034
        %10058 = vmatprep.subr.bf16.mxu0 0
        %10059 = vmatpush1.bf16.msra.mxu0 %v10035
        %10060 = vmatprep.subr.bf16.mxu0 0
        %10061 = vmatpush1.bf16.msra.mxu0 0
        %10062 = vmatprep.subr.bf16.mxu0 0
        %10063 = vmatpush1.bf16.msra.mxu0 0
        %10064 = vmatprep.subr.bf16.mxu0 0
        %10065 = vmatpush1.bf16.msra.mxu0 0
        %10066 = vmatprep.subr.bf16.mxu0 0
        %10067 = vmatpush1.bf16.msra.mxu0 0
        %10068 = vmatprep.subr.bf16.mxu0 0
        %10069 = vmatpush1.bf16.msra.mxu0 0
        %10070 = vmatprep.subr.bf16.mxu0 0
        %10071 = vmatpush1.bf16.msra.mxu0 0
        %10072 = vmatprep.subr.bf16.mxu0 0
        %10073 = vmatpush1.bf16.msra.mxu0 0
        %10074 = vmatprep.subr.bf16.mxu0 0
        %10075 = vmatpush1.bf16.msra.mxu0 0
        %10076 = vmatprep.mubr.bf16.mxu0 0
        %10077 = vmatmul.mubr.bf16.gmra.mrb[0].mxu0 %v9970
        %v10078 = vpop.f32.mrb[0].mxu0
        %v10079 = vadd.f32 %v9994, %v10078
        %v10080 = vpop.f32.mrb[0].mxu0
        %v10081 = vpop.f32.mrb[0].mxu0
        %v10082 = vadd.f32 %v9994, %v10081
        %v10083 = vpop.f32.mrb[0].mxu0
        %10084 = vdwg.mxu0
        %v10085 = vsel %vm932, %v10082, 0.0
        %v10086 = vadd.f32 %v10079, %v10085
        %v10087 = vrot.slane %v10086, 4
        %v10088 = vadd.f32 %v10086, %v10087
        %v10089 = vrot.slane %v10088, 2
        %v10090 = vadd.f32 %v10088, %v10089
        %v10091 = vrot.slane %v10090, 1
        %v10092 = vadd.f32 %v10090, %v10091
        %v10093 = vrcp.pop 9.0
        %v10094 = vmul.f32 %v10092, %v10093
        %v10095 = vld [vmem:[%s9] sm:$0x1]
        %v10096 = vadd.f32 %v10094, %v10095
        %v10097 = vsel %vm932, %v10096, -inf
        %10098 = vmax.xlane.f32.xlu0 %v10097
        %v10099 = vpop.xlane.xlu0 %10098
        %v10100 = vsub.f32 %v10096, %v10099
        %v10101 = vmul.f32 %v10100, 1.442695
        %v10102 = vpow.pop %v10101
        %v10103 = vsel %vm932, %v10102, 0.0
        %10104 = vadd.xlane.f32.xlu0 %v10103
        %v10105 = vpop.xlane.xlu0 %10104
        %v10106 = vlog2.pop %v10105
        %v10107 = vmul.f32 %v10106, 0.6931472
        %v10108 = vsub.f32 %v10100, %v10107
        %10109 = vst [vmem:[%s351] sm:$0x1] %v10108
        %s10110 = sand.u32 %s247, 1
        %s10111 = scalar_lea.sflag [#allocation3], %s10110
        %s10112 = sand.u32 %s247, 1
        %s10113 = scalar_lea.vmem [#allocation2], %s10112
        // Predicated region
        $region61: #{_lambda_.1} parent=59 // pred_check
          %p10114 = pneg %p257
        $region62: #{_lambda_.1} parent=59 // pred_check_branch
          %10116 = sbr.rel (%p10114) target = $region64
        $region63: #{_lambda_.1} parent=59 // pred_region
          %s10118 = ssub.s32 16, 16
          %10119 = vsyncadd %s10111, %s10118
          %s10120 = smul.addr %s24, 16
          %s10121 = scalar_lea.hbm %s10, %s10120
          %s10123 = sshll.u32 %s10113, 4
          %s10124 = int_to_ptr.vmem [resolvable:$true] %s10123
          %10126 = dma.vmem_to_hbm [thread:$0]  %s10124, 16, %s10121, %s10111
        $region64: #{_lambda_.1} parent=59 // pred_fallthru
          _
      $region60: #{_lambda_.1} parent=5 // pred_fallthru
        _
      %p10127 = scmp.le.s32.totalorder 2, %s19
      // Predicated region
      $region65: #{_lambda_.1} parent=5 // pred_check
        %p10128 = pneg %p10127
      $region66: #{_lambda_.1} parent=5 // pred_check_branch
        %10130 = sbr.rel (%p10128) target = $region68
      $region67: #{_lambda_.1} parent=5 // pred_region
        %s10131 = ssub.s32 %s19, 2
        // Predicated region
        $region69: #{_lambda_.1} parent=67 // pred_check
          %p10132 = pneg %p263
        $region70: #{_lambda_.1} parent=67 // pred_check_branch
          %10134 = sbr.rel (%p10132) target = $region72
        $region71: #{_lambda_.1} parent=67 // pred_region
          %s10135 = sand.u32 %s248, 1
          %s10136 = scalar_lea.sflag [#allocation3], %s10135
          %s10137 = sand.u32 %s248, 1
          %s10138 = scalar_lea.vmem [#allocation2], %s10137
          %10139 = dma.done %s10136, 16
        $region72: #{_lambda_.1} parent=67 // pred_fallthru
          _
      $region68: #{_lambda_.1} parent=5 // pred_fallthru
        _
    $region6: #{_lambda_.1} parent=1 // loop_footer
      %s23 = sadd.s32 1, %s19
    $region7: #{_lambda_.1} parent=1 // loop_footer_branch
      %18 = sbr.rel target = $region3
    $region8: #{_lambda_.1} parent=1 // loop_exit
      _
    %10140 = vsyncpa [#allocation3], 1
    %s10141 = scalar_lea.sflag [#allocation3], 1
    %10142 = vsyncpa %s10141, 1

</llo_original>
